<compile_context>
chip_gen: v7x
topology: tpu7x:2x2x1
jax: 0.10.0
libtpu: 0.0.40
codegen_flags: <defaults>
</compile_context>

<pallas_src>
import functools

import jax
import jax.numpy as jnp
from jax.experimental import pallas as pl
from jax.experimental.pallas import tpu as pltpu

# 48 MiB: above the 32 MiB scoped default (lets bigger tiles breathe on
# v5e/v6e's 128 MiB VMEM) while leaving headroom on v7x's 64 MiB physical VMEM.
_VMEM_LIMIT = 48 * 1024 * 1024
_RECUR_TILE_T = 32            # target time rows per recurrence tile (mult. of 8)


def _cp(dim_sem):
    return pltpu.CompilerParams(dimension_semantics=dim_sem,
                                vmem_limit_bytes=_VMEM_LIMIT)


def _time_tiling(T, target=_RECUR_TILE_T):
    """Pick a multiple-of-8 time tile <= target minimizing the padded length."""
    best = None
    cap = min(target, ((T + 7) // 8) * 8)
    for tile in range(8, cap + 1, 8):
        t_pad = ((T + tile - 1) // tile) * tile
        if best is None or t_pad <= best[0]:
            best = (t_pad, tile)
    return best


# ----------------------------------------------------------------------------
# Fused bidirectional LSTM layer kernel.
#   grid = (time-tile,) ("arbitrary": serial), both directions folded into the
#   same step loop.  Per tile: one hoisted MXU GEMM per direction for the
#   input projection, then the recurrence (h_prev @ W_hh only) with static
#   in-tile indices.  h/c persist in VMEM scratch across time tiles.
# ----------------------------------------------------------------------------
def _lstm_layer_kernel(n_x, t_total, len_ref, *refs):
    # refs layout:
    #   x_fwd_0..x_fwd_{n-1}   forward-indexed input streams   (tT, B, Din)
    #   x_bwd_0..x_bwd_{n-1}   time-flipped input streams      (tT, B, Din)
    #   w_ih_0..w_ih_{n-1}     (2, Din, 4H) bf16 per stream
    #   w_hh                   (2, H, 4H) bf16
    #   b                      (2, 1, 4H) f32  (b_ih + b_hh folded)
    #   h0, c0                 (2, B, H)  f32
    #   out_f, out_b           (tT, B, H) f32 blocks (out_b block time-flipped)
    #   h_scr, c_scr           (2, B, H)  f32 scratch
    #   gf_scr, gb_scr         (tT, B, 4H) f32 scratch (hoisted input proj.)
    xf = refs[0:n_x]
    xb = refs[n_x:2 * n_x]
    wih = refs[2 * n_x:3 * n_x]
    (w_hh_ref, b_ref, h0_ref, c0_ref, out_f_ref, out_b_ref,
     h_scr, c_scr, gf_scr, gb_scr) = refs[3 * n_x:]

    tb = pl.program_id(0)
    tT, B = xf[0].shape[0], xf[0].shape[1]
    H = h0_ref.shape[-1]
    G = 4 * H

    @pl.when(tb == 0)
    def _():
        h_scr[...] = h0_ref[...]
        c_scr[...] = c0_ref[...]

    # ---- hoisted input projection: one big MXU GEMM per direction per tile.
    def in_proj(x_refs, d, g_scr):
        acc = None
        for r, w in zip(x_refs, wih):
            x2 = r[...].reshape(tT * B, r.shape[-1]).astype(jnp.bfloat16)
            p = jnp.dot(x2, w[d], preferred_element_type=jnp.float32)
            acc = p if acc is None else acc + p
        g_scr[...] = (acc + b_ref[d]).reshape(tT, B, G)

    in_proj(xf, 0, gf_scr)
    in_proj(xb, 1, gb_scr)

    # ---- serial recurrence, both directions folded into one step loop.
    w_hh_f = w_hh_ref[0]                      # (H, 4H) bf16, hoisted
    w_hh_b = w_hh_ref[1]
    lens = len_ref[...]                       # (B, 1) int32, resident

    h = h_scr[...]
    c = c_scr[...]
    h_f, h_b = h[0], h[1]                     # (B, H) f32
    c_f, c_b = c[0], c[1]

    def cell(gates, c_prev):
        # PyTorch gate order along 4H: [input, forget, cell(g), output]
        s = jax.nn.sigmoid(gates)             # one EUP pass over all gates
        g = jnp.tanh(gates[:, 2 * H:3 * H])
        c_new = s[:, H:2 * H] * c_prev + s[:, 0:H] * g
        h_new = s[:, 3 * H:4 * H] * jnp.tanh(c_new)
        return h_new, c_new

    t_base = tb * tT
    for i in range(tT):                       # static in-tile indices
        t_f = t_base + i                      # forward global timestep
        t_b = (t_total - 1) - t_f             # backward global timestep

        gates_f = gf_scr[i] + jnp.dot(
            h_f.astype(jnp.bfloat16), w_hh_f,
            preferred_element_type=jnp.float32)
        gates_b = gb_scr[tT - 1 - i] + jnp.dot(
            h_b.astype(jnp.bfloat16), w_hh_b,
            preferred_element_type=jnp.float32)

        hf_new, cf_new = cell(gates_f, c_f)
        hb_new, cb_new = cell(gates_b, c_b)

        valid_f = t_f < lens                  # (B, 1) bool
        valid_b = t_b < lens

        h_f = jnp.where(valid_f, hf_new, h_f)   # packed-seq state hold
        c_f = jnp.where(valid_f, cf_new, c_f)
        h_b = jnp.where(valid_b, hb_new, h_b)
        c_b = jnp.where(valid_b, cb_new, c_b)

        out_f_ref[i] = jnp.where(valid_f, hf_new, 0.0)          # pad -> 0
        out_b_ref[tT - 1 - i] = jnp.where(valid_b, hb_new, 0.0)

    h_scr[0] = h_f
    h_scr[1] = h_b
    c_scr[0] = c_f
    c_scr[1] = c_b


def lstm_bidir_layer(x_list, lens2, w_ih_list, w_hh, b, h0, c0, *, t_pad, tile):
    """One fused bidirectional LSTM layer.  x_list: 1 stream (layer 0: the
    embedded sequence) or 2 streams (deeper layers: prev fwd / prev bwd)."""
    nT = t_pad // tile
    n_x = len(x_list)
    B = x_list[0].shape[1]
    H = h0.shape[-1]
    G = 4 * H

    in_specs = [pl.BlockSpec((B, 1), lambda t: (0, 0))]
    for x in x_list:                          # forward-indexed streams
        in_specs.append(pl.BlockSpec((tile, B, x.shape[-1]),
                                     lambda t: (t, 0, 0)))
    for x in x_list:                          # time-flipped streams (backward)
        in_specs.append(pl.BlockSpec((tile, B, x.shape[-1]),
                                     lambda t, _n=nT: (_n - 1 - t, 0, 0)))
    for w in w_ih_list:                       # resident weights / bias / state
        in_specs.append(pl.BlockSpec(w.shape, lambda t: (0, 0, 0)))
    in_specs += [pl.BlockSpec(w_hh.shape, lambda t: (0, 0, 0)),
                 pl.BlockSpec(b.shape, lambda t: (0, 0, 0)),
                 pl.BlockSpec(h0.shape, lambda t: (0, 0, 0)),
                 pl.BlockSpec(c0.shape, lambda t: (0, 0, 0))]

    out_specs = (pl.BlockSpec((tile, B, H), lambda t: (t, 0, 0)),
                 pl.BlockSpec((tile, B, H), lambda t, _n=nT: (_n - 1 - t, 0, 0)))
    out_shape = (jax.ShapeDtypeStruct((t_pad, B, H), jnp.float32),
                 jax.ShapeDtypeStruct((t_pad, B, H), jnp.float32))

    kernel = functools.partial(_lstm_layer_kernel, n_x, t_pad)
    return pl.pallas_call(
        kernel,
        grid=(nT,),
        in_specs=in_specs,
        out_specs=out_specs,
        out_shape=out_shape,
        scratch_shapes=[pltpu.VMEM((2, B, H), jnp.float32),
                        pltpu.VMEM((2, B, H), jnp.float32),
                        pltpu.VMEM((tile, B, G), jnp.float32),
                        pltpu.VMEM((tile, B, G), jnp.float32)],
        compiler_params=_cp(("arbitrary",)),
    )(lens2, *x_list, *x_list, *w_ih_list, w_hh, b, h0, c0)


# ----------------------------------------------------------------------------
# Linear + log_softmax: row-tiled over time, bf16 weights resident, lane-dense
# (V-wide) output blocks.  Consumes the two direction outputs directly
# (x @ W == x_f @ W[:H] + x_b @ W[H:]; no concat pass).
# ----------------------------------------------------------------------------
def _proj_logsoftmax_kernel(of_ref, ob_ref, wf_ref, wb_ref, b_ref, out_ref):
    tT, B, H = of_ref.shape
    of = of_ref[...].reshape(tT * B, H).astype(jnp.bfloat16)
    ob = ob_ref[...].reshape(tT * B, H).astype(jnp.bfloat16)
    logits = (jnp.dot(of, wf_ref[...], preferred_element_type=jnp.float32)
              + jnp.dot(ob, wb_ref[...], preferred_element_type=jnp.float32)
              + b_ref[...])
    m = jnp.max(logits, axis=-1, keepdims=True)
    z = logits - m
    lse = jnp.log(jnp.sum(jnp.exp(z), axis=-1, keepdims=True))
    out_ref[...] = (z - lse).reshape(tT, B, logits.shape[-1])


def proj_log_softmax(out_f, out_b, w_f, w_b, b, *, tile):
    # TODO(synk): for large vocab (esp. v7x 64 MiB VMEM), add a V grid axis
    # with a two-pass / online max-LSE; the demo vocab fits in one block.
    t_pad, B, H = out_f.shape
    V = w_f.shape[-1]
    nT = t_pad // tile
    return pl.pallas_call(
        _proj_logsoftmax_kernel,
        out_shape=jax.ShapeDtypeStruct((t_pad, B, V), jnp.float32),
        grid=(nT,),
        in_specs=[pl.BlockSpec((tile, B, H), lambda t: (t, 0, 0)),
                  pl.BlockSpec((tile, B, H), lambda t: (t, 0, 0)),
                  pl.BlockSpec((H, V), lambda t: (0, 0)),
                  pl.BlockSpec((H, V), lambda t: (0, 0)),
                  pl.BlockSpec((1, V), lambda t: (0, 0))],
        out_specs=pl.BlockSpec((tile, B, V), lambda t: (t, 0, 0)),
        compiler_params=_cp(("parallel",)),
    )(out_f, out_b, w_f, w_b, b)


# ----------------------------------------------------------------------------
# Parameters + forward (glue in JAX, hot loops in Pallas).
# ----------------------------------------------------------------------------
def init_params(key, vocab_size, embed_dim, hidden_dim, layer_num):
    H = hidden_dim // 2
    keys = iter(jax.random.split(key, 1 + layer_num * 5 + 3))
    params = {}
    # nn.Embedding default init: N(0, 1)
    params['embed'] = jax.random.normal(next(keys), (vocab_size, embed_dim),
                                        dtype=jnp.float32)
    scale = 1.0 / jnp.sqrt(jnp.float32(H))

    def u(k, shape, s):
        return jax.random.uniform(k, shape, minval=-s, maxval=s,
                                  dtype=jnp.float32)

    lstm = []
    for l in range(layer_num):
        layer = {}
        if l == 0:
            # one input stream (the embedded sequence): [ (2, E, 4H) ]
            layer['w_ih'] = [u(next(keys), (2, embed_dim, 4 * H), scale)]
        else:
            # two input streams (prev fwd half, prev bwd half)
            layer['w_ih'] = [u(next(keys), (2, H, 4 * H), scale),
                             u(next(keys), (2, H, 4 * H), scale)]
        layer['w_hh'] = u(next(keys), (2, H, 4 * H), scale)
        # b = b_ih + b_hh (folded; added in the hoisted gates GEMM)
        layer['b'] = (u(next(keys), (2, 1, 4 * H), scale)
                      + u(next(keys), (2, 1, 4 * H), scale))
        lstm.append(layer)
    params['lstm'] = lstm

    lin_scale = 1.0 / jnp.sqrt(jnp.float32(hidden_dim))
    params['line_w_f'] = u(next(keys), (H, vocab_size), lin_scale)
    params['line_w_b'] = u(next(keys), (H, vocab_size), lin_scale)
    params['line_b'] = u(next(keys), (1, vocab_size), lin_scale)
    return params


@functools.partial(jax.jit, static_argnames=('layer_num',))
def language_model_forward(params, x, length, h0, c0, *, layer_num):
    """x:(B,T) int32, length:(B,) int32, h0/c0:(layer_num*2, B, H).
       Returns (B, T, vocab) log-probabilities."""
    B, T = x.shape
    t_pad, tile = _time_tiling(T)

    # Embedding gather emits time-major (T, B, E) directly (no extra transpose
    # pass over the embedded tensor).
    # TODO(synk): could be fused into the first LSTM kernel via scalar-prefetch
    # row gather; kept as a single XLA gather here.
    seq = jnp.take(params['embed'], x.T, axis=0)            # (T, B, E)
    if t_pad > T:
        seq = jnp.pad(seq, ((0, t_pad - T), (0, 0), (0, 0)))

    lens2 = length.astype(jnp.int32).reshape(B, 1)

    def bf16(a):
        return a.astype(jnp.bfloat16)

    x_list = [seq]
    out_f = out_b = None
    for l in range(layer_num):
        lp = params['lstm'][l]
        out_f, out_b = lstm_bidir_layer(
            x_list, lens2,
            [bf16(w) for w in lp['w_ih']], bf16(lp['w_hh']), lp['b'],
            h0[2 * l:2 * l + 2], c0[2 * l:2 * l + 2],
            t_pad=t_pad, tile=tile)
        x_list = [out_f, out_b]

    logp_tbv = proj_log_softmax(out_f, out_b,
                                bf16(params['line_w_f']),
                                bf16(params['line_w_b']),
                                params['line_b'], tile=tile)
    # Final batch-first re-layout.
    # TODO(synk): emit (B, T, V) directly from the proj kernel once the
    # leading-dim tile re-layout is profiled in Mosaic; kept as one XLA op.
    return jnp.transpose(logp_tbv[:T], (1, 0, 2))           # (B, T, V)


if __name__ == "__main__":
    vocab_size, embed_dim, hidden_dim, layer_num = 128, 32, 32, 2
    B, T = 8, 8
    H = hidden_dim // 2

    key = jax.random.PRNGKey(0)
    k_params, k_x, k_h, k_c = jax.random.split(key, 4)

    params = init_params(k_params, vocab_size, embed_dim, hidden_dim, layer_num)

    x = jax.random.randint(k_x, (B, T), 0, vocab_size, dtype=jnp.int32)
    # pack_padded_sequence requires lengths sorted descending
    length = jnp.array([8, 8, 7, 6, 5, 4, 3, 2], dtype=jnp.int32)

    # init_weight(): torch.randn initial hidden/cell states (deterministic here)
    h0 = jax.random.normal(k_h, (layer_num * 2, B, H), dtype=jnp.float32)
    c0 = jax.random.normal(k_c, (layer_num * 2, B, H), dtype=jnp.float32)

    predict = language_model_forward(params, x, length, h0, c0,
                                     layer_num=layer_num)
    jax.block_until_ready(predict)

    assert predict.shape == (B, T, vocab_size)
    assert bool(jnp.all(jnp.isfinite(predict)))
    # rows must be valid log-prob distributions
    row_sums = jnp.exp(predict).sum(-1)
    assert bool(jnp.all(jnp.abs(row_sums - 1.0) < 1e-3))
    print("KERNEL_OK")
</pallas_src>

<mosaic_0001>
module attributes {stable_mosaic.version = 11 : i64} {
  func.func @_proj_logsoftmax_kernel(%arg0: i32, %arg1: memref<8x8x16xf32, #tpu.memory_space<vmem>>, %arg2: memref<8x8x16xf32, #tpu.memory_space<vmem>>, %arg3: memref<16x128xbf16, #tpu.memory_space<vmem>>, %arg4: memref<16x128xbf16, #tpu.memory_space<vmem>>, %arg5: memref<1x128xf32, #tpu.memory_space<vmem>>, %arg6: memref<8x8x128xf32, #tpu.memory_space<vmem>>) attributes {dimension_semantics = [#tpu.dimension_semantics<parallel>], iteration_bounds = array<i64: 1>, scalar_prefetch = 0 : i64, scratch_operands = 0 : i64, tpu.core_type = #tpu.core_type<tc>, window_params = [{transform_indices = @transform_0, window_bounds = array<i64: 8, 8, 16>}, {transform_indices = @transform_1, window_bounds = array<i64: 8, 8, 16>}, {pipeline_mode = #tpu.pipeline_mode<synchronous>, transform_indices = @transform_2, window_bounds = array<i64: 16, 128>}, {pipeline_mode = #tpu.pipeline_mode<synchronous>, transform_indices = @transform_3, window_bounds = array<i64: 16, 128>}, {pipeline_mode = #tpu.pipeline_mode<synchronous>, transform_indices = @transform_4, window_bounds = array<i64: 1, 128>}, {transform_indices = @transform_5, window_bounds = array<i64: 8, 8, 128>}]} {
    %c0 = arith.constant 0 : index
    %c0_0 = arith.constant 0 : index
    %c0_1 = arith.constant 0 : index
    %0 = vector.load %arg1[%c0, %c0_0, %c0_1] : memref<8x8x16xf32, #tpu.memory_space<vmem>>, vector<8x8x16xf32>
    %1 = vector.shape_cast %0 : vector<8x8x16xf32> to vector<64x16xf32>
    %2 = arith.truncf %1 : vector<64x16xf32> to vector<64x16xbf16>
    %c0_2 = arith.constant 0 : index
    %c0_3 = arith.constant 0 : index
    %c0_4 = arith.constant 0 : index
    %3 = vector.load %arg2[%c0_2, %c0_3, %c0_4] : memref<8x8x16xf32, #tpu.memory_space<vmem>>, vector<8x8x16xf32>
    %4 = vector.shape_cast %3 : vector<8x8x16xf32> to vector<64x16xf32>
    %5 = arith.truncf %4 : vector<64x16xf32> to vector<64x16xbf16>
    %c0_5 = arith.constant 0 : index
    %c0_6 = arith.constant 0 : index
    %6 = vector.load %arg3[%c0_5, %c0_6] : memref<16x128xbf16, #tpu.memory_space<vmem>>, vector<16x128xbf16>
    %cst = arith.constant dense<0.000000e+00> : vector<64x128xf32>
    %7 = tpu.matmul %2, %6, %cst {dimension_numbers = #tpu.dot_dimension_numbers<[1], [0], [0], [1], [0, 0, 1, 1], [], []>} : vector<64x16xbf16>, vector<16x128xbf16>, vector<64x128xf32> -> vector<64x128xf32>
    %c0_7 = arith.constant 0 : index
    %c0_8 = arith.constant 0 : index
    %8 = vector.load %arg4[%c0_7, %c0_8] : memref<16x128xbf16, #tpu.memory_space<vmem>>, vector<16x128xbf16>
    %cst_9 = arith.constant dense<0.000000e+00> : vector<64x128xf32>
    %9 = tpu.matmul %5, %8, %cst_9 {dimension_numbers = #tpu.dot_dimension_numbers<[1], [0], [0], [1], [0, 0, 1, 1], [], []>} : vector<64x16xbf16>, vector<16x128xbf16>, vector<64x128xf32> -> vector<64x128xf32>
    %10 = arith.addf %7, %9 : vector<64x128xf32>
    %c0_10 = arith.constant 0 : index
    %c0_11 = arith.constant 0 : index
    %11 = vector.load %arg5[%c0_10, %c0_11] : memref<1x128xf32, #tpu.memory_space<vmem>>, vector<1x128xf32>
    %12 = vector.broadcast %11 : vector<1x128xf32> to vector<64x128xf32>
    %13 = arith.addf %10, %12 : vector<64x128xf32>
    %cst_12 = arith.constant dense<0xFF800000> : vector<64xf32>
    %14 = vector.multi_reduction <maximumf>, %13, %cst_12 [1] : vector<64x128xf32> to vector<64xf32>
    %15 = vector.shape_cast %14 : vector<64xf32> to vector<64x1xf32>
    %16 = vector.broadcast %15 : vector<64x1xf32> to vector<64x128xf32>
    %17 = arith.subf %13, %16 : vector<64x128xf32>
    %18 = math.exp %17 : vector<64x128xf32>
    %cst_13 = arith.constant dense<0.000000e+00> : vector<64xf32>
    %19 = vector.multi_reduction <add>, %18, %cst_13 [1] : vector<64x128xf32> to vector<64xf32>
    %20 = vector.shape_cast %19 : vector<64xf32> to vector<64x1xf32>
    %21 = math.log %20 : vector<64x1xf32>
    %22 = vector.broadcast %21 : vector<64x1xf32> to vector<64x128xf32>
    %23 = arith.subf %17, %22 : vector<64x128xf32>
    %24 = vector.shape_cast %23 : vector<64x128xf32> to vector<8x8x128xf32>
    %c0_14 = arith.constant 0 : index
    %c0_15 = arith.constant 0 : index
    %c0_16 = arith.constant 0 : index
    %25 = vector.load %arg6[%c0_14, %c0_15, %c0_16] : memref<8x8x128xf32, #tpu.memory_space<vmem>>, vector<8x8x128xf32>
    tpu.vector_store %arg6[%c0_14, %c0_15, %c0_16], %24 {strides = array<i32>} : memref<8x8x128xf32, #tpu.memory_space<vmem>>, vector<8x8x128xf32>,
    return
  }
  func.func @transform_0(%arg0: i32) -> (i32, i32, i32) {
    %c0_i32 = arith.constant 0 : i32
    %c0_i32_0 = arith.constant 0 : i32
    %c0_i32_1 = arith.constant 0 : i32
    return %arg0, %c0_i32, %c0_i32_0 : i32, i32, i32
  }
  func.func @transform_1(%arg0: i32) -> (i32, i32, i32) {
    %c0_i32 = arith.constant 0 : i32
    %c0_i32_0 = arith.constant 0 : i32
    %c0_i32_1 = arith.constant 0 : i32
    return %arg0, %c0_i32, %c0_i32_0 : i32, i32, i32
  }
  func.func @transform_2(%arg0: i32) -> (i32, i32) {
    %c0_i32 = arith.constant 0 : i32
    %c0_i32_0 = arith.constant 0 : i32
    %c0_i32_1 = arith.constant 0 : i32
    return %c0_i32, %c0_i32_0 : i32, i32
  }
  func.func @transform_3(%arg0: i32) -> (i32, i32) {
    %c0_i32 = arith.constant 0 : i32
    %c0_i32_0 = arith.constant 0 : i32
    %c0_i32_1 = arith.constant 0 : i32
    return %c0_i32, %c0_i32_0 : i32, i32
  }
  func.func @transform_4(%arg0: i32) -> (i32, i32) {
    %c0_i32 = arith.constant 0 : i32
    %c0_i32_0 = arith.constant 0 : i32
    %c0_i32_1 = arith.constant 0 : i32
    return %c0_i32, %c0_i32_0 : i32, i32
  }
  func.func @transform_5(%arg0: i32) -> (i32, i32, i32) {
    %c0_i32 = arith.constant 0 : i32
    %c0_i32_0 = arith.constant 0 : i32
    %c0_i32_1 = arith.constant 0 : i32
    return %arg0, %c0_i32, %c0_i32_0 : i32, i32, i32
  }
}

module attributes {stable_mosaic.version = 11 : i64} {
  func.func @_lstm_layer_kernel(%arg0: i32, %arg1: memref<8x1xi32, #tpu.memory_space<vmem>>, %arg2: memref<8x8x16xf32, #tpu.memory_space<vmem>>, %arg3: memref<8x8x16xf32, #tpu.memory_space<vmem>>, %arg4: memref<8x8x16xf32, #tpu.memory_space<vmem>>, %arg5: memref<8x8x16xf32, #tpu.memory_space<vmem>>, %arg6: memref<2x16x64xbf16, #tpu.memory_space<vmem>>, %arg7: memref<2x16x64xbf16, #tpu.memory_space<vmem>>, %arg8: memref<2x16x64xbf16, #tpu.memory_space<vmem>>, %arg9: memref<2x1x64xf32, #tpu.memory_space<vmem>>, %arg10: memref<2x8x16xf32, #tpu.memory_space<vmem>>, %arg11: memref<2x8x16xf32, #tpu.memory_space<vmem>>, %arg12: memref<8x8x16xf32, #tpu.memory_space<vmem>>, %arg13: memref<8x8x16xf32, #tpu.memory_space<vmem>>, %arg14: memref<2x8x16xf32, #tpu.memory_space<vmem>>, %arg15: memref<2x8x16xf32, #tpu.memory_space<vmem>>, %arg16: memref<8x8x64xf32, #tpu.memory_space<vmem>>, %arg17: memref<8x8x64xf32, #tpu.memory_space<vmem>>) attributes {dimension_semantics = [#tpu.dimension_semantics<arbitrary>], iteration_bounds = array<i64: 1>, scalar_prefetch = 0 : i64, scratch_operands = 4 : i64, tpu.core_type = #tpu.core_type<tc>, window_params = [{pipeline_mode = #tpu.pipeline_mode<synchronous>, transform_indices = @transform_0, window_bounds = array<i64: 8, 1>}, {transform_indices = @transform_1, window_bounds = array<i64: 8, 8, 16>}, {transform_indices = @transform_2, window_bounds = array<i64: 8, 8, 16>}, {transform_indices = @transform_3, window_bounds = array<i64: 8, 8, 16>}, {transform_indices = @transform_4, window_bounds = array<i64: 8, 8, 16>}, {pipeline_mode = #tpu.pipeline_mode<synchronous>, transform_indices = @transform_5, window_bounds = array<i64: 2, 16, 64>}, {pipeline_mode = #tpu.pipeline_mode<synchronous>, transform_indices = @transform_6, window_bounds = array<i64: 2, 16, 64>}, {pipeline_mode = #tpu.pipeline_mode<synchronous>, transform_indices = @transform_7, window_bounds = array<i64: 2, 16, 64>}, {pipeline_mode = #tpu.pipeline_mode<synchronous>, transform_indices = @transform_8, window_bounds = array<i64: 2, 1, 64>}, {pipeline_mode = #tpu.pipeline_mode<synchronous>, transform_indices = @transform_9, window_bounds = array<i64: 2, 8, 16>}, {pipeline_mode = #tpu.pipeline_mode<synchronous>, transform_indices = @transform_10, window_bounds = array<i64: 2, 8, 16>}, {transform_indices = @transform_11, window_bounds = array<i64: 8, 8, 16>}, {transform_indices = @transform_12, window_bounds = array<i64: 8, 8, 16>}]} {
    %c0_i32 = arith.constant 0 : i32
    %0 = arith.cmpi eq, %arg0, %c0_i32 : i32
    %1 = arith.extui %0 : i1 to i32
    %c0_i32_0 = arith.constant 0 : i32
    %2 = arith.cmpi ne, %1, %c0_i32_0 : i32
    scf.if %2 {
      %c0_211 = arith.constant 0 : index
      %c0_212 = arith.constant 0 : index
      %c0_213 = arith.constant 0 : index
      %645 = vector.load %arg10[%c0_211, %c0_212, %c0_213] : memref<2x8x16xf32, #tpu.memory_space<vmem>>, vector<2x8x16xf32>
      %c0_214 = arith.constant 0 : index
      %c0_215 = arith.constant 0 : index
      %c0_216 = arith.constant 0 : index
      %646 = vector.load %arg14[%c0_214, %c0_215, %c0_216] : memref<2x8x16xf32, #tpu.memory_space<vmem>>, vector<2x8x16xf32>
      tpu.vector_store %arg14[%c0_214, %c0_215, %c0_216], %645 {strides = array<i32>} : memref<2x8x16xf32, #tpu.memory_space<vmem>>, vector<2x8x16xf32>,
      %c0_217 = arith.constant 0 : index
      %c0_218 = arith.constant 0 : index
      %c0_219 = arith.constant 0 : index
      %647 = vector.load %arg11[%c0_217, %c0_218, %c0_219] : memref<2x8x16xf32, #tpu.memory_space<vmem>>, vector<2x8x16xf32>
      %c0_220 = arith.constant 0 : index
      %c0_221 = arith.constant 0 : index
      %c0_222 = arith.constant 0 : index
      %648 = vector.load %arg15[%c0_220, %c0_221, %c0_222] : memref<2x8x16xf32, #tpu.memory_space<vmem>>, vector<2x8x16xf32>
      tpu.vector_store %arg15[%c0_220, %c0_221, %c0_222], %647 {strides = array<i32>} : memref<2x8x16xf32, #tpu.memory_space<vmem>>, vector<2x8x16xf32>,
    } else {
    }
    %c0 = arith.constant 0 : index
    %c0_1 = arith.constant 0 : index
    %c0_2 = arith.constant 0 : index
    %3 = vector.load %arg2[%c0, %c0_1, %c0_2] : memref<8x8x16xf32, #tpu.memory_space<vmem>>, vector<8x8x16xf32>
    %4 = vector.shape_cast %3 : vector<8x8x16xf32> to vector<64x16xf32>
    %5 = arith.truncf %4 : vector<64x16xf32> to vector<64x16xbf16>
    %c0_3 = arith.constant 0 : index
    %c0_4 = arith.constant 0 : index
    %c0_5 = arith.constant 0 : index
    %6 = vector.load %arg6[%c0_3, %c0_4, %c0_5] : memref<2x16x64xbf16, #tpu.memory_space<vmem>>, vector<1x16x64xbf16>
    %7 = vector.shape_cast %6 : vector<1x16x64xbf16> to vector<16x64xbf16>
    %cst = arith.constant dense<0.000000e+00> : vector<64x64xf32>
    %8 = tpu.matmul %5, %7, %cst {dimension_numbers = #tpu.dot_dimension_numbers<[1], [0], [0], [1], [0, 0, 1, 1], [], []>} : vector<64x16xbf16>, vector<16x64xbf16>, vector<64x64xf32> -> vector<64x64xf32>
    %c0_6 = arith.constant 0 : index
    %c0_7 = arith.constant 0 : index
    %c0_8 = arith.constant 0 : index
    %9 = vector.load %arg3[%c0_6, %c0_7, %c0_8] : memref<8x8x16xf32, #tpu.memory_space<vmem>>, vector<8x8x16xf32>
    %10 = vector.shape_cast %9 : vector<8x8x16xf32> to vector<64x16xf32>
    %11 = arith.truncf %10 : vector<64x16xf32> to vector<64x16xbf16>
    %c0_9 = arith.constant 0 : index
    %c0_10 = arith.constant 0 : index
    %c0_11 = arith.constant 0 : index
    %12 = vector.load %arg7[%c0_9, %c0_10, %c0_11] : memref<2x16x64xbf16, #tpu.memory_space<vmem>>, vector<1x16x64xbf16>
    %13 = vector.shape_cast %12 : vector<1x16x64xbf16> to vector<16x64xbf16>
    %cst_12 = arith.constant dense<0.000000e+00> : vector<64x64xf32>
    %14 = tpu.matmul %11, %13, %cst_12 {dimension_numbers = #tpu.dot_dimension_numbers<[1], [0], [0], [1], [0, 0, 1, 1], [], []>} : vector<64x16xbf16>, vector<16x64xbf16>, vector<64x64xf32> -> vector<64x64xf32>
    %15 = arith.addf %8, %14 : vector<64x64xf32>
    %c0_13 = arith.constant 0 : index
    %c0_14 = arith.constant 0 : index
    %c0_15 = arith.constant 0 : index
    %16 = vector.load %arg9[%c0_13, %c0_14, %c0_15] : memref<2x1x64xf32, #tpu.memory_space<vmem>>, vector<1x1x64xf32>
    %17 = vector.shape_cast %16 : vector<1x1x64xf32> to vector<1x64xf32>
    %18 = vector.broadcast %17 : vector<1x64xf32> to vector<64x64xf32>
    %19 = arith.addf %15, %18 : vector<64x64xf32>
    %20 = vector.shape_cast %19 : vector<64x64xf32> to vector<8x8x64xf32>
    %c0_16 = arith.constant 0 : index
    %c0_17 = arith.constant 0 : index
    %c0_18 = arith.constant 0 : index
    %21 = vector.load %arg16[%c0_16, %c0_17, %c0_18] : memref<8x8x64xf32, #tpu.memory_space<vmem>>, vector<8x8x64xf32>
    tpu.vector_store %arg16[%c0_16, %c0_17, %c0_18], %20 {strides = array<i32>} : memref<8x8x64xf32, #tpu.memory_space<vmem>>, vector<8x8x64xf32>,
    %c0_19 = arith.constant 0 : index
    %c0_20 = arith.constant 0 : index
    %c0_21 = arith.constant 0 : index
    %22 = vector.load %arg4[%c0_19, %c0_20, %c0_21] : memref<8x8x16xf32, #tpu.memory_space<vmem>>, vector<8x8x16xf32>
    %23 = vector.shape_cast %22 : vector<8x8x16xf32> to vector<64x16xf32>
    %24 = arith.truncf %23 : vector<64x16xf32> to vector<64x16xbf16>
    %c1 = arith.constant 1 : index
    %c0_22 = arith.constant 0 : index
    %c0_23 = arith.constant 0 : index
    %25 = vector.load %arg6[%c1, %c0_22, %c0_23] : memref<2x16x64xbf16, #tpu.memory_space<vmem>>, vector<1x16x64xbf16>
    %26 = vector.shape_cast %25 : vector<1x16x64xbf16> to vector<16x64xbf16>
    %cst_24 = arith.constant dense<0.000000e+00> : vector<64x64xf32>
    %27 = tpu.matmul %24, %26, %cst_24 {dimension_numbers = #tpu.dot_dimension_numbers<[1], [0], [0], [1], [0, 0, 1, 1], [], []>} : vector<64x16xbf16>, vector<16x64xbf16>, vector<64x64xf32> -> vector<64x64xf32>
    %c0_25 = arith.constant 0 : index
    %c0_26 = arith.constant 0 : index
    %c0_27 = arith.constant 0 : index
    %28 = vector.load %arg5[%c0_25, %c0_26, %c0_27] : memref<8x8x16xf32, #tpu.memory_space<vmem>>, vector<8x8x16xf32>
    %29 = vector.shape_cast %28 : vector<8x8x16xf32> to vector<64x16xf32>
    %30 = arith.truncf %29 : vector<64x16xf32> to vector<64x16xbf16>
    %c1_28 = arith.constant 1 : index
    %c0_29 = arith.constant 0 : index
    %c0_30 = arith.constant 0 : index
    %31 = vector.load %arg7[%c1_28, %c0_29, %c0_30] : memref<2x16x64xbf16, #tpu.memory_space<vmem>>, vector<1x16x64xbf16>
    %32 = vector.shape_cast %31 : vector<1x16x64xbf16> to vector<16x64xbf16>
    %cst_31 = arith.constant dense<0.000000e+00> : vector<64x64xf32>
    %33 = tpu.matmul %30, %32, %cst_31 {dimension_numbers = #tpu.dot_dimension_numbers<[1], [0], [0], [1], [0, 0, 1, 1], [], []>} : vector<64x16xbf16>, vector<16x64xbf16>, vector<64x64xf32> -> vector<64x64xf32>
    %34 = arith.addf %27, %33 : vector<64x64xf32>
    %c1_32 = arith.constant 1 : index
    %c0_33 = arith.constant 0 : index
    %c0_34 = arith.constant 0 : index
    %35 = vector.load %arg9[%c1_32, %c0_33, %c0_34] : memref<2x1x64xf32, #tpu.memory_space<vmem>>, vector<1x1x64xf32>
    %36 = vector.shape_cast %35 : vector<1x1x64xf32> to vector<1x64xf32>
    %37 = vector.broadcast %36 : vector<1x64xf32> to vector<64x64xf32>
    %38 = arith.addf %34, %37 : vector<64x64xf32>
    %39 = vector.shape_cast %38 : vector<64x64xf32> to vector<8x8x64xf32>
    %c0_35 = arith.constant 0 : index
    %c0_36 = arith.constant 0 : index
    %c0_37 = arith.constant 0 : index
    %40 = vector.load %arg17[%c0_35, %c0_36, %c0_37] : memref<8x8x64xf32, #tpu.memory_space<vmem>>, vector<8x8x64xf32>
    tpu.vector_store %arg17[%c0_35, %c0_36, %c0_37], %39 {strides = array<i32>} : memref<8x8x64xf32, #tpu.memory_space<vmem>>, vector<8x8x64xf32>,
    %c0_38 = arith.constant 0 : index
    %c0_39 = arith.constant 0 : index
    %c0_40 = arith.constant 0 : index
    %41 = vector.load %arg8[%c0_38, %c0_39, %c0_40] : memref<2x16x64xbf16, #tpu.memory_space<vmem>>, vector<1x16x64xbf16>
    %42 = vector.shape_cast %41 : vector<1x16x64xbf16> to vector<16x64xbf16>
    %c1_41 = arith.constant 1 : index
    %c0_42 = arith.constant 0 : index
    %c0_43 = arith.constant 0 : index
    %43 = vector.load %arg8[%c1_41, %c0_42, %c0_43] : memref<2x16x64xbf16, #tpu.memory_space<vmem>>, vector<1x16x64xbf16>
    %44 = vector.shape_cast %43 : vector<1x16x64xbf16> to vector<16x64xbf16>
    %c0_44 = arith.constant 0 : index
    %c0_45 = arith.constant 0 : index
    %45 = vector.load %arg1[%c0_44, %c0_45] : memref<8x1xi32, #tpu.memory_space<vmem>>, vector<8x1xi32>
    %c0_46 = arith.constant 0 : index
    %c0_47 = arith.constant 0 : index
    %c0_48 = arith.constant 0 : index
    %46 = vector.load %arg14[%c0_46, %c0_47, %c0_48] : memref<2x8x16xf32, #tpu.memory_space<vmem>>, vector<2x8x16xf32>
    %c0_49 = arith.constant 0 : index
    %c0_50 = arith.constant 0 : index
    %c0_51 = arith.constant 0 : index
    %47 = vector.load %arg15[%c0_49, %c0_50, %c0_51] : memref<2x8x16xf32, #tpu.memory_space<vmem>>, vector<2x8x16xf32>
    %48 = vector.extract_strided_slice %46 {offsets = [0, 0, 0], sizes = [1, 8, 16], strides = [1, 1, 1]} : vector<2x8x16xf32> to vector<1x8x16xf32>
    %49 = vector.shape_cast %48 : vector<1x8x16xf32> to vector<8x16xf32>
    %50 = vector.extract_strided_slice %46 {offsets = [1, 0, 0], sizes = [1, 8, 16], strides = [1, 1, 1]} : vector<2x8x16xf32> to vector<1x8x16xf32>
    %51 = vector.shape_cast %50 : vector<1x8x16xf32> to vector<8x16xf32>
    %52 = vector.extract_strided_slice %47 {offsets = [0, 0, 0], sizes = [1, 8, 16], strides = [1, 1, 1]} : vector<2x8x16xf32> to vector<1x8x16xf32>
    %53 = vector.shape_cast %52 : vector<1x8x16xf32> to vector<8x16xf32>
    %54 = vector.extract_strided_slice %47 {offsets = [1, 0, 0], sizes = [1, 8, 16], strides = [1, 1, 1]} : vector<2x8x16xf32> to vector<1x8x16xf32>
    %55 = vector.shape_cast %54 : vector<1x8x16xf32> to vector<8x16xf32>
    %c8_i32 = arith.constant 8 : i32
    %56 = arith.muli %arg0, %c8_i32 : i32
    %c0_i32_52 = arith.constant 0 : i32
    %57 = arith.addi %56, %c0_i32_52 : i32
    %c7_i32 = arith.constant 7 : i32
    %58 = arith.subi %c7_i32, %57 : i32
    %c0_53 = arith.constant 0 : index
    %c0_54 = arith.constant 0 : index
    %c0_55 = arith.constant 0 : index
    %59 = vector.load %arg16[%c0_53, %c0_54, %c0_55] : memref<8x8x64xf32, #tpu.memory_space<vmem>>, vector<1x8x64xf32>
    %60 = vector.shape_cast %59 : vector<1x8x64xf32> to vector<8x64xf32>
    %61 = arith.truncf %49 : vector<8x16xf32> to vector<8x16xbf16>
    %cst_56 = arith.constant dense<0.000000e+00> : vector<8x64xf32>
    %62 = tpu.matmul %61, %42, %cst_56 {dimension_numbers = #tpu.dot_dimension_numbers<[1], [0], [0], [1], [0, 0, 1, 1], [], []>} : vector<8x16xbf16>, vector<16x64xbf16>, vector<8x64xf32> -> vector<8x64xf32>
    %63 = arith.addf %60, %62 : vector<8x64xf32>
    %c7 = arith.constant 7 : index
    %c0_57 = arith.constant 0 : index
    %c0_58 = arith.constant 0 : index
    %64 = vector.load %arg17[%c7, %c0_57, %c0_58] : memref<8x8x64xf32, #tpu.memory_space<vmem>>, vector<1x8x64xf32>
    %65 = vector.shape_cast %64 : vector<1x8x64xf32> to vector<8x64xf32>
    %66 = arith.truncf %51 : vector<8x16xf32> to vector<8x16xbf16>
    %cst_59 = arith.constant dense<0.000000e+00> : vector<8x64xf32>
    %67 = tpu.matmul %66, %44, %cst_59 {dimension_numbers = #tpu.dot_dimension_numbers<[1], [0], [0], [1], [0, 0, 1, 1], [], []>} : vector<8x16xbf16>, vector<16x64xbf16>, vector<8x64xf32> -> vector<8x64xf32>
    %68 = arith.addf %65, %67 : vector<8x64xf32>
    %69 = arith.negf %63 : vector<8x64xf32>
    %70 = math.exp %69 : vector<8x64xf32>
    %cst_60 = arith.constant 1.000000e+00 : f32
    %71 = vector.broadcast %cst_60 : f32 to vector<8x64xf32>
    %72 = arith.addf %71, %70 : vector<8x64xf32>
    %73 = arith.divf %71, %72 : vector<8x64xf32>
    %74 = vector.extract_strided_slice %63 {offsets = [0, 32], sizes = [8, 16], strides = [1, 1]} : vector<8x64xf32> to vector<8x16xf32>
    %75 = math.tanh %74 : vector<8x16xf32>
    %76 = vector.extract_strided_slice %73 {offsets = [0, 16], sizes = [8, 16], strides = [1, 1]} : vector<8x64xf32> to vector<8x16xf32>
    %77 = arith.mulf %76, %53 : vector<8x16xf32>
    %78 = vector.extract_strided_slice %73 {offsets = [0, 0], sizes = [8, 16], strides = [1, 1]} : vector<8x64xf32> to vector<8x16xf32>
    %79 = arith.mulf %78, %75 : vector<8x16xf32>
    %80 = arith.addf %77, %79 : vector<8x16xf32>
    %81 = vector.extract_strided_slice %73 {offsets = [0, 48], sizes = [8, 16], strides = [1, 1]} : vector<8x64xf32> to vector<8x16xf32>
    %82 = math.tanh %80 : vector<8x16xf32>
    %83 = arith.mulf %81, %82 : vector<8x16xf32>
    %84 = arith.negf %68 : vector<8x64xf32>
    %85 = math.exp %84 : vector<8x64xf32>
    %cst_61 = arith.constant 1.000000e+00 : f32
    %86 = vector.broadcast %cst_61 : f32 to vector<8x64xf32>
    %87 = arith.addf %86, %85 : vector<8x64xf32>
    %88 = arith.divf %86, %87 : vector<8x64xf32>
    %89 = vector.extract_strided_slice %68 {offsets = [0, 32], sizes = [8, 16], strides = [1, 1]} : vector<8x64xf32> to vector<8x16xf32>
    %90 = math.tanh %89 : vector<8x16xf32>
    %91 = vector.extract_strided_slice %88 {offsets = [0, 16], sizes = [8, 16], strides = [1, 1]} : vector<8x64xf32> to vector<8x16xf32>
    %92 = arith.mulf %91, %55 : vector<8x16xf32>
    %93 = vector.extract_strided_slice %88 {offsets = [0, 0], sizes = [8, 16], strides = [1, 1]} : vector<8x64xf32> to vector<8x16xf32>
    %94 = arith.mulf %93, %90 : vector<8x16xf32>
    %95 = arith.addf %92, %94 : vector<8x16xf32>
    %96 = vector.extract_strided_slice %88 {offsets = [0, 48], sizes = [8, 16], strides = [1, 1]} : vector<8x64xf32> to vector<8x16xf32>
    %97 = math.tanh %95 : vector<8x16xf32>
    %98 = arith.mulf %96, %97 : vector<8x16xf32>
    %99 = vector.broadcast %57 : i32 to vector<8x1xi32>
    %100 = arith.cmpi slt, %99, %45 : vector<8x1xi32>
    %101 = vector.broadcast %58 : i32 to vector<8x1xi32>
    %102 = arith.cmpi slt, %101, %45 : vector<8x1xi32>
    %103 = vector.shape_cast %100 : vector<8x1xi1> to vector<8x1xi1>
    %104 = vector.broadcast %103 : vector<8x1xi1> to vector<8x16xi1>
    %105 = arith.select %104, %83, %49 : vector<8x16xi1>, vector<8x16xf32>
    %106 = vector.shape_cast %100 : vector<8x1xi1> to vector<8x1xi1>
    %107 = vector.broadcast %106 : vector<8x1xi1> to vector<8x16xi1>
    %108 = arith.select %107, %80, %53 : vector<8x16xi1>, vector<8x16xf32>
    %109 = vector.shape_cast %102 : vector<8x1xi1> to vector<8x1xi1>
    %110 = vector.broadcast %109 : vector<8x1xi1> to vector<8x16xi1>
    %111 = arith.select %110, %98, %51 : vector<8x16xi1>, vector<8x16xf32>
    %112 = vector.shape_cast %102 : vector<8x1xi1> to vector<8x1xi1>
    %113 = vector.broadcast %112 : vector<8x1xi1> to vector<8x16xi1>
    %114 = arith.select %113, %95, %55 : vector<8x16xi1>, vector<8x16xf32>
    %cst_62 = arith.constant 0.000000e+00 : f32
    %115 = vector.shape_cast %100 : vector<8x1xi1> to vector<8x1xi1>
    %116 = vector.broadcast %115 : vector<8x1xi1> to vector<8x16xi1>
    %117 = vector.broadcast %cst_62 : f32 to vector<8x16xf32>
    %118 = arith.select %116, %83, %117 : vector<8x16xi1>, vector<8x16xf32>
    %c0_63 = arith.constant 0 : index
    %c0_64 = arith.constant 0 : index
    %c0_65 = arith.constant 0 : index
    %119 = vector.load %arg12[%c0_63, %c0_64, %c0_65] : memref<8x8x16xf32, #tpu.memory_space<vmem>>, vector<1x8x16xf32>
    %120 = vector.shape_cast %119 : vector<1x8x16xf32> to vector<8x16xf32>
    %121 = vector.shape_cast %118 : vector<8x16xf32> to vector<1x8x16xf32>
    tpu.vector_store %arg12[%c0_63, %c0_64, %c0_65], %121 {strides = array<i32>} : memref<8x8x16xf32, #tpu.memory_space<vmem>>, vector<1x8x16xf32>,
    %cst_66 = arith.constant 0.000000e+00 : f32
    %122 = vector.shape_cast %102 : vector<8x1xi1> to vector<8x1xi1>
    %123 = vector.broadcast %122 : vector<8x1xi1> to vector<8x16xi1>
    %124 = vector.broadcast %cst_66 : f32 to vector<8x16xf32>
    %125 = arith.select %123, %98, %124 : vector<8x16xi1>, vector<8x16xf32>
    %c7_67 = arith.constant 7 : index
    %c0_68 = arith.constant 0 : index
    %c0_69 = arith.constant 0 : index
    %126 = vector.load %arg13[%c7_67, %c0_68, %c0_69] : memref<8x8x16xf32, #tpu.memory_space<vmem>>, vector<1x8x16xf32>
    %127 = vector.shape_cast %126 : vector<1x8x16xf32> to vector<8x16xf32>
    %128 = vector.shape_cast %125 : vector<8x16xf32> to vector<1x8x16xf32>
    tpu.vector_store %arg13[%c7_67, %c0_68, %c0_69], %128 {strides = array<i32>} : memref<8x8x16xf32, #tpu.memory_space<vmem>>, vector<1x8x16xf32>,
    %c1_i32 = arith.constant 1 : i32
    %129 = arith.addi %56, %c1_i32 : i32
    %c7_i32_70 = arith.constant 7 : i32
    %130 = arith.subi %c7_i32_70, %129 : i32
    %c1_71 = arith.constant 1 : index
    %c0_72 = arith.constant 0 : index
    %c0_73 = arith.constant 0 : index
    %131 = vector.load %arg16[%c1_71, %c0_72, %c0_73] : memref<8x8x64xf32, #tpu.memory_space<vmem>>, vector<1x8x64xf32>
    %132 = vector.shape_cast %131 : vector<1x8x64xf32> to vector<8x64xf32>
    %133 = arith.truncf %105 : vector<8x16xf32> to vector<8x16xbf16>
    %cst_74 = arith.constant dense<0.000000e+00> : vector<8x64xf32>
    %134 = tpu.matmul %133, %42, %cst_74 {dimension_numbers = #tpu.dot_dimension_numbers<[1], [0], [0], [1], [0, 0, 1, 1], [], []>} : vector<8x16xbf16>, vector<16x64xbf16>, vector<8x64xf32> -> vector<8x64xf32>
    %135 = arith.addf %132, %134 : vector<8x64xf32>
    %c6 = arith.constant 6 : index
    %c0_75 = arith.constant 0 : index
    %c0_76 = arith.constant 0 : index
    %136 = vector.load %arg17[%c6, %c0_75, %c0_76] : memref<8x8x64xf32, #tpu.memory_space<vmem>>, vector<1x8x64xf32>
    %137 = vector.shape_cast %136 : vector<1x8x64xf32> to vector<8x64xf32>
    %138 = arith.truncf %111 : vector<8x16xf32> to vector<8x16xbf16>
    %cst_77 = arith.constant dense<0.000000e+00> : vector<8x64xf32>
    %139 = tpu.matmul %138, %44, %cst_77 {dimension_numbers = #tpu.dot_dimension_numbers<[1], [0], [0], [1], [0, 0, 1, 1], [], []>} : vector<8x16xbf16>, vector<16x64xbf16>, vector<8x64xf32> -> vector<8x64xf32>
    %140 = arith.addf %137, %139 : vector<8x64xf32>
    %141 = arith.negf %135 : vector<8x64xf32>
    %142 = math.exp %141 : vector<8x64xf32>
    %cst_78 = arith.constant 1.000000e+00 : f32
    %143 = vector.broadcast %cst_78 : f32 to vector<8x64xf32>
    %144 = arith.addf %143, %142 : vector<8x64xf32>
    %145 = arith.divf %143, %144 : vector<8x64xf32>
    %146 = vector.extract_strided_slice %135 {offsets = [0, 32], sizes = [8, 16], strides = [1, 1]} : vector<8x64xf32> to vector<8x16xf32>
    %147 = math.tanh %146 : vector<8x16xf32>
    %148 = vector.extract_strided_slice %145 {offsets = [0, 16], sizes = [8, 16], strides = [1, 1]} : vector<8x64xf32> to vector<8x16xf32>
    %149 = arith.mulf %148, %108 : vector<8x16xf32>
    %150 = vector.extract_strided_slice %145 {offsets = [0, 0], sizes = [8, 16], strides = [1, 1]} : vector<8x64xf32> to vector<8x16xf32>
    %151 = arith.mulf %150, %147 : vector<8x16xf32>
    %152 = arith.addf %149, %151 : vector<8x16xf32>
    %153 = vector.extract_strided_slice %145 {offsets = [0, 48], sizes = [8, 16], strides = [1, 1]} : vector<8x64xf32> to vector<8x16xf32>
    %154 = math.tanh %152 : vector<8x16xf32>
    %155 = arith.mulf %153, %154 : vector<8x16xf32>
    %156 = arith.negf %140 : vector<8x64xf32>
    %157 = math.exp %156 : vector<8x64xf32>
    %cst_79 = arith.constant 1.000000e+00 : f32
    %158 = vector.broadcast %cst_79 : f32 to vector<8x64xf32>
    %159 = arith.addf %158, %157 : vector<8x64xf32>
    %160 = arith.divf %158, %159 : vector<8x64xf32>
    %161 = vector.extract_strided_slice %140 {offsets = [0, 32], sizes = [8, 16], strides = [1, 1]} : vector<8x64xf32> to vector<8x16xf32>
    %162 = math.tanh %161 : vector<8x16xf32>
    %163 = vector.extract_strided_slice %160 {offsets = [0, 16], sizes = [8, 16], strides = [1, 1]} : vector<8x64xf32> to vector<8x16xf32>
    %164 = arith.mulf %163, %114 : vector<8x16xf32>
    %165 = vector.extract_strided_slice %160 {offsets = [0, 0], sizes = [8, 16], strides = [1, 1]} : vector<8x64xf32> to vector<8x16xf32>
    %166 = arith.mulf %165, %162 : vector<8x16xf32>
    %167 = arith.addf %164, %166 : vector<8x16xf32>
    %168 = vector.extract_strided_slice %160 {offsets = [0, 48], sizes = [8, 16], strides = [1, 1]} : vector<8x64xf32> to vector<8x16xf32>
    %169 = math.tanh %167 : vector<8x16xf32>
    %170 = arith.mulf %168, %169 : vector<8x16xf32>
    %171 = vector.broadcast %129 : i32 to vector<8x1xi32>
    %172 = arith.cmpi slt, %171, %45 : vector<8x1xi32>
    %173 = vector.broadcast %130 : i32 to vector<8x1xi32>
    %174 = arith.cmpi slt, %173, %45 : vector<8x1xi32>
    %175 = vector.shape_cast %172 : vector<8x1xi1> to vector<8x1xi1>
    %176 = vector.broadcast %175 : vector<8x1xi1> to vector<8x16xi1>
    %177 = arith.select %176, %155, %105 : vector<8x16xi1>, vector<8x16xf32>
    %178 = vector.shape_cast %172 : vector<8x1xi1> to vector<8x1xi1>
    %179 = vector.broadcast %178 : vector<8x1xi1> to vector<8x16xi1>
    %180 = arith.select %179, %152, %108 : vector<8x16xi1>, vector<8x16xf32>
    %181 = vector.shape_cast %174 : vector<8x1xi1> to vector<8x1xi1>
    %182 = vector.broadcast %181 : vector<8x1xi1> to vector<8x16xi1>
    %183 = arith.select %182, %170, %111 : vector<8x16xi1>, vector<8x16xf32>
    %184 = vector.shape_cast %174 : vector<8x1xi1> to vector<8x1xi1>
    %185 = vector.broadcast %184 : vector<8x1xi1> to vector<8x16xi1>
    %186 = arith.select %185, %167, %114 : vector<8x16xi1>, vector<8x16xf32>
    %cst_80 = arith.constant 0.000000e+00 : f32
    %187 = vector.shape_cast %172 : vector<8x1xi1> to vector<8x1xi1>
    %188 = vector.broadcast %187 : vector<8x1xi1> to vector<8x16xi1>
    %189 = vector.broadcast %cst_80 : f32 to vector<8x16xf32>
    %190 = arith.select %188, %155, %189 : vector<8x16xi1>, vector<8x16xf32>
    %c1_81 = arith.constant 1 : index
    %c0_82 = arith.constant 0 : index
    %c0_83 = arith.constant 0 : index
    %191 = vector.load %arg12[%c1_81, %c0_82, %c0_83] : memref<8x8x16xf32, #tpu.memory_space<vmem>>, vector<1x8x16xf32>
    %192 = vector.shape_cast %191 : vector<1x8x16xf32> to vector<8x16xf32>
    %193 = vector.shape_cast %190 : vector<8x16xf32> to vector<1x8x16xf32>
    tpu.vector_store %arg12[%c1_81, %c0_82, %c0_83], %193 {strides = array<i32>} : memref<8x8x16xf32, #tpu.memory_space<vmem>>, vector<1x8x16xf32>,
    %cst_84 = arith.constant 0.000000e+00 : f32
    %194 = vector.shape_cast %174 : vector<8x1xi1> to vector<8x1xi1>
    %195 = vector.broadcast %194 : vector<8x1xi1> to vector<8x16xi1>
    %196 = vector.broadcast %cst_84 : f32 to vector<8x16xf32>
    %197 = arith.select %195, %170, %196 : vector<8x16xi1>, vector<8x16xf32>
    %c6_85 = arith.constant 6 : index
    %c0_86 = arith.constant 0 : index
    %c0_87 = arith.constant 0 : index
    %198 = vector.load %arg13[%c6_85, %c0_86, %c0_87] : memref<8x8x16xf32, #tpu.memory_space<vmem>>, vector<1x8x16xf32>
    %199 = vector.shape_cast %198 : vector<1x8x16xf32> to vector<8x16xf32>
    %200 = vector.shape_cast %197 : vector<8x16xf32> to vector<1x8x16xf32>
    tpu.vector_store %arg13[%c6_85, %c0_86, %c0_87], %200 {strides = array<i32>} : memref<8x8x16xf32, #tpu.memory_space<vmem>>, vector<1x8x16xf32>,
    %c2_i32 = arith.constant 2 : i32
    %201 = arith.addi %56, %c2_i32 : i32
    %c7_i32_88 = arith.constant 7 : i32
    %202 = arith.subi %c7_i32_88, %201 : i32
    %c2 = arith.constant 2 : index
    %c0_89 = arith.constant 0 : index
    %c0_90 = arith.constant 0 : index
    %203 = vector.load %arg16[%c2, %c0_89, %c0_90] : memref<8x8x64xf32, #tpu.memory_space<vmem>>, vector<1x8x64xf32>
    %204 = vector.shape_cast %203 : vector<1x8x64xf32> to vector<8x64xf32>
    %205 = arith.truncf %177 : vector<8x16xf32> to vector<8x16xbf16>
    %cst_91 = arith.constant dense<0.000000e+00> : vector<8x64xf32>
    %206 = tpu.matmul %205, %42, %cst_91 {dimension_numbers = #tpu.dot_dimension_numbers<[1], [0], [0], [1], [0, 0, 1, 1], [], []>} : vector<8x16xbf16>, vector<16x64xbf16>, vector<8x64xf32> -> vector<8x64xf32>
    %207 = arith.addf %204, %206 : vector<8x64xf32>
    %c5 = arith.constant 5 : index
    %c0_92 = arith.constant 0 : index
    %c0_93 = arith.constant 0 : index
    %208 = vector.load %arg17[%c5, %c0_92, %c0_93] : memref<8x8x64xf32, #tpu.memory_space<vmem>>, vector<1x8x64xf32>
    %209 = vector.shape_cast %208 : vector<1x8x64xf32> to vector<8x64xf32>
    %210 = arith.truncf %183 : vector<8x16xf32> to vector<8x16xbf16>
    %cst_94 = arith.constant dense<0.000000e+00> : vector<8x64xf32>
    %211 = tpu.matmul %210, %44, %cst_94 {dimension_numbers = #tpu.dot_dimension_numbers<[1], [0], [0], [1], [0, 0, 1, 1], [], []>} : vector<8x16xbf16>, vector<16x64xbf16>, vector<8x64xf32> -> vector<8x64xf32>
    %212 = arith.addf %209, %211 : vector<8x64xf32>
    %213 = arith.negf %207 : vector<8x64xf32>
    %214 = math.exp %213 : vector<8x64xf32>
    %cst_95 = arith.constant 1.000000e+00 : f32
    %215 = vector.broadcast %cst_95 : f32 to vector<8x64xf32>
    %216 = arith.addf %215, %214 : vector<8x64xf32>
    %217 = arith.divf %215, %216 : vector<8x64xf32>
    %218 = vector.extract_strided_slice %207 {offsets = [0, 32], sizes = [8, 16], strides = [1, 1]} : vector<8x64xf32> to vector<8x16xf32>
    %219 = math.tanh %218 : vector<8x16xf32>
    %220 = vector.extract_strided_slice %217 {offsets = [0, 16], sizes = [8, 16], strides = [1, 1]} : vector<8x64xf32> to vector<8x16xf32>
    %221 = arith.mulf %220, %180 : vector<8x16xf32>
    %222 = vector.extract_strided_slice %217 {offsets = [0, 0], sizes = [8, 16], strides = [1, 1]} : vector<8x64xf32> to vector<8x16xf32>
    %223 = arith.mulf %222, %219 : vector<8x16xf32>
    %224 = arith.addf %221, %223 : vector<8x16xf32>
    %225 = vector.extract_strided_slice %217 {offsets = [0, 48], sizes = [8, 16], strides = [1, 1]} : vector<8x64xf32> to vector<8x16xf32>
    %226 = math.tanh %224 : vector<8x16xf32>
    %227 = arith.mulf %225, %226 : vector<8x16xf32>
    %228 = arith.negf %212 : vector<8x64xf32>
    %229 = math.exp %228 : vector<8x64xf32>
    %cst_96 = arith.constant 1.000000e+00 : f32
    %230 = vector.broadcast %cst_96 : f32 to vector<8x64xf32>
    %231 = arith.addf %230, %229 : vector<8x64xf32>
    %232 = arith.divf %230, %231 : vector<8x64xf32>
    %233 = vector.extract_strided_slice %212 {offsets = [0, 32], sizes = [8, 16], strides = [1, 1]} : vector<8x64xf32> to vector<8x16xf32>
    %234 = math.tanh %233 : vector<8x16xf32>
    %235 = vector.extract_strided_slice %232 {offsets = [0, 16], sizes = [8, 16], strides = [1, 1]} : vector<8x64xf32> to vector<8x16xf32>
    %236 = arith.mulf %235, %186 : vector<8x16xf32>
    %237 = vector.extract_strided_slice %232 {offsets = [0, 0], sizes = [8, 16], strides = [1, 1]} : vector<8x64xf32> to vector<8x16xf32>
    %238 = arith.mulf %237, %234 : vector<8x16xf32>
    %239 = arith.addf %236, %238 : vector<8x16xf32>
    %240 = vector.extract_strided_slice %232 {offsets = [0, 48], sizes = [8, 16], strides = [1, 1]} : vector<8x64xf32> to vector<8x16xf32>
    %241 = math.tanh %239 : vector<8x16xf32>
    %242 = arith.mulf %240, %241 : vector<8x16xf32>
    %243 = vector.broadcast %201 : i32 to vector<8x1xi32>
    %244 = arith.cmpi slt, %243, %45 : vector<8x1xi32>
    %245 = vector.broadcast %202 : i32 to vector<8x1xi32>
    %246 = arith.cmpi slt, %245, %45 : vector<8x1xi32>
    %247 = vector.shape_cast %244 : vector<8x1xi1> to vector<8x1xi1>
    %248 = vector.broadcast %247 : vector<8x1xi1> to vector<8x16xi1>
    %249 = arith.select %248, %227, %177 : vector<8x16xi1>, vector<8x16xf32>
    %250 = vector.shape_cast %244 : vector<8x1xi1> to vector<8x1xi1>
    %251 = vector.broadcast %250 : vector<8x1xi1> to vector<8x16xi1>
    %252 = arith.select %251, %224, %180 : vector<8x16xi1>, vector<8x16xf32>
    %253 = vector.shape_cast %246 : vector<8x1xi1> to vector<8x1xi1>
    %254 = vector.broadcast %253 : vector<8x1xi1> to vector<8x16xi1>
    %255 = arith.select %254, %242, %183 : vector<8x16xi1>, vector<8x16xf32>
    %256 = vector.shape_cast %246 : vector<8x1xi1> to vector<8x1xi1>
    %257 = vector.broadcast %256 : vector<8x1xi1> to vector<8x16xi1>
    %258 = arith.select %257, %239, %186 : vector<8x16xi1>, vector<8x16xf32>
    %cst_97 = arith.constant 0.000000e+00 : f32
    %259 = vector.shape_cast %244 : vector<8x1xi1> to vector<8x1xi1>
    %260 = vector.broadcast %259 : vector<8x1xi1> to vector<8x16xi1>
    %261 = vector.broadcast %cst_97 : f32 to vector<8x16xf32>
    %262 = arith.select %260, %227, %261 : vector<8x16xi1>, vector<8x16xf32>
    %c2_98 = arith.constant 2 : index
    %c0_99 = arith.constant 0 : index
    %c0_100 = arith.constant 0 : index
    %263 = vector.load %arg12[%c2_98, %c0_99, %c0_100] : memref<8x8x16xf32, #tpu.memory_space<vmem>>, vector<1x8x16xf32>
    %264 = vector.shape_cast %263 : vector<1x8x16xf32> to vector<8x16xf32>
    %265 = vector.shape_cast %262 : vector<8x16xf32> to vector<1x8x16xf32>
    tpu.vector_store %arg12[%c2_98, %c0_99, %c0_100], %265 {strides = array<i32>} : memref<8x8x16xf32, #tpu.memory_space<vmem>>, vector<1x8x16xf32>,
    %cst_101 = arith.constant 0.000000e+00 : f32
    %266 = vector.shape_cast %246 : vector<8x1xi1> to vector<8x1xi1>
    %267 = vector.broadcast %266 : vector<8x1xi1> to vector<8x16xi1>
    %268 = vector.broadcast %cst_101 : f32 to vector<8x16xf32>
    %269 = arith.select %267, %242, %268 : vector<8x16xi1>, vector<8x16xf32>
    %c5_102 = arith.constant 5 : index
    %c0_103 = arith.constant 0 : index
    %c0_104 = arith.constant 0 : index
    %270 = vector.load %arg13[%c5_102, %c0_103, %c0_104] : memref<8x8x16xf32, #tpu.memory_space<vmem>>, vector<1x8x16xf32>
    %271 = vector.shape_cast %270 : vector<1x8x16xf32> to vector<8x16xf32>
    %272 = vector.shape_cast %269 : vector<8x16xf32> to vector<1x8x16xf32>
    tpu.vector_store %arg13[%c5_102, %c0_103, %c0_104], %272 {strides = array<i32>} : memref<8x8x16xf32, #tpu.memory_space<vmem>>, vector<1x8x16xf32>,
    %c3_i32 = arith.constant 3 : i32
    %273 = arith.addi %56, %c3_i32 : i32
    %c7_i32_105 = arith.constant 7 : i32
    %274 = arith.subi %c7_i32_105, %273 : i32
    %c3 = arith.constant 3 : index
    %c0_106 = arith.constant 0 : index
    %c0_107 = arith.constant 0 : index
    %275 = vector.load %arg16[%c3, %c0_106, %c0_107] : memref<8x8x64xf32, #tpu.memory_space<vmem>>, vector<1x8x64xf32>
    %276 = vector.shape_cast %275 : vector<1x8x64xf32> to vector<8x64xf32>
    %277 = arith.truncf %249 : vector<8x16xf32> to vector<8x16xbf16>
    %cst_108 = arith.constant dense<0.000000e+00> : vector<8x64xf32>
    %278 = tpu.matmul %277, %42, %cst_108 {dimension_numbers = #tpu.dot_dimension_numbers<[1], [0], [0], [1], [0, 0, 1, 1], [], []>} : vector<8x16xbf16>, vector<16x64xbf16>, vector<8x64xf32> -> vector<8x64xf32>
    %279 = arith.addf %276, %278 : vector<8x64xf32>
    %c4 = arith.constant 4 : index
    %c0_109 = arith.constant 0 : index
    %c0_110 = arith.constant 0 : index
    %280 = vector.load %arg17[%c4, %c0_109, %c0_110] : memref<8x8x64xf32, #tpu.memory_space<vmem>>, vector<1x8x64xf32>
    %281 = vector.shape_cast %280 : vector<1x8x64xf32> to vector<8x64xf32>
    %282 = arith.truncf %255 : vector<8x16xf32> to vector<8x16xbf16>
    %cst_111 = arith.constant dense<0.000000e+00> : vector<8x64xf32>
    %283 = tpu.matmul %282, %44, %cst_111 {dimension_numbers = #tpu.dot_dimension_numbers<[1], [0], [0], [1], [0, 0, 1, 1], [], []>} : vector<8x16xbf16>, vector<16x64xbf16>, vector<8x64xf32> -> vector<8x64xf32>
    %284 = arith.addf %281, %283 : vector<8x64xf32>
    %285 = arith.negf %279 : vector<8x64xf32>
    %286 = math.exp %285 : vector<8x64xf32>
    %cst_112 = arith.constant 1.000000e+00 : f32
    %287 = vector.broadcast %cst_112 : f32 to vector<8x64xf32>
    %288 = arith.addf %287, %286 : vector<8x64xf32>
    %289 = arith.divf %287, %288 : vector<8x64xf32>
    %290 = vector.extract_strided_slice %279 {offsets = [0, 32], sizes = [8, 16], strides = [1, 1]} : vector<8x64xf32> to vector<8x16xf32>
    %291 = math.tanh %290 : vector<8x16xf32>
    %292 = vector.extract_strided_slice %289 {offsets = [0, 16], sizes = [8, 16], strides = [1, 1]} : vector<8x64xf32> to vector<8x16xf32>
    %293 = arith.mulf %292, %252 : vector<8x16xf32>
    %294 = vector.extract_strided_slice %289 {offsets = [0, 0], sizes = [8, 16], strides = [1, 1]} : vector<8x64xf32> to vector<8x16xf32>
    %295 = arith.mulf %294, %291 : vector<8x16xf32>
    %296 = arith.addf %293, %295 : vector<8x16xf32>
    %297 = vector.extract_strided_slice %289 {offsets = [0, 48], sizes = [8, 16], strides = [1, 1]} : vector<8x64xf32> to vector<8x16xf32>
    %298 = math.tanh %296 : vector<8x16xf32>
    %299 = arith.mulf %297, %298 : vector<8x16xf32>
    %300 = arith.negf %284 : vector<8x64xf32>
    %301 = math.exp %300 : vector<8x64xf32>
    %cst_113 = arith.constant 1.000000e+00 : f32
    %302 = vector.broadcast %cst_113 : f32 to vector<8x64xf32>
    %303 = arith.addf %302, %301 : vector<8x64xf32>
    %304 = arith.divf %302, %303 : vector<8x64xf32>
    %305 = vector.extract_strided_slice %284 {offsets = [0, 32], sizes = [8, 16], strides = [1, 1]} : vector<8x64xf32> to vector<8x16xf32>
    %306 = math.tanh %305 : vector<8x16xf32>
    %307 = vector.extract_strided_slice %304 {offsets = [0, 16], sizes = [8, 16], strides = [1, 1]} : vector<8x64xf32> to vector<8x16xf32>
    %308 = arith.mulf %307, %258 : vector<8x16xf32>
    %309 = vector.extract_strided_slice %304 {offsets = [0, 0], sizes = [8, 16], strides = [1, 1]} : vector<8x64xf32> to vector<8x16xf32>
    %310 = arith.mulf %309, %306 : vector<8x16xf32>
    %311 = arith.addf %308, %310 : vector<8x16xf32>
    %312 = vector.extract_strided_slice %304 {offsets = [0, 48], sizes = [8, 16], strides = [1, 1]} : vector<8x64xf32> to vector<8x16xf32>
    %313 = math.tanh %311 : vector<8x16xf32>
    %314 = arith.mulf %312, %313 : vector<8x16xf32>
    %315 = vector.broadcast %273 : i32 to vector<8x1xi32>
    %316 = arith.cmpi slt, %315, %45 : vector<8x1xi32>
    %317 = vector.broadcast %274 : i32 to vector<8x1xi32>
    %318 = arith.cmpi slt, %317, %45 : vector<8x1xi32>
    %319 = vector.shape_cast %316 : vector<8x1xi1> to vector<8x1xi1>
    %320 = vector.broadcast %319 : vector<8x1xi1> to vector<8x16xi1>
    %321 = arith.select %320, %299, %249 : vector<8x16xi1>, vector<8x16xf32>
    %322 = vector.shape_cast %316 : vector<8x1xi1> to vector<8x1xi1>
    %323 = vector.broadcast %322 : vector<8x1xi1> to vector<8x16xi1>
    %324 = arith.select %323, %296, %252 : vector<8x16xi1>, vector<8x16xf32>
    %325 = vector.shape_cast %318 : vector<8x1xi1> to vector<8x1xi1>
    %326 = vector.broadcast %325 : vector<8x1xi1> to vector<8x16xi1>
    %327 = arith.select %326, %314, %255 : vector<8x16xi1>, vector<8x16xf32>
    %328 = vector.shape_cast %318 : vector<8x1xi1> to vector<8x1xi1>
    %329 = vector.broadcast %328 : vector<8x1xi1> to vector<8x16xi1>
    %330 = arith.select %329, %311, %258 : vector<8x16xi1>, vector<8x16xf32>
    %cst_114 = arith.constant 0.000000e+00 : f32
    %331 = vector.shape_cast %316 : vector<8x1xi1> to vector<8x1xi1>
    %332 = vector.broadcast %331 : vector<8x1xi1> to vector<8x16xi1>
    %333 = vector.broadcast %cst_114 : f32 to vector<8x16xf32>
    %334 = arith.select %332, %299, %333 : vector<8x16xi1>, vector<8x16xf32>
    %c3_115 = arith.constant 3 : index
    %c0_116 = arith.constant 0 : index
    %c0_117 = arith.constant 0 : index
    %335 = vector.load %arg12[%c3_115, %c0_116, %c0_117] : memref<8x8x16xf32, #tpu.memory_space<vmem>>, vector<1x8x16xf32>
    %336 = vector.shape_cast %335 : vector<1x8x16xf32> to vector<8x16xf32>
    %337 = vector.shape_cast %334 : vector<8x16xf32> to vector<1x8x16xf32>
    tpu.vector_store %arg12[%c3_115, %c0_116, %c0_117], %337 {strides = array<i32>} : memref<8x8x16xf32, #tpu.memory_space<vmem>>, vector<1x8x16xf32>,
    %cst_118 = arith.constant 0.000000e+00 : f32
    %338 = vector.shape_cast %318 : vector<8x1xi1> to vector<8x1xi1>
    %339 = vector.broadcast %338 : vector<8x1xi1> to vector<8x16xi1>
    %340 = vector.broadcast %cst_118 : f32 to vector<8x16xf32>
    %341 = arith.select %339, %314, %340 : vector<8x16xi1>, vector<8x16xf32>
    %c4_119 = arith.constant 4 : index
    %c0_120 = arith.constant 0 : index
    %c0_121 = arith.constant 0 : index
    %342 = vector.load %arg13[%c4_119, %c0_120, %c0_121] : memref<8x8x16xf32, #tpu.memory_space<vmem>>, vector<1x8x16xf32>
    %343 = vector.shape_cast %342 : vector<1x8x16xf32> to vector<8x16xf32>
    %344 = vector.shape_cast %341 : vector<8x16xf32> to vector<1x8x16xf32>
    tpu.vector_store %arg13[%c4_119, %c0_120, %c0_121], %344 {strides = array<i32>} : memref<8x8x16xf32, #tpu.memory_space<vmem>>, vector<1x8x16xf32>,
    %c4_i32 = arith.constant 4 : i32
    %345 = arith.addi %56, %c4_i32 : i32
    %c7_i32_122 = arith.constant 7 : i32
    %346 = arith.subi %c7_i32_122, %345 : i32
    %c4_123 = arith.constant 4 : index
    %c0_124 = arith.constant 0 : index
    %c0_125 = arith.constant 0 : index
    %347 = vector.load %arg16[%c4_123, %c0_124, %c0_125] : memref<8x8x64xf32, #tpu.memory_space<vmem>>, vector<1x8x64xf32>
    %348 = vector.shape_cast %347 : vector<1x8x64xf32> to vector<8x64xf32>
    %349 = arith.truncf %321 : vector<8x16xf32> to vector<8x16xbf16>
    %cst_126 = arith.constant dense<0.000000e+00> : vector<8x64xf32>
    %350 = tpu.matmul %349, %42, %cst_126 {dimension_numbers = #tpu.dot_dimension_numbers<[1], [0], [0], [1], [0, 0, 1, 1], [], []>} : vector<8x16xbf16>, vector<16x64xbf16>, vector<8x64xf32> -> vector<8x64xf32>
    %351 = arith.addf %348, %350 : vector<8x64xf32>
    %c3_127 = arith.constant 3 : index
    %c0_128 = arith.constant 0 : index
    %c0_129 = arith.constant 0 : index
    %352 = vector.load %arg17[%c3_127, %c0_128, %c0_129] : memref<8x8x64xf32, #tpu.memory_space<vmem>>, vector<1x8x64xf32>
    %353 = vector.shape_cast %352 : vector<1x8x64xf32> to vector<8x64xf32>
    %354 = arith.truncf %327 : vector<8x16xf32> to vector<8x16xbf16>
    %cst_130 = arith.constant dense<0.000000e+00> : vector<8x64xf32>
    %355 = tpu.matmul %354, %44, %cst_130 {dimension_numbers = #tpu.dot_dimension_numbers<[1], [0], [0], [1], [0, 0, 1, 1], [], []>} : vector<8x16xbf16>, vector<16x64xbf16>, vector<8x64xf32> -> vector<8x64xf32>
    %356 = arith.addf %353, %355 : vector<8x64xf32>
    %357 = arith.negf %351 : vector<8x64xf32>
    %358 = math.exp %357 : vector<8x64xf32>
    %cst_131 = arith.constant 1.000000e+00 : f32
    %359 = vector.broadcast %cst_131 : f32 to vector<8x64xf32>
    %360 = arith.addf %359, %358 : vector<8x64xf32>
    %361 = arith.divf %359, %360 : vector<8x64xf32>
    %362 = vector.extract_strided_slice %351 {offsets = [0, 32], sizes = [8, 16], strides = [1, 1]} : vector<8x64xf32> to vector<8x16xf32>
    %363 = math.tanh %362 : vector<8x16xf32>
    %364 = vector.extract_strided_slice %361 {offsets = [0, 16], sizes = [8, 16], strides = [1, 1]} : vector<8x64xf32> to vector<8x16xf32>
    %365 = arith.mulf %364, %324 : vector<8x16xf32>
    %366 = vector.extract_strided_slice %361 {offsets = [0, 0], sizes = [8, 16], strides = [1, 1]} : vector<8x64xf32> to vector<8x16xf32>
    %367 = arith.mulf %366, %363 : vector<8x16xf32>
    %368 = arith.addf %365, %367 : vector<8x16xf32>
    %369 = vector.extract_strided_slice %361 {offsets = [0, 48], sizes = [8, 16], strides = [1, 1]} : vector<8x64xf32> to vector<8x16xf32>
    %370 = math.tanh %368 : vector<8x16xf32>
    %371 = arith.mulf %369, %370 : vector<8x16xf32>
    %372 = arith.negf %356 : vector<8x64xf32>
    %373 = math.exp %372 : vector<8x64xf32>
    %cst_132 = arith.constant 1.000000e+00 : f32
    %374 = vector.broadcast %cst_132 : f32 to vector<8x64xf32>
    %375 = arith.addf %374, %373 : vector<8x64xf32>
    %376 = arith.divf %374, %375 : vector<8x64xf32>
    %377 = vector.extract_strided_slice %356 {offsets = [0, 32], sizes = [8, 16], strides = [1, 1]} : vector<8x64xf32> to vector<8x16xf32>
    %378 = math.tanh %377 : vector<8x16xf32>
    %379 = vector.extract_strided_slice %376 {offsets = [0, 16], sizes = [8, 16], strides = [1, 1]} : vector<8x64xf32> to vector<8x16xf32>
    %380 = arith.mulf %379, %330 : vector<8x16xf32>
    %381 = vector.extract_strided_slice %376 {offsets = [0, 0], sizes = [8, 16], strides = [1, 1]} : vector<8x64xf32> to vector<8x16xf32>
    %382 = arith.mulf %381, %378 : vector<8x16xf32>
    %383 = arith.addf %380, %382 : vector<8x16xf32>
    %384 = vector.extract_strided_slice %376 {offsets = [0, 48], sizes = [8, 16], strides = [1, 1]} : vector<8x64xf32> to vector<8x16xf32>
    %385 = math.tanh %383 : vector<8x16xf32>
    %386 = arith.mulf %384, %385 : vector<8x16xf32>
    %387 = vector.broadcast %345 : i32 to vector<8x1xi32>
    %388 = arith.cmpi slt, %387, %45 : vector<8x1xi32>
    %389 = vector.broadcast %346 : i32 to vector<8x1xi32>
    %390 = arith.cmpi slt, %389, %45 : vector<8x1xi32>
    %391 = vector.shape_cast %388 : vector<8x1xi1> to vector<8x1xi1>
    %392 = vector.broadcast %391 : vector<8x1xi1> to vector<8x16xi1>
    %393 = arith.select %392, %371, %321 : vector<8x16xi1>, vector<8x16xf32>
    %394 = vector.shape_cast %388 : vector<8x1xi1> to vector<8x1xi1>
    %395 = vector.broadcast %394 : vector<8x1xi1> to vector<8x16xi1>
    %396 = arith.select %395, %368, %324 : vector<8x16xi1>, vector<8x16xf32>
    %397 = vector.shape_cast %390 : vector<8x1xi1> to vector<8x1xi1>
    %398 = vector.broadcast %397 : vector<8x1xi1> to vector<8x16xi1>
    %399 = arith.select %398, %386, %327 : vector<8x16xi1>, vector<8x16xf32>
    %400 = vector.shape_cast %390 : vector<8x1xi1> to vector<8x1xi1>
    %401 = vector.broadcast %400 : vector<8x1xi1> to vector<8x16xi1>
    %402 = arith.select %401, %383, %330 : vector<8x16xi1>, vector<8x16xf32>
    %cst_133 = arith.constant 0.000000e+00 : f32
    %403 = vector.shape_cast %388 : vector<8x1xi1> to vector<8x1xi1>
    %404 = vector.broadcast %403 : vector<8x1xi1> to vector<8x16xi1>
    %405 = vector.broadcast %cst_133 : f32 to vector<8x16xf32>
    %406 = arith.select %404, %371, %405 : vector<8x16xi1>, vector<8x16xf32>
    %c4_134 = arith.constant 4 : index
    %c0_135 = arith.constant 0 : index
    %c0_136 = arith.constant 0 : index
    %407 = vector.load %arg12[%c4_134, %c0_135, %c0_136] : memref<8x8x16xf32, #tpu.memory_space<vmem>>, vector<1x8x16xf32>
    %408 = vector.shape_cast %407 : vector<1x8x16xf32> to vector<8x16xf32>
    %409 = vector.shape_cast %406 : vector<8x16xf32> to vector<1x8x16xf32>
    tpu.vector_store %arg12[%c4_134, %c0_135, %c0_136], %409 {strides = array<i32>} : memref<8x8x16xf32, #tpu.memory_space<vmem>>, vector<1x8x16xf32>,
    %cst_137 = arith.constant 0.000000e+00 : f32
    %410 = vector.shape_cast %390 : vector<8x1xi1> to vector<8x1xi1>
    %411 = vector.broadcast %410 : vector<8x1xi1> to vector<8x16xi1>
    %412 = vector.broadcast %cst_137 : f32 to vector<8x16xf32>
    %413 = arith.select %411, %386, %412 : vector<8x16xi1>, vector<8x16xf32>
    %c3_138 = arith.constant 3 : index
    %c0_139 = arith.constant 0 : index
    %c0_140 = arith.constant 0 : index
    %414 = vector.load %arg13[%c3_138, %c0_139, %c0_140] : memref<8x8x16xf32, #tpu.memory_space<vmem>>, vector<1x8x16xf32>
    %415 = vector.shape_cast %414 : vector<1x8x16xf32> to vector<8x16xf32>
    %416 = vector.shape_cast %413 : vector<8x16xf32> to vector<1x8x16xf32>
    tpu.vector_store %arg13[%c3_138, %c0_139, %c0_140], %416 {strides = array<i32>} : memref<8x8x16xf32, #tpu.memory_space<vmem>>, vector<1x8x16xf32>,
    %c5_i32 = arith.constant 5 : i32
    %417 = arith.addi %56, %c5_i32 : i32
    %c7_i32_141 = arith.constant 7 : i32
    %418 = arith.subi %c7_i32_141, %417 : i32
    %c5_142 = arith.constant 5 : index
    %c0_143 = arith.constant 0 : index
    %c0_144 = arith.constant 0 : index
    %419 = vector.load %arg16[%c5_142, %c0_143, %c0_144] : memref<8x8x64xf32, #tpu.memory_space<vmem>>, vector<1x8x64xf32>
    %420 = vector.shape_cast %419 : vector<1x8x64xf32> to vector<8x64xf32>
    %421 = arith.truncf %393 : vector<8x16xf32> to vector<8x16xbf16>
    %cst_145 = arith.constant dense<0.000000e+00> : vector<8x64xf32>
    %422 = tpu.matmul %421, %42, %cst_145 {dimension_numbers = #tpu.dot_dimension_numbers<[1], [0], [0], [1], [0, 0, 1, 1], [], []>} : vector<8x16xbf16>, vector<16x64xbf16>, vector<8x64xf32> -> vector<8x64xf32>
    %423 = arith.addf %420, %422 : vector<8x64xf32>
    %c2_146 = arith.constant 2 : index
    %c0_147 = arith.constant 0 : index
    %c0_148 = arith.constant 0 : index
    %424 = vector.load %arg17[%c2_146, %c0_147, %c0_148] : memref<8x8x64xf32, #tpu.memory_space<vmem>>, vector<1x8x64xf32>
    %425 = vector.shape_cast %424 : vector<1x8x64xf32> to vector<8x64xf32>
    %426 = arith.truncf %399 : vector<8x16xf32> to vector<8x16xbf16>
    %cst_149 = arith.constant dense<0.000000e+00> : vector<8x64xf32>
    %427 = tpu.matmul %426, %44, %cst_149 {dimension_numbers = #tpu.dot_dimension_numbers<[1], [0], [0], [1], [0, 0, 1, 1], [], []>} : vector<8x16xbf16>, vector<16x64xbf16>, vector<8x64xf32> -> vector<8x64xf32>
    %428 = arith.addf %425, %427 : vector<8x64xf32>
    %429 = arith.negf %423 : vector<8x64xf32>
    %430 = math.exp %429 : vector<8x64xf32>
    %cst_150 = arith.constant 1.000000e+00 : f32
    %431 = vector.broadcast %cst_150 : f32 to vector<8x64xf32>
    %432 = arith.addf %431, %430 : vector<8x64xf32>
    %433 = arith.divf %431, %432 : vector<8x64xf32>
    %434 = vector.extract_strided_slice %423 {offsets = [0, 32], sizes = [8, 16], strides = [1, 1]} : vector<8x64xf32> to vector<8x16xf32>
    %435 = math.tanh %434 : vector<8x16xf32>
    %436 = vector.extract_strided_slice %433 {offsets = [0, 16], sizes = [8, 16], strides = [1, 1]} : vector<8x64xf32> to vector<8x16xf32>
    %437 = arith.mulf %436, %396 : vector<8x16xf32>
    %438 = vector.extract_strided_slice %433 {offsets = [0, 0], sizes = [8, 16], strides = [1, 1]} : vector<8x64xf32> to vector<8x16xf32>
    %439 = arith.mulf %438, %435 : vector<8x16xf32>
    %440 = arith.addf %437, %439 : vector<8x16xf32>
    %441 = vector.extract_strided_slice %433 {offsets = [0, 48], sizes = [8, 16], strides = [1, 1]} : vector<8x64xf32> to vector<8x16xf32>
    %442 = math.tanh %440 : vector<8x16xf32>
    %443 = arith.mulf %441, %442 : vector<8x16xf32>
    %444 = arith.negf %428 : vector<8x64xf32>
    %445 = math.exp %444 : vector<8x64xf32>
    %cst_151 = arith.constant 1.000000e+00 : f32
    %446 = vector.broadcast %cst_151 : f32 to vector<8x64xf32>
    %447 = arith.addf %446, %445 : vector<8x64xf32>
    %448 = arith.divf %446, %447 : vector<8x64xf32>
    %449 = vector.extract_strided_slice %428 {offsets = [0, 32], sizes = [8, 16], strides = [1, 1]} : vector<8x64xf32> to vector<8x16xf32>
    %450 = math.tanh %449 : vector<8x16xf32>
    %451 = vector.extract_strided_slice %448 {offsets = [0, 16], sizes = [8, 16], strides = [1, 1]} : vector<8x64xf32> to vector<8x16xf32>
    %452 = arith.mulf %451, %402 : vector<8x16xf32>
    %453 = vector.extract_strided_slice %448 {offsets = [0, 0], sizes = [8, 16], strides = [1, 1]} : vector<8x64xf32> to vector<8x16xf32>
    %454 = arith.mulf %453, %450 : vector<8x16xf32>
    %455 = arith.addf %452, %454 : vector<8x16xf32>
    %456 = vector.extract_strided_slice %448 {offsets = [0, 48], sizes = [8, 16], strides = [1, 1]} : vector<8x64xf32> to vector<8x16xf32>
    %457 = math.tanh %455 : vector<8x16xf32>
    %458 = arith.mulf %456, %457 : vector<8x16xf32>
    %459 = vector.broadcast %417 : i32 to vector<8x1xi32>
    %460 = arith.cmpi slt, %459, %45 : vector<8x1xi32>
    %461 = vector.broadcast %418 : i32 to vector<8x1xi32>
    %462 = arith.cmpi slt, %461, %45 : vector<8x1xi32>
    %463 = vector.shape_cast %460 : vector<8x1xi1> to vector<8x1xi1>
    %464 = vector.broadcast %463 : vector<8x1xi1> to vector<8x16xi1>
    %465 = arith.select %464, %443, %393 : vector<8x16xi1>, vector<8x16xf32>
    %466 = vector.shape_cast %460 : vector<8x1xi1> to vector<8x1xi1>
    %467 = vector.broadcast %466 : vector<8x1xi1> to vector<8x16xi1>
    %468 = arith.select %467, %440, %396 : vector<8x16xi1>, vector<8x16xf32>
    %469 = vector.shape_cast %462 : vector<8x1xi1> to vector<8x1xi1>
    %470 = vector.broadcast %469 : vector<8x1xi1> to vector<8x16xi1>
    %471 = arith.select %470, %458, %399 : vector<8x16xi1>, vector<8x16xf32>
    %472 = vector.shape_cast %462 : vector<8x1xi1> to vector<8x1xi1>
    %473 = vector.broadcast %472 : vector<8x1xi1> to vector<8x16xi1>
    %474 = arith.select %473, %455, %402 : vector<8x16xi1>, vector<8x16xf32>
    %cst_152 = arith.constant 0.000000e+00 : f32
    %475 = vector.shape_cast %460 : vector<8x1xi1> to vector<8x1xi1>
    %476 = vector.broadcast %475 : vector<8x1xi1> to vector<8x16xi1>
    %477 = vector.broadcast %cst_152 : f32 to vector<8x16xf32>
    %478 = arith.select %476, %443, %477 : vector<8x16xi1>, vector<8x16xf32>
    %c5_153 = arith.constant 5 : index
    %c0_154 = arith.constant 0 : index
    %c0_155 = arith.constant 0 : index
    %479 = vector.load %arg12[%c5_153, %c0_154, %c0_155] : memref<8x8x16xf32, #tpu.memory_space<vmem>>, vector<1x8x16xf32>
    %480 = vector.shape_cast %479 : vector<1x8x16xf32> to vector<8x16xf32>
    %481 = vector.shape_cast %478 : vector<8x16xf32> to vector<1x8x16xf32>
    tpu.vector_store %arg12[%c5_153, %c0_154, %c0_155], %481 {strides = array<i32>} : memref<8x8x16xf32, #tpu.memory_space<vmem>>, vector<1x8x16xf32>,
    %cst_156 = arith.constant 0.000000e+00 : f32
    %482 = vector.shape_cast %462 : vector<8x1xi1> to vector<8x1xi1>
    %483 = vector.broadcast %482 : vector<8x1xi1> to vector<8x16xi1>
    %484 = vector.broadcast %cst_156 : f32 to vector<8x16xf32>
    %485 = arith.select %483, %458, %484 : vector<8x16xi1>, vector<8x16xf32>
    %c2_157 = arith.constant 2 : index
    %c0_158 = arith.constant 0 : index
    %c0_159 = arith.constant 0 : index
    %486 = vector.load %arg13[%c2_157, %c0_158, %c0_159] : memref<8x8x16xf32, #tpu.memory_space<vmem>>, vector<1x8x16xf32>
    %487 = vector.shape_cast %486 : vector<1x8x16xf32> to vector<8x16xf32>
    %488 = vector.shape_cast %485 : vector<8x16xf32> to vector<1x8x16xf32>
    tpu.vector_store %arg13[%c2_157, %c0_158, %c0_159], %488 {strides = array<i32>} : memref<8x8x16xf32, #tpu.memory_space<vmem>>, vector<1x8x16xf32>,
    %c6_i32 = arith.constant 6 : i32
    %489 = arith.addi %56, %c6_i32 : i32
    %c7_i32_160 = arith.constant 7 : i32
    %490 = arith.subi %c7_i32_160, %489 : i32
    %c6_161 = arith.constant 6 : index
    %c0_162 = arith.constant 0 : index
    %c0_163 = arith.constant 0 : index
    %491 = vector.load %arg16[%c6_161, %c0_162, %c0_163] : memref<8x8x64xf32, #tpu.memory_space<vmem>>, vector<1x8x64xf32>
    %492 = vector.shape_cast %491 : vector<1x8x64xf32> to vector<8x64xf32>
    %493 = arith.truncf %465 : vector<8x16xf32> to vector<8x16xbf16>
    %cst_164 = arith.constant dense<0.000000e+00> : vector<8x64xf32>
    %494 = tpu.matmul %493, %42, %cst_164 {dimension_numbers = #tpu.dot_dimension_numbers<[1], [0], [0], [1], [0, 0, 1, 1], [], []>} : vector<8x16xbf16>, vector<16x64xbf16>, vector<8x64xf32> -> vector<8x64xf32>
    %495 = arith.addf %492, %494 : vector<8x64xf32>
    %c1_165 = arith.constant 1 : index
    %c0_166 = arith.constant 0 : index
    %c0_167 = arith.constant 0 : index
    %496 = vector.load %arg17[%c1_165, %c0_166, %c0_167] : memref<8x8x64xf32, #tpu.memory_space<vmem>>, vector<1x8x64xf32>
    %497 = vector.shape_cast %496 : vector<1x8x64xf32> to vector<8x64xf32>
    %498 = arith.truncf %471 : vector<8x16xf32> to vector<8x16xbf16>
    %cst_168 = arith.constant dense<0.000000e+00> : vector<8x64xf32>
    %499 = tpu.matmul %498, %44, %cst_168 {dimension_numbers = #tpu.dot_dimension_numbers<[1], [0], [0], [1], [0, 0, 1, 1], [], []>} : vector<8x16xbf16>, vector<16x64xbf16>, vector<8x64xf32> -> vector<8x64xf32>
    %500 = arith.addf %497, %499 : vector<8x64xf32>
    %501 = arith.negf %495 : vector<8x64xf32>
    %502 = math.exp %501 : vector<8x64xf32>
    %cst_169 = arith.constant 1.000000e+00 : f32
    %503 = vector.broadcast %cst_169 : f32 to vector<8x64xf32>
    %504 = arith.addf %503, %502 : vector<8x64xf32>
    %505 = arith.divf %503, %504 : vector<8x64xf32>
    %506 = vector.extract_strided_slice %495 {offsets = [0, 32], sizes = [8, 16], strides = [1, 1]} : vector<8x64xf32> to vector<8x16xf32>
    %507 = math.tanh %506 : vector<8x16xf32>
    %508 = vector.extract_strided_slice %505 {offsets = [0, 16], sizes = [8, 16], strides = [1, 1]} : vector<8x64xf32> to vector<8x16xf32>
    %509 = arith.mulf %508, %468 : vector<8x16xf32>
    %510 = vector.extract_strided_slice %505 {offsets = [0, 0], sizes = [8, 16], strides = [1, 1]} : vector<8x64xf32> to vector<8x16xf32>
    %511 = arith.mulf %510, %507 : vector<8x16xf32>
    %512 = arith.addf %509, %511 : vector<8x16xf32>
    %513 = vector.extract_strided_slice %505 {offsets = [0, 48], sizes = [8, 16], strides = [1, 1]} : vector<8x64xf32> to vector<8x16xf32>
    %514 = math.tanh %512 : vector<8x16xf32>
    %515 = arith.mulf %513, %514 : vector<8x16xf32>
    %516 = arith.negf %500 : vector<8x64xf32>
    %517 = math.exp %516 : vector<8x64xf32>
    %cst_170 = arith.constant 1.000000e+00 : f32
    %518 = vector.broadcast %cst_170 : f32 to vector<8x64xf32>
    %519 = arith.addf %518, %517 : vector<8x64xf32>
    %520 = arith.divf %518, %519 : vector<8x64xf32>
    %521 = vector.extract_strided_slice %500 {offsets = [0, 32], sizes = [8, 16], strides = [1, 1]} : vector<8x64xf32> to vector<8x16xf32>
    %522 = math.tanh %521 : vector<8x16xf32>
    %523 = vector.extract_strided_slice %520 {offsets = [0, 16], sizes = [8, 16], strides = [1, 1]} : vector<8x64xf32> to vector<8x16xf32>
    %524 = arith.mulf %523, %474 : vector<8x16xf32>
    %525 = vector.extract_strided_slice %520 {offsets = [0, 0], sizes = [8, 16], strides = [1, 1]} : vector<8x64xf32> to vector<8x16xf32>
    %526 = arith.mulf %525, %522 : vector<8x16xf32>
    %527 = arith.addf %524, %526 : vector<8x16xf32>
    %528 = vector.extract_strided_slice %520 {offsets = [0, 48], sizes = [8, 16], strides = [1, 1]} : vector<8x64xf32> to vector<8x16xf32>
    %529 = math.tanh %527 : vector<8x16xf32>
    %530 = arith.mulf %528, %529 : vector<8x16xf32>
    %531 = vector.broadcast %489 : i32 to vector<8x1xi32>
    %532 = arith.cmpi slt, %531, %45 : vector<8x1xi32>
    %533 = vector.broadcast %490 : i32 to vector<8x1xi32>
    %534 = arith.cmpi slt, %533, %45 : vector<8x1xi32>
    %535 = vector.shape_cast %532 : vector<8x1xi1> to vector<8x1xi1>
    %536 = vector.broadcast %535 : vector<8x1xi1> to vector<8x16xi1>
    %537 = arith.select %536, %515, %465 : vector<8x16xi1>, vector<8x16xf32>
    %538 = vector.shape_cast %532 : vector<8x1xi1> to vector<8x1xi1>
    %539 = vector.broadcast %538 : vector<8x1xi1> to vector<8x16xi1>
    %540 = arith.select %539, %512, %468 : vector<8x16xi1>, vector<8x16xf32>
    %541 = vector.shape_cast %534 : vector<8x1xi1> to vector<8x1xi1>
    %542 = vector.broadcast %541 : vector<8x1xi1> to vector<8x16xi1>
    %543 = arith.select %542, %530, %471 : vector<8x16xi1>, vector<8x16xf32>
    %544 = vector.shape_cast %534 : vector<8x1xi1> to vector<8x1xi1>
    %545 = vector.broadcast %544 : vector<8x1xi1> to vector<8x16xi1>
    %546 = arith.select %545, %527, %474 : vector<8x16xi1>, vector<8x16xf32>
    %cst_171 = arith.constant 0.000000e+00 : f32
    %547 = vector.shape_cast %532 : vector<8x1xi1> to vector<8x1xi1>
    %548 = vector.broadcast %547 : vector<8x1xi1> to vector<8x16xi1>
    %549 = vector.broadcast %cst_171 : f32 to vector<8x16xf32>
    %550 = arith.select %548, %515, %549 : vector<8x16xi1>, vector<8x16xf32>
    %c6_172 = arith.constant 6 : index
    %c0_173 = arith.constant 0 : index
    %c0_174 = arith.constant 0 : index
    %551 = vector.load %arg12[%c6_172, %c0_173, %c0_174] : memref<8x8x16xf32, #tpu.memory_space<vmem>>, vector<1x8x16xf32>
    %552 = vector.shape_cast %551 : vector<1x8x16xf32> to vector<8x16xf32>
    %553 = vector.shape_cast %550 : vector<8x16xf32> to vector<1x8x16xf32>
    tpu.vector_store %arg12[%c6_172, %c0_173, %c0_174], %553 {strides = array<i32>} : memref<8x8x16xf32, #tpu.memory_space<vmem>>, vector<1x8x16xf32>,
    %cst_175 = arith.constant 0.000000e+00 : f32
    %554 = vector.shape_cast %534 : vector<8x1xi1> to vector<8x1xi1>
    %555 = vector.broadcast %554 : vector<8x1xi1> to vector<8x16xi1>
    %556 = vector.broadcast %cst_175 : f32 to vector<8x16xf32>
    %557 = arith.select %555, %530, %556 : vector<8x16xi1>, vector<8x16xf32>
    %c1_176 = arith.constant 1 : index
    %c0_177 = arith.constant 0 : index
    %c0_178 = arith.constant 0 : index
    %558 = vector.load %arg13[%c1_176, %c0_177, %c0_178] : memref<8x8x16xf32, #tpu.memory_space<vmem>>, vector<1x8x16xf32>
    %559 = vector.shape_cast %558 : vector<1x8x16xf32> to vector<8x16xf32>
    %560 = vector.shape_cast %557 : vector<8x16xf32> to vector<1x8x16xf32>
    tpu.vector_store %arg13[%c1_176, %c0_177, %c0_178], %560 {strides = array<i32>} : memref<8x8x16xf32, #tpu.memory_space<vmem>>, vector<1x8x16xf32>,
    %c7_i32_179 = arith.constant 7 : i32
    %561 = arith.addi %56, %c7_i32_179 : i32
    %c7_i32_180 = arith.constant 7 : i32
    %562 = arith.subi %c7_i32_180, %561 : i32
    %c7_181 = arith.constant 7 : index
    %c0_182 = arith.constant 0 : index
    %c0_183 = arith.constant 0 : index
    %563 = vector.load %arg16[%c7_181, %c0_182, %c0_183] : memref<8x8x64xf32, #tpu.memory_space<vmem>>, vector<1x8x64xf32>
    %564 = vector.shape_cast %563 : vector<1x8x64xf32> to vector<8x64xf32>
    %565 = arith.truncf %537 : vector<8x16xf32> to vector<8x16xbf16>
    %cst_184 = arith.constant dense<0.000000e+00> : vector<8x64xf32>
    %566 = tpu.matmul %565, %42, %cst_184 {dimension_numbers = #tpu.dot_dimension_numbers<[1], [0], [0], [1], [0, 0, 1, 1], [], []>} : vector<8x16xbf16>, vector<16x64xbf16>, vector<8x64xf32> -> vector<8x64xf32>
    %567 = arith.addf %564, %566 : vector<8x64xf32>
    %c0_185 = arith.constant 0 : index
    %c0_186 = arith.constant 0 : index
    %c0_187 = arith.constant 0 : index
    %568 = vector.load %arg17[%c0_185, %c0_186, %c0_187] : memref<8x8x64xf32, #tpu.memory_space<vmem>>, vector<1x8x64xf32>
    %569 = vector.shape_cast %568 : vector<1x8x64xf32> to vector<8x64xf32>
    %570 = arith.truncf %543 : vector<8x16xf32> to vector<8x16xbf16>
    %cst_188 = arith.constant dense<0.000000e+00> : vector<8x64xf32>
    %571 = tpu.matmul %570, %44, %cst_188 {dimension_numbers = #tpu.dot_dimension_numbers<[1], [0], [0], [1], [0, 0, 1, 1], [], []>} : vector<8x16xbf16>, vector<16x64xbf16>, vector<8x64xf32> -> vector<8x64xf32>
    %572 = arith.addf %569, %571 : vector<8x64xf32>
    %573 = arith.negf %567 : vector<8x64xf32>
    %574 = math.exp %573 : vector<8x64xf32>
    %cst_189 = arith.constant 1.000000e+00 : f32
    %575 = vector.broadcast %cst_189 : f32 to vector<8x64xf32>
    %576 = arith.addf %575, %574 : vector<8x64xf32>
    %577 = arith.divf %575, %576 : vector<8x64xf32>
    %578 = vector.extract_strided_slice %567 {offsets = [0, 32], sizes = [8, 16], strides = [1, 1]} : vector<8x64xf32> to vector<8x16xf32>
    %579 = math.tanh %578 : vector<8x16xf32>
    %580 = vector.extract_strided_slice %577 {offsets = [0, 16], sizes = [8, 16], strides = [1, 1]} : vector<8x64xf32> to vector<8x16xf32>
    %581 = arith.mulf %580, %540 : vector<8x16xf32>
    %582 = vector.extract_strided_slice %577 {offsets = [0, 0], sizes = [8, 16], strides = [1, 1]} : vector<8x64xf32> to vector<8x16xf32>
    %583 = arith.mulf %582, %579 : vector<8x16xf32>
    %584 = arith.addf %581, %583 : vector<8x16xf32>
    %585 = vector.extract_strided_slice %577 {offsets = [0, 48], sizes = [8, 16], strides = [1, 1]} : vector<8x64xf32> to vector<8x16xf32>
    %586 = math.tanh %584 : vector<8x16xf32>
    %587 = arith.mulf %585, %586 : vector<8x16xf32>
    %588 = arith.negf %572 : vector<8x64xf32>
    %589 = math.exp %588 : vector<8x64xf32>
    %cst_190 = arith.constant 1.000000e+00 : f32
    %590 = vector.broadcast %cst_190 : f32 to vector<8x64xf32>
    %591 = arith.addf %590, %589 : vector<8x64xf32>
    %592 = arith.divf %590, %591 : vector<8x64xf32>
    %593 = vector.extract_strided_slice %572 {offsets = [0, 32], sizes = [8, 16], strides = [1, 1]} : vector<8x64xf32> to vector<8x16xf32>
    %594 = math.tanh %593 : vector<8x16xf32>
    %595 = vector.extract_strided_slice %592 {offsets = [0, 16], sizes = [8, 16], strides = [1, 1]} : vector<8x64xf32> to vector<8x16xf32>
    %596 = arith.mulf %595, %546 : vector<8x16xf32>
    %597 = vector.extract_strided_slice %592 {offsets = [0, 0], sizes = [8, 16], strides = [1, 1]} : vector<8x64xf32> to vector<8x16xf32>
    %598 = arith.mulf %597, %594 : vector<8x16xf32>
    %599 = arith.addf %596, %598 : vector<8x16xf32>
    %600 = vector.extract_strided_slice %592 {offsets = [0, 48], sizes = [8, 16], strides = [1, 1]} : vector<8x64xf32> to vector<8x16xf32>
    %601 = math.tanh %599 : vector<8x16xf32>
    %602 = arith.mulf %600, %601 : vector<8x16xf32>
    %603 = vector.broadcast %561 : i32 to vector<8x1xi32>
    %604 = arith.cmpi slt, %603, %45 : vector<8x1xi32>
    %605 = vector.broadcast %562 : i32 to vector<8x1xi32>
    %606 = arith.cmpi slt, %605, %45 : vector<8x1xi32>
    %607 = vector.shape_cast %604 : vector<8x1xi1> to vector<8x1xi1>
    %608 = vector.broadcast %607 : vector<8x1xi1> to vector<8x16xi1>
    %609 = arith.select %608, %587, %537 : vector<8x16xi1>, vector<8x16xf32>
    %610 = vector.shape_cast %604 : vector<8x1xi1> to vector<8x1xi1>
    %611 = vector.broadcast %610 : vector<8x1xi1> to vector<8x16xi1>
    %612 = arith.select %611, %584, %540 : vector<8x16xi1>, vector<8x16xf32>
    %613 = vector.shape_cast %606 : vector<8x1xi1> to vector<8x1xi1>
    %614 = vector.broadcast %613 : vector<8x1xi1> to vector<8x16xi1>
    %615 = arith.select %614, %602, %543 : vector<8x16xi1>, vector<8x16xf32>
    %616 = vector.shape_cast %606 : vector<8x1xi1> to vector<8x1xi1>
    %617 = vector.broadcast %616 : vector<8x1xi1> to vector<8x16xi1>
    %618 = arith.select %617, %599, %546 : vector<8x16xi1>, vector<8x16xf32>
    %cst_191 = arith.constant 0.000000e+00 : f32
    %619 = vector.shape_cast %604 : vector<8x1xi1> to vector<8x1xi1>
    %620 = vector.broadcast %619 : vector<8x1xi1> to vector<8x16xi1>
    %621 = vector.broadcast %cst_191 : f32 to vector<8x16xf32>
    %622 = arith.select %620, %587, %621 : vector<8x16xi1>, vector<8x16xf32>
    %c7_192 = arith.constant 7 : index
    %c0_193 = arith.constant 0 : index
    %c0_194 = arith.constant 0 : index
    %623 = vector.load %arg12[%c7_192, %c0_193, %c0_194] : memref<8x8x16xf32, #tpu.memory_space<vmem>>, vector<1x8x16xf32>
    %624 = vector.shape_cast %623 : vector<1x8x16xf32> to vector<8x16xf32>
    %625 = vector.shape_cast %622 : vector<8x16xf32> to vector<1x8x16xf32>
    tpu.vector_store %arg12[%c7_192, %c0_193, %c0_194], %625 {strides = array<i32>} : memref<8x8x16xf32, #tpu.memory_space<vmem>>, vector<1x8x16xf32>,
    %cst_195 = arith.constant 0.000000e+00 : f32
    %626 = vector.shape_cast %606 : vector<8x1xi1> to vector<8x1xi1>
    %627 = vector.broadcast %626 : vector<8x1xi1> to vector<8x16xi1>
    %628 = vector.broadcast %cst_195 : f32 to vector<8x16xf32>
    %629 = arith.select %627, %602, %628 : vector<8x16xi1>, vector<8x16xf32>
    %c0_196 = arith.constant 0 : index
    %c0_197 = arith.constant 0 : index
    %c0_198 = arith.constant 0 : index
    %630 = vector.load %arg13[%c0_196, %c0_197, %c0_198] : memref<8x8x16xf32, #tpu.memory_space<vmem>>, vector<1x8x16xf32>
    %631 = vector.shape_cast %630 : vector<1x8x16xf32> to vector<8x16xf32>
    %632 = vector.shape_cast %629 : vector<8x16xf32> to vector<1x8x16xf32>
    tpu.vector_store %arg13[%c0_196, %c0_197, %c0_198], %632 {strides = array<i32>} : memref<8x8x16xf32, #tpu.memory_space<vmem>>, vector<1x8x16xf32>,
    %c0_199 = arith.constant 0 : index
    %c0_200 = arith.constant 0 : index
    %c0_201 = arith.constant 0 : index
    %633 = vector.load %arg14[%c0_199, %c0_200, %c0_201] : memref<2x8x16xf32, #tpu.memory_space<vmem>>, vector<1x8x16xf32>
    %634 = vector.shape_cast %633 : vector<1x8x16xf32> to vector<8x16xf32>
    %635 = vector.shape_cast %609 : vector<8x16xf32> to vector<1x8x16xf32>
    tpu.vector_store %arg14[%c0_199, %c0_200, %c0_201], %635 {strides = array<i32>} : memref<2x8x16xf32, #tpu.memory_space<vmem>>, vector<1x8x16xf32>,
    %c1_202 = arith.constant 1 : index
    %c0_203 = arith.constant 0 : index
    %c0_204 = arith.constant 0 : index
    %636 = vector.load %arg14[%c1_202, %c0_203, %c0_204] : memref<2x8x16xf32, #tpu.memory_space<vmem>>, vector<1x8x16xf32>
    %637 = vector.shape_cast %636 : vector<1x8x16xf32> to vector<8x16xf32>
    %638 = vector.shape_cast %615 : vector<8x16xf32> to vector<1x8x16xf32>
    tpu.vector_store %arg14[%c1_202, %c0_203, %c0_204], %638 {strides = array<i32>} : memref<2x8x16xf32, #tpu.memory_space<vmem>>, vector<1x8x16xf32>,
    %c0_205 = arith.constant 0 : index
    %c0_206 = arith.constant 0 : index
    %c0_207 = arith.constant 0 : index
    %639 = vector.load %arg15[%c0_205, %c0_206, %c0_207] : memref<2x8x16xf32, #tpu.memory_space<vmem>>, vector<1x8x16xf32>
    %640 = vector.shape_cast %639 : vector<1x8x16xf32> to vector<8x16xf32>
    %641 = vector.shape_cast %612 : vector<8x16xf32> to vector<1x8x16xf32>
    tpu.vector_store %arg15[%c0_205, %c0_206, %c0_207], %641 {strides = array<i32>} : memref<2x8x16xf32, #tpu.memory_space<vmem>>, vector<1x8x16xf32>,
    %c1_208 = arith.constant 1 : index
    %c0_209 = arith.constant 0 : index
    %c0_210 = arith.constant 0 : index
    %642 = vector.load %arg15[%c1_208, %c0_209, %c0_210] : memref<2x8x16xf32, #tpu.memory_space<vmem>>, vector<1x8x16xf32>
    %643 = vector.shape_cast %642 : vector<1x8x16xf32> to vector<8x16xf32>
    %644 = vector.shape_cast %618 : vector<8x16xf32> to vector<1x8x16xf32>
    tpu.vector_store %arg15[%c1_208, %c0_209, %c0_210], %644 {strides = array<i32>} : memref<2x8x16xf32, #tpu.memory_space<vmem>>, vector<1x8x16xf32>,
    return
  }
  func.func @transform_0(%arg0: i32) -> (i32, i32) {
    %c0_i32 = arith.constant 0 : i32
    %c0_i32_0 = arith.constant 0 : i32
    %c0_i32_1 = arith.constant 0 : i32
    return %c0_i32, %c0_i32_0 : i32, i32
  }
  func.func @transform_1(%arg0: i32) -> (i32, i32, i32) {
    %c0_i32 = arith.constant 0 : i32
    %c0_i32_0 = arith.constant 0 : i32
    %c0_i32_1 = arith.constant 0 : i32
    return %arg0, %c0_i32, %c0_i32_0 : i32, i32, i32
  }
  func.func @transform_2(%arg0: i32) -> (i32, i32, i32) {
    %c0_i32 = arith.constant 0 : i32
    %c0_i32_0 = arith.constant 0 : i32
    %c0_i32_1 = arith.constant 0 : i32
    return %arg0, %c0_i32, %c0_i32_0 : i32, i32, i32
  }
  func.func @transform_3(%arg0: i32) -> (i32, i32, i32) {
    %c0_i32 = arith.constant 0 : i32
    %0 = arith.subi %c0_i32, %arg0 : i32
    %c0_i32_0 = arith.constant 0 : i32
    %c0_i32_1 = arith.constant 0 : i32
    %c0_i32_2 = arith.constant 0 : i32
    return %0, %c0_i32_0, %c0_i32_1 : i32, i32, i32
  }
  func.func @transform_4(%arg0: i32) -> (i32, i32, i32) {
    %c0_i32 = arith.constant 0 : i32
    %0 = arith.subi %c0_i32, %arg0 : i32
    %c0_i32_0 = arith.constant 0 : i32
    %c0_i32_1 = arith.constant 0 : i32
    %c0_i32_2 = arith.constant 0 : i32
    return %0, %c0_i32_0, %c0_i32_1 : i32, i32, i32
  }
  func.func @transform_5(%arg0: i32) -> (i32, i32, i32) {
    %c0_i32 = arith.constant 0 : i32
    %c0_i32_0 = arith.constant 0 : i32
    %c0_i32_1 = arith.constant 0 : i32
    %c0_i32_2 = arith.constant 0 : i32
    return %c0_i32, %c0_i32_0, %c0_i32_1 : i32, i32, i32
  }
  func.func @transform_6(%arg0: i32) -> (i32, i32, i32) {
    %c0_i32 = arith.constant 0 : i32
    %c0_i32_0 = arith.constant 0 : i32
    %c0_i32_1 = arith.constant 0 : i32
    %c0_i32_2 = arith.constant 0 : i32
    return %c0_i32, %c0_i32_0, %c0_i32_1 : i32, i32, i32
  }
  func.func @transform_7(%arg0: i32) -> (i32, i32, i32) {
    %c0_i32 = arith.constant 0 : i32
    %c0_i32_0 = arith.constant 0 : i32
    %c0_i32_1 = arith.constant 0 : i32
    %c0_i32_2 = arith.constant 0 : i32
    return %c0_i32, %c0_i32_0, %c0_i32_1 : i32, i32, i32
  }
  func.func @transform_8(%arg0: i32) -> (i32, i32, i32) {
    %c0_i32 = arith.constant 0 : i32
    %c0_i32_0 = arith.constant 0 : i32
    %c0_i32_1 = arith.constant 0 : i32
    %c0_i32_2 = arith.constant 0 : i32
    return %c0_i32, %c0_i32_0, %c0_i32_1 : i32, i32, i32
  }
  func.func @transform_9(%arg0: i32) -> (i32, i32, i32) {
    %c0_i32 = arith.constant 0 : i32
    %c0_i32_0 = arith.constant 0 : i32
    %c0_i32_1 = arith.constant 0 : i32
    %c0_i32_2 = arith.constant 0 : i32
    return %c0_i32, %c0_i32_0, %c0_i32_1 : i32, i32, i32
  }
  func.func @transform_10(%arg0: i32) -> (i32, i32, i32) {
    %c0_i32 = arith.constant 0 : i32
    %c0_i32_0 = arith.constant 0 : i32
    %c0_i32_1 = arith.constant 0 : i32
    %c0_i32_2 = arith.constant 0 : i32
    return %c0_i32, %c0_i32_0, %c0_i32_1 : i32, i32, i32
  }
  func.func @transform_11(%arg0: i32) -> (i32, i32, i32) {
    %c0_i32 = arith.constant 0 : i32
    %c0_i32_0 = arith.constant 0 : i32
    %c0_i32_1 = arith.constant 0 : i32
    return %arg0, %c0_i32, %c0_i32_0 : i32, i32, i32
  }
  func.func @transform_12(%arg0: i32) -> (i32, i32, i32) {
    %c0_i32 = arith.constant 0 : i32
    %0 = arith.subi %c0_i32, %arg0 : i32
    %c0_i32_0 = arith.constant 0 : i32
    %c0_i32_1 = arith.constant 0 : i32
    %c0_i32_2 = arith.constant 0 : i32
    return %0, %c0_i32_0, %c0_i32_1 : i32, i32, i32
  }
}

module attributes {stable_mosaic.version = 11 : i64} {
  func.func @_lstm_layer_kernel(%arg0: i32, %arg1: memref<8x1xi32, #tpu.memory_space<vmem>>, %arg2: memref<8x8x32xf32, #tpu.memory_space<vmem>>, %arg3: memref<8x8x32xf32, #tpu.memory_space<vmem>>, %arg4: memref<2x32x64xbf16, #tpu.memory_space<vmem>>, %arg5: memref<2x16x64xbf16, #tpu.memory_space<vmem>>, %arg6: memref<2x1x64xf32, #tpu.memory_space<vmem>>, %arg7: memref<2x8x16xf32, #tpu.memory_space<vmem>>, %arg8: memref<2x8x16xf32, #tpu.memory_space<vmem>>, %arg9: memref<8x8x16xf32, #tpu.memory_space<vmem>>, %arg10: memref<8x8x16xf32, #tpu.memory_space<vmem>>, %arg11: memref<2x8x16xf32, #tpu.memory_space<vmem>>, %arg12: memref<2x8x16xf32, #tpu.memory_space<vmem>>, %arg13: memref<8x8x64xf32, #tpu.memory_space<vmem>>, %arg14: memref<8x8x64xf32, #tpu.memory_space<vmem>>) attributes {dimension_semantics = [#tpu.dimension_semantics<arbitrary>], iteration_bounds = array<i64: 1>, scalar_prefetch = 0 : i64, scratch_operands = 4 : i64, tpu.core_type = #tpu.core_type<tc>, window_params = [{pipeline_mode = #tpu.pipeline_mode<synchronous>, transform_indices = @transform_0, window_bounds = array<i64: 8, 1>}, {transform_indices = @transform_1, window_bounds = array<i64: 8, 8, 32>}, {transform_indices = @transform_2, window_bounds = array<i64: 8, 8, 32>}, {pipeline_mode = #tpu.pipeline_mode<synchronous>, transform_indices = @transform_3, window_bounds = array<i64: 2, 32, 64>}, {pipeline_mode = #tpu.pipeline_mode<synchronous>, transform_indices = @transform_4, window_bounds = array<i64: 2, 16, 64>}, {pipeline_mode = #tpu.pipeline_mode<synchronous>, transform_indices = @transform_5, window_bounds = array<i64: 2, 1, 64>}, {pipeline_mode = #tpu.pipeline_mode<synchronous>, transform_indices = @transform_6, window_bounds = array<i64: 2, 8, 16>}, {pipeline_mode = #tpu.pipeline_mode<synchronous>, transform_indices = @transform_7, window_bounds = array<i64: 2, 8, 16>}, {transform_indices = @transform_8, window_bounds = array<i64: 8, 8, 16>}, {transform_indices = @transform_9, window_bounds = array<i64: 8, 8, 16>}]} {
    %c0_i32 = arith.constant 0 : i32
    %0 = arith.cmpi eq, %arg0, %c0_i32 : i32
    %1 = arith.extui %0 : i1 to i32
    %c0_i32_0 = arith.constant 0 : i32
    %2 = arith.cmpi ne, %1, %c0_i32_0 : i32
    scf.if %2 {
      %c0_197 = arith.constant 0 : index
      %c0_198 = arith.constant 0 : index
      %c0_199 = arith.constant 0 : index
      %631 = vector.load %arg7[%c0_197, %c0_198, %c0_199] : memref<2x8x16xf32, #tpu.memory_space<vmem>>, vector<2x8x16xf32>
      %c0_200 = arith.constant 0 : index
      %c0_201 = arith.constant 0 : index
      %c0_202 = arith.constant 0 : index
      %632 = vector.load %arg11[%c0_200, %c0_201, %c0_202] : memref<2x8x16xf32, #tpu.memory_space<vmem>>, vector<2x8x16xf32>
      tpu.vector_store %arg11[%c0_200, %c0_201, %c0_202], %631 {strides = array<i32>} : memref<2x8x16xf32, #tpu.memory_space<vmem>>, vector<2x8x16xf32>,
      %c0_203 = arith.constant 0 : index
      %c0_204 = arith.constant 0 : index
      %c0_205 = arith.constant 0 : index
      %633 = vector.load %arg8[%c0_203, %c0_204, %c0_205] : memref<2x8x16xf32, #tpu.memory_space<vmem>>, vector<2x8x16xf32>
      %c0_206 = arith.constant 0 : index
      %c0_207 = arith.constant 0 : index
      %c0_208 = arith.constant 0 : index
      %634 = vector.load %arg12[%c0_206, %c0_207, %c0_208] : memref<2x8x16xf32, #tpu.memory_space<vmem>>, vector<2x8x16xf32>
      tpu.vector_store %arg12[%c0_206, %c0_207, %c0_208], %633 {strides = array<i32>} : memref<2x8x16xf32, #tpu.memory_space<vmem>>, vector<2x8x16xf32>,
    } else {
    }
    %c0 = arith.constant 0 : index
    %c0_1 = arith.constant 0 : index
    %c0_2 = arith.constant 0 : index
    %3 = vector.load %arg2[%c0, %c0_1, %c0_2] : memref<8x8x32xf32, #tpu.memory_space<vmem>>, vector<8x8x32xf32>
    %4 = vector.shape_cast %3 : vector<8x8x32xf32> to vector<64x32xf32>
    %5 = arith.truncf %4 : vector<64x32xf32> to vector<64x32xbf16>
    %c0_3 = arith.constant 0 : index
    %c0_4 = arith.constant 0 : index
    %c0_5 = arith.constant 0 : index
    %6 = vector.load %arg4[%c0_3, %c0_4, %c0_5] : memref<2x32x64xbf16, #tpu.memory_space<vmem>>, vector<1x32x64xbf16>
    %7 = vector.shape_cast %6 : vector<1x32x64xbf16> to vector<32x64xbf16>
    %cst = arith.constant dense<0.000000e+00> : vector<64x64xf32>
    %8 = tpu.matmul %5, %7, %cst {dimension_numbers = #tpu.dot_dimension_numbers<[1], [0], [0], [1], [0, 0, 1, 1], [], []>} : vector<64x32xbf16>, vector<32x64xbf16>, vector<64x64xf32> -> vector<64x64xf32>
    %c0_6 = arith.constant 0 : index
    %c0_7 = arith.constant 0 : index
    %c0_8 = arith.constant 0 : index
    %9 = vector.load %arg6[%c0_6, %c0_7, %c0_8] : memref<2x1x64xf32, #tpu.memory_space<vmem>>, vector<1x1x64xf32>
    %10 = vector.shape_cast %9 : vector<1x1x64xf32> to vector<1x64xf32>
    %11 = vector.broadcast %10 : vector<1x64xf32> to vector<64x64xf32>
    %12 = arith.addf %8, %11 : vector<64x64xf32>
    %13 = vector.shape_cast %12 : vector<64x64xf32> to vector<8x8x64xf32>
    %c0_9 = arith.constant 0 : index
    %c0_10 = arith.constant 0 : index
    %c0_11 = arith.constant 0 : index
    %14 = vector.load %arg13[%c0_9, %c0_10, %c0_11] : memref<8x8x64xf32, #tpu.memory_space<vmem>>, vector<8x8x64xf32>
    tpu.vector_store %arg13[%c0_9, %c0_10, %c0_11], %13 {strides = array<i32>} : memref<8x8x64xf32, #tpu.memory_space<vmem>>, vector<8x8x64xf32>,
    %c0_12 = arith.constant 0 : index
    %c0_13 = arith.constant 0 : index
    %c0_14 = arith.constant 0 : index
    %15 = vector.load %arg3[%c0_12, %c0_13, %c0_14] : memref<8x8x32xf32, #tpu.memory_space<vmem>>, vector<8x8x32xf32>
    %16 = vector.shape_cast %15 : vector<8x8x32xf32> to vector<64x32xf32>
    %17 = arith.truncf %16 : vector<64x32xf32> to vector<64x32xbf16>
    %c1 = arith.constant 1 : index
    %c0_15 = arith.constant 0 : index
    %c0_16 = arith.constant 0 : index
    %18 = vector.load %arg4[%c1, %c0_15, %c0_16] : memref<2x32x64xbf16, #tpu.memory_space<vmem>>, vector<1x32x64xbf16>
    %19 = vector.shape_cast %18 : vector<1x32x64xbf16> to vector<32x64xbf16>
    %cst_17 = arith.constant dense<0.000000e+00> : vector<64x64xf32>
    %20 = tpu.matmul %17, %19, %cst_17 {dimension_numbers = #tpu.dot_dimension_numbers<[1], [0], [0], [1], [0, 0, 1, 1], [], []>} : vector<64x32xbf16>, vector<32x64xbf16>, vector<64x64xf32> -> vector<64x64xf32>
    %c1_18 = arith.constant 1 : index
    %c0_19 = arith.constant 0 : index
    %c0_20 = arith.constant 0 : index
    %21 = vector.load %arg6[%c1_18, %c0_19, %c0_20] : memref<2x1x64xf32, #tpu.memory_space<vmem>>, vector<1x1x64xf32>
    %22 = vector.shape_cast %21 : vector<1x1x64xf32> to vector<1x64xf32>
    %23 = vector.broadcast %22 : vector<1x64xf32> to vector<64x64xf32>
    %24 = arith.addf %20, %23 : vector<64x64xf32>
    %25 = vector.shape_cast %24 : vector<64x64xf32> to vector<8x8x64xf32>
    %c0_21 = arith.constant 0 : index
    %c0_22 = arith.constant 0 : index
    %c0_23 = arith.constant 0 : index
    %26 = vector.load %arg14[%c0_21, %c0_22, %c0_23] : memref<8x8x64xf32, #tpu.memory_space<vmem>>, vector<8x8x64xf32>
    tpu.vector_store %arg14[%c0_21, %c0_22, %c0_23], %25 {strides = array<i32>} : memref<8x8x64xf32, #tpu.memory_space<vmem>>, vector<8x8x64xf32>,
    %c0_24 = arith.constant 0 : index
    %c0_25 = arith.constant 0 : index
    %c0_26 = arith.constant 0 : index
    %27 = vector.load %arg5[%c0_24, %c0_25, %c0_26] : memref<2x16x64xbf16, #tpu.memory_space<vmem>>, vector<1x16x64xbf16>
    %28 = vector.shape_cast %27 : vector<1x16x64xbf16> to vector<16x64xbf16>
    %c1_27 = arith.constant 1 : index
    %c0_28 = arith.constant 0 : index
    %c0_29 = arith.constant 0 : index
    %29 = vector.load %arg5[%c1_27, %c0_28, %c0_29] : memref<2x16x64xbf16, #tpu.memory_space<vmem>>, vector<1x16x64xbf16>
    %30 = vector.shape_cast %29 : vector<1x16x64xbf16> to vector<16x64xbf16>
    %c0_30 = arith.constant 0 : index
    %c0_31 = arith.constant 0 : index
    %31 = vector.load %arg1[%c0_30, %c0_31] : memref<8x1xi32, #tpu.memory_space<vmem>>, vector<8x1xi32>
    %c0_32 = arith.constant 0 : index
    %c0_33 = arith.constant 0 : index
    %c0_34 = arith.constant 0 : index
    %32 = vector.load %arg11[%c0_32, %c0_33, %c0_34] : memref<2x8x16xf32, #tpu.memory_space<vmem>>, vector<2x8x16xf32>
    %c0_35 = arith.constant 0 : index
    %c0_36 = arith.constant 0 : index
    %c0_37 = arith.constant 0 : index
    %33 = vector.load %arg12[%c0_35, %c0_36, %c0_37] : memref<2x8x16xf32, #tpu.memory_space<vmem>>, vector<2x8x16xf32>
    %34 = vector.extract_strided_slice %32 {offsets = [0, 0, 0], sizes = [1, 8, 16], strides = [1, 1, 1]} : vector<2x8x16xf32> to vector<1x8x16xf32>
    %35 = vector.shape_cast %34 : vector<1x8x16xf32> to vector<8x16xf32>
    %36 = vector.extract_strided_slice %32 {offsets = [1, 0, 0], sizes = [1, 8, 16], strides = [1, 1, 1]} : vector<2x8x16xf32> to vector<1x8x16xf32>
    %37 = vector.shape_cast %36 : vector<1x8x16xf32> to vector<8x16xf32>
    %38 = vector.extract_strided_slice %33 {offsets = [0, 0, 0], sizes = [1, 8, 16], strides = [1, 1, 1]} : vector<2x8x16xf32> to vector<1x8x16xf32>
    %39 = vector.shape_cast %38 : vector<1x8x16xf32> to vector<8x16xf32>
    %40 = vector.extract_strided_slice %33 {offsets = [1, 0, 0], sizes = [1, 8, 16], strides = [1, 1, 1]} : vector<2x8x16xf32> to vector<1x8x16xf32>
    %41 = vector.shape_cast %40 : vector<1x8x16xf32> to vector<8x16xf32>
    %c8_i32 = arith.constant 8 : i32
    %42 = arith.muli %arg0, %c8_i32 : i32
    %c0_i32_38 = arith.constant 0 : i32
    %43 = arith.addi %42, %c0_i32_38 : i32
    %c7_i32 = arith.constant 7 : i32
    %44 = arith.subi %c7_i32, %43 : i32
    %c0_39 = arith.constant 0 : index
    %c0_40 = arith.constant 0 : index
    %c0_41 = arith.constant 0 : index
    %45 = vector.load %arg13[%c0_39, %c0_40, %c0_41] : memref<8x8x64xf32, #tpu.memory_space<vmem>>, vector<1x8x64xf32>
    %46 = vector.shape_cast %45 : vector<1x8x64xf32> to vector<8x64xf32>
    %47 = arith.truncf %35 : vector<8x16xf32> to vector<8x16xbf16>
    %cst_42 = arith.constant dense<0.000000e+00> : vector<8x64xf32>
    %48 = tpu.matmul %47, %28, %cst_42 {dimension_numbers = #tpu.dot_dimension_numbers<[1], [0], [0], [1], [0, 0, 1, 1], [], []>} : vector<8x16xbf16>, vector<16x64xbf16>, vector<8x64xf32> -> vector<8x64xf32>
    %49 = arith.addf %46, %48 : vector<8x64xf32>
    %c7 = arith.constant 7 : index
    %c0_43 = arith.constant 0 : index
    %c0_44 = arith.constant 0 : index
    %50 = vector.load %arg14[%c7, %c0_43, %c0_44] : memref<8x8x64xf32, #tpu.memory_space<vmem>>, vector<1x8x64xf32>
    %51 = vector.shape_cast %50 : vector<1x8x64xf32> to vector<8x64xf32>
    %52 = arith.truncf %37 : vector<8x16xf32> to vector<8x16xbf16>
    %cst_45 = arith.constant dense<0.000000e+00> : vector<8x64xf32>
    %53 = tpu.matmul %52, %30, %cst_45 {dimension_numbers = #tpu.dot_dimension_numbers<[1], [0], [0], [1], [0, 0, 1, 1], [], []>} : vector<8x16xbf16>, vector<16x64xbf16>, vector<8x64xf32> -> vector<8x64xf32>
    %54 = arith.addf %51, %53 : vector<8x64xf32>
    %55 = arith.negf %49 : vector<8x64xf32>
    %56 = math.exp %55 : vector<8x64xf32>
    %cst_46 = arith.constant 1.000000e+00 : f32
    %57 = vector.broadcast %cst_46 : f32 to vector<8x64xf32>
    %58 = arith.addf %57, %56 : vector<8x64xf32>
    %59 = arith.divf %57, %58 : vector<8x64xf32>
    %60 = vector.extract_strided_slice %49 {offsets = [0, 32], sizes = [8, 16], strides = [1, 1]} : vector<8x64xf32> to vector<8x16xf32>
    %61 = math.tanh %60 : vector<8x16xf32>
    %62 = vector.extract_strided_slice %59 {offsets = [0, 16], sizes = [8, 16], strides = [1, 1]} : vector<8x64xf32> to vector<8x16xf32>
    %63 = arith.mulf %62, %39 : vector<8x16xf32>
    %64 = vector.extract_strided_slice %59 {offsets = [0, 0], sizes = [8, 16], strides = [1, 1]} : vector<8x64xf32> to vector<8x16xf32>
    %65 = arith.mulf %64, %61 : vector<8x16xf32>
    %66 = arith.addf %63, %65 : vector<8x16xf32>
    %67 = vector.extract_strided_slice %59 {offsets = [0, 48], sizes = [8, 16], strides = [1, 1]} : vector<8x64xf32> to vector<8x16xf32>
    %68 = math.tanh %66 : vector<8x16xf32>
    %69 = arith.mulf %67, %68 : vector<8x16xf32>
    %70 = arith.negf %54 : vector<8x64xf32>
    %71 = math.exp %70 : vector<8x64xf32>
    %cst_47 = arith.constant 1.000000e+00 : f32
    %72 = vector.broadcast %cst_47 : f32 to vector<8x64xf32>
    %73 = arith.addf %72, %71 : vector<8x64xf32>
    %74 = arith.divf %72, %73 : vector<8x64xf32>
    %75 = vector.extract_strided_slice %54 {offsets = [0, 32], sizes = [8, 16], strides = [1, 1]} : vector<8x64xf32> to vector<8x16xf32>
    %76 = math.tanh %75 : vector<8x16xf32>
    %77 = vector.extract_strided_slice %74 {offsets = [0, 16], sizes = [8, 16], strides = [1, 1]} : vector<8x64xf32> to vector<8x16xf32>
    %78 = arith.mulf %77, %41 : vector<8x16xf32>
    %79 = vector.extract_strided_slice %74 {offsets = [0, 0], sizes = [8, 16], strides = [1, 1]} : vector<8x64xf32> to vector<8x16xf32>
    %80 = arith.mulf %79, %76 : vector<8x16xf32>
    %81 = arith.addf %78, %80 : vector<8x16xf32>
    %82 = vector.extract_strided_slice %74 {offsets = [0, 48], sizes = [8, 16], strides = [1, 1]} : vector<8x64xf32> to vector<8x16xf32>
    %83 = math.tanh %81 : vector<8x16xf32>
    %84 = arith.mulf %82, %83 : vector<8x16xf32>
    %85 = vector.broadcast %43 : i32 to vector<8x1xi32>
    %86 = arith.cmpi slt, %85, %31 : vector<8x1xi32>
    %87 = vector.broadcast %44 : i32 to vector<8x1xi32>
    %88 = arith.cmpi slt, %87, %31 : vector<8x1xi32>
    %89 = vector.shape_cast %86 : vector<8x1xi1> to vector<8x1xi1>
    %90 = vector.broadcast %89 : vector<8x1xi1> to vector<8x16xi1>
    %91 = arith.select %90, %69, %35 : vector<8x16xi1>, vector<8x16xf32>
    %92 = vector.shape_cast %86 : vector<8x1xi1> to vector<8x1xi1>
    %93 = vector.broadcast %92 : vector<8x1xi1> to vector<8x16xi1>
    %94 = arith.select %93, %66, %39 : vector<8x16xi1>, vector<8x16xf32>
    %95 = vector.shape_cast %88 : vector<8x1xi1> to vector<8x1xi1>
    %96 = vector.broadcast %95 : vector<8x1xi1> to vector<8x16xi1>
    %97 = arith.select %96, %84, %37 : vector<8x16xi1>, vector<8x16xf32>
    %98 = vector.shape_cast %88 : vector<8x1xi1> to vector<8x1xi1>
    %99 = vector.broadcast %98 : vector<8x1xi1> to vector<8x16xi1>
    %100 = arith.select %99, %81, %41 : vector<8x16xi1>, vector<8x16xf32>
    %cst_48 = arith.constant 0.000000e+00 : f32
    %101 = vector.shape_cast %86 : vector<8x1xi1> to vector<8x1xi1>
    %102 = vector.broadcast %101 : vector<8x1xi1> to vector<8x16xi1>
    %103 = vector.broadcast %cst_48 : f32 to vector<8x16xf32>
    %104 = arith.select %102, %69, %103 : vector<8x16xi1>, vector<8x16xf32>
    %c0_49 = arith.constant 0 : index
    %c0_50 = arith.constant 0 : index
    %c0_51 = arith.constant 0 : index
    %105 = vector.load %arg9[%c0_49, %c0_50, %c0_51] : memref<8x8x16xf32, #tpu.memory_space<vmem>>, vector<1x8x16xf32>
    %106 = vector.shape_cast %105 : vector<1x8x16xf32> to vector<8x16xf32>
    %107 = vector.shape_cast %104 : vector<8x16xf32> to vector<1x8x16xf32>
    tpu.vector_store %arg9[%c0_49, %c0_50, %c0_51], %107 {strides = array<i32>} : memref<8x8x16xf32, #tpu.memory_space<vmem>>, vector<1x8x16xf32>,
    %cst_52 = arith.constant 0.000000e+00 : f32
    %108 = vector.shape_cast %88 : vector<8x1xi1> to vector<8x1xi1>
    %109 = vector.broadcast %108 : vector<8x1xi1> to vector<8x16xi1>
    %110 = vector.broadcast %cst_52 : f32 to vector<8x16xf32>
    %111 = arith.select %109, %84, %110 : vector<8x16xi1>, vector<8x16xf32>
    %c7_53 = arith.constant 7 : index
    %c0_54 = arith.constant 0 : index
    %c0_55 = arith.constant 0 : index
    %112 = vector.load %arg10[%c7_53, %c0_54, %c0_55] : memref<8x8x16xf32, #tpu.memory_space<vmem>>, vector<1x8x16xf32>
    %113 = vector.shape_cast %112 : vector<1x8x16xf32> to vector<8x16xf32>
    %114 = vector.shape_cast %111 : vector<8x16xf32> to vector<1x8x16xf32>
    tpu.vector_store %arg10[%c7_53, %c0_54, %c0_55], %114 {strides = array<i32>} : memref<8x8x16xf32, #tpu.memory_space<vmem>>, vector<1x8x16xf32>,
    %c1_i32 = arith.constant 1 : i32
    %115 = arith.addi %42, %c1_i32 : i32
    %c7_i32_56 = arith.constant 7 : i32
    %116 = arith.subi %c7_i32_56, %115 : i32
    %c1_57 = arith.constant 1 : index
    %c0_58 = arith.constant 0 : index
    %c0_59 = arith.constant 0 : index
    %117 = vector.load %arg13[%c1_57, %c0_58, %c0_59] : memref<8x8x64xf32, #tpu.memory_space<vmem>>, vector<1x8x64xf32>
    %118 = vector.shape_cast %117 : vector<1x8x64xf32> to vector<8x64xf32>
    %119 = arith.truncf %91 : vector<8x16xf32> to vector<8x16xbf16>
    %cst_60 = arith.constant dense<0.000000e+00> : vector<8x64xf32>
    %120 = tpu.matmul %119, %28, %cst_60 {dimension_numbers = #tpu.dot_dimension_numbers<[1], [0], [0], [1], [0, 0, 1, 1], [], []>} : vector<8x16xbf16>, vector<16x64xbf16>, vector<8x64xf32> -> vector<8x64xf32>
    %121 = arith.addf %118, %120 : vector<8x64xf32>
    %c6 = arith.constant 6 : index
    %c0_61 = arith.constant 0 : index
    %c0_62 = arith.constant 0 : index
    %122 = vector.load %arg14[%c6, %c0_61, %c0_62] : memref<8x8x64xf32, #tpu.memory_space<vmem>>, vector<1x8x64xf32>
    %123 = vector.shape_cast %122 : vector<1x8x64xf32> to vector<8x64xf32>
    %124 = arith.truncf %97 : vector<8x16xf32> to vector<8x16xbf16>
    %cst_63 = arith.constant dense<0.000000e+00> : vector<8x64xf32>
    %125 = tpu.matmul %124, %30, %cst_63 {dimension_numbers = #tpu.dot_dimension_numbers<[1], [0], [0], [1], [0, 0, 1, 1], [], []>} : vector<8x16xbf16>, vector<16x64xbf16>, vector<8x64xf32> -> vector<8x64xf32>
    %126 = arith.addf %123, %125 : vector<8x64xf32>
    %127 = arith.negf %121 : vector<8x64xf32>
    %128 = math.exp %127 : vector<8x64xf32>
    %cst_64 = arith.constant 1.000000e+00 : f32
    %129 = vector.broadcast %cst_64 : f32 to vector<8x64xf32>
    %130 = arith.addf %129, %128 : vector<8x64xf32>
    %131 = arith.divf %129, %130 : vector<8x64xf32>
    %132 = vector.extract_strided_slice %121 {offsets = [0, 32], sizes = [8, 16], strides = [1, 1]} : vector<8x64xf32> to vector<8x16xf32>
    %133 = math.tanh %132 : vector<8x16xf32>
    %134 = vector.extract_strided_slice %131 {offsets = [0, 16], sizes = [8, 16], strides = [1, 1]} : vector<8x64xf32> to vector<8x16xf32>
    %135 = arith.mulf %134, %94 : vector<8x16xf32>
    %136 = vector.extract_strided_slice %131 {offsets = [0, 0], sizes = [8, 16], strides = [1, 1]} : vector<8x64xf32> to vector<8x16xf32>
    %137 = arith.mulf %136, %133 : vector<8x16xf32>
    %138 = arith.addf %135, %137 : vector<8x16xf32>
    %139 = vector.extract_strided_slice %131 {offsets = [0, 48], sizes = [8, 16], strides = [1, 1]} : vector<8x64xf32> to vector<8x16xf32>
    %140 = math.tanh %138 : vector<8x16xf32>
    %141 = arith.mulf %139, %140 : vector<8x16xf32>
    %142 = arith.negf %126 : vector<8x64xf32>
    %143 = math.exp %142 : vector<8x64xf32>
    %cst_65 = arith.constant 1.000000e+00 : f32
    %144 = vector.broadcast %cst_65 : f32 to vector<8x64xf32>
    %145 = arith.addf %144, %143 : vector<8x64xf32>
    %146 = arith.divf %144, %145 : vector<8x64xf32>
    %147 = vector.extract_strided_slice %126 {offsets = [0, 32], sizes = [8, 16], strides = [1, 1]} : vector<8x64xf32> to vector<8x16xf32>
    %148 = math.tanh %147 : vector<8x16xf32>
    %149 = vector.extract_strided_slice %146 {offsets = [0, 16], sizes = [8, 16], strides = [1, 1]} : vector<8x64xf32> to vector<8x16xf32>
    %150 = arith.mulf %149, %100 : vector<8x16xf32>
    %151 = vector.extract_strided_slice %146 {offsets = [0, 0], sizes = [8, 16], strides = [1, 1]} : vector<8x64xf32> to vector<8x16xf32>
    %152 = arith.mulf %151, %148 : vector<8x16xf32>
    %153 = arith.addf %150, %152 : vector<8x16xf32>
    %154 = vector.extract_strided_slice %146 {offsets = [0, 48], sizes = [8, 16], strides = [1, 1]} : vector<8x64xf32> to vector<8x16xf32>
    %155 = math.tanh %153 : vector<8x16xf32>
    %156 = arith.mulf %154, %155 : vector<8x16xf32>
    %157 = vector.broadcast %115 : i32 to vector<8x1xi32>
    %158 = arith.cmpi slt, %157, %31 : vector<8x1xi32>
    %159 = vector.broadcast %116 : i32 to vector<8x1xi32>
    %160 = arith.cmpi slt, %159, %31 : vector<8x1xi32>
    %161 = vector.shape_cast %158 : vector<8x1xi1> to vector<8x1xi1>
    %162 = vector.broadcast %161 : vector<8x1xi1> to vector<8x16xi1>
    %163 = arith.select %162, %141, %91 : vector<8x16xi1>, vector<8x16xf32>
    %164 = vector.shape_cast %158 : vector<8x1xi1> to vector<8x1xi1>
    %165 = vector.broadcast %164 : vector<8x1xi1> to vector<8x16xi1>
    %166 = arith.select %165, %138, %94 : vector<8x16xi1>, vector<8x16xf32>
    %167 = vector.shape_cast %160 : vector<8x1xi1> to vector<8x1xi1>
    %168 = vector.broadcast %167 : vector<8x1xi1> to vector<8x16xi1>
    %169 = arith.select %168, %156, %97 : vector<8x16xi1>, vector<8x16xf32>
    %170 = vector.shape_cast %160 : vector<8x1xi1> to vector<8x1xi1>
    %171 = vector.broadcast %170 : vector<8x1xi1> to vector<8x16xi1>
    %172 = arith.select %171, %153, %100 : vector<8x16xi1>, vector<8x16xf32>
    %cst_66 = arith.constant 0.000000e+00 : f32
    %173 = vector.shape_cast %158 : vector<8x1xi1> to vector<8x1xi1>
    %174 = vector.broadcast %173 : vector<8x1xi1> to vector<8x16xi1>
    %175 = vector.broadcast %cst_66 : f32 to vector<8x16xf32>
    %176 = arith.select %174, %141, %175 : vector<8x16xi1>, vector<8x16xf32>
    %c1_67 = arith.constant 1 : index
    %c0_68 = arith.constant 0 : index
    %c0_69 = arith.constant 0 : index
    %177 = vector.load %arg9[%c1_67, %c0_68, %c0_69] : memref<8x8x16xf32, #tpu.memory_space<vmem>>, vector<1x8x16xf32>
    %178 = vector.shape_cast %177 : vector<1x8x16xf32> to vector<8x16xf32>
    %179 = vector.shape_cast %176 : vector<8x16xf32> to vector<1x8x16xf32>
    tpu.vector_store %arg9[%c1_67, %c0_68, %c0_69], %179 {strides = array<i32>} : memref<8x8x16xf32, #tpu.memory_space<vmem>>, vector<1x8x16xf32>,
    %cst_70 = arith.constant 0.000000e+00 : f32
    %180 = vector.shape_cast %160 : vector<8x1xi1> to vector<8x1xi1>
    %181 = vector.broadcast %180 : vector<8x1xi1> to vector<8x16xi1>
    %182 = vector.broadcast %cst_70 : f32 to vector<8x16xf32>
    %183 = arith.select %181, %156, %182 : vector<8x16xi1>, vector<8x16xf32>
    %c6_71 = arith.constant 6 : index
    %c0_72 = arith.constant 0 : index
    %c0_73 = arith.constant 0 : index
    %184 = vector.load %arg10[%c6_71, %c0_72, %c0_73] : memref<8x8x16xf32, #tpu.memory_space<vmem>>, vector<1x8x16xf32>
    %185 = vector.shape_cast %184 : vector<1x8x16xf32> to vector<8x16xf32>
    %186 = vector.shape_cast %183 : vector<8x16xf32> to vector<1x8x16xf32>
    tpu.vector_store %arg10[%c6_71, %c0_72, %c0_73], %186 {strides = array<i32>} : memref<8x8x16xf32, #tpu.memory_space<vmem>>, vector<1x8x16xf32>,
    %c2_i32 = arith.constant 2 : i32
    %187 = arith.addi %42, %c2_i32 : i32
    %c7_i32_74 = arith.constant 7 : i32
    %188 = arith.subi %c7_i32_74, %187 : i32
    %c2 = arith.constant 2 : index
    %c0_75 = arith.constant 0 : index
    %c0_76 = arith.constant 0 : index
    %189 = vector.load %arg13[%c2, %c0_75, %c0_76] : memref<8x8x64xf32, #tpu.memory_space<vmem>>, vector<1x8x64xf32>
    %190 = vector.shape_cast %189 : vector<1x8x64xf32> to vector<8x64xf32>
    %191 = arith.truncf %163 : vector<8x16xf32> to vector<8x16xbf16>
    %cst_77 = arith.constant dense<0.000000e+00> : vector<8x64xf32>
    %192 = tpu.matmul %191, %28, %cst_77 {dimension_numbers = #tpu.dot_dimension_numbers<[1], [0], [0], [1], [0, 0, 1, 1], [], []>} : vector<8x16xbf16>, vector<16x64xbf16>, vector<8x64xf32> -> vector<8x64xf32>
    %193 = arith.addf %190, %192 : vector<8x64xf32>
    %c5 = arith.constant 5 : index
    %c0_78 = arith.constant 0 : index
    %c0_79 = arith.constant 0 : index
    %194 = vector.load %arg14[%c5, %c0_78, %c0_79] : memref<8x8x64xf32, #tpu.memory_space<vmem>>, vector<1x8x64xf32>
    %195 = vector.shape_cast %194 : vector<1x8x64xf32> to vector<8x64xf32>
    %196 = arith.truncf %169 : vector<8x16xf32> to vector<8x16xbf16>
    %cst_80 = arith.constant dense<0.000000e+00> : vector<8x64xf32>
    %197 = tpu.matmul %196, %30, %cst_80 {dimension_numbers = #tpu.dot_dimension_numbers<[1], [0], [0], [1], [0, 0, 1, 1], [], []>} : vector<8x16xbf16>, vector<16x64xbf16>, vector<8x64xf32> -> vector<8x64xf32>
    %198 = arith.addf %195, %197 : vector<8x64xf32>
    %199 = arith.negf %193 : vector<8x64xf32>
    %200 = math.exp %199 : vector<8x64xf32>
    %cst_81 = arith.constant 1.000000e+00 : f32
    %201 = vector.broadcast %cst_81 : f32 to vector<8x64xf32>
    %202 = arith.addf %201, %200 : vector<8x64xf32>
    %203 = arith.divf %201, %202 : vector<8x64xf32>
    %204 = vector.extract_strided_slice %193 {offsets = [0, 32], sizes = [8, 16], strides = [1, 1]} : vector<8x64xf32> to vector<8x16xf32>
    %205 = math.tanh %204 : vector<8x16xf32>
    %206 = vector.extract_strided_slice %203 {offsets = [0, 16], sizes = [8, 16], strides = [1, 1]} : vector<8x64xf32> to vector<8x16xf32>
    %207 = arith.mulf %206, %166 : vector<8x16xf32>
    %208 = vector.extract_strided_slice %203 {offsets = [0, 0], sizes = [8, 16], strides = [1, 1]} : vector<8x64xf32> to vector<8x16xf32>
    %209 = arith.mulf %208, %205 : vector<8x16xf32>
    %210 = arith.addf %207, %209 : vector<8x16xf32>
    %211 = vector.extract_strided_slice %203 {offsets = [0, 48], sizes = [8, 16], strides = [1, 1]} : vector<8x64xf32> to vector<8x16xf32>
    %212 = math.tanh %210 : vector<8x16xf32>
    %213 = arith.mulf %211, %212 : vector<8x16xf32>
    %214 = arith.negf %198 : vector<8x64xf32>
    %215 = math.exp %214 : vector<8x64xf32>
    %cst_82 = arith.constant 1.000000e+00 : f32
    %216 = vector.broadcast %cst_82 : f32 to vector<8x64xf32>
    %217 = arith.addf %216, %215 : vector<8x64xf32>
    %218 = arith.divf %216, %217 : vector<8x64xf32>
    %219 = vector.extract_strided_slice %198 {offsets = [0, 32], sizes = [8, 16], strides = [1, 1]} : vector<8x64xf32> to vector<8x16xf32>
    %220 = math.tanh %219 : vector<8x16xf32>
    %221 = vector.extract_strided_slice %218 {offsets = [0, 16], sizes = [8, 16], strides = [1, 1]} : vector<8x64xf32> to vector<8x16xf32>
    %222 = arith.mulf %221, %172 : vector<8x16xf32>
    %223 = vector.extract_strided_slice %218 {offsets = [0, 0], sizes = [8, 16], strides = [1, 1]} : vector<8x64xf32> to vector<8x16xf32>
    %224 = arith.mulf %223, %220 : vector<8x16xf32>
    %225 = arith.addf %222, %224 : vector<8x16xf32>
    %226 = vector.extract_strided_slice %218 {offsets = [0, 48], sizes = [8, 16], strides = [1, 1]} : vector<8x64xf32> to vector<8x16xf32>
    %227 = math.tanh %225 : vector<8x16xf32>
    %228 = arith.mulf %226, %227 : vector<8x16xf32>
    %229 = vector.broadcast %187 : i32 to vector<8x1xi32>
    %230 = arith.cmpi slt, %229, %31 : vector<8x1xi32>
    %231 = vector.broadcast %188 : i32 to vector<8x1xi32>
    %232 = arith.cmpi slt, %231, %31 : vector<8x1xi32>
    %233 = vector.shape_cast %230 : vector<8x1xi1> to vector<8x1xi1>
    %234 = vector.broadcast %233 : vector<8x1xi1> to vector<8x16xi1>
    %235 = arith.select %234, %213, %163 : vector<8x16xi1>, vector<8x16xf32>
    %236 = vector.shape_cast %230 : vector<8x1xi1> to vector<8x1xi1>
    %237 = vector.broadcast %236 : vector<8x1xi1> to vector<8x16xi1>
    %238 = arith.select %237, %210, %166 : vector<8x16xi1>, vector<8x16xf32>
    %239 = vector.shape_cast %232 : vector<8x1xi1> to vector<8x1xi1>
    %240 = vector.broadcast %239 : vector<8x1xi1> to vector<8x16xi1>
    %241 = arith.select %240, %228, %169 : vector<8x16xi1>, vector<8x16xf32>
    %242 = vector.shape_cast %232 : vector<8x1xi1> to vector<8x1xi1>
    %243 = vector.broadcast %242 : vector<8x1xi1> to vector<8x16xi1>
    %244 = arith.select %243, %225, %172 : vector<8x16xi1>, vector<8x16xf32>
    %cst_83 = arith.constant 0.000000e+00 : f32
    %245 = vector.shape_cast %230 : vector<8x1xi1> to vector<8x1xi1>
    %246 = vector.broadcast %245 : vector<8x1xi1> to vector<8x16xi1>
    %247 = vector.broadcast %cst_83 : f32 to vector<8x16xf32>
    %248 = arith.select %246, %213, %247 : vector<8x16xi1>, vector<8x16xf32>
    %c2_84 = arith.constant 2 : index
    %c0_85 = arith.constant 0 : index
    %c0_86 = arith.constant 0 : index
    %249 = vector.load %arg9[%c2_84, %c0_85, %c0_86] : memref<8x8x16xf32, #tpu.memory_space<vmem>>, vector<1x8x16xf32>
    %250 = vector.shape_cast %249 : vector<1x8x16xf32> to vector<8x16xf32>
    %251 = vector.shape_cast %248 : vector<8x16xf32> to vector<1x8x16xf32>
    tpu.vector_store %arg9[%c2_84, %c0_85, %c0_86], %251 {strides = array<i32>} : memref<8x8x16xf32, #tpu.memory_space<vmem>>, vector<1x8x16xf32>,
    %cst_87 = arith.constant 0.000000e+00 : f32
    %252 = vector.shape_cast %232 : vector<8x1xi1> to vector<8x1xi1>
    %253 = vector.broadcast %252 : vector<8x1xi1> to vector<8x16xi1>
    %254 = vector.broadcast %cst_87 : f32 to vector<8x16xf32>
    %255 = arith.select %253, %228, %254 : vector<8x16xi1>, vector<8x16xf32>
    %c5_88 = arith.constant 5 : index
    %c0_89 = arith.constant 0 : index
    %c0_90 = arith.constant 0 : index
    %256 = vector.load %arg10[%c5_88, %c0_89, %c0_90] : memref<8x8x16xf32, #tpu.memory_space<vmem>>, vector<1x8x16xf32>
    %257 = vector.shape_cast %256 : vector<1x8x16xf32> to vector<8x16xf32>
    %258 = vector.shape_cast %255 : vector<8x16xf32> to vector<1x8x16xf32>
    tpu.vector_store %arg10[%c5_88, %c0_89, %c0_90], %258 {strides = array<i32>} : memref<8x8x16xf32, #tpu.memory_space<vmem>>, vector<1x8x16xf32>,
    %c3_i32 = arith.constant 3 : i32
    %259 = arith.addi %42, %c3_i32 : i32
    %c7_i32_91 = arith.constant 7 : i32
    %260 = arith.subi %c7_i32_91, %259 : i32
    %c3 = arith.constant 3 : index
    %c0_92 = arith.constant 0 : index
    %c0_93 = arith.constant 0 : index
    %261 = vector.load %arg13[%c3, %c0_92, %c0_93] : memref<8x8x64xf32, #tpu.memory_space<vmem>>, vector<1x8x64xf32>
    %262 = vector.shape_cast %261 : vector<1x8x64xf32> to vector<8x64xf32>
    %263 = arith.truncf %235 : vector<8x16xf32> to vector<8x16xbf16>
    %cst_94 = arith.constant dense<0.000000e+00> : vector<8x64xf32>
    %264 = tpu.matmul %263, %28, %cst_94 {dimension_numbers = #tpu.dot_dimension_numbers<[1], [0], [0], [1], [0, 0, 1, 1], [], []>} : vector<8x16xbf16>, vector<16x64xbf16>, vector<8x64xf32> -> vector<8x64xf32>
    %265 = arith.addf %262, %264 : vector<8x64xf32>
    %c4 = arith.constant 4 : index
    %c0_95 = arith.constant 0 : index
    %c0_96 = arith.constant 0 : index
    %266 = vector.load %arg14[%c4, %c0_95, %c0_96] : memref<8x8x64xf32, #tpu.memory_space<vmem>>, vector<1x8x64xf32>
    %267 = vector.shape_cast %266 : vector<1x8x64xf32> to vector<8x64xf32>
    %268 = arith.truncf %241 : vector<8x16xf32> to vector<8x16xbf16>
    %cst_97 = arith.constant dense<0.000000e+00> : vector<8x64xf32>
    %269 = tpu.matmul %268, %30, %cst_97 {dimension_numbers = #tpu.dot_dimension_numbers<[1], [0], [0], [1], [0, 0, 1, 1], [], []>} : vector<8x16xbf16>, vector<16x64xbf16>, vector<8x64xf32> -> vector<8x64xf32>
    %270 = arith.addf %267, %269 : vector<8x64xf32>
    %271 = arith.negf %265 : vector<8x64xf32>
    %272 = math.exp %271 : vector<8x64xf32>
    %cst_98 = arith.constant 1.000000e+00 : f32
    %273 = vector.broadcast %cst_98 : f32 to vector<8x64xf32>
    %274 = arith.addf %273, %272 : vector<8x64xf32>
    %275 = arith.divf %273, %274 : vector<8x64xf32>
    %276 = vector.extract_strided_slice %265 {offsets = [0, 32], sizes = [8, 16], strides = [1, 1]} : vector<8x64xf32> to vector<8x16xf32>
    %277 = math.tanh %276 : vector<8x16xf32>
    %278 = vector.extract_strided_slice %275 {offsets = [0, 16], sizes = [8, 16], strides = [1, 1]} : vector<8x64xf32> to vector<8x16xf32>
    %279 = arith.mulf %278, %238 : vector<8x16xf32>
    %280 = vector.extract_strided_slice %275 {offsets = [0, 0], sizes = [8, 16], strides = [1, 1]} : vector<8x64xf32> to vector<8x16xf32>
    %281 = arith.mulf %280, %277 : vector<8x16xf32>
    %282 = arith.addf %279, %281 : vector<8x16xf32>
    %283 = vector.extract_strided_slice %275 {offsets = [0, 48], sizes = [8, 16], strides = [1, 1]} : vector<8x64xf32> to vector<8x16xf32>
    %284 = math.tanh %282 : vector<8x16xf32>
    %285 = arith.mulf %283, %284 : vector<8x16xf32>
    %286 = arith.negf %270 : vector<8x64xf32>
    %287 = math.exp %286 : vector<8x64xf32>
    %cst_99 = arith.constant 1.000000e+00 : f32
    %288 = vector.broadcast %cst_99 : f32 to vector<8x64xf32>
    %289 = arith.addf %288, %287 : vector<8x64xf32>
    %290 = arith.divf %288, %289 : vector<8x64xf32>
    %291 = vector.extract_strided_slice %270 {offsets = [0, 32], sizes = [8, 16], strides = [1, 1]} : vector<8x64xf32> to vector<8x16xf32>
    %292 = math.tanh %291 : vector<8x16xf32>
    %293 = vector.extract_strided_slice %290 {offsets = [0, 16], sizes = [8, 16], strides = [1, 1]} : vector<8x64xf32> to vector<8x16xf32>
    %294 = arith.mulf %293, %244 : vector<8x16xf32>
    %295 = vector.extract_strided_slice %290 {offsets = [0, 0], sizes = [8, 16], strides = [1, 1]} : vector<8x64xf32> to vector<8x16xf32>
    %296 = arith.mulf %295, %292 : vector<8x16xf32>
    %297 = arith.addf %294, %296 : vector<8x16xf32>
    %298 = vector.extract_strided_slice %290 {offsets = [0, 48], sizes = [8, 16], strides = [1, 1]} : vector<8x64xf32> to vector<8x16xf32>
    %299 = math.tanh %297 : vector<8x16xf32>
    %300 = arith.mulf %298, %299 : vector<8x16xf32>
    %301 = vector.broadcast %259 : i32 to vector<8x1xi32>
    %302 = arith.cmpi slt, %301, %31 : vector<8x1xi32>
    %303 = vector.broadcast %260 : i32 to vector<8x1xi32>
    %304 = arith.cmpi slt, %303, %31 : vector<8x1xi32>
    %305 = vector.shape_cast %302 : vector<8x1xi1> to vector<8x1xi1>
    %306 = vector.broadcast %305 : vector<8x1xi1> to vector<8x16xi1>
    %307 = arith.select %306, %285, %235 : vector<8x16xi1>, vector<8x16xf32>
    %308 = vector.shape_cast %302 : vector<8x1xi1> to vector<8x1xi1>
    %309 = vector.broadcast %308 : vector<8x1xi1> to vector<8x16xi1>
    %310 = arith.select %309, %282, %238 : vector<8x16xi1>, vector<8x16xf32>
    %311 = vector.shape_cast %304 : vector<8x1xi1> to vector<8x1xi1>
    %312 = vector.broadcast %311 : vector<8x1xi1> to vector<8x16xi1>
    %313 = arith.select %312, %300, %241 : vector<8x16xi1>, vector<8x16xf32>
    %314 = vector.shape_cast %304 : vector<8x1xi1> to vector<8x1xi1>
    %315 = vector.broadcast %314 : vector<8x1xi1> to vector<8x16xi1>
    %316 = arith.select %315, %297, %244 : vector<8x16xi1>, vector<8x16xf32>
    %cst_100 = arith.constant 0.000000e+00 : f32
    %317 = vector.shape_cast %302 : vector<8x1xi1> to vector<8x1xi1>
    %318 = vector.broadcast %317 : vector<8x1xi1> to vector<8x16xi1>
    %319 = vector.broadcast %cst_100 : f32 to vector<8x16xf32>
    %320 = arith.select %318, %285, %319 : vector<8x16xi1>, vector<8x16xf32>
    %c3_101 = arith.constant 3 : index
    %c0_102 = arith.constant 0 : index
    %c0_103 = arith.constant 0 : index
    %321 = vector.load %arg9[%c3_101, %c0_102, %c0_103] : memref<8x8x16xf32, #tpu.memory_space<vmem>>, vector<1x8x16xf32>
    %322 = vector.shape_cast %321 : vector<1x8x16xf32> to vector<8x16xf32>
    %323 = vector.shape_cast %320 : vector<8x16xf32> to vector<1x8x16xf32>
    tpu.vector_store %arg9[%c3_101, %c0_102, %c0_103], %323 {strides = array<i32>} : memref<8x8x16xf32, #tpu.memory_space<vmem>>, vector<1x8x16xf32>,
    %cst_104 = arith.constant 0.000000e+00 : f32
    %324 = vector.shape_cast %304 : vector<8x1xi1> to vector<8x1xi1>
    %325 = vector.broadcast %324 : vector<8x1xi1> to vector<8x16xi1>
    %326 = vector.broadcast %cst_104 : f32 to vector<8x16xf32>
    %327 = arith.select %325, %300, %326 : vector<8x16xi1>, vector<8x16xf32>
    %c4_105 = arith.constant 4 : index
    %c0_106 = arith.constant 0 : index
    %c0_107 = arith.constant 0 : index
    %328 = vector.load %arg10[%c4_105, %c0_106, %c0_107] : memref<8x8x16xf32, #tpu.memory_space<vmem>>, vector<1x8x16xf32>
    %329 = vector.shape_cast %328 : vector<1x8x16xf32> to vector<8x16xf32>
    %330 = vector.shape_cast %327 : vector<8x16xf32> to vector<1x8x16xf32>
    tpu.vector_store %arg10[%c4_105, %c0_106, %c0_107], %330 {strides = array<i32>} : memref<8x8x16xf32, #tpu.memory_space<vmem>>, vector<1x8x16xf32>,
    %c4_i32 = arith.constant 4 : i32
    %331 = arith.addi %42, %c4_i32 : i32
    %c7_i32_108 = arith.constant 7 : i32
    %332 = arith.subi %c7_i32_108, %331 : i32
    %c4_109 = arith.constant 4 : index
    %c0_110 = arith.constant 0 : index
    %c0_111 = arith.constant 0 : index
    %333 = vector.load %arg13[%c4_109, %c0_110, %c0_111] : memref<8x8x64xf32, #tpu.memory_space<vmem>>, vector<1x8x64xf32>
    %334 = vector.shape_cast %333 : vector<1x8x64xf32> to vector<8x64xf32>
    %335 = arith.truncf %307 : vector<8x16xf32> to vector<8x16xbf16>
    %cst_112 = arith.constant dense<0.000000e+00> : vector<8x64xf32>
    %336 = tpu.matmul %335, %28, %cst_112 {dimension_numbers = #tpu.dot_dimension_numbers<[1], [0], [0], [1], [0, 0, 1, 1], [], []>} : vector<8x16xbf16>, vector<16x64xbf16>, vector<8x64xf32> -> vector<8x64xf32>
    %337 = arith.addf %334, %336 : vector<8x64xf32>
    %c3_113 = arith.constant 3 : index
    %c0_114 = arith.constant 0 : index
    %c0_115 = arith.constant 0 : index
    %338 = vector.load %arg14[%c3_113, %c0_114, %c0_115] : memref<8x8x64xf32, #tpu.memory_space<vmem>>, vector<1x8x64xf32>
    %339 = vector.shape_cast %338 : vector<1x8x64xf32> to vector<8x64xf32>
    %340 = arith.truncf %313 : vector<8x16xf32> to vector<8x16xbf16>
    %cst_116 = arith.constant dense<0.000000e+00> : vector<8x64xf32>
    %341 = tpu.matmul %340, %30, %cst_116 {dimension_numbers = #tpu.dot_dimension_numbers<[1], [0], [0], [1], [0, 0, 1, 1], [], []>} : vector<8x16xbf16>, vector<16x64xbf16>, vector<8x64xf32> -> vector<8x64xf32>
    %342 = arith.addf %339, %341 : vector<8x64xf32>
    %343 = arith.negf %337 : vector<8x64xf32>
    %344 = math.exp %343 : vector<8x64xf32>
    %cst_117 = arith.constant 1.000000e+00 : f32
    %345 = vector.broadcast %cst_117 : f32 to vector<8x64xf32>
    %346 = arith.addf %345, %344 : vector<8x64xf32>
    %347 = arith.divf %345, %346 : vector<8x64xf32>
    %348 = vector.extract_strided_slice %337 {offsets = [0, 32], sizes = [8, 16], strides = [1, 1]} : vector<8x64xf32> to vector<8x16xf32>
    %349 = math.tanh %348 : vector<8x16xf32>
    %350 = vector.extract_strided_slice %347 {offsets = [0, 16], sizes = [8, 16], strides = [1, 1]} : vector<8x64xf32> to vector<8x16xf32>
    %351 = arith.mulf %350, %310 : vector<8x16xf32>
    %352 = vector.extract_strided_slice %347 {offsets = [0, 0], sizes = [8, 16], strides = [1, 1]} : vector<8x64xf32> to vector<8x16xf32>
    %353 = arith.mulf %352, %349 : vector<8x16xf32>
    %354 = arith.addf %351, %353 : vector<8x16xf32>
    %355 = vector.extract_strided_slice %347 {offsets = [0, 48], sizes = [8, 16], strides = [1, 1]} : vector<8x64xf32> to vector<8x16xf32>
    %356 = math.tanh %354 : vector<8x16xf32>
    %357 = arith.mulf %355, %356 : vector<8x16xf32>
    %358 = arith.negf %342 : vector<8x64xf32>
    %359 = math.exp %358 : vector<8x64xf32>
    %cst_118 = arith.constant 1.000000e+00 : f32
    %360 = vector.broadcast %cst_118 : f32 to vector<8x64xf32>
    %361 = arith.addf %360, %359 : vector<8x64xf32>
    %362 = arith.divf %360, %361 : vector<8x64xf32>
    %363 = vector.extract_strided_slice %342 {offsets = [0, 32], sizes = [8, 16], strides = [1, 1]} : vector<8x64xf32> to vector<8x16xf32>
    %364 = math.tanh %363 : vector<8x16xf32>
    %365 = vector.extract_strided_slice %362 {offsets = [0, 16], sizes = [8, 16], strides = [1, 1]} : vector<8x64xf32> to vector<8x16xf32>
    %366 = arith.mulf %365, %316 : vector<8x16xf32>
    %367 = vector.extract_strided_slice %362 {offsets = [0, 0], sizes = [8, 16], strides = [1, 1]} : vector<8x64xf32> to vector<8x16xf32>
    %368 = arith.mulf %367, %364 : vector<8x16xf32>
    %369 = arith.addf %366, %368 : vector<8x16xf32>
    %370 = vector.extract_strided_slice %362 {offsets = [0, 48], sizes = [8, 16], strides = [1, 1]} : vector<8x64xf32> to vector<8x16xf32>
    %371 = math.tanh %369 : vector<8x16xf32>
    %372 = arith.mulf %370, %371 : vector<8x16xf32>
    %373 = vector.broadcast %331 : i32 to vector<8x1xi32>
    %374 = arith.cmpi slt, %373, %31 : vector<8x1xi32>
    %375 = vector.broadcast %332 : i32 to vector<8x1xi32>
    %376 = arith.cmpi slt, %375, %31 : vector<8x1xi32>
    %377 = vector.shape_cast %374 : vector<8x1xi1> to vector<8x1xi1>
    %378 = vector.broadcast %377 : vector<8x1xi1> to vector<8x16xi1>
    %379 = arith.select %378, %357, %307 : vector<8x16xi1>, vector<8x16xf32>
    %380 = vector.shape_cast %374 : vector<8x1xi1> to vector<8x1xi1>
    %381 = vector.broadcast %380 : vector<8x1xi1> to vector<8x16xi1>
    %382 = arith.select %381, %354, %310 : vector<8x16xi1>, vector<8x16xf32>
    %383 = vector.shape_cast %376 : vector<8x1xi1> to vector<8x1xi1>
    %384 = vector.broadcast %383 : vector<8x1xi1> to vector<8x16xi1>
    %385 = arith.select %384, %372, %313 : vector<8x16xi1>, vector<8x16xf32>
    %386 = vector.shape_cast %376 : vector<8x1xi1> to vector<8x1xi1>
    %387 = vector.broadcast %386 : vector<8x1xi1> to vector<8x16xi1>
    %388 = arith.select %387, %369, %316 : vector<8x16xi1>, vector<8x16xf32>
    %cst_119 = arith.constant 0.000000e+00 : f32
    %389 = vector.shape_cast %374 : vector<8x1xi1> to vector<8x1xi1>
    %390 = vector.broadcast %389 : vector<8x1xi1> to vector<8x16xi1>
    %391 = vector.broadcast %cst_119 : f32 to vector<8x16xf32>
    %392 = arith.select %390, %357, %391 : vector<8x16xi1>, vector<8x16xf32>
    %c4_120 = arith.constant 4 : index
    %c0_121 = arith.constant 0 : index
    %c0_122 = arith.constant 0 : index
    %393 = vector.load %arg9[%c4_120, %c0_121, %c0_122] : memref<8x8x16xf32, #tpu.memory_space<vmem>>, vector<1x8x16xf32>
    %394 = vector.shape_cast %393 : vector<1x8x16xf32> to vector<8x16xf32>
    %395 = vector.shape_cast %392 : vector<8x16xf32> to vector<1x8x16xf32>
    tpu.vector_store %arg9[%c4_120, %c0_121, %c0_122], %395 {strides = array<i32>} : memref<8x8x16xf32, #tpu.memory_space<vmem>>, vector<1x8x16xf32>,
    %cst_123 = arith.constant 0.000000e+00 : f32
    %396 = vector.shape_cast %376 : vector<8x1xi1> to vector<8x1xi1>
    %397 = vector.broadcast %396 : vector<8x1xi1> to vector<8x16xi1>
    %398 = vector.broadcast %cst_123 : f32 to vector<8x16xf32>
    %399 = arith.select %397, %372, %398 : vector<8x16xi1>, vector<8x16xf32>
    %c3_124 = arith.constant 3 : index
    %c0_125 = arith.constant 0 : index
    %c0_126 = arith.constant 0 : index
    %400 = vector.load %arg10[%c3_124, %c0_125, %c0_126] : memref<8x8x16xf32, #tpu.memory_space<vmem>>, vector<1x8x16xf32>
    %401 = vector.shape_cast %400 : vector<1x8x16xf32> to vector<8x16xf32>
    %402 = vector.shape_cast %399 : vector<8x16xf32> to vector<1x8x16xf32>
    tpu.vector_store %arg10[%c3_124, %c0_125, %c0_126], %402 {strides = array<i32>} : memref<8x8x16xf32, #tpu.memory_space<vmem>>, vector<1x8x16xf32>,
    %c5_i32 = arith.constant 5 : i32
    %403 = arith.addi %42, %c5_i32 : i32
    %c7_i32_127 = arith.constant 7 : i32
    %404 = arith.subi %c7_i32_127, %403 : i32
    %c5_128 = arith.constant 5 : index
    %c0_129 = arith.constant 0 : index
    %c0_130 = arith.constant 0 : index
    %405 = vector.load %arg13[%c5_128, %c0_129, %c0_130] : memref<8x8x64xf32, #tpu.memory_space<vmem>>, vector<1x8x64xf32>
    %406 = vector.shape_cast %405 : vector<1x8x64xf32> to vector<8x64xf32>
    %407 = arith.truncf %379 : vector<8x16xf32> to vector<8x16xbf16>
    %cst_131 = arith.constant dense<0.000000e+00> : vector<8x64xf32>
    %408 = tpu.matmul %407, %28, %cst_131 {dimension_numbers = #tpu.dot_dimension_numbers<[1], [0], [0], [1], [0, 0, 1, 1], [], []>} : vector<8x16xbf16>, vector<16x64xbf16>, vector<8x64xf32> -> vector<8x64xf32>
    %409 = arith.addf %406, %408 : vector<8x64xf32>
    %c2_132 = arith.constant 2 : index
    %c0_133 = arith.constant 0 : index
    %c0_134 = arith.constant 0 : index
    %410 = vector.load %arg14[%c2_132, %c0_133, %c0_134] : memref<8x8x64xf32, #tpu.memory_space<vmem>>, vector<1x8x64xf32>
    %411 = vector.shape_cast %410 : vector<1x8x64xf32> to vector<8x64xf32>
    %412 = arith.truncf %385 : vector<8x16xf32> to vector<8x16xbf16>
    %cst_135 = arith.constant dense<0.000000e+00> : vector<8x64xf32>
    %413 = tpu.matmul %412, %30, %cst_135 {dimension_numbers = #tpu.dot_dimension_numbers<[1], [0], [0], [1], [0, 0, 1, 1], [], []>} : vector<8x16xbf16>, vector<16x64xbf16>, vector<8x64xf32> -> vector<8x64xf32>
    %414 = arith.addf %411, %413 : vector<8x64xf32>
    %415 = arith.negf %409 : vector<8x64xf32>
    %416 = math.exp %415 : vector<8x64xf32>
    %cst_136 = arith.constant 1.000000e+00 : f32
    %417 = vector.broadcast %cst_136 : f32 to vector<8x64xf32>
    %418 = arith.addf %417, %416 : vector<8x64xf32>
    %419 = arith.divf %417, %418 : vector<8x64xf32>
    %420 = vector.extract_strided_slice %409 {offsets = [0, 32], sizes = [8, 16], strides = [1, 1]} : vector<8x64xf32> to vector<8x16xf32>
    %421 = math.tanh %420 : vector<8x16xf32>
    %422 = vector.extract_strided_slice %419 {offsets = [0, 16], sizes = [8, 16], strides = [1, 1]} : vector<8x64xf32> to vector<8x16xf32>
    %423 = arith.mulf %422, %382 : vector<8x16xf32>
    %424 = vector.extract_strided_slice %419 {offsets = [0, 0], sizes = [8, 16], strides = [1, 1]} : vector<8x64xf32> to vector<8x16xf32>
    %425 = arith.mulf %424, %421 : vector<8x16xf32>
    %426 = arith.addf %423, %425 : vector<8x16xf32>
    %427 = vector.extract_strided_slice %419 {offsets = [0, 48], sizes = [8, 16], strides = [1, 1]} : vector<8x64xf32> to vector<8x16xf32>
    %428 = math.tanh %426 : vector<8x16xf32>
    %429 = arith.mulf %427, %428 : vector<8x16xf32>
    %430 = arith.negf %414 : vector<8x64xf32>
    %431 = math.exp %430 : vector<8x64xf32>
    %cst_137 = arith.constant 1.000000e+00 : f32
    %432 = vector.broadcast %cst_137 : f32 to vector<8x64xf32>
    %433 = arith.addf %432, %431 : vector<8x64xf32>
    %434 = arith.divf %432, %433 : vector<8x64xf32>
    %435 = vector.extract_strided_slice %414 {offsets = [0, 32], sizes = [8, 16], strides = [1, 1]} : vector<8x64xf32> to vector<8x16xf32>
    %436 = math.tanh %435 : vector<8x16xf32>
    %437 = vector.extract_strided_slice %434 {offsets = [0, 16], sizes = [8, 16], strides = [1, 1]} : vector<8x64xf32> to vector<8x16xf32>
    %438 = arith.mulf %437, %388 : vector<8x16xf32>
    %439 = vector.extract_strided_slice %434 {offsets = [0, 0], sizes = [8, 16], strides = [1, 1]} : vector<8x64xf32> to vector<8x16xf32>
    %440 = arith.mulf %439, %436 : vector<8x16xf32>
    %441 = arith.addf %438, %440 : vector<8x16xf32>
    %442 = vector.extract_strided_slice %434 {offsets = [0, 48], sizes = [8, 16], strides = [1, 1]} : vector<8x64xf32> to vector<8x16xf32>
    %443 = math.tanh %441 : vector<8x16xf32>
    %444 = arith.mulf %442, %443 : vector<8x16xf32>
    %445 = vector.broadcast %403 : i32 to vector<8x1xi32>
    %446 = arith.cmpi slt, %445, %31 : vector<8x1xi32>
    %447 = vector.broadcast %404 : i32 to vector<8x1xi32>
    %448 = arith.cmpi slt, %447, %31 : vector<8x1xi32>
    %449 = vector.shape_cast %446 : vector<8x1xi1> to vector<8x1xi1>
    %450 = vector.broadcast %449 : vector<8x1xi1> to vector<8x16xi1>
    %451 = arith.select %450, %429, %379 : vector<8x16xi1>, vector<8x16xf32>
    %452 = vector.shape_cast %446 : vector<8x1xi1> to vector<8x1xi1>
    %453 = vector.broadcast %452 : vector<8x1xi1> to vector<8x16xi1>
    %454 = arith.select %453, %426, %382 : vector<8x16xi1>, vector<8x16xf32>
    %455 = vector.shape_cast %448 : vector<8x1xi1> to vector<8x1xi1>
    %456 = vector.broadcast %455 : vector<8x1xi1> to vector<8x16xi1>
    %457 = arith.select %456, %444, %385 : vector<8x16xi1>, vector<8x16xf32>
    %458 = vector.shape_cast %448 : vector<8x1xi1> to vector<8x1xi1>
    %459 = vector.broadcast %458 : vector<8x1xi1> to vector<8x16xi1>
    %460 = arith.select %459, %441, %388 : vector<8x16xi1>, vector<8x16xf32>
    %cst_138 = arith.constant 0.000000e+00 : f32
    %461 = vector.shape_cast %446 : vector<8x1xi1> to vector<8x1xi1>
    %462 = vector.broadcast %461 : vector<8x1xi1> to vector<8x16xi1>
    %463 = vector.broadcast %cst_138 : f32 to vector<8x16xf32>
    %464 = arith.select %462, %429, %463 : vector<8x16xi1>, vector<8x16xf32>
    %c5_139 = arith.constant 5 : index
    %c0_140 = arith.constant 0 : index
    %c0_141 = arith.constant 0 : index
    %465 = vector.load %arg9[%c5_139, %c0_140, %c0_141] : memref<8x8x16xf32, #tpu.memory_space<vmem>>, vector<1x8x16xf32>
    %466 = vector.shape_cast %465 : vector<1x8x16xf32> to vector<8x16xf32>
    %467 = vector.shape_cast %464 : vector<8x16xf32> to vector<1x8x16xf32>
    tpu.vector_store %arg9[%c5_139, %c0_140, %c0_141], %467 {strides = array<i32>} : memref<8x8x16xf32, #tpu.memory_space<vmem>>, vector<1x8x16xf32>,
    %cst_142 = arith.constant 0.000000e+00 : f32
    %468 = vector.shape_cast %448 : vector<8x1xi1> to vector<8x1xi1>
    %469 = vector.broadcast %468 : vector<8x1xi1> to vector<8x16xi1>
    %470 = vector.broadcast %cst_142 : f32 to vector<8x16xf32>
    %471 = arith.select %469, %444, %470 : vector<8x16xi1>, vector<8x16xf32>
    %c2_143 = arith.constant 2 : index
    %c0_144 = arith.constant 0 : index
    %c0_145 = arith.constant 0 : index
    %472 = vector.load %arg10[%c2_143, %c0_144, %c0_145] : memref<8x8x16xf32, #tpu.memory_space<vmem>>, vector<1x8x16xf32>
    %473 = vector.shape_cast %472 : vector<1x8x16xf32> to vector<8x16xf32>
    %474 = vector.shape_cast %471 : vector<8x16xf32> to vector<1x8x16xf32>
    tpu.vector_store %arg10[%c2_143, %c0_144, %c0_145], %474 {strides = array<i32>} : memref<8x8x16xf32, #tpu.memory_space<vmem>>, vector<1x8x16xf32>,
    %c6_i32 = arith.constant 6 : i32
    %475 = arith.addi %42, %c6_i32 : i32
    %c7_i32_146 = arith.constant 7 : i32
    %476 = arith.subi %c7_i32_146, %475 : i32
    %c6_147 = arith.constant 6 : index
    %c0_148 = arith.constant 0 : index
    %c0_149 = arith.constant 0 : index
    %477 = vector.load %arg13[%c6_147, %c0_148, %c0_149] : memref<8x8x64xf32, #tpu.memory_space<vmem>>, vector<1x8x64xf32>
    %478 = vector.shape_cast %477 : vector<1x8x64xf32> to vector<8x64xf32>
    %479 = arith.truncf %451 : vector<8x16xf32> to vector<8x16xbf16>
    %cst_150 = arith.constant dense<0.000000e+00> : vector<8x64xf32>
    %480 = tpu.matmul %479, %28, %cst_150 {dimension_numbers = #tpu.dot_dimension_numbers<[1], [0], [0], [1], [0, 0, 1, 1], [], []>} : vector<8x16xbf16>, vector<16x64xbf16>, vector<8x64xf32> -> vector<8x64xf32>
    %481 = arith.addf %478, %480 : vector<8x64xf32>
    %c1_151 = arith.constant 1 : index
    %c0_152 = arith.constant 0 : index
    %c0_153 = arith.constant 0 : index
    %482 = vector.load %arg14[%c1_151, %c0_152, %c0_153] : memref<8x8x64xf32, #tpu.memory_space<vmem>>, vector<1x8x64xf32>
    %483 = vector.shape_cast %482 : vector<1x8x64xf32> to vector<8x64xf32>
    %484 = arith.truncf %457 : vector<8x16xf32> to vector<8x16xbf16>
    %cst_154 = arith.constant dense<0.000000e+00> : vector<8x64xf32>
    %485 = tpu.matmul %484, %30, %cst_154 {dimension_numbers = #tpu.dot_dimension_numbers<[1], [0], [0], [1], [0, 0, 1, 1], [], []>} : vector<8x16xbf16>, vector<16x64xbf16>, vector<8x64xf32> -> vector<8x64xf32>
    %486 = arith.addf %483, %485 : vector<8x64xf32>
    %487 = arith.negf %481 : vector<8x64xf32>
    %488 = math.exp %487 : vector<8x64xf32>
    %cst_155 = arith.constant 1.000000e+00 : f32
    %489 = vector.broadcast %cst_155 : f32 to vector<8x64xf32>
    %490 = arith.addf %489, %488 : vector<8x64xf32>
    %491 = arith.divf %489, %490 : vector<8x64xf32>
    %492 = vector.extract_strided_slice %481 {offsets = [0, 32], sizes = [8, 16], strides = [1, 1]} : vector<8x64xf32> to vector<8x16xf32>
    %493 = math.tanh %492 : vector<8x16xf32>
    %494 = vector.extract_strided_slice %491 {offsets = [0, 16], sizes = [8, 16], strides = [1, 1]} : vector<8x64xf32> to vector<8x16xf32>
    %495 = arith.mulf %494, %454 : vector<8x16xf32>
    %496 = vector.extract_strided_slice %491 {offsets = [0, 0], sizes = [8, 16], strides = [1, 1]} : vector<8x64xf32> to vector<8x16xf32>
    %497 = arith.mulf %496, %493 : vector<8x16xf32>
    %498 = arith.addf %495, %497 : vector<8x16xf32>
    %499 = vector.extract_strided_slice %491 {offsets = [0, 48], sizes = [8, 16], strides = [1, 1]} : vector<8x64xf32> to vector<8x16xf32>
    %500 = math.tanh %498 : vector<8x16xf32>
    %501 = arith.mulf %499, %500 : vector<8x16xf32>
    %502 = arith.negf %486 : vector<8x64xf32>
    %503 = math.exp %502 : vector<8x64xf32>
    %cst_156 = arith.constant 1.000000e+00 : f32
    %504 = vector.broadcast %cst_156 : f32 to vector<8x64xf32>
    %505 = arith.addf %504, %503 : vector<8x64xf32>
    %506 = arith.divf %504, %505 : vector<8x64xf32>
    %507 = vector.extract_strided_slice %486 {offsets = [0, 32], sizes = [8, 16], strides = [1, 1]} : vector<8x64xf32> to vector<8x16xf32>
    %508 = math.tanh %507 : vector<8x16xf32>
    %509 = vector.extract_strided_slice %506 {offsets = [0, 16], sizes = [8, 16], strides = [1, 1]} : vector<8x64xf32> to vector<8x16xf32>
    %510 = arith.mulf %509, %460 : vector<8x16xf32>
    %511 = vector.extract_strided_slice %506 {offsets = [0, 0], sizes = [8, 16], strides = [1, 1]} : vector<8x64xf32> to vector<8x16xf32>
    %512 = arith.mulf %511, %508 : vector<8x16xf32>
    %513 = arith.addf %510, %512 : vector<8x16xf32>
    %514 = vector.extract_strided_slice %506 {offsets = [0, 48], sizes = [8, 16], strides = [1, 1]} : vector<8x64xf32> to vector<8x16xf32>
    %515 = math.tanh %513 : vector<8x16xf32>
    %516 = arith.mulf %514, %515 : vector<8x16xf32>
    %517 = vector.broadcast %475 : i32 to vector<8x1xi32>
    %518 = arith.cmpi slt, %517, %31 : vector<8x1xi32>
    %519 = vector.broadcast %476 : i32 to vector<8x1xi32>
    %520 = arith.cmpi slt, %519, %31 : vector<8x1xi32>
    %521 = vector.shape_cast %518 : vector<8x1xi1> to vector<8x1xi1>
    %522 = vector.broadcast %521 : vector<8x1xi1> to vector<8x16xi1>
    %523 = arith.select %522, %501, %451 : vector<8x16xi1>, vector<8x16xf32>
    %524 = vector.shape_cast %518 : vector<8x1xi1> to vector<8x1xi1>
    %525 = vector.broadcast %524 : vector<8x1xi1> to vector<8x16xi1>
    %526 = arith.select %525, %498, %454 : vector<8x16xi1>, vector<8x16xf32>
    %527 = vector.shape_cast %520 : vector<8x1xi1> to vector<8x1xi1>
    %528 = vector.broadcast %527 : vector<8x1xi1> to vector<8x16xi1>
    %529 = arith.select %528, %516, %457 : vector<8x16xi1>, vector<8x16xf32>
    %530 = vector.shape_cast %520 : vector<8x1xi1> to vector<8x1xi1>
    %531 = vector.broadcast %530 : vector<8x1xi1> to vector<8x16xi1>
    %532 = arith.select %531, %513, %460 : vector<8x16xi1>, vector<8x16xf32>
    %cst_157 = arith.constant 0.000000e+00 : f32
    %533 = vector.shape_cast %518 : vector<8x1xi1> to vector<8x1xi1>
    %534 = vector.broadcast %533 : vector<8x1xi1> to vector<8x16xi1>
    %535 = vector.broadcast %cst_157 : f32 to vector<8x16xf32>
    %536 = arith.select %534, %501, %535 : vector<8x16xi1>, vector<8x16xf32>
    %c6_158 = arith.constant 6 : index
    %c0_159 = arith.constant 0 : index
    %c0_160 = arith.constant 0 : index
    %537 = vector.load %arg9[%c6_158, %c0_159, %c0_160] : memref<8x8x16xf32, #tpu.memory_space<vmem>>, vector<1x8x16xf32>
    %538 = vector.shape_cast %537 : vector<1x8x16xf32> to vector<8x16xf32>
    %539 = vector.shape_cast %536 : vector<8x16xf32> to vector<1x8x16xf32>
    tpu.vector_store %arg9[%c6_158, %c0_159, %c0_160], %539 {strides = array<i32>} : memref<8x8x16xf32, #tpu.memory_space<vmem>>, vector<1x8x16xf32>,
    %cst_161 = arith.constant 0.000000e+00 : f32
    %540 = vector.shape_cast %520 : vector<8x1xi1> to vector<8x1xi1>
    %541 = vector.broadcast %540 : vector<8x1xi1> to vector<8x16xi1>
    %542 = vector.broadcast %cst_161 : f32 to vector<8x16xf32>
    %543 = arith.select %541, %516, %542 : vector<8x16xi1>, vector<8x16xf32>
    %c1_162 = arith.constant 1 : index
    %c0_163 = arith.constant 0 : index
    %c0_164 = arith.constant 0 : index
    %544 = vector.load %arg10[%c1_162, %c0_163, %c0_164] : memref<8x8x16xf32, #tpu.memory_space<vmem>>, vector<1x8x16xf32>
    %545 = vector.shape_cast %544 : vector<1x8x16xf32> to vector<8x16xf32>
    %546 = vector.shape_cast %543 : vector<8x16xf32> to vector<1x8x16xf32>
    tpu.vector_store %arg10[%c1_162, %c0_163, %c0_164], %546 {strides = array<i32>} : memref<8x8x16xf32, #tpu.memory_space<vmem>>, vector<1x8x16xf32>,
    %c7_i32_165 = arith.constant 7 : i32
    %547 = arith.addi %42, %c7_i32_165 : i32
    %c7_i32_166 = arith.constant 7 : i32
    %548 = arith.subi %c7_i32_166, %547 : i32
    %c7_167 = arith.constant 7 : index
    %c0_168 = arith.constant 0 : index
    %c0_169 = arith.constant 0 : index
    %549 = vector.load %arg13[%c7_167, %c0_168, %c0_169] : memref<8x8x64xf32, #tpu.memory_space<vmem>>, vector<1x8x64xf32>
    %550 = vector.shape_cast %549 : vector<1x8x64xf32> to vector<8x64xf32>
    %551 = arith.truncf %523 : vector<8x16xf32> to vector<8x16xbf16>
    %cst_170 = arith.constant dense<0.000000e+00> : vector<8x64xf32>
    %552 = tpu.matmul %551, %28, %cst_170 {dimension_numbers = #tpu.dot_dimension_numbers<[1], [0], [0], [1], [0, 0, 1, 1], [], []>} : vector<8x16xbf16>, vector<16x64xbf16>, vector<8x64xf32> -> vector<8x64xf32>
    %553 = arith.addf %550, %552 : vector<8x64xf32>
    %c0_171 = arith.constant 0 : index
    %c0_172 = arith.constant 0 : index
    %c0_173 = arith.constant 0 : index
    %554 = vector.load %arg14[%c0_171, %c0_172, %c0_173] : memref<8x8x64xf32, #tpu.memory_space<vmem>>, vector<1x8x64xf32>
    %555 = vector.shape_cast %554 : vector<1x8x64xf32> to vector<8x64xf32>
    %556 = arith.truncf %529 : vector<8x16xf32> to vector<8x16xbf16>
    %cst_174 = arith.constant dense<0.000000e+00> : vector<8x64xf32>
    %557 = tpu.matmul %556, %30, %cst_174 {dimension_numbers = #tpu.dot_dimension_numbers<[1], [0], [0], [1], [0, 0, 1, 1], [], []>} : vector<8x16xbf16>, vector<16x64xbf16>, vector<8x64xf32> -> vector<8x64xf32>
    %558 = arith.addf %555, %557 : vector<8x64xf32>
    %559 = arith.negf %553 : vector<8x64xf32>
    %560 = math.exp %559 : vector<8x64xf32>
    %cst_175 = arith.constant 1.000000e+00 : f32
    %561 = vector.broadcast %cst_175 : f32 to vector<8x64xf32>
    %562 = arith.addf %561, %560 : vector<8x64xf32>
    %563 = arith.divf %561, %562 : vector<8x64xf32>
    %564 = vector.extract_strided_slice %553 {offsets = [0, 32], sizes = [8, 16], strides = [1, 1]} : vector<8x64xf32> to vector<8x16xf32>
    %565 = math.tanh %564 : vector<8x16xf32>
    %566 = vector.extract_strided_slice %563 {offsets = [0, 16], sizes = [8, 16], strides = [1, 1]} : vector<8x64xf32> to vector<8x16xf32>
    %567 = arith.mulf %566, %526 : vector<8x16xf32>
    %568 = vector.extract_strided_slice %563 {offsets = [0, 0], sizes = [8, 16], strides = [1, 1]} : vector<8x64xf32> to vector<8x16xf32>
    %569 = arith.mulf %568, %565 : vector<8x16xf32>
    %570 = arith.addf %567, %569 : vector<8x16xf32>
    %571 = vector.extract_strided_slice %563 {offsets = [0, 48], sizes = [8, 16], strides = [1, 1]} : vector<8x64xf32> to vector<8x16xf32>
    %572 = math.tanh %570 : vector<8x16xf32>
    %573 = arith.mulf %571, %572 : vector<8x16xf32>
    %574 = arith.negf %558 : vector<8x64xf32>
    %575 = math.exp %574 : vector<8x64xf32>
    %cst_176 = arith.constant 1.000000e+00 : f32
    %576 = vector.broadcast %cst_176 : f32 to vector<8x64xf32>
    %577 = arith.addf %576, %575 : vector<8x64xf32>
    %578 = arith.divf %576, %577 : vector<8x64xf32>
    %579 = vector.extract_strided_slice %558 {offsets = [0, 32], sizes = [8, 16], strides = [1, 1]} : vector<8x64xf32> to vector<8x16xf32>
    %580 = math.tanh %579 : vector<8x16xf32>
    %581 = vector.extract_strided_slice %578 {offsets = [0, 16], sizes = [8, 16], strides = [1, 1]} : vector<8x64xf32> to vector<8x16xf32>
    %582 = arith.mulf %581, %532 : vector<8x16xf32>
    %583 = vector.extract_strided_slice %578 {offsets = [0, 0], sizes = [8, 16], strides = [1, 1]} : vector<8x64xf32> to vector<8x16xf32>
    %584 = arith.mulf %583, %580 : vector<8x16xf32>
    %585 = arith.addf %582, %584 : vector<8x16xf32>
    %586 = vector.extract_strided_slice %578 {offsets = [0, 48], sizes = [8, 16], strides = [1, 1]} : vector<8x64xf32> to vector<8x16xf32>
    %587 = math.tanh %585 : vector<8x16xf32>
    %588 = arith.mulf %586, %587 : vector<8x16xf32>
    %589 = vector.broadcast %547 : i32 to vector<8x1xi32>
    %590 = arith.cmpi slt, %589, %31 : vector<8x1xi32>
    %591 = vector.broadcast %548 : i32 to vector<8x1xi32>
    %592 = arith.cmpi slt, %591, %31 : vector<8x1xi32>
    %593 = vector.shape_cast %590 : vector<8x1xi1> to vector<8x1xi1>
    %594 = vector.broadcast %593 : vector<8x1xi1> to vector<8x16xi1>
    %595 = arith.select %594, %573, %523 : vector<8x16xi1>, vector<8x16xf32>
    %596 = vector.shape_cast %590 : vector<8x1xi1> to vector<8x1xi1>
    %597 = vector.broadcast %596 : vector<8x1xi1> to vector<8x16xi1>
    %598 = arith.select %597, %570, %526 : vector<8x16xi1>, vector<8x16xf32>
    %599 = vector.shape_cast %592 : vector<8x1xi1> to vector<8x1xi1>
    %600 = vector.broadcast %599 : vector<8x1xi1> to vector<8x16xi1>
    %601 = arith.select %600, %588, %529 : vector<8x16xi1>, vector<8x16xf32>
    %602 = vector.shape_cast %592 : vector<8x1xi1> to vector<8x1xi1>
    %603 = vector.broadcast %602 : vector<8x1xi1> to vector<8x16xi1>
    %604 = arith.select %603, %585, %532 : vector<8x16xi1>, vector<8x16xf32>
    %cst_177 = arith.constant 0.000000e+00 : f32
    %605 = vector.shape_cast %590 : vector<8x1xi1> to vector<8x1xi1>
    %606 = vector.broadcast %605 : vector<8x1xi1> to vector<8x16xi1>
    %607 = vector.broadcast %cst_177 : f32 to vector<8x16xf32>
    %608 = arith.select %606, %573, %607 : vector<8x16xi1>, vector<8x16xf32>
    %c7_178 = arith.constant 7 : index
    %c0_179 = arith.constant 0 : index
    %c0_180 = arith.constant 0 : index
    %609 = vector.load %arg9[%c7_178, %c0_179, %c0_180] : memref<8x8x16xf32, #tpu.memory_space<vmem>>, vector<1x8x16xf32>
    %610 = vector.shape_cast %609 : vector<1x8x16xf32> to vector<8x16xf32>
    %611 = vector.shape_cast %608 : vector<8x16xf32> to vector<1x8x16xf32>
    tpu.vector_store %arg9[%c7_178, %c0_179, %c0_180], %611 {strides = array<i32>} : memref<8x8x16xf32, #tpu.memory_space<vmem>>, vector<1x8x16xf32>,
    %cst_181 = arith.constant 0.000000e+00 : f32
    %612 = vector.shape_cast %592 : vector<8x1xi1> to vector<8x1xi1>
    %613 = vector.broadcast %612 : vector<8x1xi1> to vector<8x16xi1>
    %614 = vector.broadcast %cst_181 : f32 to vector<8x16xf32>
    %615 = arith.select %613, %588, %614 : vector<8x16xi1>, vector<8x16xf32>
    %c0_182 = arith.constant 0 : index
    %c0_183 = arith.constant 0 : index
    %c0_184 = arith.constant 0 : index
    %616 = vector.load %arg10[%c0_182, %c0_183, %c0_184] : memref<8x8x16xf32, #tpu.memory_space<vmem>>, vector<1x8x16xf32>
    %617 = vector.shape_cast %616 : vector<1x8x16xf32> to vector<8x16xf32>
    %618 = vector.shape_cast %615 : vector<8x16xf32> to vector<1x8x16xf32>
    tpu.vector_store %arg10[%c0_182, %c0_183, %c0_184], %618 {strides = array<i32>} : memref<8x8x16xf32, #tpu.memory_space<vmem>>, vector<1x8x16xf32>,
    %c0_185 = arith.constant 0 : index
    %c0_186 = arith.constant 0 : index
    %c0_187 = arith.constant 0 : index
    %619 = vector.load %arg11[%c0_185, %c0_186, %c0_187] : memref<2x8x16xf32, #tpu.memory_space<vmem>>, vector<1x8x16xf32>
    %620 = vector.shape_cast %619 : vector<1x8x16xf32> to vector<8x16xf32>
    %621 = vector.shape_cast %595 : vector<8x16xf32> to vector<1x8x16xf32>
    tpu.vector_store %arg11[%c0_185, %c0_186, %c0_187], %621 {strides = array<i32>} : memref<2x8x16xf32, #tpu.memory_space<vmem>>, vector<1x8x16xf32>,
    %c1_188 = arith.constant 1 : index
    %c0_189 = arith.constant 0 : index
    %c0_190 = arith.constant 0 : index
    %622 = vector.load %arg11[%c1_188, %c0_189, %c0_190] : memref<2x8x16xf32, #tpu.memory_space<vmem>>, vector<1x8x16xf32>
    %623 = vector.shape_cast %622 : vector<1x8x16xf32> to vector<8x16xf32>
    %624 = vector.shape_cast %601 : vector<8x16xf32> to vector<1x8x16xf32>
    tpu.vector_store %arg11[%c1_188, %c0_189, %c0_190], %624 {strides = array<i32>} : memref<2x8x16xf32, #tpu.memory_space<vmem>>, vector<1x8x16xf32>,
    %c0_191 = arith.constant 0 : index
    %c0_192 = arith.constant 0 : index
    %c0_193 = arith.constant 0 : index
    %625 = vector.load %arg12[%c0_191, %c0_192, %c0_193] : memref<2x8x16xf32, #tpu.memory_space<vmem>>, vector<1x8x16xf32>
    %626 = vector.shape_cast %625 : vector<1x8x16xf32> to vector<8x16xf32>
    %627 = vector.shape_cast %598 : vector<8x16xf32> to vector<1x8x16xf32>
    tpu.vector_store %arg12[%c0_191, %c0_192, %c0_193], %627 {strides = array<i32>} : memref<2x8x16xf32, #tpu.memory_space<vmem>>, vector<1x8x16xf32>,
    %c1_194 = arith.constant 1 : index
    %c0_195 = arith.constant 0 : index
    %c0_196 = arith.constant 0 : index
    %628 = vector.load %arg12[%c1_194, %c0_195, %c0_196] : memref<2x8x16xf32, #tpu.memory_space<vmem>>, vector<1x8x16xf32>
    %629 = vector.shape_cast %628 : vector<1x8x16xf32> to vector<8x16xf32>
    %630 = vector.shape_cast %604 : vector<8x16xf32> to vector<1x8x16xf32>
    tpu.vector_store %arg12[%c1_194, %c0_195, %c0_196], %630 {strides = array<i32>} : memref<2x8x16xf32, #tpu.memory_space<vmem>>, vector<1x8x16xf32>,
    return
  }
  func.func @transform_0(%arg0: i32) -> (i32, i32) {
    %c0_i32 = arith.constant 0 : i32
    %c0_i32_0 = arith.constant 0 : i32
    %c0_i32_1 = arith.constant 0 : i32
    return %c0_i32, %c0_i32_0 : i32, i32
  }
  func.func @transform_1(%arg0: i32) -> (i32, i32, i32) {
    %c0_i32 = arith.constant 0 : i32
    %c0_i32_0 = arith.constant 0 : i32
    %c0_i32_1 = arith.constant 0 : i32
    return %arg0, %c0_i32, %c0_i32_0 : i32, i32, i32
  }
  func.func @transform_2(%arg0: i32) -> (i32, i32, i32) {
    %c0_i32 = arith.constant 0 : i32
    %0 = arith.subi %c0_i32, %arg0 : i32
    %c0_i32_0 = arith.constant 0 : i32
    %c0_i32_1 = arith.constant 0 : i32
    %c0_i32_2 = arith.constant 0 : i32
    return %0, %c0_i32_0, %c0_i32_1 : i32, i32, i32
  }
  func.func @transform_3(%arg0: i32) -> (i32, i32, i32) {
    %c0_i32 = arith.constant 0 : i32
    %c0_i32_0 = arith.constant 0 : i32
    %c0_i32_1 = arith.constant 0 : i32
    %c0_i32_2 = arith.constant 0 : i32
    return %c0_i32, %c0_i32_0, %c0_i32_1 : i32, i32, i32
  }
  func.func @transform_4(%arg0: i32) -> (i32, i32, i32) {
    %c0_i32 = arith.constant 0 : i32
    %c0_i32_0 = arith.constant 0 : i32
    %c0_i32_1 = arith.constant 0 : i32
    %c0_i32_2 = arith.constant 0 : i32
    return %c0_i32, %c0_i32_0, %c0_i32_1 : i32, i32, i32
  }
  func.func @transform_5(%arg0: i32) -> (i32, i32, i32) {
    %c0_i32 = arith.constant 0 : i32
    %c0_i32_0 = arith.constant 0 : i32
    %c0_i32_1 = arith.constant 0 : i32
    %c0_i32_2 = arith.constant 0 : i32
    return %c0_i32, %c0_i32_0, %c0_i32_1 : i32, i32, i32
  }
  func.func @transform_6(%arg0: i32) -> (i32, i32, i32) {
    %c0_i32 = arith.constant 0 : i32
    %c0_i32_0 = arith.constant 0 : i32
    %c0_i32_1 = arith.constant 0 : i32
    %c0_i32_2 = arith.constant 0 : i32
    return %c0_i32, %c0_i32_0, %c0_i32_1 : i32, i32, i32
  }
  func.func @transform_7(%arg0: i32) -> (i32, i32, i32) {
    %c0_i32 = arith.constant 0 : i32
    %c0_i32_0 = arith.constant 0 : i32
    %c0_i32_1 = arith.constant 0 : i32
    %c0_i32_2 = arith.constant 0 : i32
    return %c0_i32, %c0_i32_0, %c0_i32_1 : i32, i32, i32
  }
  func.func @transform_8(%arg0: i32) -> (i32, i32, i32) {
    %c0_i32 = arith.constant 0 : i32
    %c0_i32_0 = arith.constant 0 : i32
    %c0_i32_1 = arith.constant 0 : i32
    return %arg0, %c0_i32, %c0_i32_0 : i32, i32, i32
  }
  func.func @transform_9(%arg0: i32) -> (i32, i32, i32) {
    %c0_i32 = arith.constant 0 : i32
    %0 = arith.subi %c0_i32, %arg0 : i32
    %c0_i32_0 = arith.constant 0 : i32
    %c0_i32_1 = arith.constant 0 : i32
    %c0_i32_2 = arith.constant 0 : i32
    return %0, %c0_i32_0, %c0_i32_1 : i32, i32, i32
  }
}

</mosaic_0001>

<llo_original>
// kernel: language_model_forward.5
$region0: #{language_model_forward.5}
  #allocation0 [shape = 'u32[]', space=smem, size = 0x4, offset = 0x4, fixed_abs, tag = 'smem constant byte address 0x4 - core index']
  #allocation1 [shape = 'u32[144,128]{1,0:T(1,128)}', space=vmem, size = 0x12000, scoped, tag = 'internal scratch']
  %s0 = inlined_call_operand.vmem [shape: f32[8,8,16], index: 0, kind: input, shape index: {}]
  %s1 = inlined_call_operand.vmem [shape: f32[8,8,16], index: 1, kind: input, shape index: {}]
  %s2 = inlined_call_operand.vmem [shape: bf16[16,128], index: 2, kind: input, shape index: {}]
  %s3 = inlined_call_operand.vmem [shape: bf16[16,128], index: 3, kind: input, shape index: {}]
  %s4 = inlined_call_operand.vmem [shape: f32[1,128], index: 4, kind: input, shape index: {}]
  %s5 = inlined_call_operand.vmem [shape: f32[8,8,128], index: 5, kind: output, shape index: {}]
  %s6 = sld [smem:[#allocation0]]
  $region30: #{language_model_forward.5} parent=0
    _
  %s8 = ssub.s32 1, %s6
  %s9 = scalar_select 0, %s8, %s6
  // Predicated region
  $region2: #{language_model_forward.5} parent=0 // pred_check
    _
  $region3: #{language_model_forward.5} parent=0 // pred_check_branch
    %11 = sbr.rel (0) target = $region5
  $region4: #{language_model_forward.5} parent=0 // pred_region
    _
  $region5: #{language_model_forward.5} parent=0 // pred_fallthru
    _
  // Predicated region
  $region6: #{language_model_forward.5} parent=0 // pred_check
    _
  $region7: #{language_model_forward.5} parent=0 // pred_check_branch
    %13 = sbr.rel (0) target = $region9
  $region8: #{language_model_forward.5} parent=0 // pred_region
    _
  $region9: #{language_model_forward.5} parent=0 // pred_fallthru
    _
  // Predicated region
  $region10: #{language_model_forward.5} parent=0 // pred_check
    _
  $region11: #{language_model_forward.5} parent=0 // pred_check_branch
    %15 = sbr.rel (0) target = $region13
  $region12: #{language_model_forward.5} parent=0 // pred_region
    _
  $region13: #{language_model_forward.5} parent=0 // pred_fallthru
    _
  // Predicated region
  $region14: #{language_model_forward.5} parent=0 // pred_check
    _
  $region15: #{language_model_forward.5} parent=0 // pred_check_branch
    %17 = sbr.rel (0) target = $region17
  $region16: #{language_model_forward.5} parent=0 // pred_region
    _
  $region17: #{language_model_forward.5} parent=0 // pred_fallthru
    _
  // Predicated region
  $region18: #{language_model_forward.5} parent=0 // pred_check
    _
  $region19: #{language_model_forward.5} parent=0 // pred_check_branch
    %19 = sbr.rel (0) target = $region21
  $region20: #{language_model_forward.5} parent=0 // pred_region
    _
  $region21: #{language_model_forward.5} parent=0 // pred_fallthru
    _
  %v21 = vld [vmem:[%s0] sm:$0xff]
  %v22 = vld [vmem:[%s0 + $0x8] sm:$0xff]
  %v23 = vld [vmem:[%s0 + $0x10] sm:$0xff]
  %v24 = vld [vmem:[%s0 + $0x18] sm:$0xff]
  %v25 = vld [vmem:[%s0 + $0x20] sm:$0xff]
  %v26 = vld [vmem:[%s0 + $0x28] sm:$0xff]
  %v27 = vld [vmem:[%s0 + $0x30] sm:$0xff]
  %v28 = vld [vmem:[%s0 + $0x38] sm:$0xff]
  %v29 = vpack.c.bf16 %v22, %v21
  %v30 = vpack.c.bf16 %v24, %v23
  %v31 = vpack.c.bf16 %v26, %v25
  %v32 = vpack.c.bf16 %v28, %v27
  %v33 = vld [vmem:[%s1] sm:$0xff]
  %v34 = vld [vmem:[%s1 + $0x8] sm:$0xff]
  %v35 = vld [vmem:[%s1 + $0x10] sm:$0xff]
  %v36 = vld [vmem:[%s1 + $0x18] sm:$0xff]
  %v37 = vld [vmem:[%s1 + $0x20] sm:$0xff]
  %v38 = vld [vmem:[%s1 + $0x28] sm:$0xff]
  %v39 = vld [vmem:[%s1 + $0x30] sm:$0xff]
  %v40 = vld [vmem:[%s1 + $0x38] sm:$0xff]
  %v41 = vpack.c.bf16 %v34, %v33
  %v42 = vpack.c.bf16 %v36, %v35
  %v43 = vpack.c.bf16 %v38, %v37
  %v44 = vpack.c.bf16 %v40, %v39
  %v45 = vld [vmem:[%s2] sm:$0xf]
  %v46 = vld [vmem:[%s2 + $0x4] sm:$0xf]
  %v47 = vld [vmem:[%s3] sm:$0xf]
  %v48 = vld [vmem:[%s3 + $0x4] sm:$0xf]
  %v51 = vunpack.c.l.b16 %v47
  %v52 = vunpack.c.l.b16 %v48
  %v53 = vpack.c.b16 %v52, %v51
  %vm55 = vcmask 130048
  %v57 = vsel %vm55, %v41, 0
  %v60 = vsel %vm55, %v42, 0
  %v63 = vsel %vm55, %v43, 0
  %v66 = vsel %vm55, %v44, 0
  %68 = vmatprep.subr.bf16.mxu0 0
  %69 = vmatpush1.bf16.msra.mxu0 %v53
  %70 = vmatprep.subr.bf16.mxu0 0
  %71 = vmatpush1.bf16.msra.mxu0 0
  %72 = vmatprep.subr.bf16.mxu0 0
  %73 = vmatpush1.bf16.msra.mxu0 0
  %74 = vmatprep.subr.bf16.mxu0 0
  %75 = vmatpush1.bf16.msra.mxu0 0
  %76 = vmatprep.subr.bf16.mxu0 0
  %77 = vmatpush1.bf16.msra.mxu0 0
  %78 = vmatprep.subr.bf16.mxu0 0
  %79 = vmatpush1.bf16.msra.mxu0 0
  %80 = vmatprep.subr.bf16.mxu0 0
  %81 = vmatpush1.bf16.msra.mxu0 0
  %82 = vmatprep.subr.bf16.mxu0 0
  %83 = vmatpush1.bf16.msra.mxu0 0
  %84 = vmatprep.subr.bf16.mxu0 0
  %85 = vmatpush1.bf16.msra.mxu0 0
  %86 = vmatprep.subr.bf16.mxu0 0
  %87 = vmatpush1.bf16.msra.mxu0 0
  %88 = vmatprep.subr.bf16.mxu0 0
  %89 = vmatpush1.bf16.msra.mxu0 0
  %90 = vmatprep.subr.bf16.mxu0 0
  %91 = vmatpush1.bf16.msra.mxu0 0
  %92 = vmatprep.subr.bf16.mxu0 0
  %93 = vmatpush1.bf16.msra.mxu0 0
  %94 = vmatprep.subr.bf16.mxu0 0
  %95 = vmatpush1.bf16.msra.mxu0 0
  %96 = vmatprep.subr.bf16.mxu0 0
  %97 = vmatpush1.bf16.msra.mxu0 0
  %98 = vmatprep.subr.bf16.mxu0 0
  %99 = vmatpush1.bf16.msra.mxu0 0
  %100 = vmatprep.mubr.bf16.mxu0 0
  %101 = vmatmul.mubr.bf16.gmra.mrb[0].mxu0 %v57
  %v102 = vpop.f32.mrb[0].mxu0
  %v103 = vadd.f32 0.0, %v102
  %v104 = vpop.f32.mrb[0].mxu0
  %v105 = vpop.f32.mrb[0].mxu0
  %v106 = vadd.f32 0.0, %v105
  %v107 = vpop.f32.mrb[0].mxu0
  %108 = vmatprep.mubr.bf16.mxu0 0
  %109 = vmatmul.mubr.bf16.gmra.mrb[0].mxu0 %v60
  %v110 = vpop.f32.mrb[0].mxu0
  %v111 = vadd.f32 0.0, %v110
  %v112 = vpop.f32.mrb[0].mxu0
  %v113 = vpop.f32.mrb[0].mxu0
  %v114 = vadd.f32 0.0, %v113
  %v115 = vpop.f32.mrb[0].mxu0
  %116 = vmatprep.mubr.bf16.mxu0 0
  %117 = vmatmul.mubr.bf16.gmra.mrb[0].mxu0 %v63
  %v118 = vpop.f32.mrb[0].mxu0
  %v119 = vadd.f32 0.0, %v118
  %v120 = vpop.f32.mrb[0].mxu0
  %v121 = vpop.f32.mrb[0].mxu0
  %v122 = vadd.f32 0.0, %v121
  %v123 = vpop.f32.mrb[0].mxu0
  %124 = vmatprep.mubr.bf16.mxu0 0
  %125 = vmatmul.mubr.bf16.gmra.mrb[0].mxu0 %v66
  %v126 = vpop.f32.mrb[0].mxu0
  %v127 = vadd.f32 0.0, %v126
  %v128 = vpop.f32.mrb[0].mxu0
  %v129 = vpop.f32.mrb[0].mxu0
  %v130 = vadd.f32 0.0, %v129
  %v131 = vpop.f32.mrb[0].mxu0
  %132 = vdwg.mxu0
  %v135 = vunpack.c.l.b16 %v45
  %v136 = vunpack.c.l.b16 %v46
  %v137 = vpack.c.b16 %v136, %v135
  %v140 = vsel %vm55, %v29, 0
  %v143 = vsel %vm55, %v30, 0
  %v146 = vsel %vm55, %v31, 0
  %v149 = vsel %vm55, %v32, 0
  %151 = vmatprep.subr.bf16.mxu0 0
  %152 = vmatpush1.bf16.msra.mxu0 %v137
  %153 = vmatprep.subr.bf16.mxu0 0
  %154 = vmatpush1.bf16.msra.mxu0 0
  %155 = vmatprep.subr.bf16.mxu0 0
  %156 = vmatpush1.bf16.msra.mxu0 0
  %157 = vmatprep.subr.bf16.mxu0 0
  %158 = vmatpush1.bf16.msra.mxu0 0
  %159 = vmatprep.subr.bf16.mxu0 0
  %160 = vmatpush1.bf16.msra.mxu0 0
  %161 = vmatprep.subr.bf16.mxu0 0
  %162 = vmatpush1.bf16.msra.mxu0 0
  %163 = vmatprep.subr.bf16.mxu0 0
  %164 = vmatpush1.bf16.msra.mxu0 0
  %165 = vmatprep.subr.bf16.mxu0 0
  %166 = vmatpush1.bf16.msra.mxu0 0
  %167 = vmatprep.subr.bf16.mxu0 0
  %168 = vmatpush1.bf16.msra.mxu0 0
  %169 = vmatprep.subr.bf16.mxu0 0
  %170 = vmatpush1.bf16.msra.mxu0 0
  %171 = vmatprep.subr.bf16.mxu0 0
  %172 = vmatpush1.bf16.msra.mxu0 0
  %173 = vmatprep.subr.bf16.mxu0 0
  %174 = vmatpush1.bf16.msra.mxu0 0
  %175 = vmatprep.subr.bf16.mxu0 0
  %176 = vmatpush1.bf16.msra.mxu0 0
  %177 = vmatprep.subr.bf16.mxu0 0
  %178 = vmatpush1.bf16.msra.mxu0 0
  %179 = vmatprep.subr.bf16.mxu0 0
  %180 = vmatpush1.bf16.msra.mxu0 0
  %181 = vmatprep.subr.bf16.mxu0 0
  %182 = vmatpush1.bf16.msra.mxu0 0
  %183 = vmatprep.mubr.bf16.mxu0 0
  %184 = vmatmul.mubr.bf16.gmra.mrb[0].mxu0 %v140
  %v185 = vpop.f32.mrb[0].mxu0
  %v186 = vadd.f32 %v103, %v185
  %v187 = vpop.f32.mrb[0].mxu0
  %v188 = vpop.f32.mrb[0].mxu0
  %v189 = vadd.f32 %v106, %v188
  %v190 = vpop.f32.mrb[0].mxu0
  %191 = vmatprep.mubr.bf16.mxu0 0
  %192 = vmatmul.mubr.bf16.gmra.mrb[0].mxu0 %v143
  %v193 = vpop.f32.mrb[0].mxu0
  %v194 = vadd.f32 %v111, %v193
  %v195 = vpop.f32.mrb[0].mxu0
  %v196 = vpop.f32.mrb[0].mxu0
  %v197 = vadd.f32 %v114, %v196
  %v198 = vpop.f32.mrb[0].mxu0
  %199 = vmatprep.mubr.bf16.mxu0 0
  %200 = vmatmul.mubr.bf16.gmra.mrb[0].mxu0 %v146
  %v201 = vpop.f32.mrb[0].mxu0
  %v202 = vadd.f32 %v119, %v201
  %v203 = vpop.f32.mrb[0].mxu0
  %v204 = vpop.f32.mrb[0].mxu0
  %v205 = vadd.f32 %v122, %v204
  %v206 = vpop.f32.mrb[0].mxu0
  %207 = vmatprep.mubr.bf16.mxu0 0
  %208 = vmatmul.mubr.bf16.gmra.mrb[0].mxu0 %v149
  %v209 = vpop.f32.mrb[0].mxu0
  %v210 = vadd.f32 %v127, %v209
  %v211 = vpop.f32.mrb[0].mxu0
  %v212 = vpop.f32.mrb[0].mxu0
  %v213 = vadd.f32 %v130, %v212
  %v214 = vpop.f32.mrb[0].mxu0
  %215 = vdwg.mxu0
  %v216 = vld [vmem:[%s4] sm:$0x1]
  %v218 = vlaneseq
  %v219 = vshrl.u32 %v218, 7
  %v220 = vsub.s32 0, %v219
  %v221 = vrot.slane %v216, %v220
  %v223 = vadd.f32 %v186, %v221
  %v224 = vadd.f32 %v189, %v221
  %v225 = vadd.f32 %v194, %v221
  %v226 = vadd.f32 %v197, %v221
  %v227 = vadd.f32 %v202, %v221
  %v228 = vadd.f32 %v205, %v221
  %v229 = vadd.f32 %v210, %v221
  %v230 = vadd.f32 %v213, %v221
  %231 = vmax.xlane.f32.xlu0 %v223
  %v232 = vpop.xlane.xlu0 %231
  %233 = vmax.xlane.f32.xlu0 %v224
  %v234 = vpop.xlane.xlu0 %233
  %235 = vmax.xlane.f32.xlu0 %v225
  %v236 = vpop.xlane.xlu0 %235
  %237 = vmax.xlane.f32.xlu0 %v226
  %v238 = vpop.xlane.xlu0 %237
  %239 = vmax.xlane.f32.xlu0 %v227
  %v240 = vpop.xlane.xlu0 %239
  %241 = vmax.xlane.f32.xlu0 %v228
  %v242 = vpop.xlane.xlu0 %241
  %243 = vmax.xlane.f32.xlu0 %v229
  %v244 = vpop.xlane.xlu0 %243
  %245 = vmax.xlane.f32.xlu0 %v230
  %v246 = vpop.xlane.xlu0 %245
  %v247 = vsub.f32 %v223, %v232
  %v248 = vsub.f32 %v224, %v234
  %v249 = vsub.f32 %v225, %v236
  %v250 = vsub.f32 %v226, %v238
  %v251 = vsub.f32 %v227, %v240
  %v252 = vsub.f32 %v228, %v242
  %v253 = vsub.f32 %v229, %v244
  %v254 = vsub.f32 %v230, %v246
  %v255 = vmul.f32 %v247, 1.442695
  %v256 = vpow.pop %v255
  %v257 = vmul.f32 %v248, 1.442695
  %v258 = vpow.pop %v257
  %v259 = vmul.f32 %v249, 1.442695
  %v260 = vpow.pop %v259
  %v261 = vmul.f32 %v250, 1.442695
  %v262 = vpow.pop %v261
  %v263 = vmul.f32 %v251, 1.442695
  %v264 = vpow.pop %v263
  %v265 = vmul.f32 %v252, 1.442695
  %v266 = vpow.pop %v265
  %v267 = vmul.f32 %v253, 1.442695
  %v268 = vpow.pop %v267
  %v269 = vmul.f32 %v254, 1.442695
  %v270 = vpow.pop %v269
  %271 = vadd.xlane.f32.xlu0 %v256
  %v272 = vpop.xlane.xlu0 %271
  %273 = vadd.xlane.f32.xlu0 %v258
  %v274 = vpop.xlane.xlu0 %273
  %275 = vadd.xlane.f32.xlu0 %v260
  %v276 = vpop.xlane.xlu0 %275
  %277 = vadd.xlane.f32.xlu0 %v262
  %v278 = vpop.xlane.xlu0 %277
  %279 = vadd.xlane.f32.xlu0 %v264
  %v280 = vpop.xlane.xlu0 %279
  %281 = vadd.xlane.f32.xlu0 %v266
  %v282 = vpop.xlane.xlu0 %281
  %283 = vadd.xlane.f32.xlu0 %v268
  %v284 = vpop.xlane.xlu0 %283
  %285 = vadd.xlane.f32.xlu0 %v270
  %v286 = vpop.xlane.xlu0 %285
  %v287 = vlog2.pop %v272
  %v288 = vmul.f32 %v287, 0.6931472
  %v289 = vlog2.pop %v274
  %v290 = vmul.f32 %v289, 0.6931472
  %v291 = vlog2.pop %v276
  %v292 = vmul.f32 %v291, 0.6931472
  %v293 = vlog2.pop %v278
  %v294 = vmul.f32 %v293, 0.6931472
  %v295 = vlog2.pop %v280
  %v296 = vmul.f32 %v295, 0.6931472
  %v297 = vlog2.pop %v282
  %v298 = vmul.f32 %v297, 0.6931472
  %v299 = vlog2.pop %v284
  %v300 = vmul.f32 %v299, 0.6931472
  %v301 = vlog2.pop %v286
  %v302 = vmul.f32 %v301, 0.6931472
  %v303 = vsub.f32 %v247, %v288
  %v304 = vsub.f32 %v248, %v290
  %v305 = vsub.f32 %v249, %v292
  %v306 = vsub.f32 %v250, %v294
  %v307 = vsub.f32 %v251, %v296
  %v308 = vsub.f32 %v252, %v298
  %v309 = vsub.f32 %v253, %v300
  %v310 = vsub.f32 %v254, %v302
  %311 = vst [vmem:[%s5] sm:$0xff] %v303
  %312 = vst [vmem:[%s5 + $0x8] sm:$0xff] %v304
  %313 = vst [vmem:[%s5 + $0x10] sm:$0xff] %v305
  %314 = vst [vmem:[%s5 + $0x18] sm:$0xff] %v306
  %315 = vst [vmem:[%s5 + $0x20] sm:$0xff] %v307
  %316 = vst [vmem:[%s5 + $0x28] sm:$0xff] %v308
  %317 = vst [vmem:[%s5 + $0x30] sm:$0xff] %v309
  %318 = vst [vmem:[%s5 + $0x38] sm:$0xff] %v310
  // Predicated region
  $region22: #{language_model_forward.5} parent=0 // pred_check
    _
  $region23: #{language_model_forward.5} parent=0 // pred_check_branch
    %320 = sbr.rel (0) target = $region25
  $region24: #{language_model_forward.5} parent=0 // pred_region
    _
  $region25: #{language_model_forward.5} parent=0 // pred_fallthru
    _
  // Predicated region
  $region26: #{language_model_forward.5} parent=0 // pred_check
    _
  $region27: #{language_model_forward.5} parent=0 // pred_check_branch
    %322 = sbr.rel (0) target = $region29
  $region28: #{language_model_forward.5} parent=0 // pred_region
    _
  $region29: #{language_model_forward.5} parent=0 // pred_fallthru
    _

// kernel: language_model_forward.3
$region0: #{language_model_forward.3}
  #allocation0 [shape = 'u32[]', space=smem, size = 0x4, offset = 0x4, fixed_abs, tag = 'smem constant byte address 0x4 - core index']
  #allocation1 [shape = 'u32[144,128]{1,0:T(1,128)}', space=vmem, size = 0x12000, scoped, tag = 'internal scratch']
  #allocation2 [shape = 'f32[2,8,16]{2,1,0:T(8,128)}', space=vmem, size = 0x2000, scoped, tag = 'scratch operand']
  #allocation3 [shape = 'f32[2,8,16]{2,1,0:T(8,128)}', space=vmem, size = 0x2000, scoped, tag = 'scratch operand']
  #allocation4 [shape = 'f32[8,8,64]{2,1,0:T(8,128)}', space=vmem, size = 0x8000, scoped, tag = 'scratch operand']
  #allocation5 [shape = 'f32[8,8,64]{2,1,0:T(8,128)}', space=vmem, size = 0x8000, scoped, tag = 'scratch operand']
  %s0 = inlined_call_operand.vmem [shape: s32[8,1], index: 0, kind: input, shape index: {}]
  %s1 = inlined_call_operand.vmem [shape: f32[8,8,32], index: 1, kind: input, shape index: {}, may-alias: {1,2}]
  %s2 = inlined_call_operand.vmem [shape: f32[8,8,32], index: 2, kind: input, shape index: {}, may-alias: {1,2}]
  %s3 = inlined_call_operand.vmem [shape: bf16[2,32,64], index: 3, kind: input, shape index: {}]
  %s4 = inlined_call_operand.vmem [shape: bf16[2,16,64], index: 4, kind: input, shape index: {}]
  %s5 = inlined_call_operand.vmem [shape: f32[2,1,64], index: 5, kind: input, shape index: {}]
  %s6 = inlined_call_operand.vmem [shape: f32[2,8,16], index: 6, kind: input, shape index: {}]
  %s7 = inlined_call_operand.vmem [shape: f32[2,8,16], index: 7, kind: input, shape index: {}]
  %s8 = inlined_call_operand.vmem [shape: f32[8,8,16], index: 8, kind: output, shape index: {0}]
  %s9 = inlined_call_operand.vmem [shape: f32[8,8,16], index: 9, kind: output, shape index: {1}]
  %10 = xla_tuple %s8, %s9
  %s11 = sld [smem:[#allocation0]]
  $region54: #{language_model_forward.3} parent=0
    _
  %s13 = ssub.s32 1, %s11
  %s14 = scalar_select 0, %s13, %s11
  // Predicated region
  $region2: #{language_model_forward.3} parent=0 // pred_check
    _
  $region3: #{language_model_forward.3} parent=0 // pred_check_branch
    %16 = sbr.rel (0) target = $region5
  $region4: #{language_model_forward.3} parent=0 // pred_region
    _
  $region5: #{language_model_forward.3} parent=0 // pred_fallthru
    _
  // Predicated region
  $region6: #{language_model_forward.3} parent=0 // pred_check
    _
  $region7: #{language_model_forward.3} parent=0 // pred_check_branch
    %18 = sbr.rel (0) target = $region9
  $region8: #{language_model_forward.3} parent=0 // pred_region
    _
  $region9: #{language_model_forward.3} parent=0 // pred_fallthru
    _
  // Predicated region
  $region10: #{language_model_forward.3} parent=0 // pred_check
    _
  $region11: #{language_model_forward.3} parent=0 // pred_check_branch
    %20 = sbr.rel (0) target = $region13
  $region12: #{language_model_forward.3} parent=0 // pred_region
    %s21 = ssub.s32 0, 0
    %s22 = smul.u32 8, %s21
    %p23 = scmp.lt.s32.totalorder %s22, 7
    %s24 = scalar_select %p23, %s22, 7
    %s25 = smul.addr %s24, 8
    %s26 = scalar_lea.vmem %s2, %s25
    %s27 = ssub.s32 0, 0
    %s28 = smul.u32 8, %s27
  $region13: #{language_model_forward.3} parent=0 // pred_fallthru
    _
  // Predicated region
  $region14: #{language_model_forward.3} parent=0 // pred_check
    _
  $region15: #{language_model_forward.3} parent=0 // pred_check_branch
    %30 = sbr.rel (0) target = $region17
  $region16: #{language_model_forward.3} parent=0 // pred_region
    _
  $region17: #{language_model_forward.3} parent=0 // pred_fallthru
    _
  // Predicated region
  $region18: #{language_model_forward.3} parent=0 // pred_check
    _
  $region19: #{language_model_forward.3} parent=0 // pred_check_branch
    %32 = sbr.rel (0) target = $region21
  $region20: #{language_model_forward.3} parent=0 // pred_region
    _
  $region21: #{language_model_forward.3} parent=0 // pred_fallthru
    _
  // Predicated region
  $region22: #{language_model_forward.3} parent=0 // pred_check
    _
  $region23: #{language_model_forward.3} parent=0 // pred_check_branch
    %34 = sbr.rel (0) target = $region25
  $region24: #{language_model_forward.3} parent=0 // pred_region
    _
  $region25: #{language_model_forward.3} parent=0 // pred_fallthru
    _
  // Predicated region
  $region26: #{language_model_forward.3} parent=0 // pred_check
    _
  $region27: #{language_model_forward.3} parent=0 // pred_check_branch
    %36 = sbr.rel (0) target = $region29
  $region28: #{language_model_forward.3} parent=0 // pred_region
    _
  $region29: #{language_model_forward.3} parent=0 // pred_fallthru
    _
  // Predicated region
  $region30: #{language_model_forward.3} parent=0 // pred_check
    _
  $region31: #{language_model_forward.3} parent=0 // pred_check_branch
    %38 = sbr.rel (0) target = $region33
  $region32: #{language_model_forward.3} parent=0 // pred_region
    _
  $region33: #{language_model_forward.3} parent=0 // pred_fallthru
    _
  %s39 = ssub.s32 0, 0
  %s40 = smul.u32 8, %s39
  %p41 = scmp.lt.s32.totalorder %s40, 7
  %s42 = scalar_select %p41, %s40, 7
  %s43 = smul.addr %s42, 8
  %s44 = scalar_lea.vmem %s2, %s43
  %s45 = ssub.s32 0, 0
  %s46 = smul.u32 8, %s45
  %p47 = scmp.lt.s32.totalorder %s46, 7
  %s48 = scalar_select %p47, %s46, 7
  %s49 = smul.addr %s48, 8
  %s50 = scalar_lea.vmem %s9, %s49
  %s51 = ssub.s32 0, 0
  %s52 = smul.u32 8, %s51
  %p53 = scmp.lt.s32.totalorder %s52, 7
  %s54 = scalar_select %p53, %s52, 7
  %s55 = smul.addr %s54, 8
  %s56 = scalar_lea.vmem %s2, %s55
  %s57 = ssub.s32 0, 0
  %s58 = smul.u32 8, %s57
  %s59 = ssub.s32 0, 0
  %s60 = smul.u32 8, %s59
  %p61 = scmp.lt.s32.totalorder %s60, 7
  %s62 = scalar_select %p61, %s60, 7
  %s63 = smul.addr %s62, 8
  %s64 = scalar_lea.vmem %s9, %s63
  %s65 = ssub.s32 0, 0
  %s66 = smul.u32 8, %s65
  %p68 = scmp.eq.s32.totalorder 0, 0
  // Predicated region
  $region34: #{language_model_forward.3} parent=0 // pred_check
    %p69 = pneg %p68
  $region35: #{language_model_forward.3} parent=0 // pred_check_branch
    %71 = sbr.rel (%p69) target = $region37
  $region36: #{language_model_forward.3} parent=0 // pred_region
    %v72 = vld [vmem:[%s6] sm:$0xff]
    %v73 = vld [vmem:[%s6 + $0x8] sm:$0xff]
    %vm74 = vcmask 130048
    %75 = vst.msk [vmem:[#allocation2] sm:$0xff] %vm74, %v72
    %76 = vst.msk [vmem:[#allocation2 + $0x8] sm:$0xff] %vm74, %v73
    %v77 = vld [vmem:[%s7] sm:$0xff]
    %v78 = vld [vmem:[%s7 + $0x8] sm:$0xff]
    %79 = vst.msk [vmem:[#allocation3] sm:$0xff] %vm74, %v77
    %80 = vst.msk [vmem:[#allocation3 + $0x8] sm:$0xff] %vm74, %v78
  $region37: #{language_model_forward.3} parent=0 // pred_fallthru
    _
  %v81 = vld [vmem:[%s1] sm:$0xff]
  %v82 = vld [vmem:[%s1 + $0x8] sm:$0xff]
  %v83 = vld [vmem:[%s1 + $0x10] sm:$0xff]
  %v84 = vld [vmem:[%s1 + $0x18] sm:$0xff]
  %v85 = vld [vmem:[%s1 + $0x20] sm:$0xff]
  %v86 = vld [vmem:[%s1 + $0x28] sm:$0xff]
  %v87 = vld [vmem:[%s1 + $0x30] sm:$0xff]
  %v88 = vld [vmem:[%s1 + $0x38] sm:$0xff]
  %v89 = vpack.c.bf16 %v82, %v81
  %v90 = vpack.c.bf16 %v84, %v83
  %v91 = vpack.c.bf16 %v86, %v85
  %v92 = vpack.c.bf16 %v88, %v87
  %v93 = vld [vmem:[%s3] sm:$0xf]
  %v94 = vld [vmem:[%s3 + $0x4] sm:$0xf]
  %v95 = vld [vmem:[%s3 + $0x8] sm:$0xf]
  %v96 = vld [vmem:[%s3 + $0xc] sm:$0xf]
  %v97 = vld [vmem:[%s5] sm:$0x1]
  %v99 = vlaneseq
  %v100 = vshrl.u32 %v99, 7
  %v101 = vsub.s32 0, %v100
  %v102 = vrot.slane %v97, %v101
  %v108 = vunpack.c.l.b16 %v93
  %v109 = vunpack.c.l.b16 %v94
  %v110 = vunpack.c.l.b16 %v95
  %v111 = vunpack.c.l.b16 %v96
  %v112 = vpack.c.b16 %v109, %v108
  %v113 = vpack.c.b16 %v111, %v110
  %vm116 = vcmask 261120
  %v118 = vsel %vm116, %v89, 0
  %v121 = vsel %vm116, %v90, 0
  %v124 = vsel %vm116, %v91, 0
  %v127 = vsel %vm116, %v92, 0
  %129 = vmatprep.subr.bf16.mxu0 0
  %130 = vmatpush1.bf16.msra.mxu0 %v112
  %131 = vmatprep.subr.bf16.mxu0 0
  %132 = vmatpush1.bf16.msra.mxu0 %v113
  %133 = vmatprep.subr.bf16.mxu0 0
  %134 = vmatpush1.bf16.msra.mxu0 0
  %135 = vmatprep.subr.bf16.mxu0 0
  %136 = vmatpush1.bf16.msra.mxu0 0
  %137 = vmatprep.subr.bf16.mxu0 0
  %138 = vmatpush1.bf16.msra.mxu0 0
  %139 = vmatprep.subr.bf16.mxu0 0
  %140 = vmatpush1.bf16.msra.mxu0 0
  %141 = vmatprep.subr.bf16.mxu0 0
  %142 = vmatpush1.bf16.msra.mxu0 0
  %143 = vmatprep.subr.bf16.mxu0 0
  %144 = vmatpush1.bf16.msra.mxu0 0
  %145 = vmatprep.subr.bf16.mxu0 0
  %146 = vmatpush1.bf16.msra.mxu0 0
  %147 = vmatprep.subr.bf16.mxu0 0
  %148 = vmatpush1.bf16.msra.mxu0 0
  %149 = vmatprep.subr.bf16.mxu0 0
  %150 = vmatpush1.bf16.msra.mxu0 0
  %151 = vmatprep.subr.bf16.mxu0 0
  %152 = vmatpush1.bf16.msra.mxu0 0
  %153 = vmatprep.subr.bf16.mxu0 0
  %154 = vmatpush1.bf16.msra.mxu0 0
  %155 = vmatprep.subr.bf16.mxu0 0
  %156 = vmatpush1.bf16.msra.mxu0 0
  %157 = vmatprep.subr.bf16.mxu0 0
  %158 = vmatpush1.bf16.msra.mxu0 0
  %159 = vmatprep.subr.bf16.mxu0 0
  %160 = vmatpush1.bf16.msra.mxu0 0
  %161 = vmatprep.mubr.bf16.mxu0 0
  %162 = vmatmul.mubr.bf16.gmra.mrb[0].mxu0 %v118
  %v163 = vpop.f32.mrb[0].mxu0
  %v164 = vadd.f32 %v102, %v163
  %v165 = vpop.f32.mrb[0].mxu0
  %v166 = vpop.f32.mrb[0].mxu0
  %v167 = vadd.f32 %v102, %v166
  %v168 = vpop.f32.mrb[0].mxu0
  %169 = vmatprep.mubr.bf16.mxu0 0
  %170 = vmatmul.mubr.bf16.gmra.mrb[0].mxu0 %v121
  %v171 = vpop.f32.mrb[0].mxu0
  %v172 = vadd.f32 %v102, %v171
  %v173 = vpop.f32.mrb[0].mxu0
  %v174 = vpop.f32.mrb[0].mxu0
  %v175 = vadd.f32 %v102, %v174
  %v176 = vpop.f32.mrb[0].mxu0
  %177 = vmatprep.mubr.bf16.mxu0 0
  %178 = vmatmul.mubr.bf16.gmra.mrb[0].mxu0 %v124
  %v179 = vpop.f32.mrb[0].mxu0
  %v180 = vadd.f32 %v102, %v179
  %v181 = vpop.f32.mrb[0].mxu0
  %v182 = vpop.f32.mrb[0].mxu0
  %v183 = vadd.f32 %v102, %v182
  %v184 = vpop.f32.mrb[0].mxu0
  %185 = vmatprep.mubr.bf16.mxu0 0
  %186 = vmatmul.mubr.bf16.gmra.mrb[0].mxu0 %v127
  %v187 = vpop.f32.mrb[0].mxu0
  %v188 = vadd.f32 %v102, %v187
  %v189 = vpop.f32.mrb[0].mxu0
  %v190 = vpop.f32.mrb[0].mxu0
  %v191 = vadd.f32 %v102, %v190
  %v192 = vpop.f32.mrb[0].mxu0
  %193 = vdwg.mxu0
  %vm194 = vcmask 523264
  %195 = vst.msk [vmem:[#allocation4] sm:$0xff] %vm194, %v164
  %196 = vst.msk [vmem:[#allocation4 + $0x8] sm:$0xff] %vm194, %v167
  %197 = vst.msk [vmem:[#allocation4 + $0x10] sm:$0xff] %vm194, %v172
  %198 = vst.msk [vmem:[#allocation4 + $0x18] sm:$0xff] %vm194, %v175
  %199 = vst.msk [vmem:[#allocation4 + $0x20] sm:$0xff] %vm194, %v180
  %200 = vst.msk [vmem:[#allocation4 + $0x28] sm:$0xff] %vm194, %v183
  %201 = vst.msk [vmem:[#allocation4 + $0x30] sm:$0xff] %vm194, %v188
  %202 = vst.msk [vmem:[#allocation4 + $0x38] sm:$0xff] %vm194, %v191
  %v203 = vld [vmem:[%s56] sm:$0xff]
  %v204 = vld [vmem:[%s56 + $0x8] sm:$0xff]
  %v205 = vld [vmem:[%s56 + $0x10] sm:$0xff]
  %v206 = vld [vmem:[%s56 + $0x18] sm:$0xff]
  %v207 = vld [vmem:[%s56 + $0x20] sm:$0xff]
  %v208 = vld [vmem:[%s56 + $0x28] sm:$0xff]
  %v209 = vld [vmem:[%s56 + $0x30] sm:$0xff]
  %v210 = vld [vmem:[%s56 + $0x38] sm:$0xff]
  %v211 = vpack.c.bf16 %v204, %v203
  %v212 = vpack.c.bf16 %v206, %v205
  %v213 = vpack.c.bf16 %v208, %v207
  %v214 = vpack.c.bf16 %v210, %v209
  %s215 = scalar_lea.vmem %s3, 16
  %v216 = vld [vmem:[%s215] sm:$0xf]
  %v217 = vld [vmem:[%s215 + $0x4] sm:$0xf]
  %v218 = vld [vmem:[%s215 + $0x8] sm:$0xf]
  %v219 = vld [vmem:[%s215 + $0xc] sm:$0xf]
  %s220 = scalar_lea.vmem %s5, 1
  %v221 = vld [vmem:[%s220] sm:$0x1]
  %v223 = vlaneseq
  %v224 = vshrl.u32 %v223, 7
  %v225 = vsub.s32 0, %v224
  %v226 = vrot.slane %v221, %v225
  %v232 = vunpack.c.l.b16 %v216
  %v233 = vunpack.c.l.b16 %v217
  %v234 = vunpack.c.l.b16 %v218
  %v235 = vunpack.c.l.b16 %v219
  %v236 = vpack.c.b16 %v233, %v232
  %v237 = vpack.c.b16 %v235, %v234
  %v241 = vsel %vm116, %v211, 0
  %v244 = vsel %vm116, %v212, 0
  %v247 = vsel %vm116, %v213, 0
  %v250 = vsel %vm116, %v214, 0
  %252 = vmatprep.subr.bf16.mxu0 0
  %253 = vmatpush1.bf16.msra.mxu0 %v236
  %254 = vmatprep.subr.bf16.mxu0 0
  %255 = vmatpush1.bf16.msra.mxu0 %v237
  %256 = vmatprep.subr.bf16.mxu0 0
  %257 = vmatpush1.bf16.msra.mxu0 0
  %258 = vmatprep.subr.bf16.mxu0 0
  %259 = vmatpush1.bf16.msra.mxu0 0
  %260 = vmatprep.subr.bf16.mxu0 0
  %261 = vmatpush1.bf16.msra.mxu0 0
  %262 = vmatprep.subr.bf16.mxu0 0
  %263 = vmatpush1.bf16.msra.mxu0 0
  %264 = vmatprep.subr.bf16.mxu0 0
  %265 = vmatpush1.bf16.msra.mxu0 0
  %266 = vmatprep.subr.bf16.mxu0 0
  %267 = vmatpush1.bf16.msra.mxu0 0
  %268 = vmatprep.subr.bf16.mxu0 0
  %269 = vmatpush1.bf16.msra.mxu0 0
  %270 = vmatprep.subr.bf16.mxu0 0
  %271 = vmatpush1.bf16.msra.mxu0 0
  %272 = vmatprep.subr.bf16.mxu0 0
  %273 = vmatpush1.bf16.msra.mxu0 0
  %274 = vmatprep.subr.bf16.mxu0 0
  %275 = vmatpush1.bf16.msra.mxu0 0
  %276 = vmatprep.subr.bf16.mxu0 0
  %277 = vmatpush1.bf16.msra.mxu0 0
  %278 = vmatprep.subr.bf16.mxu0 0
  %279 = vmatpush1.bf16.msra.mxu0 0
  %280 = vmatprep.subr.bf16.mxu0 0
  %281 = vmatpush1.bf16.msra.mxu0 0
  %282 = vmatprep.subr.bf16.mxu0 0
  %283 = vmatpush1.bf16.msra.mxu0 0
  %284 = vmatprep.mubr.bf16.mxu0 0
  %285 = vmatmul.mubr.bf16.gmra.mrb[0].mxu0 %v241
  %v286 = vpop.f32.mrb[0].mxu0
  %v287 = vadd.f32 %v226, %v286
  %v288 = vpop.f32.mrb[0].mxu0
  %v289 = vpop.f32.mrb[0].mxu0
  %v290 = vadd.f32 %v226, %v289
  %v291 = vpop.f32.mrb[0].mxu0
  %292 = vmatprep.mubr.bf16.mxu0 0
  %293 = vmatmul.mubr.bf16.gmra.mrb[0].mxu0 %v244
  %v294 = vpop.f32.mrb[0].mxu0
  %v295 = vadd.f32 %v226, %v294
  %v296 = vpop.f32.mrb[0].mxu0
  %v297 = vpop.f32.mrb[0].mxu0
  %v298 = vadd.f32 %v226, %v297
  %v299 = vpop.f32.mrb[0].mxu0
  %300 = vmatprep.mubr.bf16.mxu0 0
  %301 = vmatmul.mubr.bf16.gmra.mrb[0].mxu0 %v247
  %v302 = vpop.f32.mrb[0].mxu0
  %v303 = vadd.f32 %v226, %v302
  %v304 = vpop.f32.mrb[0].mxu0
  %v305 = vpop.f32.mrb[0].mxu0
  %v306 = vadd.f32 %v226, %v305
  %v307 = vpop.f32.mrb[0].mxu0
  %308 = vmatprep.mubr.bf16.mxu0 0
  %309 = vmatmul.mubr.bf16.gmra.mrb[0].mxu0 %v250
  %v310 = vpop.f32.mrb[0].mxu0
  %v311 = vadd.f32 %v226, %v310
  %v312 = vpop.f32.mrb[0].mxu0
  %v313 = vpop.f32.mrb[0].mxu0
  %v314 = vadd.f32 %v226, %v313
  %v315 = vpop.f32.mrb[0].mxu0
  %316 = vdwg.mxu0
  %317 = vst.msk [vmem:[#allocation5] sm:$0xff] %vm194, %v287
  %318 = vst.msk [vmem:[#allocation5 + $0x8] sm:$0xff] %vm194, %v290
  %319 = vst.msk [vmem:[#allocation5 + $0x10] sm:$0xff] %vm194, %v295
  %320 = vst.msk [vmem:[#allocation5 + $0x18] sm:$0xff] %vm194, %v298
  %321 = vst.msk [vmem:[#allocation5 + $0x20] sm:$0xff] %vm194, %v303
  %322 = vst.msk [vmem:[#allocation5 + $0x28] sm:$0xff] %vm194, %v306
  %323 = vst.msk [vmem:[#allocation5 + $0x30] sm:$0xff] %vm194, %v311
  %324 = vst.msk [vmem:[#allocation5 + $0x38] sm:$0xff] %vm194, %v314
  %v325 = vld [vmem:[%s4] sm:$0xf]
  %v326 = vld [vmem:[%s4 + $0x4] sm:$0xf]
  %s327 = scalar_lea.vmem %s4, 8
  %v328 = vld [vmem:[%s327] sm:$0xf]
  %v329 = vld [vmem:[%s327 + $0x4] sm:$0xf]
  %v330 = vld [vmem:[%s0] sm:$0xff]
  %v331 = vld [vmem:[#allocation2] sm:$0xff]
  %v332 = vld [vmem:[#allocation2 + $0x8] sm:$0xff]
  %v333 = vld [vmem:[#allocation3] sm:$0xff]
  %v334 = vld [vmem:[#allocation3 + $0x8] sm:$0xff]
  %s335 = smul.u32 0, 8
  %s336 = ssub.s32 7, %s335
  %v337 = vld [vmem:[#allocation4] sm:$0xff]
  %v338 = vpack.c.bf16 %v331, %v331
  %v341 = vunpack.c.l.b16 %v325
  %v342 = vunpack.c.l.b16 %v326
  %v343 = vpack.c.b16 %v342, %v341
  %vm345 = vcmask 130048
  %v347 = vsel %vm345, %v338, 0
  %349 = vmatprep.subr.bf16.mxu0 0
  %350 = vmatpush1.bf16.msra.mxu0 %v343
  %351 = vmatprep.subr.bf16.mxu0 0
  %352 = vmatpush1.bf16.msra.mxu0 0
  %353 = vmatprep.subr.bf16.mxu0 0
  %354 = vmatpush1.bf16.msra.mxu0 0
  %355 = vmatprep.subr.bf16.mxu0 0
  %356 = vmatpush1.bf16.msra.mxu0 0
  %357 = vmatprep.subr.bf16.mxu0 0
  %358 = vmatpush1.bf16.msra.mxu0 0
  %359 = vmatprep.subr.bf16.mxu0 0
  %360 = vmatpush1.bf16.msra.mxu0 0
  %361 = vmatprep.subr.bf16.mxu0 0
  %362 = vmatpush1.bf16.msra.mxu0 0
  %363 = vmatprep.subr.bf16.mxu0 0
  %364 = vmatpush1.bf16.msra.mxu0 0
  %365 = vmatprep.subr.bf16.mxu0 0
  %366 = vmatpush1.bf16.msra.mxu0 0
  %367 = vmatprep.subr.bf16.mxu0 0
  %368 = vmatpush1.bf16.msra.mxu0 0
  %369 = vmatprep.subr.bf16.mxu0 0
  %370 = vmatpush1.bf16.msra.mxu0 0
  %371 = vmatprep.subr.bf16.mxu0 0
  %372 = vmatpush1.bf16.msra.mxu0 0
  %373 = vmatprep.subr.bf16.mxu0 0
  %374 = vmatpush1.bf16.msra.mxu0 0
  %375 = vmatprep.subr.bf16.mxu0 0
  %376 = vmatpush1.bf16.msra.mxu0 0
  %377 = vmatprep.subr.bf16.mxu0 0
  %378 = vmatpush1.bf16.msra.mxu0 0
  %379 = vmatprep.subr.bf16.mxu0 0
  %380 = vmatpush1.bf16.msra.mxu0 0
  %381 = vmatprep.mubr.bf16.mxu0 0
  %382 = vmatmul.mubr.bf16.gmra.mrb[0].mxu0 %v347
  %v383 = vpop.f32.mrb[0].mxu0
  %v384 = vadd.f32 0.0, %v383
  %v385 = vpop.f32.mrb[0].mxu0
  %v386 = vpop.f32.mrb[0].mxu0
  %v387 = vpop.f32.mrb[0].mxu0
  %388 = vdwg.mxu0
  %v389 = vadd.f32 %v337, %v384
  %s390 = scalar_lea.vmem [#allocation5], 56
  %v391 = vld [vmem:[%s390] sm:$0xff]
  %v392 = vpack.c.bf16 %v332, %v332
  %v395 = vunpack.c.l.b16 %v328
  %v396 = vunpack.c.l.b16 %v329
  %v397 = vpack.c.b16 %v396, %v395
  %v400 = vsel %vm345, %v392, 0
  %402 = vmatprep.subr.bf16.mxu0 0
  %403 = vmatpush1.bf16.msra.mxu0 %v397
  %404 = vmatprep.subr.bf16.mxu0 0
  %405 = vmatpush1.bf16.msra.mxu0 0
  %406 = vmatprep.subr.bf16.mxu0 0
  %407 = vmatpush1.bf16.msra.mxu0 0
  %408 = vmatprep.subr.bf16.mxu0 0
  %409 = vmatpush1.bf16.msra.mxu0 0
  %410 = vmatprep.subr.bf16.mxu0 0
  %411 = vmatpush1.bf16.msra.mxu0 0
  %412 = vmatprep.subr.bf16.mxu0 0
  %413 = vmatpush1.bf16.msra.mxu0 0
  %414 = vmatprep.subr.bf16.mxu0 0
  %415 = vmatpush1.bf16.msra.mxu0 0
  %416 = vmatprep.subr.bf16.mxu0 0
  %417 = vmatpush1.bf16.msra.mxu0 0
  %418 = vmatprep.subr.bf16.mxu0 0
  %419 = vmatpush1.bf16.msra.mxu0 0
  %420 = vmatprep.subr.bf16.mxu0 0
  %421 = vmatpush1.bf16.msra.mxu0 0
  %422 = vmatprep.subr.bf16.mxu0 0
  %423 = vmatpush1.bf16.msra.mxu0 0
  %424 = vmatprep.subr.bf16.mxu0 0
  %425 = vmatpush1.bf16.msra.mxu0 0
  %426 = vmatprep.subr.bf16.mxu0 0
  %427 = vmatpush1.bf16.msra.mxu0 0
  %428 = vmatprep.subr.bf16.mxu0 0
  %429 = vmatpush1.bf16.msra.mxu0 0
  %430 = vmatprep.subr.bf16.mxu0 0
  %431 = vmatpush1.bf16.msra.mxu0 0
  %432 = vmatprep.subr.bf16.mxu0 0
  %433 = vmatpush1.bf16.msra.mxu0 0
  %434 = vmatprep.mubr.bf16.mxu0 0
  %435 = vmatmul.mubr.bf16.gmra.mrb[0].mxu0 %v400
  %v436 = vpop.f32.mrb[0].mxu0
  %v437 = vadd.f32 0.0, %v436
  %v438 = vpop.f32.mrb[0].mxu0
  %v439 = vpop.f32.mrb[0].mxu0
  %v440 = vpop.f32.mrb[0].mxu0
  %441 = vdwg.mxu0
  %v442 = vadd.f32 %v391, %v437
  %v443 = vxor.u32 %v389, 2147483648
  %v444 = vmul.f32 %v443, 1.442695
  %v445 = vpow.pop %v444
  %v446 = vadd.f32 %v445, 1.0
  %v447 = vrcp.pop %v446
  %v448 = vmul.f32 1.0, %v447
  %v449 = vtanh.pop %v389
  %451 = vrot.lane.b32.xlu0 %v333, 16
  %v452 = vpop.permute.xlu0 %451
  %v454 = vmul.f32 %v448, %v452
  %456 = vrot.lane.b32.xlu0 %v449, 96
  %v457 = vpop.permute.xlu0 %456
  %v459 = vmul.f32 %v448, %v457
  %461 = vrot.lane.b32.xlu0 %v459, 16
  %v462 = vpop.permute.xlu0 %461
  %v464 = vadd.f32 %v454, %v462
  %v465 = vtanh.pop %v464
  %467 = vrot.lane.b32.xlu0 %v465, 32
  %v468 = vpop.permute.xlu0 %467
  %v470 = vmul.f32 %v448, %v468
  %v471 = vxor.u32 %v442, 2147483648
  %v472 = vmul.f32 %v471, 1.442695
  %v473 = vpow.pop %v472
  %v474 = vadd.f32 %v473, 1.0
  %v475 = vrcp.pop %v474
  %v476 = vmul.f32 1.0, %v475
  %v477 = vtanh.pop %v442
  %479 = vrot.lane.b32.xlu0 %v334, 16
  %v480 = vpop.permute.xlu0 %479
  %v482 = vmul.f32 %v476, %v480
  %484 = vrot.lane.b32.xlu0 %v477, 96
  %v485 = vpop.permute.xlu0 %484
  %v487 = vmul.f32 %v476, %v485
  %489 = vrot.lane.b32.xlu0 %v487, 16
  %v490 = vpop.permute.xlu0 %489
  %v492 = vadd.f32 %v482, %v490
  %v493 = vtanh.pop %v492
  %495 = vrot.lane.b32.xlu0 %v493, 32
  %v496 = vpop.permute.xlu0 %495
  %v498 = vmul.f32 %v476, %v496
  %v499 = vstv %s335
  %vm500 = vcmp.lt.s32.totalorder %v499, %v330
  %v501 = vstv %s336
  %vm502 = vcmp.lt.s32.totalorder %v501, %v330
  %v503 = vsel %vm500, 1, 0
  %504 = vset.pattern.permute.xlu0 0
  %505 = vperm.xlu0 %504, %v503
  %v506 = vpop.permute.xlu0 %505
  %vm507 = vcmp.eq.s32.totalorder %v506, 1
  %509 = vrot.lane.b32.xlu0 %v331, 48
  %v510 = vpop.permute.xlu0 %509
  %v512 = vsel %vm507, %v470, %v510
  %v513 = vsel %vm507, %v464, %v452
  %v514 = vsel %vm502, 1, 0
  %515 = vset.pattern.permute.xlu0 0
  %516 = vperm.xlu0 %515, %v514
  %v517 = vpop.permute.xlu0 %516
  %vm518 = vcmp.eq.s32.totalorder %v517, 1
  %520 = vrot.lane.b32.xlu0 %v332, 48
  %v521 = vpop.permute.xlu0 %520
  %v523 = vsel %vm518, %v498, %v521
  %v524 = vsel %vm518, %v492, %v480
  %v525 = vsel %vm507, %v470, 0.0
  %527 = vrot.lane.b32.xlu0 %v525, 80
  %v528 = vpop.permute.xlu0 %527
  %530 = vst.msk [vmem:[%s8] sm:$0xff] %vm345, %v528
  %v531 = vsel %vm518, %v498, 0.0
  %533 = vrot.lane.b32.xlu0 %v531, 80
  %v534 = vpop.permute.xlu0 %533
  %s536 = scalar_lea.vmem %s64, 56
  %537 = vst.msk [vmem:[%s536] sm:$0xff] %vm345, %v534
  %s538 = sadd.s32 %s335, 1
  %s539 = ssub.s32 6, %s335
  %s540 = scalar_lea.vmem [#allocation4], 8
  %v541 = vld [vmem:[%s540] sm:$0xff]
  %v542 = vpack.c.bf16 %v512, %v512
  %544 = vrot.lane.b32.xlu0 %v542, 80
  %v545 = vpop.permute.xlu0 %544
  %v547 = vsel %vm345, %v545, 0
  %549 = vmatprep.subr.bf16.mxu0 0
  %550 = vmatpush1.bf16.msra.mxu0 %v343
  %551 = vmatprep.subr.bf16.mxu0 0
  %552 = vmatpush1.bf16.msra.mxu0 0
  %553 = vmatprep.subr.bf16.mxu0 0
  %554 = vmatpush1.bf16.msra.mxu0 0
  %555 = vmatprep.subr.bf16.mxu0 0
  %556 = vmatpush1.bf16.msra.mxu0 0
  %557 = vmatprep.subr.bf16.mxu0 0
  %558 = vmatpush1.bf16.msra.mxu0 0
  %559 = vmatprep.subr.bf16.mxu0 0
  %560 = vmatpush1.bf16.msra.mxu0 0
  %561 = vmatprep.subr.bf16.mxu0 0
  %562 = vmatpush1.bf16.msra.mxu0 0
  %563 = vmatprep.subr.bf16.mxu0 0
  %564 = vmatpush1.bf16.msra.mxu0 0
  %565 = vmatprep.subr.bf16.mxu0 0
  %566 = vmatpush1.bf16.msra.mxu0 0
  %567 = vmatprep.subr.bf16.mxu0 0
  %568 = vmatpush1.bf16.msra.mxu0 0
  %569 = vmatprep.subr.bf16.mxu0 0
  %570 = vmatpush1.bf16.msra.mxu0 0
  %571 = vmatprep.subr.bf16.mxu0 0
  %572 = vmatpush1.bf16.msra.mxu0 0
  %573 = vmatprep.subr.bf16.mxu0 0
  %574 = vmatpush1.bf16.msra.mxu0 0
  %575 = vmatprep.subr.bf16.mxu0 0
  %576 = vmatpush1.bf16.msra.mxu0 0
  %577 = vmatprep.subr.bf16.mxu0 0
  %578 = vmatpush1.bf16.msra.mxu0 0
  %579 = vmatprep.subr.bf16.mxu0 0
  %580 = vmatpush1.bf16.msra.mxu0 0
  %581 = vmatprep.mubr.bf16.mxu0 0
  %582 = vmatmul.mubr.bf16.gmra.mrb[0].mxu0 %v547
  %v583 = vpop.f32.mrb[0].mxu0
  %v584 = vadd.f32 0.0, %v583
  %v585 = vpop.f32.mrb[0].mxu0
  %v586 = vpop.f32.mrb[0].mxu0
  %v587 = vpop.f32.mrb[0].mxu0
  %588 = vdwg.mxu0
  %v589 = vadd.f32 %v541, %v584
  %s590 = scalar_lea.vmem [#allocation5], 48
  %v591 = vld [vmem:[%s590] sm:$0xff]
  %v592 = vpack.c.bf16 %v523, %v523
  %594 = vrot.lane.b32.xlu0 %v592, 80
  %v595 = vpop.permute.xlu0 %594
  %v597 = vsel %vm345, %v595, 0
  %599 = vmatprep.subr.bf16.mxu0 0
  %600 = vmatpush1.bf16.msra.mxu0 %v397
  %601 = vmatprep.subr.bf16.mxu0 0
  %602 = vmatpush1.bf16.msra.mxu0 0
  %603 = vmatprep.subr.bf16.mxu0 0
  %604 = vmatpush1.bf16.msra.mxu0 0
  %605 = vmatprep.subr.bf16.mxu0 0
  %606 = vmatpush1.bf16.msra.mxu0 0
  %607 = vmatprep.subr.bf16.mxu0 0
  %608 = vmatpush1.bf16.msra.mxu0 0
  %609 = vmatprep.subr.bf16.mxu0 0
  %610 = vmatpush1.bf16.msra.mxu0 0
  %611 = vmatprep.subr.bf16.mxu0 0
  %612 = vmatpush1.bf16.msra.mxu0 0
  %613 = vmatprep.subr.bf16.mxu0 0
  %614 = vmatpush1.bf16.msra.mxu0 0
  %615 = vmatprep.subr.bf16.mxu0 0
  %616 = vmatpush1.bf16.msra.mxu0 0
  %617 = vmatprep.subr.bf16.mxu0 0
  %618 = vmatpush1.bf16.msra.mxu0 0
  %619 = vmatprep.subr.bf16.mxu0 0
  %620 = vmatpush1.bf16.msra.mxu0 0
  %621 = vmatprep.subr.bf16.mxu0 0
  %622 = vmatpush1.bf16.msra.mxu0 0
  %623 = vmatprep.subr.bf16.mxu0 0
  %624 = vmatpush1.bf16.msra.mxu0 0
  %625 = vmatprep.subr.bf16.mxu0 0
  %626 = vmatpush1.bf16.msra.mxu0 0
  %627 = vmatprep.subr.bf16.mxu0 0
  %628 = vmatpush1.bf16.msra.mxu0 0
  %629 = vmatprep.subr.bf16.mxu0 0
  %630 = vmatpush1.bf16.msra.mxu0 0
  %631 = vmatprep.mubr.bf16.mxu0 0
  %632 = vmatmul.mubr.bf16.gmra.mrb[0].mxu0 %v597
  %v633 = vpop.f32.mrb[0].mxu0
  %v634 = vadd.f32 0.0, %v633
  %v635 = vpop.f32.mrb[0].mxu0
  %v636 = vpop.f32.mrb[0].mxu0
  %v637 = vpop.f32.mrb[0].mxu0
  %638 = vdwg.mxu0
  %v639 = vadd.f32 %v591, %v634
  %v640 = vxor.u32 %v589, 2147483648
  %v641 = vmul.f32 %v640, 1.442695
  %v642 = vpow.pop %v641
  %v643 = vadd.f32 %v642, 1.0
  %v644 = vrcp.pop %v643
  %v645 = vmul.f32 1.0, %v644
  %v646 = vtanh.pop %v589
  %v647 = vmul.f32 %v645, %v513
  %649 = vrot.lane.b32.xlu0 %v646, 96
  %v650 = vpop.permute.xlu0 %649
  %v652 = vmul.f32 %v645, %v650
  %654 = vrot.lane.b32.xlu0 %v652, 16
  %v655 = vpop.permute.xlu0 %654
  %v657 = vadd.f32 %v647, %v655
  %v658 = vtanh.pop %v657
  %660 = vrot.lane.b32.xlu0 %v658, 32
  %v661 = vpop.permute.xlu0 %660
  %v663 = vmul.f32 %v645, %v661
  %v664 = vxor.u32 %v639, 2147483648
  %v665 = vmul.f32 %v664, 1.442695
  %v666 = vpow.pop %v665
  %v667 = vadd.f32 %v666, 1.0
  %v668 = vrcp.pop %v667
  %v669 = vmul.f32 1.0, %v668
  %v670 = vtanh.pop %v639
  %v671 = vmul.f32 %v669, %v524
  %673 = vrot.lane.b32.xlu0 %v670, 96
  %v674 = vpop.permute.xlu0 %673
  %v676 = vmul.f32 %v669, %v674
  %678 = vrot.lane.b32.xlu0 %v676, 16
  %v679 = vpop.permute.xlu0 %678
  %v681 = vadd.f32 %v671, %v679
  %v682 = vtanh.pop %v681
  %684 = vrot.lane.b32.xlu0 %v682, 32
  %v685 = vpop.permute.xlu0 %684
  %v687 = vmul.f32 %v669, %v685
  %v688 = vstv %s538
  %vm689 = vcmp.lt.s32.totalorder %v688, %v330
  %v690 = vstv %s539
  %vm691 = vcmp.lt.s32.totalorder %v690, %v330
  %v692 = vsel %vm689, 1, 0
  %693 = vset.pattern.permute.xlu0 0
  %694 = vperm.xlu0 %693, %v692
  %v695 = vpop.permute.xlu0 %694
  %vm696 = vcmp.eq.s32.totalorder %v695, 1
  %v697 = vsel %vm696, %v663, %v512
  %v698 = vsel %vm696, %v657, %v513
  %v699 = vsel %vm691, 1, 0
  %700 = vset.pattern.permute.xlu0 0
  %701 = vperm.xlu0 %700, %v699
  %v702 = vpop.permute.xlu0 %701
  %vm703 = vcmp.eq.s32.totalorder %v702, 1
  %v704 = vsel %vm703, %v687, %v523
  %v705 = vsel %vm703, %v681, %v524
  %v706 = vsel %vm696, %v663, 0.0
  %708 = vrot.lane.b32.xlu0 %v706, 80
  %v709 = vpop.permute.xlu0 %708
  %s711 = scalar_lea.vmem %s8, 8
  %712 = vst.msk [vmem:[%s711] sm:$0xff] %vm345, %v709
  %v713 = vsel %vm703, %v687, 0.0
  %715 = vrot.lane.b32.xlu0 %v713, 80
  %v716 = vpop.permute.xlu0 %715
  %s718 = scalar_lea.vmem %s64, 48
  %719 = vst.msk [vmem:[%s718] sm:$0xff] %vm345, %v716
  %s720 = sadd.s32 %s335, 2
  %s721 = ssub.s32 5, %s335
  %s722 = scalar_lea.vmem [#allocation4], 16
  %v723 = vld [vmem:[%s722] sm:$0xff]
  %v724 = vpack.c.bf16 %v697, %v697
  %726 = vrot.lane.b32.xlu0 %v724, 80
  %v727 = vpop.permute.xlu0 %726
  %v729 = vsel %vm345, %v727, 0
  %731 = vmatprep.subr.bf16.mxu0 0
  %732 = vmatpush1.bf16.msra.mxu0 %v343
  %733 = vmatprep.subr.bf16.mxu0 0
  %734 = vmatpush1.bf16.msra.mxu0 0
  %735 = vmatprep.subr.bf16.mxu0 0
  %736 = vmatpush1.bf16.msra.mxu0 0
  %737 = vmatprep.subr.bf16.mxu0 0
  %738 = vmatpush1.bf16.msra.mxu0 0
  %739 = vmatprep.subr.bf16.mxu0 0
  %740 = vmatpush1.bf16.msra.mxu0 0
  %741 = vmatprep.subr.bf16.mxu0 0
  %742 = vmatpush1.bf16.msra.mxu0 0
  %743 = vmatprep.subr.bf16.mxu0 0
  %744 = vmatpush1.bf16.msra.mxu0 0
  %745 = vmatprep.subr.bf16.mxu0 0
  %746 = vmatpush1.bf16.msra.mxu0 0
  %747 = vmatprep.subr.bf16.mxu0 0
  %748 = vmatpush1.bf16.msra.mxu0 0
  %749 = vmatprep.subr.bf16.mxu0 0
  %750 = vmatpush1.bf16.msra.mxu0 0
  %751 = vmatprep.subr.bf16.mxu0 0
  %752 = vmatpush1.bf16.msra.mxu0 0
  %753 = vmatprep.subr.bf16.mxu0 0
  %754 = vmatpush1.bf16.msra.mxu0 0
  %755 = vmatprep.subr.bf16.mxu0 0
  %756 = vmatpush1.bf16.msra.mxu0 0
  %757 = vmatprep.subr.bf16.mxu0 0
  %758 = vmatpush1.bf16.msra.mxu0 0
  %759 = vmatprep.subr.bf16.mxu0 0
  %760 = vmatpush1.bf16.msra.mxu0 0
  %761 = vmatprep.subr.bf16.mxu0 0
  %762 = vmatpush1.bf16.msra.mxu0 0
  %763 = vmatprep.mubr.bf16.mxu0 0
  %764 = vmatmul.mubr.bf16.gmra.mrb[0].mxu0 %v729
  %v765 = vpop.f32.mrb[0].mxu0
  %v766 = vadd.f32 0.0, %v765
  %v767 = vpop.f32.mrb[0].mxu0
  %v768 = vpop.f32.mrb[0].mxu0
  %v769 = vpop.f32.mrb[0].mxu0
  %770 = vdwg.mxu0
  %v771 = vadd.f32 %v723, %v766
  %s772 = scalar_lea.vmem [#allocation5], 40
  %v773 = vld [vmem:[%s772] sm:$0xff]
  %v774 = vpack.c.bf16 %v704, %v704
  %776 = vrot.lane.b32.xlu0 %v774, 80
  %v777 = vpop.permute.xlu0 %776
  %v779 = vsel %vm345, %v777, 0
  %781 = vmatprep.subr.bf16.mxu0 0
  %782 = vmatpush1.bf16.msra.mxu0 %v397
  %783 = vmatprep.subr.bf16.mxu0 0
  %784 = vmatpush1.bf16.msra.mxu0 0
  %785 = vmatprep.subr.bf16.mxu0 0
  %786 = vmatpush1.bf16.msra.mxu0 0
  %787 = vmatprep.subr.bf16.mxu0 0
  %788 = vmatpush1.bf16.msra.mxu0 0
  %789 = vmatprep.subr.bf16.mxu0 0
  %790 = vmatpush1.bf16.msra.mxu0 0
  %791 = vmatprep.subr.bf16.mxu0 0
  %792 = vmatpush1.bf16.msra.mxu0 0
  %793 = vmatprep.subr.bf16.mxu0 0
  %794 = vmatpush1.bf16.msra.mxu0 0
  %795 = vmatprep.subr.bf16.mxu0 0
  %796 = vmatpush1.bf16.msra.mxu0 0
  %797 = vmatprep.subr.bf16.mxu0 0
  %798 = vmatpush1.bf16.msra.mxu0 0
  %799 = vmatprep.subr.bf16.mxu0 0
  %800 = vmatpush1.bf16.msra.mxu0 0
  %801 = vmatprep.subr.bf16.mxu0 0
  %802 = vmatpush1.bf16.msra.mxu0 0
  %803 = vmatprep.subr.bf16.mxu0 0
  %804 = vmatpush1.bf16.msra.mxu0 0
  %805 = vmatprep.subr.bf16.mxu0 0
  %806 = vmatpush1.bf16.msra.mxu0 0
  %807 = vmatprep.subr.bf16.mxu0 0
  %808 = vmatpush1.bf16.msra.mxu0 0
  %809 = vmatprep.subr.bf16.mxu0 0
  %810 = vmatpush1.bf16.msra.mxu0 0
  %811 = vmatprep.subr.bf16.mxu0 0
  %812 = vmatpush1.bf16.msra.mxu0 0
  %813 = vmatprep.mubr.bf16.mxu0 0
  %814 = vmatmul.mubr.bf16.gmra.mrb[0].mxu0 %v779
  %v815 = vpop.f32.mrb[0].mxu0
  %v816 = vadd.f32 0.0, %v815
  %v817 = vpop.f32.mrb[0].mxu0
  %v818 = vpop.f32.mrb[0].mxu0
  %v819 = vpop.f32.mrb[0].mxu0
  %820 = vdwg.mxu0
  %v821 = vadd.f32 %v773, %v816
  %v822 = vxor.u32 %v771, 2147483648
  %v823 = vmul.f32 %v822, 1.442695
  %v824 = vpow.pop %v823
  %v825 = vadd.f32 %v824, 1.0
  %v826 = vrcp.pop %v825
  %v827 = vmul.f32 1.0, %v826
  %v828 = vtanh.pop %v771
  %v829 = vmul.f32 %v827, %v698
  %831 = vrot.lane.b32.xlu0 %v828, 96
  %v832 = vpop.permute.xlu0 %831
  %v834 = vmul.f32 %v827, %v832
  %836 = vrot.lane.b32.xlu0 %v834, 16
  %v837 = vpop.permute.xlu0 %836
  %v839 = vadd.f32 %v829, %v837
  %v840 = vtanh.pop %v839
  %842 = vrot.lane.b32.xlu0 %v840, 32
  %v843 = vpop.permute.xlu0 %842
  %v845 = vmul.f32 %v827, %v843
  %v846 = vxor.u32 %v821, 2147483648
  %v847 = vmul.f32 %v846, 1.442695
  %v848 = vpow.pop %v847
  %v849 = vadd.f32 %v848, 1.0
  %v850 = vrcp.pop %v849
  %v851 = vmul.f32 1.0, %v850
  %v852 = vtanh.pop %v821
  %v853 = vmul.f32 %v851, %v705
  %855 = vrot.lane.b32.xlu0 %v852, 96
  %v856 = vpop.permute.xlu0 %855
  %v858 = vmul.f32 %v851, %v856
  %860 = vrot.lane.b32.xlu0 %v858, 16
  %v861 = vpop.permute.xlu0 %860
  %v863 = vadd.f32 %v853, %v861
  %v864 = vtanh.pop %v863
  %866 = vrot.lane.b32.xlu0 %v864, 32
  %v867 = vpop.permute.xlu0 %866
  %v869 = vmul.f32 %v851, %v867
  %v870 = vstv %s720
  %vm871 = vcmp.lt.s32.totalorder %v870, %v330
  %v872 = vstv %s721
  %vm873 = vcmp.lt.s32.totalorder %v872, %v330
  %v874 = vsel %vm871, 1, 0
  %875 = vset.pattern.permute.xlu0 0
  %876 = vperm.xlu0 %875, %v874
  %v877 = vpop.permute.xlu0 %876
  %vm878 = vcmp.eq.s32.totalorder %v877, 1
  %v879 = vsel %vm878, %v845, %v697
  %v880 = vsel %vm878, %v839, %v698
  %v881 = vsel %vm873, 1, 0
  %882 = vset.pattern.permute.xlu0 0
  %883 = vperm.xlu0 %882, %v881
  %v884 = vpop.permute.xlu0 %883
  %vm885 = vcmp.eq.s32.totalorder %v884, 1
  %v886 = vsel %vm885, %v869, %v704
  %v887 = vsel %vm885, %v863, %v705
  %v888 = vsel %vm878, %v845, 0.0
  %890 = vrot.lane.b32.xlu0 %v888, 80
  %v891 = vpop.permute.xlu0 %890
  %s893 = scalar_lea.vmem %s8, 16
  %894 = vst.msk [vmem:[%s893] sm:$0xff] %vm345, %v891
  %v895 = vsel %vm885, %v869, 0.0
  %897 = vrot.lane.b32.xlu0 %v895, 80
  %v898 = vpop.permute.xlu0 %897
  %s900 = scalar_lea.vmem %s64, 40
  %901 = vst.msk [vmem:[%s900] sm:$0xff] %vm345, %v898
  %s902 = sadd.s32 %s335, 3
  %s903 = ssub.s32 4, %s335
  %s904 = scalar_lea.vmem [#allocation4], 24
  %v905 = vld [vmem:[%s904] sm:$0xff]
  %v906 = vpack.c.bf16 %v879, %v879
  %908 = vrot.lane.b32.xlu0 %v906, 80
  %v909 = vpop.permute.xlu0 %908
  %v911 = vsel %vm345, %v909, 0
  %913 = vmatprep.subr.bf16.mxu0 0
  %914 = vmatpush1.bf16.msra.mxu0 %v343
  %915 = vmatprep.subr.bf16.mxu0 0
  %916 = vmatpush1.bf16.msra.mxu0 0
  %917 = vmatprep.subr.bf16.mxu0 0
  %918 = vmatpush1.bf16.msra.mxu0 0
  %919 = vmatprep.subr.bf16.mxu0 0
  %920 = vmatpush1.bf16.msra.mxu0 0
  %921 = vmatprep.subr.bf16.mxu0 0
  %922 = vmatpush1.bf16.msra.mxu0 0
  %923 = vmatprep.subr.bf16.mxu0 0
  %924 = vmatpush1.bf16.msra.mxu0 0
  %925 = vmatprep.subr.bf16.mxu0 0
  %926 = vmatpush1.bf16.msra.mxu0 0
  %927 = vmatprep.subr.bf16.mxu0 0
  %928 = vmatpush1.bf16.msra.mxu0 0
  %929 = vmatprep.subr.bf16.mxu0 0
  %930 = vmatpush1.bf16.msra.mxu0 0
  %931 = vmatprep.subr.bf16.mxu0 0
  %932 = vmatpush1.bf16.msra.mxu0 0
  %933 = vmatprep.subr.bf16.mxu0 0
  %934 = vmatpush1.bf16.msra.mxu0 0
  %935 = vmatprep.subr.bf16.mxu0 0
  %936 = vmatpush1.bf16.msra.mxu0 0
  %937 = vmatprep.subr.bf16.mxu0 0
  %938 = vmatpush1.bf16.msra.mxu0 0
  %939 = vmatprep.subr.bf16.mxu0 0
  %940 = vmatpush1.bf16.msra.mxu0 0
  %941 = vmatprep.subr.bf16.mxu0 0
  %942 = vmatpush1.bf16.msra.mxu0 0
  %943 = vmatprep.subr.bf16.mxu0 0
  %944 = vmatpush1.bf16.msra.mxu0 0
  %945 = vmatprep.mubr.bf16.mxu0 0
  %946 = vmatmul.mubr.bf16.gmra.mrb[0].mxu0 %v911
  %v947 = vpop.f32.mrb[0].mxu0
  %v948 = vadd.f32 0.0, %v947
  %v949 = vpop.f32.mrb[0].mxu0
  %v950 = vpop.f32.mrb[0].mxu0
  %v951 = vpop.f32.mrb[0].mxu0
  %952 = vdwg.mxu0
  %v953 = vadd.f32 %v905, %v948
  %s954 = scalar_lea.vmem [#allocation5], 32
  %v955 = vld [vmem:[%s954] sm:$0xff]
  %v956 = vpack.c.bf16 %v886, %v886
  %958 = vrot.lane.b32.xlu0 %v956, 80
  %v959 = vpop.permute.xlu0 %958
  %v961 = vsel %vm345, %v959, 0
  %963 = vmatprep.subr.bf16.mxu0 0
  %964 = vmatpush1.bf16.msra.mxu0 %v397
  %965 = vmatprep.subr.bf16.mxu0 0
  %966 = vmatpush1.bf16.msra.mxu0 0
  %967 = vmatprep.subr.bf16.mxu0 0
  %968 = vmatpush1.bf16.msra.mxu0 0
  %969 = vmatprep.subr.bf16.mxu0 0
  %970 = vmatpush1.bf16.msra.mxu0 0
  %971 = vmatprep.subr.bf16.mxu0 0
  %972 = vmatpush1.bf16.msra.mxu0 0
  %973 = vmatprep.subr.bf16.mxu0 0
  %974 = vmatpush1.bf16.msra.mxu0 0
  %975 = vmatprep.subr.bf16.mxu0 0
  %976 = vmatpush1.bf16.msra.mxu0 0
  %977 = vmatprep.subr.bf16.mxu0 0
  %978 = vmatpush1.bf16.msra.mxu0 0
  %979 = vmatprep.subr.bf16.mxu0 0
  %980 = vmatpush1.bf16.msra.mxu0 0
  %981 = vmatprep.subr.bf16.mxu0 0
  %982 = vmatpush1.bf16.msra.mxu0 0
  %983 = vmatprep.subr.bf16.mxu0 0
  %984 = vmatpush1.bf16.msra.mxu0 0
  %985 = vmatprep.subr.bf16.mxu0 0
  %986 = vmatpush1.bf16.msra.mxu0 0
  %987 = vmatprep.subr.bf16.mxu0 0
  %988 = vmatpush1.bf16.msra.mxu0 0
  %989 = vmatprep.subr.bf16.mxu0 0
  %990 = vmatpush1.bf16.msra.mxu0 0
  %991 = vmatprep.subr.bf16.mxu0 0
  %992 = vmatpush1.bf16.msra.mxu0 0
  %993 = vmatprep.subr.bf16.mxu0 0
  %994 = vmatpush1.bf16.msra.mxu0 0
  %995 = vmatprep.mubr.bf16.mxu0 0
  %996 = vmatmul.mubr.bf16.gmra.mrb[0].mxu0 %v961
  %v997 = vpop.f32.mrb[0].mxu0
  %v998 = vadd.f32 0.0, %v997
  %v999 = vpop.f32.mrb[0].mxu0
  %v1000 = vpop.f32.mrb[0].mxu0
  %v1001 = vpop.f32.mrb[0].mxu0
  %1002 = vdwg.mxu0
  %v1003 = vadd.f32 %v955, %v998
  %v1004 = vxor.u32 %v953, 2147483648
  %v1005 = vmul.f32 %v1004, 1.442695
  %v1006 = vpow.pop %v1005
  %v1007 = vadd.f32 %v1006, 1.0
  %v1008 = vrcp.pop %v1007
  %v1009 = vmul.f32 1.0, %v1008
  %v1010 = vtanh.pop %v953
  %v1011 = vmul.f32 %v1009, %v880
  %1013 = vrot.lane.b32.xlu0 %v1010, 96
  %v1014 = vpop.permute.xlu0 %1013
  %v1016 = vmul.f32 %v1009, %v1014
  %1018 = vrot.lane.b32.xlu0 %v1016, 16
  %v1019 = vpop.permute.xlu0 %1018
  %v1021 = vadd.f32 %v1011, %v1019
  %v1022 = vtanh.pop %v1021
  %1024 = vrot.lane.b32.xlu0 %v1022, 32
  %v1025 = vpop.permute.xlu0 %1024
  %v1027 = vmul.f32 %v1009, %v1025
  %v1028 = vxor.u32 %v1003, 2147483648
  %v1029 = vmul.f32 %v1028, 1.442695
  %v1030 = vpow.pop %v1029
  %v1031 = vadd.f32 %v1030, 1.0
  %v1032 = vrcp.pop %v1031
  %v1033 = vmul.f32 1.0, %v1032
  %v1034 = vtanh.pop %v1003
  %v1035 = vmul.f32 %v1033, %v887
  %1037 = vrot.lane.b32.xlu0 %v1034, 96
  %v1038 = vpop.permute.xlu0 %1037
  %v1040 = vmul.f32 %v1033, %v1038
  %1042 = vrot.lane.b32.xlu0 %v1040, 16
  %v1043 = vpop.permute.xlu0 %1042
  %v1045 = vadd.f32 %v1035, %v1043
  %v1046 = vtanh.pop %v1045
  %1048 = vrot.lane.b32.xlu0 %v1046, 32
  %v1049 = vpop.permute.xlu0 %1048
  %v1051 = vmul.f32 %v1033, %v1049
  %v1052 = vstv %s902
  %vm1053 = vcmp.lt.s32.totalorder %v1052, %v330
  %v1054 = vstv %s903
  %vm1055 = vcmp.lt.s32.totalorder %v1054, %v330
  %v1056 = vsel %vm1053, 1, 0
  %1057 = vset.pattern.permute.xlu0 0
  %1058 = vperm.xlu0 %1057, %v1056
  %v1059 = vpop.permute.xlu0 %1058
  %vm1060 = vcmp.eq.s32.totalorder %v1059, 1
  %v1061 = vsel %vm1060, %v1027, %v879
  %v1062 = vsel %vm1060, %v1021, %v880
  %v1063 = vsel %vm1055, 1, 0
  %1064 = vset.pattern.permute.xlu0 0
  %1065 = vperm.xlu0 %1064, %v1063
  %v1066 = vpop.permute.xlu0 %1065
  %vm1067 = vcmp.eq.s32.totalorder %v1066, 1
  %v1068 = vsel %vm1067, %v1051, %v886
  %v1069 = vsel %vm1067, %v1045, %v887
  %v1070 = vsel %vm1060, %v1027, 0.0
  %1072 = vrot.lane.b32.xlu0 %v1070, 80
  %v1073 = vpop.permute.xlu0 %1072
  %s1075 = scalar_lea.vmem %s8, 24
  %1076 = vst.msk [vmem:[%s1075] sm:$0xff] %vm345, %v1073
  %v1077 = vsel %vm1067, %v1051, 0.0
  %1079 = vrot.lane.b32.xlu0 %v1077, 80
  %v1080 = vpop.permute.xlu0 %1079
  %s1082 = scalar_lea.vmem %s64, 32
  %1083 = vst.msk [vmem:[%s1082] sm:$0xff] %vm345, %v1080
  %s1084 = sadd.s32 %s335, 4
  %s1085 = ssub.s32 3, %s335
  %s1086 = scalar_lea.vmem [#allocation4], 32
  %v1087 = vld [vmem:[%s1086] sm:$0xff]
  %v1088 = vpack.c.bf16 %v1061, %v1061
  %1090 = vrot.lane.b32.xlu0 %v1088, 80
  %v1091 = vpop.permute.xlu0 %1090
  %v1093 = vsel %vm345, %v1091, 0
  %1095 = vmatprep.subr.bf16.mxu0 0
  %1096 = vmatpush1.bf16.msra.mxu0 %v343
  %1097 = vmatprep.subr.bf16.mxu0 0
  %1098 = vmatpush1.bf16.msra.mxu0 0
  %1099 = vmatprep.subr.bf16.mxu0 0
  %1100 = vmatpush1.bf16.msra.mxu0 0
  %1101 = vmatprep.subr.bf16.mxu0 0
  %1102 = vmatpush1.bf16.msra.mxu0 0
  %1103 = vmatprep.subr.bf16.mxu0 0
  %1104 = vmatpush1.bf16.msra.mxu0 0
  %1105 = vmatprep.subr.bf16.mxu0 0
  %1106 = vmatpush1.bf16.msra.mxu0 0
  %1107 = vmatprep.subr.bf16.mxu0 0
  %1108 = vmatpush1.bf16.msra.mxu0 0
  %1109 = vmatprep.subr.bf16.mxu0 0
  %1110 = vmatpush1.bf16.msra.mxu0 0
  %1111 = vmatprep.subr.bf16.mxu0 0
  %1112 = vmatpush1.bf16.msra.mxu0 0
  %1113 = vmatprep.subr.bf16.mxu0 0
  %1114 = vmatpush1.bf16.msra.mxu0 0
  %1115 = vmatprep.subr.bf16.mxu0 0
  %1116 = vmatpush1.bf16.msra.mxu0 0
  %1117 = vmatprep.subr.bf16.mxu0 0
  %1118 = vmatpush1.bf16.msra.mxu0 0
  %1119 = vmatprep.subr.bf16.mxu0 0
  %1120 = vmatpush1.bf16.msra.mxu0 0
  %1121 = vmatprep.subr.bf16.mxu0 0
  %1122 = vmatpush1.bf16.msra.mxu0 0
  %1123 = vmatprep.subr.bf16.mxu0 0
  %1124 = vmatpush1.bf16.msra.mxu0 0
  %1125 = vmatprep.subr.bf16.mxu0 0
  %1126 = vmatpush1.bf16.msra.mxu0 0
  %1127 = vmatprep.mubr.bf16.mxu0 0
  %1128 = vmatmul.mubr.bf16.gmra.mrb[0].mxu0 %v1093
  %v1129 = vpop.f32.mrb[0].mxu0
  %v1130 = vadd.f32 0.0, %v1129
  %v1131 = vpop.f32.mrb[0].mxu0
  %v1132 = vpop.f32.mrb[0].mxu0
  %v1133 = vpop.f32.mrb[0].mxu0
  %1134 = vdwg.mxu0
  %v1135 = vadd.f32 %v1087, %v1130
  %s1136 = scalar_lea.vmem [#allocation5], 24
  %v1137 = vld [vmem:[%s1136] sm:$0xff]
  %v1138 = vpack.c.bf16 %v1068, %v1068
  %1140 = vrot.lane.b32.xlu0 %v1138, 80
  %v1141 = vpop.permute.xlu0 %1140
  %v1143 = vsel %vm345, %v1141, 0
  %1145 = vmatprep.subr.bf16.mxu0 0
  %1146 = vmatpush1.bf16.msra.mxu0 %v397
  %1147 = vmatprep.subr.bf16.mxu0 0
  %1148 = vmatpush1.bf16.msra.mxu0 0
  %1149 = vmatprep.subr.bf16.mxu0 0
  %1150 = vmatpush1.bf16.msra.mxu0 0
  %1151 = vmatprep.subr.bf16.mxu0 0
  %1152 = vmatpush1.bf16.msra.mxu0 0
  %1153 = vmatprep.subr.bf16.mxu0 0
  %1154 = vmatpush1.bf16.msra.mxu0 0
  %1155 = vmatprep.subr.bf16.mxu0 0
  %1156 = vmatpush1.bf16.msra.mxu0 0
  %1157 = vmatprep.subr.bf16.mxu0 0
  %1158 = vmatpush1.bf16.msra.mxu0 0
  %1159 = vmatprep.subr.bf16.mxu0 0
  %1160 = vmatpush1.bf16.msra.mxu0 0
  %1161 = vmatprep.subr.bf16.mxu0 0
  %1162 = vmatpush1.bf16.msra.mxu0 0
  %1163 = vmatprep.subr.bf16.mxu0 0
  %1164 = vmatpush1.bf16.msra.mxu0 0
  %1165 = vmatprep.subr.bf16.mxu0 0
  %1166 = vmatpush1.bf16.msra.mxu0 0
  %1167 = vmatprep.subr.bf16.mxu0 0
  %1168 = vmatpush1.bf16.msra.mxu0 0
  %1169 = vmatprep.subr.bf16.mxu0 0
  %1170 = vmatpush1.bf16.msra.mxu0 0
  %1171 = vmatprep.subr.bf16.mxu0 0
  %1172 = vmatpush1.bf16.msra.mxu0 0
  %1173 = vmatprep.subr.bf16.mxu0 0
  %1174 = vmatpush1.bf16.msra.mxu0 0
  %1175 = vmatprep.subr.bf16.mxu0 0
  %1176 = vmatpush1.bf16.msra.mxu0 0
  %1177 = vmatprep.mubr.bf16.mxu0 0
  %1178 = vmatmul.mubr.bf16.gmra.mrb[0].mxu0 %v1143
  %v1179 = vpop.f32.mrb[0].mxu0
  %v1180 = vadd.f32 0.0, %v1179
  %v1181 = vpop.f32.mrb[0].mxu0
  %v1182 = vpop.f32.mrb[0].mxu0
  %v1183 = vpop.f32.mrb[0].mxu0
  %1184 = vdwg.mxu0
  %v1185 = vadd.f32 %v1137, %v1180
  %v1186 = vxor.u32 %v1135, 2147483648
  %v1187 = vmul.f32 %v1186, 1.442695
  %v1188 = vpow.pop %v1187
  %v1189 = vadd.f32 %v1188, 1.0
  %v1190 = vrcp.pop %v1189
  %v1191 = vmul.f32 1.0, %v1190
  %v1192 = vtanh.pop %v1135
  %v1193 = vmul.f32 %v1191, %v1062
  %1195 = vrot.lane.b32.xlu0 %v1192, 96
  %v1196 = vpop.permute.xlu0 %1195
  %v1198 = vmul.f32 %v1191, %v1196
  %1200 = vrot.lane.b32.xlu0 %v1198, 16
  %v1201 = vpop.permute.xlu0 %1200
  %v1203 = vadd.f32 %v1193, %v1201
  %v1204 = vtanh.pop %v1203
  %1206 = vrot.lane.b32.xlu0 %v1204, 32
  %v1207 = vpop.permute.xlu0 %1206
  %v1209 = vmul.f32 %v1191, %v1207
  %v1210 = vxor.u32 %v1185, 2147483648
  %v1211 = vmul.f32 %v1210, 1.442695
  %v1212 = vpow.pop %v1211
  %v1213 = vadd.f32 %v1212, 1.0
  %v1214 = vrcp.pop %v1213
  %v1215 = vmul.f32 1.0, %v1214
  %v1216 = vtanh.pop %v1185
  %v1217 = vmul.f32 %v1215, %v1069
  %1219 = vrot.lane.b32.xlu0 %v1216, 96
  %v1220 = vpop.permute.xlu0 %1219
  %v1222 = vmul.f32 %v1215, %v1220
  %1224 = vrot.lane.b32.xlu0 %v1222, 16
  %v1225 = vpop.permute.xlu0 %1224
  %v1227 = vadd.f32 %v1217, %v1225
  %v1228 = vtanh.pop %v1227
  %1230 = vrot.lane.b32.xlu0 %v1228, 32
  %v1231 = vpop.permute.xlu0 %1230
  %v1233 = vmul.f32 %v1215, %v1231
  %v1234 = vstv %s1084
  %vm1235 = vcmp.lt.s32.totalorder %v1234, %v330
  %v1236 = vstv %s1085
  %vm1237 = vcmp.lt.s32.totalorder %v1236, %v330
  %v1238 = vsel %vm1235, 1, 0
  %1239 = vset.pattern.permute.xlu0 0
  %1240 = vperm.xlu0 %1239, %v1238
  %v1241 = vpop.permute.xlu0 %1240
  %vm1242 = vcmp.eq.s32.totalorder %v1241, 1
  %v1243 = vsel %vm1242, %v1209, %v1061
  %v1244 = vsel %vm1242, %v1203, %v1062
  %v1245 = vsel %vm1237, 1, 0
  %1246 = vset.pattern.permute.xlu0 0
  %1247 = vperm.xlu0 %1246, %v1245
  %v1248 = vpop.permute.xlu0 %1247
  %vm1249 = vcmp.eq.s32.totalorder %v1248, 1
  %v1250 = vsel %vm1249, %v1233, %v1068
  %v1251 = vsel %vm1249, %v1227, %v1069
  %v1252 = vsel %vm1242, %v1209, 0.0
  %1254 = vrot.lane.b32.xlu0 %v1252, 80
  %v1255 = vpop.permute.xlu0 %1254
  %s1257 = scalar_lea.vmem %s8, 32
  %1258 = vst.msk [vmem:[%s1257] sm:$0xff] %vm345, %v1255
  %v1259 = vsel %vm1249, %v1233, 0.0
  %1261 = vrot.lane.b32.xlu0 %v1259, 80
  %v1262 = vpop.permute.xlu0 %1261
  %s1264 = scalar_lea.vmem %s64, 24
  %1265 = vst.msk [vmem:[%s1264] sm:$0xff] %vm345, %v1262
  %s1266 = sadd.s32 %s335, 5
  %s1267 = ssub.s32 2, %s335
  %s1268 = scalar_lea.vmem [#allocation4], 40
  %v1269 = vld [vmem:[%s1268] sm:$0xff]
  %v1270 = vpack.c.bf16 %v1243, %v1243
  %1272 = vrot.lane.b32.xlu0 %v1270, 80
  %v1273 = vpop.permute.xlu0 %1272
  %v1275 = vsel %vm345, %v1273, 0
  %1277 = vmatprep.subr.bf16.mxu0 0
  %1278 = vmatpush1.bf16.msra.mxu0 %v343
  %1279 = vmatprep.subr.bf16.mxu0 0
  %1280 = vmatpush1.bf16.msra.mxu0 0
  %1281 = vmatprep.subr.bf16.mxu0 0
  %1282 = vmatpush1.bf16.msra.mxu0 0
  %1283 = vmatprep.subr.bf16.mxu0 0
  %1284 = vmatpush1.bf16.msra.mxu0 0
  %1285 = vmatprep.subr.bf16.mxu0 0
  %1286 = vmatpush1.bf16.msra.mxu0 0
  %1287 = vmatprep.subr.bf16.mxu0 0
  %1288 = vmatpush1.bf16.msra.mxu0 0
  %1289 = vmatprep.subr.bf16.mxu0 0
  %1290 = vmatpush1.bf16.msra.mxu0 0
  %1291 = vmatprep.subr.bf16.mxu0 0
  %1292 = vmatpush1.bf16.msra.mxu0 0
  %1293 = vmatprep.subr.bf16.mxu0 0
  %1294 = vmatpush1.bf16.msra.mxu0 0
  %1295 = vmatprep.subr.bf16.mxu0 0
  %1296 = vmatpush1.bf16.msra.mxu0 0
  %1297 = vmatprep.subr.bf16.mxu0 0
  %1298 = vmatpush1.bf16.msra.mxu0 0
  %1299 = vmatprep.subr.bf16.mxu0 0
  %1300 = vmatpush1.bf16.msra.mxu0 0
  %1301 = vmatprep.subr.bf16.mxu0 0
  %1302 = vmatpush1.bf16.msra.mxu0 0
  %1303 = vmatprep.subr.bf16.mxu0 0
  %1304 = vmatpush1.bf16.msra.mxu0 0
  %1305 = vmatprep.subr.bf16.mxu0 0
  %1306 = vmatpush1.bf16.msra.mxu0 0
  %1307 = vmatprep.subr.bf16.mxu0 0
  %1308 = vmatpush1.bf16.msra.mxu0 0
  %1309 = vmatprep.mubr.bf16.mxu0 0
  %1310 = vmatmul.mubr.bf16.gmra.mrb[0].mxu0 %v1275
  %v1311 = vpop.f32.mrb[0].mxu0
  %v1312 = vadd.f32 0.0, %v1311
  %v1313 = vpop.f32.mrb[0].mxu0
  %v1314 = vpop.f32.mrb[0].mxu0
  %v1315 = vpop.f32.mrb[0].mxu0
  %1316 = vdwg.mxu0
  %v1317 = vadd.f32 %v1269, %v1312
  %s1318 = scalar_lea.vmem [#allocation5], 16
  %v1319 = vld [vmem:[%s1318] sm:$0xff]
  %v1320 = vpack.c.bf16 %v1250, %v1250
  %1322 = vrot.lane.b32.xlu0 %v1320, 80
  %v1323 = vpop.permute.xlu0 %1322
  %v1325 = vsel %vm345, %v1323, 0
  %1327 = vmatprep.subr.bf16.mxu0 0
  %1328 = vmatpush1.bf16.msra.mxu0 %v397
  %1329 = vmatprep.subr.bf16.mxu0 0
  %1330 = vmatpush1.bf16.msra.mxu0 0
  %1331 = vmatprep.subr.bf16.mxu0 0
  %1332 = vmatpush1.bf16.msra.mxu0 0
  %1333 = vmatprep.subr.bf16.mxu0 0
  %1334 = vmatpush1.bf16.msra.mxu0 0
  %1335 = vmatprep.subr.bf16.mxu0 0
  %1336 = vmatpush1.bf16.msra.mxu0 0
  %1337 = vmatprep.subr.bf16.mxu0 0
  %1338 = vmatpush1.bf16.msra.mxu0 0
  %1339 = vmatprep.subr.bf16.mxu0 0
  %1340 = vmatpush1.bf16.msra.mxu0 0
  %1341 = vmatprep.subr.bf16.mxu0 0
  %1342 = vmatpush1.bf16.msra.mxu0 0
  %1343 = vmatprep.subr.bf16.mxu0 0
  %1344 = vmatpush1.bf16.msra.mxu0 0
  %1345 = vmatprep.subr.bf16.mxu0 0
  %1346 = vmatpush1.bf16.msra.mxu0 0
  %1347 = vmatprep.subr.bf16.mxu0 0
  %1348 = vmatpush1.bf16.msra.mxu0 0
  %1349 = vmatprep.subr.bf16.mxu0 0
  %1350 = vmatpush1.bf16.msra.mxu0 0
  %1351 = vmatprep.subr.bf16.mxu0 0
  %1352 = vmatpush1.bf16.msra.mxu0 0
  %1353 = vmatprep.subr.bf16.mxu0 0
  %1354 = vmatpush1.bf16.msra.mxu0 0
  %1355 = vmatprep.subr.bf16.mxu0 0
  %1356 = vmatpush1.bf16.msra.mxu0 0
  %1357 = vmatprep.subr.bf16.mxu0 0
  %1358 = vmatpush1.bf16.msra.mxu0 0
  %1359 = vmatprep.mubr.bf16.mxu0 0
  %1360 = vmatmul.mubr.bf16.gmra.mrb[0].mxu0 %v1325
  %v1361 = vpop.f32.mrb[0].mxu0
  %v1362 = vadd.f32 0.0, %v1361
  %v1363 = vpop.f32.mrb[0].mxu0
  %v1364 = vpop.f32.mrb[0].mxu0
  %v1365 = vpop.f32.mrb[0].mxu0
  %1366 = vdwg.mxu0
  %v1367 = vadd.f32 %v1319, %v1362
  %v1368 = vxor.u32 %v1317, 2147483648
  %v1369 = vmul.f32 %v1368, 1.442695
  %v1370 = vpow.pop %v1369
  %v1371 = vadd.f32 %v1370, 1.0
  %v1372 = vrcp.pop %v1371
  %v1373 = vmul.f32 1.0, %v1372
  %v1374 = vtanh.pop %v1317
  %v1375 = vmul.f32 %v1373, %v1244
  %1377 = vrot.lane.b32.xlu0 %v1374, 96
  %v1378 = vpop.permute.xlu0 %1377
  %v1380 = vmul.f32 %v1373, %v1378
  %1382 = vrot.lane.b32.xlu0 %v1380, 16
  %v1383 = vpop.permute.xlu0 %1382
  %v1385 = vadd.f32 %v1375, %v1383
  %v1386 = vtanh.pop %v1385
  %1388 = vrot.lane.b32.xlu0 %v1386, 32
  %v1389 = vpop.permute.xlu0 %1388
  %v1391 = vmul.f32 %v1373, %v1389
  %v1392 = vxor.u32 %v1367, 2147483648
  %v1393 = vmul.f32 %v1392, 1.442695
  %v1394 = vpow.pop %v1393
  %v1395 = vadd.f32 %v1394, 1.0
  %v1396 = vrcp.pop %v1395
  %v1397 = vmul.f32 1.0, %v1396
  %v1398 = vtanh.pop %v1367
  %v1399 = vmul.f32 %v1397, %v1251
  %1401 = vrot.lane.b32.xlu0 %v1398, 96
  %v1402 = vpop.permute.xlu0 %1401
  %v1404 = vmul.f32 %v1397, %v1402
  %1406 = vrot.lane.b32.xlu0 %v1404, 16
  %v1407 = vpop.permute.xlu0 %1406
  %v1409 = vadd.f32 %v1399, %v1407
  %v1410 = vtanh.pop %v1409
  %1412 = vrot.lane.b32.xlu0 %v1410, 32
  %v1413 = vpop.permute.xlu0 %1412
  %v1415 = vmul.f32 %v1397, %v1413
  %v1416 = vstv %s1266
  %vm1417 = vcmp.lt.s32.totalorder %v1416, %v330
  %v1418 = vstv %s1267
  %vm1419 = vcmp.lt.s32.totalorder %v1418, %v330
  %v1420 = vsel %vm1417, 1, 0
  %1421 = vset.pattern.permute.xlu0 0
  %1422 = vperm.xlu0 %1421, %v1420
  %v1423 = vpop.permute.xlu0 %1422
  %vm1424 = vcmp.eq.s32.totalorder %v1423, 1
  %v1425 = vsel %vm1424, %v1391, %v1243
  %v1426 = vsel %vm1424, %v1385, %v1244
  %v1427 = vsel %vm1419, 1, 0
  %1428 = vset.pattern.permute.xlu0 0
  %1429 = vperm.xlu0 %1428, %v1427
  %v1430 = vpop.permute.xlu0 %1429
  %vm1431 = vcmp.eq.s32.totalorder %v1430, 1
  %v1432 = vsel %vm1431, %v1415, %v1250
  %v1433 = vsel %vm1431, %v1409, %v1251
  %v1434 = vsel %vm1424, %v1391, 0.0
  %1436 = vrot.lane.b32.xlu0 %v1434, 80
  %v1437 = vpop.permute.xlu0 %1436
  %s1439 = scalar_lea.vmem %s8, 40
  %1440 = vst.msk [vmem:[%s1439] sm:$0xff] %vm345, %v1437
  %v1441 = vsel %vm1431, %v1415, 0.0
  %1443 = vrot.lane.b32.xlu0 %v1441, 80
  %v1444 = vpop.permute.xlu0 %1443
  %s1446 = scalar_lea.vmem %s64, 16
  %1447 = vst.msk [vmem:[%s1446] sm:$0xff] %vm345, %v1444
  %s1448 = sadd.s32 %s335, 6
  %s1449 = ssub.s32 1, %s335
  %s1450 = scalar_lea.vmem [#allocation4], 48
  %v1451 = vld [vmem:[%s1450] sm:$0xff]
  %v1452 = vpack.c.bf16 %v1425, %v1425
  %1454 = vrot.lane.b32.xlu0 %v1452, 80
  %v1455 = vpop.permute.xlu0 %1454
  %v1457 = vsel %vm345, %v1455, 0
  %1459 = vmatprep.subr.bf16.mxu0 0
  %1460 = vmatpush1.bf16.msra.mxu0 %v343
  %1461 = vmatprep.subr.bf16.mxu0 0
  %1462 = vmatpush1.bf16.msra.mxu0 0
  %1463 = vmatprep.subr.bf16.mxu0 0
  %1464 = vmatpush1.bf16.msra.mxu0 0
  %1465 = vmatprep.subr.bf16.mxu0 0
  %1466 = vmatpush1.bf16.msra.mxu0 0
  %1467 = vmatprep.subr.bf16.mxu0 0
  %1468 = vmatpush1.bf16.msra.mxu0 0
  %1469 = vmatprep.subr.bf16.mxu0 0
  %1470 = vmatpush1.bf16.msra.mxu0 0
  %1471 = vmatprep.subr.bf16.mxu0 0
  %1472 = vmatpush1.bf16.msra.mxu0 0
  %1473 = vmatprep.subr.bf16.mxu0 0
  %1474 = vmatpush1.bf16.msra.mxu0 0
  %1475 = vmatprep.subr.bf16.mxu0 0
  %1476 = vmatpush1.bf16.msra.mxu0 0
  %1477 = vmatprep.subr.bf16.mxu0 0
  %1478 = vmatpush1.bf16.msra.mxu0 0
  %1479 = vmatprep.subr.bf16.mxu0 0
  %1480 = vmatpush1.bf16.msra.mxu0 0
  %1481 = vmatprep.subr.bf16.mxu0 0
  %1482 = vmatpush1.bf16.msra.mxu0 0
  %1483 = vmatprep.subr.bf16.mxu0 0
  %1484 = vmatpush1.bf16.msra.mxu0 0
  %1485 = vmatprep.subr.bf16.mxu0 0
  %1486 = vmatpush1.bf16.msra.mxu0 0
  %1487 = vmatprep.subr.bf16.mxu0 0
  %1488 = vmatpush1.bf16.msra.mxu0 0
  %1489 = vmatprep.subr.bf16.mxu0 0
  %1490 = vmatpush1.bf16.msra.mxu0 0
  %1491 = vmatprep.mubr.bf16.mxu0 0
  %1492 = vmatmul.mubr.bf16.gmra.mrb[0].mxu0 %v1457
  %v1493 = vpop.f32.mrb[0].mxu0
  %v1494 = vadd.f32 0.0, %v1493
  %v1495 = vpop.f32.mrb[0].mxu0
  %v1496 = vpop.f32.mrb[0].mxu0
  %v1497 = vpop.f32.mrb[0].mxu0
  %1498 = vdwg.mxu0
  %v1499 = vadd.f32 %v1451, %v1494
  %s1500 = scalar_lea.vmem [#allocation5], 8
  %v1501 = vld [vmem:[%s1500] sm:$0xff]
  %v1502 = vpack.c.bf16 %v1432, %v1432
  %1504 = vrot.lane.b32.xlu0 %v1502, 80
  %v1505 = vpop.permute.xlu0 %1504
  %v1507 = vsel %vm345, %v1505, 0
  %1509 = vmatprep.subr.bf16.mxu0 0
  %1510 = vmatpush1.bf16.msra.mxu0 %v397
  %1511 = vmatprep.subr.bf16.mxu0 0
  %1512 = vmatpush1.bf16.msra.mxu0 0
  %1513 = vmatprep.subr.bf16.mxu0 0
  %1514 = vmatpush1.bf16.msra.mxu0 0
  %1515 = vmatprep.subr.bf16.mxu0 0
  %1516 = vmatpush1.bf16.msra.mxu0 0
  %1517 = vmatprep.subr.bf16.mxu0 0
  %1518 = vmatpush1.bf16.msra.mxu0 0
  %1519 = vmatprep.subr.bf16.mxu0 0
  %1520 = vmatpush1.bf16.msra.mxu0 0
  %1521 = vmatprep.subr.bf16.mxu0 0
  %1522 = vmatpush1.bf16.msra.mxu0 0
  %1523 = vmatprep.subr.bf16.mxu0 0
  %1524 = vmatpush1.bf16.msra.mxu0 0
  %1525 = vmatprep.subr.bf16.mxu0 0
  %1526 = vmatpush1.bf16.msra.mxu0 0
  %1527 = vmatprep.subr.bf16.mxu0 0
  %1528 = vmatpush1.bf16.msra.mxu0 0
  %1529 = vmatprep.subr.bf16.mxu0 0
  %1530 = vmatpush1.bf16.msra.mxu0 0
  %1531 = vmatprep.subr.bf16.mxu0 0
  %1532 = vmatpush1.bf16.msra.mxu0 0
  %1533 = vmatprep.subr.bf16.mxu0 0
  %1534 = vmatpush1.bf16.msra.mxu0 0
  %1535 = vmatprep.subr.bf16.mxu0 0
  %1536 = vmatpush1.bf16.msra.mxu0 0
  %1537 = vmatprep.subr.bf16.mxu0 0
  %1538 = vmatpush1.bf16.msra.mxu0 0
  %1539 = vmatprep.subr.bf16.mxu0 0
  %1540 = vmatpush1.bf16.msra.mxu0 0
  %1541 = vmatprep.mubr.bf16.mxu0 0
  %1542 = vmatmul.mubr.bf16.gmra.mrb[0].mxu0 %v1507
  %v1543 = vpop.f32.mrb[0].mxu0
  %v1544 = vadd.f32 0.0, %v1543
  %v1545 = vpop.f32.mrb[0].mxu0
  %v1546 = vpop.f32.mrb[0].mxu0
  %v1547 = vpop.f32.mrb[0].mxu0
  %1548 = vdwg.mxu0
  %v1549 = vadd.f32 %v1501, %v1544
  %v1550 = vxor.u32 %v1499, 2147483648
  %v1551 = vmul.f32 %v1550, 1.442695
  %v1552 = vpow.pop %v1551
  %v1553 = vadd.f32 %v1552, 1.0
  %v1554 = vrcp.pop %v1553
  %v1555 = vmul.f32 1.0, %v1554
  %v1556 = vtanh.pop %v1499
  %v1557 = vmul.f32 %v1555, %v1426
  %1559 = vrot.lane.b32.xlu0 %v1556, 96
  %v1560 = vpop.permute.xlu0 %1559
  %v1562 = vmul.f32 %v1555, %v1560
  %1564 = vrot.lane.b32.xlu0 %v1562, 16
  %v1565 = vpop.permute.xlu0 %1564
  %v1567 = vadd.f32 %v1557, %v1565
  %v1568 = vtanh.pop %v1567
  %1570 = vrot.lane.b32.xlu0 %v1568, 32
  %v1571 = vpop.permute.xlu0 %1570
  %v1573 = vmul.f32 %v1555, %v1571
  %v1574 = vxor.u32 %v1549, 2147483648
  %v1575 = vmul.f32 %v1574, 1.442695
  %v1576 = vpow.pop %v1575
  %v1577 = vadd.f32 %v1576, 1.0
  %v1578 = vrcp.pop %v1577
  %v1579 = vmul.f32 1.0, %v1578
  %v1580 = vtanh.pop %v1549
  %v1581 = vmul.f32 %v1579, %v1433
  %1583 = vrot.lane.b32.xlu0 %v1580, 96
  %v1584 = vpop.permute.xlu0 %1583
  %v1586 = vmul.f32 %v1579, %v1584
  %1588 = vrot.lane.b32.xlu0 %v1586, 16
  %v1589 = vpop.permute.xlu0 %1588
  %v1591 = vadd.f32 %v1581, %v1589
  %v1592 = vtanh.pop %v1591
  %1594 = vrot.lane.b32.xlu0 %v1592, 32
  %v1595 = vpop.permute.xlu0 %1594
  %v1597 = vmul.f32 %v1579, %v1595
  %v1598 = vstv %s1448
  %vm1599 = vcmp.lt.s32.totalorder %v1598, %v330
  %v1600 = vstv %s1449
  %vm1601 = vcmp.lt.s32.totalorder %v1600, %v330
  %v1602 = vsel %vm1599, 1, 0
  %1603 = vset.pattern.permute.xlu0 0
  %1604 = vperm.xlu0 %1603, %v1602
  %v1605 = vpop.permute.xlu0 %1604
  %vm1606 = vcmp.eq.s32.totalorder %v1605, 1
  %v1607 = vsel %vm1606, %v1573, %v1425
  %v1608 = vsel %vm1606, %v1567, %v1426
  %v1609 = vsel %vm1601, 1, 0
  %1610 = vset.pattern.permute.xlu0 0
  %1611 = vperm.xlu0 %1610, %v1609
  %v1612 = vpop.permute.xlu0 %1611
  %vm1613 = vcmp.eq.s32.totalorder %v1612, 1
  %v1614 = vsel %vm1613, %v1597, %v1432
  %v1615 = vsel %vm1613, %v1591, %v1433
  %v1616 = vsel %vm1606, %v1573, 0.0
  %1618 = vrot.lane.b32.xlu0 %v1616, 80
  %v1619 = vpop.permute.xlu0 %1618
  %s1621 = scalar_lea.vmem %s8, 48
  %1622 = vst.msk [vmem:[%s1621] sm:$0xff] %vm345, %v1619
  %v1623 = vsel %vm1613, %v1597, 0.0
  %1625 = vrot.lane.b32.xlu0 %v1623, 80
  %v1626 = vpop.permute.xlu0 %1625
  %s1628 = scalar_lea.vmem %s64, 8
  %1629 = vst.msk [vmem:[%s1628] sm:$0xff] %vm345, %v1626
  %s1630 = sadd.s32 %s335, 7
  %s1631 = ssub.s32 0, %s335
  %s1632 = scalar_lea.vmem [#allocation4], 56
  %v1633 = vld [vmem:[%s1632] sm:$0xff]
  %v1634 = vpack.c.bf16 %v1607, %v1607
  %1636 = vrot.lane.b32.xlu0 %v1634, 80
  %v1637 = vpop.permute.xlu0 %1636
  %v1639 = vsel %vm345, %v1637, 0
  %1641 = vmatprep.subr.bf16.mxu0 0
  %1642 = vmatpush1.bf16.msra.mxu0 %v343
  %1643 = vmatprep.subr.bf16.mxu0 0
  %1644 = vmatpush1.bf16.msra.mxu0 0
  %1645 = vmatprep.subr.bf16.mxu0 0
  %1646 = vmatpush1.bf16.msra.mxu0 0
  %1647 = vmatprep.subr.bf16.mxu0 0
  %1648 = vmatpush1.bf16.msra.mxu0 0
  %1649 = vmatprep.subr.bf16.mxu0 0
  %1650 = vmatpush1.bf16.msra.mxu0 0
  %1651 = vmatprep.subr.bf16.mxu0 0
  %1652 = vmatpush1.bf16.msra.mxu0 0
  %1653 = vmatprep.subr.bf16.mxu0 0
  %1654 = vmatpush1.bf16.msra.mxu0 0
  %1655 = vmatprep.subr.bf16.mxu0 0
  %1656 = vmatpush1.bf16.msra.mxu0 0
  %1657 = vmatprep.subr.bf16.mxu0 0
  %1658 = vmatpush1.bf16.msra.mxu0 0
  %1659 = vmatprep.subr.bf16.mxu0 0
  %1660 = vmatpush1.bf16.msra.mxu0 0
  %1661 = vmatprep.subr.bf16.mxu0 0
  %1662 = vmatpush1.bf16.msra.mxu0 0
  %1663 = vmatprep.subr.bf16.mxu0 0
  %1664 = vmatpush1.bf16.msra.mxu0 0
  %1665 = vmatprep.subr.bf16.mxu0 0
  %1666 = vmatpush1.bf16.msra.mxu0 0
  %1667 = vmatprep.subr.bf16.mxu0 0
  %1668 = vmatpush1.bf16.msra.mxu0 0
  %1669 = vmatprep.subr.bf16.mxu0 0
  %1670 = vmatpush1.bf16.msra.mxu0 0
  %1671 = vmatprep.subr.bf16.mxu0 0
  %1672 = vmatpush1.bf16.msra.mxu0 0
  %1673 = vmatprep.mubr.bf16.mxu0 0
  %1674 = vmatmul.mubr.bf16.gmra.mrb[0].mxu0 %v1639
  %v1675 = vpop.f32.mrb[0].mxu0
  %v1676 = vadd.f32 0.0, %v1675
  %v1677 = vpop.f32.mrb[0].mxu0
  %v1678 = vpop.f32.mrb[0].mxu0
  %v1679 = vpop.f32.mrb[0].mxu0
  %1680 = vdwg.mxu0
  %v1681 = vadd.f32 %v1633, %v1676
  %v1682 = vld [vmem:[#allocation5] sm:$0xff]
  %v1683 = vpack.c.bf16 %v1614, %v1614
  %1685 = vrot.lane.b32.xlu0 %v1683, 80
  %v1686 = vpop.permute.xlu0 %1685
  %v1688 = vsel %vm345, %v1686, 0
  %1690 = vmatprep.subr.bf16.mxu0 0
  %1691 = vmatpush1.bf16.msra.mxu0 %v397
  %1692 = vmatprep.subr.bf16.mxu0 0
  %1693 = vmatpush1.bf16.msra.mxu0 0
  %1694 = vmatprep.subr.bf16.mxu0 0
  %1695 = vmatpush1.bf16.msra.mxu0 0
  %1696 = vmatprep.subr.bf16.mxu0 0
  %1697 = vmatpush1.bf16.msra.mxu0 0
  %1698 = vmatprep.subr.bf16.mxu0 0
  %1699 = vmatpush1.bf16.msra.mxu0 0
  %1700 = vmatprep.subr.bf16.mxu0 0
  %1701 = vmatpush1.bf16.msra.mxu0 0
  %1702 = vmatprep.subr.bf16.mxu0 0
  %1703 = vmatpush1.bf16.msra.mxu0 0
  %1704 = vmatprep.subr.bf16.mxu0 0
  %1705 = vmatpush1.bf16.msra.mxu0 0
  %1706 = vmatprep.subr.bf16.mxu0 0
  %1707 = vmatpush1.bf16.msra.mxu0 0
  %1708 = vmatprep.subr.bf16.mxu0 0
  %1709 = vmatpush1.bf16.msra.mxu0 0
  %1710 = vmatprep.subr.bf16.mxu0 0
  %1711 = vmatpush1.bf16.msra.mxu0 0
  %1712 = vmatprep.subr.bf16.mxu0 0
  %1713 = vmatpush1.bf16.msra.mxu0 0
  %1714 = vmatprep.subr.bf16.mxu0 0
  %1715 = vmatpush1.bf16.msra.mxu0 0
  %1716 = vmatprep.subr.bf16.mxu0 0
  %1717 = vmatpush1.bf16.msra.mxu0 0
  %1718 = vmatprep.subr.bf16.mxu0 0
  %1719 = vmatpush1.bf16.msra.mxu0 0
  %1720 = vmatprep.subr.bf16.mxu0 0
  %1721 = vmatpush1.bf16.msra.mxu0 0
  %1722 = vmatprep.mubr.bf16.mxu0 0
  %1723 = vmatmul.mubr.bf16.gmra.mrb[0].mxu0 %v1688
  %v1724 = vpop.f32.mrb[0].mxu0
  %v1725 = vadd.f32 0.0, %v1724
  %v1726 = vpop.f32.mrb[0].mxu0
  %v1727 = vpop.f32.mrb[0].mxu0
  %v1728 = vpop.f32.mrb[0].mxu0
  %1729 = vdwg.mxu0
  %v1730 = vadd.f32 %v1682, %v1725
  %v1731 = vxor.u32 %v1681, 2147483648
  %v1732 = vmul.f32 %v1731, 1.442695
  %v1733 = vpow.pop %v1732
  %v1734 = vadd.f32 %v1733, 1.0
  %v1735 = vrcp.pop %v1734
  %v1736 = vmul.f32 1.0, %v1735
  %v1737 = vtanh.pop %v1681
  %v1738 = vmul.f32 %v1736, %v1608
  %1740 = vrot.lane.b32.xlu0 %v1737, 96
  %v1741 = vpop.permute.xlu0 %1740
  %v1743 = vmul.f32 %v1736, %v1741
  %1745 = vrot.lane.b32.xlu0 %v1743, 16
  %v1746 = vpop.permute.xlu0 %1745
  %v1748 = vadd.f32 %v1738, %v1746
  %v1749 = vtanh.pop %v1748
  %1751 = vrot.lane.b32.xlu0 %v1749, 32
  %v1752 = vpop.permute.xlu0 %1751
  %v1754 = vmul.f32 %v1736, %v1752
  %v1755 = vxor.u32 %v1730, 2147483648
  %v1756 = vmul.f32 %v1755, 1.442695
  %v1757 = vpow.pop %v1756
  %v1758 = vadd.f32 %v1757, 1.0
  %v1759 = vrcp.pop %v1758
  %v1760 = vmul.f32 1.0, %v1759
  %v1761 = vtanh.pop %v1730
  %v1762 = vmul.f32 %v1760, %v1615
  %1764 = vrot.lane.b32.xlu0 %v1761, 96
  %v1765 = vpop.permute.xlu0 %1764
  %v1767 = vmul.f32 %v1760, %v1765
  %1769 = vrot.lane.b32.xlu0 %v1767, 16
  %v1770 = vpop.permute.xlu0 %1769
  %v1772 = vadd.f32 %v1762, %v1770
  %v1773 = vtanh.pop %v1772
  %1775 = vrot.lane.b32.xlu0 %v1773, 32
  %v1776 = vpop.permute.xlu0 %1775
  %v1778 = vmul.f32 %v1760, %v1776
  %v1779 = vstv %s1630
  %vm1780 = vcmp.lt.s32.totalorder %v1779, %v330
  %v1781 = vstv %s1631
  %vm1782 = vcmp.lt.s32.totalorder %v1781, %v330
  %v1783 = vsel %vm1780, 1, 0
  %1784 = vset.pattern.permute.xlu0 0
  %1785 = vperm.xlu0 %1784, %v1783
  %v1786 = vpop.permute.xlu0 %1785
  %vm1787 = vcmp.eq.s32.totalorder %v1786, 1
  %v1788 = vsel %vm1787, %v1754, %v1607
  %v1789 = vsel %vm1787, %v1748, %v1608
  %v1790 = vsel %vm1782, 1, 0
  %1791 = vset.pattern.permute.xlu0 0
  %1792 = vperm.xlu0 %1791, %v1790
  %v1793 = vpop.permute.xlu0 %1792
  %vm1794 = vcmp.eq.s32.totalorder %v1793, 1
  %v1795 = vsel %vm1794, %v1778, %v1614
  %v1796 = vsel %vm1794, %v1772, %v1615
  %v1797 = vsel %vm1787, %v1754, 0.0
  %1799 = vrot.lane.b32.xlu0 %v1797, 80
  %v1800 = vpop.permute.xlu0 %1799
  %s1802 = scalar_lea.vmem %s8, 56
  %1803 = vst.msk [vmem:[%s1802] sm:$0xff] %vm345, %v1800
  %v1804 = vsel %vm1794, %v1778, 0.0
  %1806 = vrot.lane.b32.xlu0 %v1804, 80
  %v1807 = vpop.permute.xlu0 %1806
  %1809 = vst.msk [vmem:[%s64] sm:$0xff] %vm345, %v1807
  %1811 = vrot.lane.b32.xlu0 %v1788, 80
  %v1812 = vpop.permute.xlu0 %1811
  %1814 = vst.msk [vmem:[#allocation2] sm:$0xff] %vm345, %v1812
  %1816 = vrot.lane.b32.xlu0 %v1795, 80
  %v1817 = vpop.permute.xlu0 %1816
  %s1819 = scalar_lea.vmem [#allocation2], 8
  %1820 = vst.msk [vmem:[%s1819] sm:$0xff] %vm345, %v1817
  %1822 = vrot.lane.b32.xlu0 %v1789, 112
  %v1823 = vpop.permute.xlu0 %1822
  %1825 = vst.msk [vmem:[#allocation3] sm:$0xff] %vm345, %v1823
  %1827 = vrot.lane.b32.xlu0 %v1796, 112
  %v1828 = vpop.permute.xlu0 %1827
  %s1830 = scalar_lea.vmem [#allocation3], 8
  %1831 = vst.msk [vmem:[%s1830] sm:$0xff] %vm345, %v1828
  %s1832 = ssub.s32 0, 0
  %s1833 = smul.u32 8, %s1832
  %p1834 = scmp.lt.s32.totalorder %s1833, 7
  %s1835 = scalar_select %p1834, %s1833, 7
  %s1836 = smul.addr %s1835, 8
  %s1837 = scalar_lea.vmem %s9, %s1836
  // Predicated region
  $region38: #{language_model_forward.3} parent=0 // pred_check
    _
  $region39: #{language_model_forward.3} parent=0 // pred_check_branch
    %1839 = sbr.rel (0) target = $region41
  $region40: #{language_model_forward.3} parent=0 // pred_region
    _
  $region41: #{language_model_forward.3} parent=0 // pred_fallthru
    _
  // Predicated region
  $region42: #{language_model_forward.3} parent=0 // pred_check
    _
  $region43: #{language_model_forward.3} parent=0 // pred_check_branch
    %1841 = sbr.rel (0) target = $region45
  $region44: #{language_model_forward.3} parent=0 // pred_region
    %s1842 = ssub.s32 0, 0
    %s1843 = smul.u32 8, %s1842
  $region45: #{language_model_forward.3} parent=0 // pred_fallthru
    _
  // Predicated region
  $region46: #{language_model_forward.3} parent=0 // pred_check
    _
  $region47: #{language_model_forward.3} parent=0 // pred_check_branch
    %1845 = sbr.rel (0) target = $region49
  $region48: #{language_model_forward.3} parent=0 // pred_region
    _
  $region49: #{language_model_forward.3} parent=0 // pred_fallthru
    _
  // Predicated region
  $region50: #{language_model_forward.3} parent=0 // pred_check
    _
  $region51: #{language_model_forward.3} parent=0 // pred_check_branch
    %1847 = sbr.rel (0) target = $region53
  $region52: #{language_model_forward.3} parent=0 // pred_region
    %s1848 = ssub.s32 0, 0
    %s1849 = smul.u32 8, %s1848
    %p1850 = scmp.lt.s32.totalorder %s1849, 7
    %s1851 = scalar_select %p1850, %s1849, 7
    %s1852 = smul.addr %s1851, 8
    %s1853 = scalar_lea.vmem %s9, %s1852
  $region53: #{language_model_forward.3} parent=0 // pred_fallthru
    _

// kernel: language_model_forward.4
$region0: #{language_model_forward.4}
  #allocation0 [shape = 'u32[]', space=smem, size = 0x4, offset = 0x4, fixed_abs, tag = 'smem constant byte address 0x4 - core index']
  #allocation1 [shape = 'u32[144,128]{1,0:T(1,128)}', space=vmem, size = 0x12000, scoped, tag = 'internal scratch']
  #allocation2 [shape = 'f32[2,8,16]{2,1,0:T(8,128)}', space=vmem, size = 0x2000, scoped, tag = 'scratch operand']
  #allocation3 [shape = 'f32[2,8,16]{2,1,0:T(8,128)}', space=vmem, size = 0x2000, scoped, tag = 'scratch operand']
  #allocation4 [shape = 'f32[8,8,64]{2,1,0:T(8,128)}', space=vmem, size = 0x8000, scoped, tag = 'scratch operand']
  #allocation5 [shape = 'f32[8,8,64]{2,1,0:T(8,128)}', space=vmem, size = 0x8000, scoped, tag = 'scratch operand']
  %s0 = inlined_call_operand.vmem [shape: s32[8,1], index: 0, kind: input, shape index: {}]
  %s1 = inlined_call_operand.vmem [shape: f32[8,8,16], index: 1, kind: input, shape index: {}, may-alias: {1,3}]
  %s2 = inlined_call_operand.vmem [shape: f32[8,8,16], index: 2, kind: input, shape index: {}, may-alias: {2,4}]
  %s3 = inlined_call_operand.vmem [shape: f32[8,8,16], index: 3, kind: input, shape index: {}, may-alias: {1,3}]
  %s4 = inlined_call_operand.vmem [shape: f32[8,8,16], index: 4, kind: input, shape index: {}, may-alias: {2,4}]
  %s5 = inlined_call_operand.vmem [shape: bf16[2,16,64], index: 5, kind: input, shape index: {}]
  %s6 = inlined_call_operand.vmem [shape: bf16[2,16,64], index: 6, kind: input, shape index: {}]
  %s7 = inlined_call_operand.vmem [shape: bf16[2,16,64], index: 7, kind: input, shape index: {}]
  %s8 = inlined_call_operand.vmem [shape: f32[2,1,64], index: 8, kind: input, shape index: {}]
  %s9 = inlined_call_operand.vmem [shape: f32[2,8,16], index: 9, kind: input, shape index: {}]
  %s10 = inlined_call_operand.vmem [shape: f32[2,8,16], index: 10, kind: input, shape index: {}]
  %s11 = inlined_call_operand.vmem [shape: f32[8,8,16], index: 11, kind: output, shape index: {0}]
  %s12 = inlined_call_operand.vmem [shape: f32[8,8,16], index: 12, kind: output, shape index: {1}]
  %13 = xla_tuple %s11, %s12
  %s14 = sld [smem:[#allocation0]]
  $region66: #{language_model_forward.4} parent=0
    _
  %s16 = ssub.s32 1, %s14
  %s17 = scalar_select 0, %s16, %s14
  // Predicated region
  $region2: #{language_model_forward.4} parent=0 // pred_check
    _
  $region3: #{language_model_forward.4} parent=0 // pred_check_branch
    %19 = sbr.rel (0) target = $region5
  $region4: #{language_model_forward.4} parent=0 // pred_region
    _
  $region5: #{language_model_forward.4} parent=0 // pred_fallthru
    _
  // Predicated region
  $region6: #{language_model_forward.4} parent=0 // pred_check
    _
  $region7: #{language_model_forward.4} parent=0 // pred_check_branch
    %21 = sbr.rel (0) target = $region9
  $region8: #{language_model_forward.4} parent=0 // pred_region
    _
  $region9: #{language_model_forward.4} parent=0 // pred_fallthru
    _
  // Predicated region
  $region10: #{language_model_forward.4} parent=0 // pred_check
    _
  $region11: #{language_model_forward.4} parent=0 // pred_check_branch
    %23 = sbr.rel (0) target = $region13
  $region12: #{language_model_forward.4} parent=0 // pred_region
    _
  $region13: #{language_model_forward.4} parent=0 // pred_fallthru
    _
  // Predicated region
  $region14: #{language_model_forward.4} parent=0 // pred_check
    _
  $region15: #{language_model_forward.4} parent=0 // pred_check_branch
    %25 = sbr.rel (0) target = $region17
  $region16: #{language_model_forward.4} parent=0 // pred_region
    %s26 = ssub.s32 0, 0
    %s27 = smul.u32 8, %s26
    %p28 = scmp.lt.s32.totalorder %s27, 7
    %s29 = scalar_select %p28, %s27, 7
    %s30 = smul.addr %s29, 8
    %s31 = scalar_lea.vmem %s3, %s30
    %s32 = ssub.s32 0, 0
    %s33 = smul.u32 8, %s32
  $region17: #{language_model_forward.4} parent=0 // pred_fallthru
    _
  // Predicated region
  $region18: #{language_model_forward.4} parent=0 // pred_check
    _
  $region19: #{language_model_forward.4} parent=0 // pred_check_branch
    %35 = sbr.rel (0) target = $region21
  $region20: #{language_model_forward.4} parent=0 // pred_region
    %s36 = ssub.s32 0, 0
    %s37 = smul.u32 8, %s36
    %p38 = scmp.lt.s32.totalorder %s37, 7
    %s39 = scalar_select %p38, %s37, 7
    %s40 = smul.addr %s39, 8
    %s41 = scalar_lea.vmem %s4, %s40
    %s42 = ssub.s32 0, 0
    %s43 = smul.u32 8, %s42
  $region21: #{language_model_forward.4} parent=0 // pred_fallthru
    _
  // Predicated region
  $region22: #{language_model_forward.4} parent=0 // pred_check
    _
  $region23: #{language_model_forward.4} parent=0 // pred_check_branch
    %45 = sbr.rel (0) target = $region25
  $region24: #{language_model_forward.4} parent=0 // pred_region
    _
  $region25: #{language_model_forward.4} parent=0 // pred_fallthru
    _
  // Predicated region
  $region26: #{language_model_forward.4} parent=0 // pred_check
    _
  $region27: #{language_model_forward.4} parent=0 // pred_check_branch
    %47 = sbr.rel (0) target = $region29
  $region28: #{language_model_forward.4} parent=0 // pred_region
    _
  $region29: #{language_model_forward.4} parent=0 // pred_fallthru
    _
  // Predicated region
  $region30: #{language_model_forward.4} parent=0 // pred_check
    _
  $region31: #{language_model_forward.4} parent=0 // pred_check_branch
    %49 = sbr.rel (0) target = $region33
  $region32: #{language_model_forward.4} parent=0 // pred_region
    _
  $region33: #{language_model_forward.4} parent=0 // pred_fallthru
    _
  // Predicated region
  $region34: #{language_model_forward.4} parent=0 // pred_check
    _
  $region35: #{language_model_forward.4} parent=0 // pred_check_branch
    %51 = sbr.rel (0) target = $region37
  $region36: #{language_model_forward.4} parent=0 // pred_region
    _
  $region37: #{language_model_forward.4} parent=0 // pred_fallthru
    _
  // Predicated region
  $region38: #{language_model_forward.4} parent=0 // pred_check
    _
  $region39: #{language_model_forward.4} parent=0 // pred_check_branch
    %53 = sbr.rel (0) target = $region41
  $region40: #{language_model_forward.4} parent=0 // pred_region
    _
  $region41: #{language_model_forward.4} parent=0 // pred_fallthru
    _
  // Predicated region
  $region42: #{language_model_forward.4} parent=0 // pred_check
    _
  $region43: #{language_model_forward.4} parent=0 // pred_check_branch
    %55 = sbr.rel (0) target = $region45
  $region44: #{language_model_forward.4} parent=0 // pred_region
    _
  $region45: #{language_model_forward.4} parent=0 // pred_fallthru
    _
  %s56 = ssub.s32 0, 0
  %s57 = smul.u32 8, %s56
  %p58 = scmp.lt.s32.totalorder %s57, 7
  %s59 = scalar_select %p58, %s57, 7
  %s60 = smul.addr %s59, 8
  %s61 = scalar_lea.vmem %s3, %s60
  %s62 = ssub.s32 0, 0
  %s63 = smul.u32 8, %s62
  %p64 = scmp.lt.s32.totalorder %s63, 7
  %s65 = scalar_select %p64, %s63, 7
  %s66 = smul.addr %s65, 8
  %s67 = scalar_lea.vmem %s4, %s66
  %s68 = ssub.s32 0, 0
  %s69 = smul.u32 8, %s68
  %p70 = scmp.lt.s32.totalorder %s69, 7
  %s71 = scalar_select %p70, %s69, 7
  %s72 = smul.addr %s71, 8
  %s73 = scalar_lea.vmem %s12, %s72
  %s74 = ssub.s32 0, 0
  %s75 = smul.u32 8, %s74
  %p76 = scmp.lt.s32.totalorder %s75, 7
  %s77 = scalar_select %p76, %s75, 7
  %s78 = smul.addr %s77, 8
  %s79 = scalar_lea.vmem %s3, %s78
  %s80 = ssub.s32 0, 0
  %s81 = smul.u32 8, %s80
  %s82 = ssub.s32 0, 0
  %s83 = smul.u32 8, %s82
  %p84 = scmp.lt.s32.totalorder %s83, 7
  %s85 = scalar_select %p84, %s83, 7
  %s86 = smul.addr %s85, 8
  %s87 = scalar_lea.vmem %s4, %s86
  %s88 = ssub.s32 0, 0
  %s89 = smul.u32 8, %s88
  %s90 = ssub.s32 0, 0
  %s91 = smul.u32 8, %s90
  %p92 = scmp.lt.s32.totalorder %s91, 7
  %s93 = scalar_select %p92, %s91, 7
  %s94 = smul.addr %s93, 8
  %s95 = scalar_lea.vmem %s12, %s94
  %s96 = ssub.s32 0, 0
  %s97 = smul.u32 8, %s96
  %p99 = scmp.eq.s32.totalorder 0, 0
  // Predicated region
  $region46: #{language_model_forward.4} parent=0 // pred_check
    %p100 = pneg %p99
  $region47: #{language_model_forward.4} parent=0 // pred_check_branch
    %102 = sbr.rel (%p100) target = $region49
  $region48: #{language_model_forward.4} parent=0 // pred_region
    %v103 = vld [vmem:[%s9] sm:$0xff]
    %v104 = vld [vmem:[%s9 + $0x8] sm:$0xff]
    %vm105 = vcmask 130048
    %106 = vst.msk [vmem:[#allocation2] sm:$0xff] %vm105, %v103
    %107 = vst.msk [vmem:[#allocation2 + $0x8] sm:$0xff] %vm105, %v104
    %v108 = vld [vmem:[%s10] sm:$0xff]
    %v109 = vld [vmem:[%s10 + $0x8] sm:$0xff]
    %110 = vst.msk [vmem:[#allocation3] sm:$0xff] %vm105, %v108
    %111 = vst.msk [vmem:[#allocation3 + $0x8] sm:$0xff] %vm105, %v109
  $region49: #{language_model_forward.4} parent=0 // pred_fallthru
    _
  %v112 = vld [vmem:[%s1] sm:$0xff]
  %v113 = vld [vmem:[%s1 + $0x8] sm:$0xff]
  %v114 = vld [vmem:[%s1 + $0x10] sm:$0xff]
  %v115 = vld [vmem:[%s1 + $0x18] sm:$0xff]
  %v116 = vld [vmem:[%s1 + $0x20] sm:$0xff]
  %v117 = vld [vmem:[%s1 + $0x28] sm:$0xff]
  %v118 = vld [vmem:[%s1 + $0x30] sm:$0xff]
  %v119 = vld [vmem:[%s1 + $0x38] sm:$0xff]
  %v120 = vpack.c.bf16 %v113, %v112
  %v121 = vpack.c.bf16 %v115, %v114
  %v122 = vpack.c.bf16 %v117, %v116
  %v123 = vpack.c.bf16 %v119, %v118
  %v124 = vld [vmem:[%s5] sm:$0xf]
  %v125 = vld [vmem:[%s5 + $0x4] sm:$0xf]
  %v126 = vld [vmem:[%s2] sm:$0xff]
  %v127 = vld [vmem:[%s2 + $0x8] sm:$0xff]
  %v128 = vld [vmem:[%s2 + $0x10] sm:$0xff]
  %v129 = vld [vmem:[%s2 + $0x18] sm:$0xff]
  %v130 = vld [vmem:[%s2 + $0x20] sm:$0xff]
  %v131 = vld [vmem:[%s2 + $0x28] sm:$0xff]
  %v132 = vld [vmem:[%s2 + $0x30] sm:$0xff]
  %v133 = vld [vmem:[%s2 + $0x38] sm:$0xff]
  %v134 = vpack.c.bf16 %v127, %v126
  %v135 = vpack.c.bf16 %v129, %v128
  %v136 = vpack.c.bf16 %v131, %v130
  %v137 = vpack.c.bf16 %v133, %v132
  %v138 = vld [vmem:[%s6] sm:$0xf]
  %v139 = vld [vmem:[%s6 + $0x4] sm:$0xf]
  %v142 = vunpack.c.l.b16 %v138
  %v143 = vunpack.c.l.b16 %v139
  %v144 = vpack.c.b16 %v143, %v142
  %vm146 = vcmask 130048
  %v148 = vsel %vm146, %v134, 0
  %v151 = vsel %vm146, %v135, 0
  %v154 = vsel %vm146, %v136, 0
  %v157 = vsel %vm146, %v137, 0
  %159 = vmatprep.subr.bf16.mxu0 0
  %160 = vmatpush1.bf16.msra.mxu0 %v144
  %161 = vmatprep.subr.bf16.mxu0 0
  %162 = vmatpush1.bf16.msra.mxu0 0
  %163 = vmatprep.subr.bf16.mxu0 0
  %164 = vmatpush1.bf16.msra.mxu0 0
  %165 = vmatprep.subr.bf16.mxu0 0
  %166 = vmatpush1.bf16.msra.mxu0 0
  %167 = vmatprep.subr.bf16.mxu0 0
  %168 = vmatpush1.bf16.msra.mxu0 0
  %169 = vmatprep.subr.bf16.mxu0 0
  %170 = vmatpush1.bf16.msra.mxu0 0
  %171 = vmatprep.subr.bf16.mxu0 0
  %172 = vmatpush1.bf16.msra.mxu0 0
  %173 = vmatprep.subr.bf16.mxu0 0
  %174 = vmatpush1.bf16.msra.mxu0 0
  %175 = vmatprep.subr.bf16.mxu0 0
  %176 = vmatpush1.bf16.msra.mxu0 0
  %177 = vmatprep.subr.bf16.mxu0 0
  %178 = vmatpush1.bf16.msra.mxu0 0
  %179 = vmatprep.subr.bf16.mxu0 0
  %180 = vmatpush1.bf16.msra.mxu0 0
  %181 = vmatprep.subr.bf16.mxu0 0
  %182 = vmatpush1.bf16.msra.mxu0 0
  %183 = vmatprep.subr.bf16.mxu0 0
  %184 = vmatpush1.bf16.msra.mxu0 0
  %185 = vmatprep.subr.bf16.mxu0 0
  %186 = vmatpush1.bf16.msra.mxu0 0
  %187 = vmatprep.subr.bf16.mxu0 0
  %188 = vmatpush1.bf16.msra.mxu0 0
  %189 = vmatprep.subr.bf16.mxu0 0
  %190 = vmatpush1.bf16.msra.mxu0 0
  %191 = vmatprep.mubr.bf16.mxu0 0
  %192 = vmatmul.mubr.bf16.gmra.mrb[0].mxu0 %v148
  %v193 = vpop.f32.mrb[0].mxu0
  %v194 = vadd.f32 0.0, %v193
  %v195 = vpop.f32.mrb[0].mxu0
  %v196 = vpop.f32.mrb[0].mxu0
  %v197 = vadd.f32 0.0, %v196
  %v198 = vpop.f32.mrb[0].mxu0
  %199 = vmatprep.mubr.bf16.mxu0 0
  %200 = vmatmul.mubr.bf16.gmra.mrb[0].mxu0 %v151
  %v201 = vpop.f32.mrb[0].mxu0
  %v202 = vadd.f32 0.0, %v201
  %v203 = vpop.f32.mrb[0].mxu0
  %v204 = vpop.f32.mrb[0].mxu0
  %v205 = vadd.f32 0.0, %v204
  %v206 = vpop.f32.mrb[0].mxu0
  %207 = vmatprep.mubr.bf16.mxu0 0
  %208 = vmatmul.mubr.bf16.gmra.mrb[0].mxu0 %v154
  %v209 = vpop.f32.mrb[0].mxu0
  %v210 = vadd.f32 0.0, %v209
  %v211 = vpop.f32.mrb[0].mxu0
  %v212 = vpop.f32.mrb[0].mxu0
  %v213 = vadd.f32 0.0, %v212
  %v214 = vpop.f32.mrb[0].mxu0
  %215 = vmatprep.mubr.bf16.mxu0 0
  %216 = vmatmul.mubr.bf16.gmra.mrb[0].mxu0 %v157
  %v217 = vpop.f32.mrb[0].mxu0
  %v218 = vadd.f32 0.0, %v217
  %v219 = vpop.f32.mrb[0].mxu0
  %v220 = vpop.f32.mrb[0].mxu0
  %v221 = vadd.f32 0.0, %v220
  %v222 = vpop.f32.mrb[0].mxu0
  %223 = vdwg.mxu0
  %v226 = vunpack.c.l.b16 %v124
  %v227 = vunpack.c.l.b16 %v125
  %v228 = vpack.c.b16 %v227, %v226
  %v231 = vsel %vm146, %v120, 0
  %v234 = vsel %vm146, %v121, 0
  %v237 = vsel %vm146, %v122, 0
  %v240 = vsel %vm146, %v123, 0
  %242 = vmatprep.subr.bf16.mxu0 0
  %243 = vmatpush1.bf16.msra.mxu0 %v228
  %244 = vmatprep.subr.bf16.mxu0 0
  %245 = vmatpush1.bf16.msra.mxu0 0
  %246 = vmatprep.subr.bf16.mxu0 0
  %247 = vmatpush1.bf16.msra.mxu0 0
  %248 = vmatprep.subr.bf16.mxu0 0
  %249 = vmatpush1.bf16.msra.mxu0 0
  %250 = vmatprep.subr.bf16.mxu0 0
  %251 = vmatpush1.bf16.msra.mxu0 0
  %252 = vmatprep.subr.bf16.mxu0 0
  %253 = vmatpush1.bf16.msra.mxu0 0
  %254 = vmatprep.subr.bf16.mxu0 0
  %255 = vmatpush1.bf16.msra.mxu0 0
  %256 = vmatprep.subr.bf16.mxu0 0
  %257 = vmatpush1.bf16.msra.mxu0 0
  %258 = vmatprep.subr.bf16.mxu0 0
  %259 = vmatpush1.bf16.msra.mxu0 0
  %260 = vmatprep.subr.bf16.mxu0 0
  %261 = vmatpush1.bf16.msra.mxu0 0
  %262 = vmatprep.subr.bf16.mxu0 0
  %263 = vmatpush1.bf16.msra.mxu0 0
  %264 = vmatprep.subr.bf16.mxu0 0
  %265 = vmatpush1.bf16.msra.mxu0 0
  %266 = vmatprep.subr.bf16.mxu0 0
  %267 = vmatpush1.bf16.msra.mxu0 0
  %268 = vmatprep.subr.bf16.mxu0 0
  %269 = vmatpush1.bf16.msra.mxu0 0
  %270 = vmatprep.subr.bf16.mxu0 0
  %271 = vmatpush1.bf16.msra.mxu0 0
  %272 = vmatprep.subr.bf16.mxu0 0
  %273 = vmatpush1.bf16.msra.mxu0 0
  %274 = vmatprep.mubr.bf16.mxu0 0
  %275 = vmatmul.mubr.bf16.gmra.mrb[0].mxu0 %v231
  %v276 = vpop.f32.mrb[0].mxu0
  %v277 = vadd.f32 %v194, %v276
  %v278 = vpop.f32.mrb[0].mxu0
  %v279 = vpop.f32.mrb[0].mxu0
  %v280 = vadd.f32 %v197, %v279
  %v281 = vpop.f32.mrb[0].mxu0
  %282 = vmatprep.mubr.bf16.mxu0 0
  %283 = vmatmul.mubr.bf16.gmra.mrb[0].mxu0 %v234
  %v284 = vpop.f32.mrb[0].mxu0
  %v285 = vadd.f32 %v202, %v284
  %v286 = vpop.f32.mrb[0].mxu0
  %v287 = vpop.f32.mrb[0].mxu0
  %v288 = vadd.f32 %v205, %v287
  %v289 = vpop.f32.mrb[0].mxu0
  %290 = vmatprep.mubr.bf16.mxu0 0
  %291 = vmatmul.mubr.bf16.gmra.mrb[0].mxu0 %v237
  %v292 = vpop.f32.mrb[0].mxu0
  %v293 = vadd.f32 %v210, %v292
  %v294 = vpop.f32.mrb[0].mxu0
  %v295 = vpop.f32.mrb[0].mxu0
  %v296 = vadd.f32 %v213, %v295
  %v297 = vpop.f32.mrb[0].mxu0
  %298 = vmatprep.mubr.bf16.mxu0 0
  %299 = vmatmul.mubr.bf16.gmra.mrb[0].mxu0 %v240
  %v300 = vpop.f32.mrb[0].mxu0
  %v301 = vadd.f32 %v218, %v300
  %v302 = vpop.f32.mrb[0].mxu0
  %v303 = vpop.f32.mrb[0].mxu0
  %v304 = vadd.f32 %v221, %v303
  %v305 = vpop.f32.mrb[0].mxu0
  %306 = vdwg.mxu0
  %v307 = vld [vmem:[%s8] sm:$0x1]
  %v309 = vlaneseq
  %v310 = vshrl.u32 %v309, 7
  %v311 = vsub.s32 0, %v310
  %v312 = vrot.slane %v307, %v311
  %v314 = vadd.f32 %v277, %v312
  %v315 = vadd.f32 %v280, %v312
  %v316 = vadd.f32 %v285, %v312
  %v317 = vadd.f32 %v288, %v312
  %v318 = vadd.f32 %v293, %v312
  %v319 = vadd.f32 %v296, %v312
  %v320 = vadd.f32 %v301, %v312
  %v321 = vadd.f32 %v304, %v312
  %vm322 = vcmask 523264
  %323 = vst.msk [vmem:[#allocation4] sm:$0xff] %vm322, %v314
  %324 = vst.msk [vmem:[#allocation4 + $0x8] sm:$0xff] %vm322, %v315
  %325 = vst.msk [vmem:[#allocation4 + $0x10] sm:$0xff] %vm322, %v316
  %326 = vst.msk [vmem:[#allocation4 + $0x18] sm:$0xff] %vm322, %v317
  %327 = vst.msk [vmem:[#allocation4 + $0x20] sm:$0xff] %vm322, %v318
  %328 = vst.msk [vmem:[#allocation4 + $0x28] sm:$0xff] %vm322, %v319
  %329 = vst.msk [vmem:[#allocation4 + $0x30] sm:$0xff] %vm322, %v320
  %330 = vst.msk [vmem:[#allocation4 + $0x38] sm:$0xff] %vm322, %v321
  %v331 = vld [vmem:[%s79] sm:$0xff]
  %v332 = vld [vmem:[%s79 + $0x8] sm:$0xff]
  %v333 = vld [vmem:[%s79 + $0x10] sm:$0xff]
  %v334 = vld [vmem:[%s79 + $0x18] sm:$0xff]
  %v335 = vld [vmem:[%s79 + $0x20] sm:$0xff]
  %v336 = vld [vmem:[%s79 + $0x28] sm:$0xff]
  %v337 = vld [vmem:[%s79 + $0x30] sm:$0xff]
  %v338 = vld [vmem:[%s79 + $0x38] sm:$0xff]
  %v339 = vpack.c.bf16 %v332, %v331
  %v340 = vpack.c.bf16 %v334, %v333
  %v341 = vpack.c.bf16 %v336, %v335
  %v342 = vpack.c.bf16 %v338, %v337
  %s343 = scalar_lea.vmem %s5, 8
  %v344 = vld [vmem:[%s343] sm:$0xf]
  %v345 = vld [vmem:[%s343 + $0x4] sm:$0xf]
  %v346 = vld [vmem:[%s87] sm:$0xff]
  %v347 = vld [vmem:[%s87 + $0x8] sm:$0xff]
  %v348 = vld [vmem:[%s87 + $0x10] sm:$0xff]
  %v349 = vld [vmem:[%s87 + $0x18] sm:$0xff]
  %v350 = vld [vmem:[%s87 + $0x20] sm:$0xff]
  %v351 = vld [vmem:[%s87 + $0x28] sm:$0xff]
  %v352 = vld [vmem:[%s87 + $0x30] sm:$0xff]
  %v353 = vld [vmem:[%s87 + $0x38] sm:$0xff]
  %v354 = vpack.c.bf16 %v347, %v346
  %v355 = vpack.c.bf16 %v349, %v348
  %v356 = vpack.c.bf16 %v351, %v350
  %v357 = vpack.c.bf16 %v353, %v352
  %s358 = scalar_lea.vmem %s6, 8
  %v359 = vld [vmem:[%s358] sm:$0xf]
  %v360 = vld [vmem:[%s358 + $0x4] sm:$0xf]
  %v363 = vunpack.c.l.b16 %v359
  %v364 = vunpack.c.l.b16 %v360
  %v365 = vpack.c.b16 %v364, %v363
  %v368 = vsel %vm146, %v354, 0
  %v371 = vsel %vm146, %v355, 0
  %v374 = vsel %vm146, %v356, 0
  %v377 = vsel %vm146, %v357, 0
  %379 = vmatprep.subr.bf16.mxu0 0
  %380 = vmatpush1.bf16.msra.mxu0 %v365
  %381 = vmatprep.subr.bf16.mxu0 0
  %382 = vmatpush1.bf16.msra.mxu0 0
  %383 = vmatprep.subr.bf16.mxu0 0
  %384 = vmatpush1.bf16.msra.mxu0 0
  %385 = vmatprep.subr.bf16.mxu0 0
  %386 = vmatpush1.bf16.msra.mxu0 0
  %387 = vmatprep.subr.bf16.mxu0 0
  %388 = vmatpush1.bf16.msra.mxu0 0
  %389 = vmatprep.subr.bf16.mxu0 0
  %390 = vmatpush1.bf16.msra.mxu0 0
  %391 = vmatprep.subr.bf16.mxu0 0
  %392 = vmatpush1.bf16.msra.mxu0 0
  %393 = vmatprep.subr.bf16.mxu0 0
  %394 = vmatpush1.bf16.msra.mxu0 0
  %395 = vmatprep.subr.bf16.mxu0 0
  %396 = vmatpush1.bf16.msra.mxu0 0
  %397 = vmatprep.subr.bf16.mxu0 0
  %398 = vmatpush1.bf16.msra.mxu0 0
  %399 = vmatprep.subr.bf16.mxu0 0
  %400 = vmatpush1.bf16.msra.mxu0 0
  %401 = vmatprep.subr.bf16.mxu0 0
  %402 = vmatpush1.bf16.msra.mxu0 0
  %403 = vmatprep.subr.bf16.mxu0 0
  %404 = vmatpush1.bf16.msra.mxu0 0
  %405 = vmatprep.subr.bf16.mxu0 0
  %406 = vmatpush1.bf16.msra.mxu0 0
  %407 = vmatprep.subr.bf16.mxu0 0
  %408 = vmatpush1.bf16.msra.mxu0 0
  %409 = vmatprep.subr.bf16.mxu0 0
  %410 = vmatpush1.bf16.msra.mxu0 0
  %411 = vmatprep.mubr.bf16.mxu0 0
  %412 = vmatmul.mubr.bf16.gmra.mrb[0].mxu0 %v368
  %v413 = vpop.f32.mrb[0].mxu0
  %v414 = vadd.f32 0.0, %v413
  %v415 = vpop.f32.mrb[0].mxu0
  %v416 = vpop.f32.mrb[0].mxu0
  %v417 = vadd.f32 0.0, %v416
  %v418 = vpop.f32.mrb[0].mxu0
  %419 = vmatprep.mubr.bf16.mxu0 0
  %420 = vmatmul.mubr.bf16.gmra.mrb[0].mxu0 %v371
  %v421 = vpop.f32.mrb[0].mxu0
  %v422 = vadd.f32 0.0, %v421
  %v423 = vpop.f32.mrb[0].mxu0
  %v424 = vpop.f32.mrb[0].mxu0
  %v425 = vadd.f32 0.0, %v424
  %v426 = vpop.f32.mrb[0].mxu0
  %427 = vmatprep.mubr.bf16.mxu0 0
  %428 = vmatmul.mubr.bf16.gmra.mrb[0].mxu0 %v374
  %v429 = vpop.f32.mrb[0].mxu0
  %v430 = vadd.f32 0.0, %v429
  %v431 = vpop.f32.mrb[0].mxu0
  %v432 = vpop.f32.mrb[0].mxu0
  %v433 = vadd.f32 0.0, %v432
  %v434 = vpop.f32.mrb[0].mxu0
  %435 = vmatprep.mubr.bf16.mxu0 0
  %436 = vmatmul.mubr.bf16.gmra.mrb[0].mxu0 %v377
  %v437 = vpop.f32.mrb[0].mxu0
  %v438 = vadd.f32 0.0, %v437
  %v439 = vpop.f32.mrb[0].mxu0
  %v440 = vpop.f32.mrb[0].mxu0
  %v441 = vadd.f32 0.0, %v440
  %v442 = vpop.f32.mrb[0].mxu0
  %443 = vdwg.mxu0
  %v446 = vunpack.c.l.b16 %v344
  %v447 = vunpack.c.l.b16 %v345
  %v448 = vpack.c.b16 %v447, %v446
  %v451 = vsel %vm146, %v339, 0
  %v454 = vsel %vm146, %v340, 0
  %v457 = vsel %vm146, %v341, 0
  %v460 = vsel %vm146, %v342, 0
  %462 = vmatprep.subr.bf16.mxu0 0
  %463 = vmatpush1.bf16.msra.mxu0 %v448
  %464 = vmatprep.subr.bf16.mxu0 0
  %465 = vmatpush1.bf16.msra.mxu0 0
  %466 = vmatprep.subr.bf16.mxu0 0
  %467 = vmatpush1.bf16.msra.mxu0 0
  %468 = vmatprep.subr.bf16.mxu0 0
  %469 = vmatpush1.bf16.msra.mxu0 0
  %470 = vmatprep.subr.bf16.mxu0 0
  %471 = vmatpush1.bf16.msra.mxu0 0
  %472 = vmatprep.subr.bf16.mxu0 0
  %473 = vmatpush1.bf16.msra.mxu0 0
  %474 = vmatprep.subr.bf16.mxu0 0
  %475 = vmatpush1.bf16.msra.mxu0 0
  %476 = vmatprep.subr.bf16.mxu0 0
  %477 = vmatpush1.bf16.msra.mxu0 0
  %478 = vmatprep.subr.bf16.mxu0 0
  %479 = vmatpush1.bf16.msra.mxu0 0
  %480 = vmatprep.subr.bf16.mxu0 0
  %481 = vmatpush1.bf16.msra.mxu0 0
  %482 = vmatprep.subr.bf16.mxu0 0
  %483 = vmatpush1.bf16.msra.mxu0 0
  %484 = vmatprep.subr.bf16.mxu0 0
  %485 = vmatpush1.bf16.msra.mxu0 0
  %486 = vmatprep.subr.bf16.mxu0 0
  %487 = vmatpush1.bf16.msra.mxu0 0
  %488 = vmatprep.subr.bf16.mxu0 0
  %489 = vmatpush1.bf16.msra.mxu0 0
  %490 = vmatprep.subr.bf16.mxu0 0
  %491 = vmatpush1.bf16.msra.mxu0 0
  %492 = vmatprep.subr.bf16.mxu0 0
  %493 = vmatpush1.bf16.msra.mxu0 0
  %494 = vmatprep.mubr.bf16.mxu0 0
  %495 = vmatmul.mubr.bf16.gmra.mrb[0].mxu0 %v451
  %v496 = vpop.f32.mrb[0].mxu0
  %v497 = vadd.f32 %v414, %v496
  %v498 = vpop.f32.mrb[0].mxu0
  %v499 = vpop.f32.mrb[0].mxu0
  %v500 = vadd.f32 %v417, %v499
  %v501 = vpop.f32.mrb[0].mxu0
  %502 = vmatprep.mubr.bf16.mxu0 0
  %503 = vmatmul.mubr.bf16.gmra.mrb[0].mxu0 %v454
  %v504 = vpop.f32.mrb[0].mxu0
  %v505 = vadd.f32 %v422, %v504
  %v506 = vpop.f32.mrb[0].mxu0
  %v507 = vpop.f32.mrb[0].mxu0
  %v508 = vadd.f32 %v425, %v507
  %v509 = vpop.f32.mrb[0].mxu0
  %510 = vmatprep.mubr.bf16.mxu0 0
  %511 = vmatmul.mubr.bf16.gmra.mrb[0].mxu0 %v457
  %v512 = vpop.f32.mrb[0].mxu0
  %v513 = vadd.f32 %v430, %v512
  %v514 = vpop.f32.mrb[0].mxu0
  %v515 = vpop.f32.mrb[0].mxu0
  %v516 = vadd.f32 %v433, %v515
  %v517 = vpop.f32.mrb[0].mxu0
  %518 = vmatprep.mubr.bf16.mxu0 0
  %519 = vmatmul.mubr.bf16.gmra.mrb[0].mxu0 %v460
  %v520 = vpop.f32.mrb[0].mxu0
  %v521 = vadd.f32 %v438, %v520
  %v522 = vpop.f32.mrb[0].mxu0
  %v523 = vpop.f32.mrb[0].mxu0
  %v524 = vadd.f32 %v441, %v523
  %v525 = vpop.f32.mrb[0].mxu0
  %526 = vdwg.mxu0
  %s527 = scalar_lea.vmem %s8, 1
  %v528 = vld [vmem:[%s527] sm:$0x1]
  %v530 = vlaneseq
  %v531 = vshrl.u32 %v530, 7
  %v532 = vsub.s32 0, %v531
  %v533 = vrot.slane %v528, %v532
  %v535 = vadd.f32 %v497, %v533
  %v536 = vadd.f32 %v500, %v533
  %v537 = vadd.f32 %v505, %v533
  %v538 = vadd.f32 %v508, %v533
  %v539 = vadd.f32 %v513, %v533
  %v540 = vadd.f32 %v516, %v533
  %v541 = vadd.f32 %v521, %v533
  %v542 = vadd.f32 %v524, %v533
  %543 = vst.msk [vmem:[#allocation5] sm:$0xff] %vm322, %v535
  %544 = vst.msk [vmem:[#allocation5 + $0x8] sm:$0xff] %vm322, %v536
  %545 = vst.msk [vmem:[#allocation5 + $0x10] sm:$0xff] %vm322, %v537
  %546 = vst.msk [vmem:[#allocation5 + $0x18] sm:$0xff] %vm322, %v538
  %547 = vst.msk [vmem:[#allocation5 + $0x20] sm:$0xff] %vm322, %v539
  %548 = vst.msk [vmem:[#allocation5 + $0x28] sm:$0xff] %vm322, %v540
  %549 = vst.msk [vmem:[#allocation5 + $0x30] sm:$0xff] %vm322, %v541
  %550 = vst.msk [vmem:[#allocation5 + $0x38] sm:$0xff] %vm322, %v542
  %v551 = vld [vmem:[%s7] sm:$0xf]
  %v552 = vld [vmem:[%s7 + $0x4] sm:$0xf]
  %s553 = scalar_lea.vmem %s7, 8
  %v554 = vld [vmem:[%s553] sm:$0xf]
  %v555 = vld [vmem:[%s553 + $0x4] sm:$0xf]
  %v556 = vld [vmem:[%s0] sm:$0xff]
  %v557 = vld [vmem:[#allocation2] sm:$0xff]
  %v558 = vld [vmem:[#allocation2 + $0x8] sm:$0xff]
  %v559 = vld [vmem:[#allocation3] sm:$0xff]
  %v560 = vld [vmem:[#allocation3 + $0x8] sm:$0xff]
  %s561 = smul.u32 0, 8
  %s562 = ssub.s32 7, %s561
  %v563 = vld [vmem:[#allocation4] sm:$0xff]
  %v564 = vpack.c.bf16 %v557, %v557
  %v567 = vunpack.c.l.b16 %v551
  %v568 = vunpack.c.l.b16 %v552
  %v569 = vpack.c.b16 %v568, %v567
  %v572 = vsel %vm146, %v564, 0
  %574 = vmatprep.subr.bf16.mxu0 0
  %575 = vmatpush1.bf16.msra.mxu0 %v569
  %576 = vmatprep.subr.bf16.mxu0 0
  %577 = vmatpush1.bf16.msra.mxu0 0
  %578 = vmatprep.subr.bf16.mxu0 0
  %579 = vmatpush1.bf16.msra.mxu0 0
  %580 = vmatprep.subr.bf16.mxu0 0
  %581 = vmatpush1.bf16.msra.mxu0 0
  %582 = vmatprep.subr.bf16.mxu0 0
  %583 = vmatpush1.bf16.msra.mxu0 0
  %584 = vmatprep.subr.bf16.mxu0 0
  %585 = vmatpush1.bf16.msra.mxu0 0
  %586 = vmatprep.subr.bf16.mxu0 0
  %587 = vmatpush1.bf16.msra.mxu0 0
  %588 = vmatprep.subr.bf16.mxu0 0
  %589 = vmatpush1.bf16.msra.mxu0 0
  %590 = vmatprep.subr.bf16.mxu0 0
  %591 = vmatpush1.bf16.msra.mxu0 0
  %592 = vmatprep.subr.bf16.mxu0 0
  %593 = vmatpush1.bf16.msra.mxu0 0
  %594 = vmatprep.subr.bf16.mxu0 0
  %595 = vmatpush1.bf16.msra.mxu0 0
  %596 = vmatprep.subr.bf16.mxu0 0
  %597 = vmatpush1.bf16.msra.mxu0 0
  %598 = vmatprep.subr.bf16.mxu0 0
  %599 = vmatpush1.bf16.msra.mxu0 0
  %600 = vmatprep.subr.bf16.mxu0 0
  %601 = vmatpush1.bf16.msra.mxu0 0
  %602 = vmatprep.subr.bf16.mxu0 0
  %603 = vmatpush1.bf16.msra.mxu0 0
  %604 = vmatprep.subr.bf16.mxu0 0
  %605 = vmatpush1.bf16.msra.mxu0 0
  %606 = vmatprep.mubr.bf16.mxu0 0
  %607 = vmatmul.mubr.bf16.gmra.mrb[0].mxu0 %v572
  %v608 = vpop.f32.mrb[0].mxu0
  %v609 = vadd.f32 0.0, %v608
  %v610 = vpop.f32.mrb[0].mxu0
  %v611 = vpop.f32.mrb[0].mxu0
  %v612 = vpop.f32.mrb[0].mxu0
  %613 = vdwg.mxu0
  %v614 = vadd.f32 %v563, %v609
  %s615 = scalar_lea.vmem [#allocation5], 56
  %v616 = vld [vmem:[%s615] sm:$0xff]
  %v617 = vpack.c.bf16 %v558, %v558
  %v620 = vunpack.c.l.b16 %v554
  %v621 = vunpack.c.l.b16 %v555
  %v622 = vpack.c.b16 %v621, %v620
  %v625 = vsel %vm146, %v617, 0
  %627 = vmatprep.subr.bf16.mxu0 0
  %628 = vmatpush1.bf16.msra.mxu0 %v622
  %629 = vmatprep.subr.bf16.mxu0 0
  %630 = vmatpush1.bf16.msra.mxu0 0
  %631 = vmatprep.subr.bf16.mxu0 0
  %632 = vmatpush1.bf16.msra.mxu0 0
  %633 = vmatprep.subr.bf16.mxu0 0
  %634 = vmatpush1.bf16.msra.mxu0 0
  %635 = vmatprep.subr.bf16.mxu0 0
  %636 = vmatpush1.bf16.msra.mxu0 0
  %637 = vmatprep.subr.bf16.mxu0 0
  %638 = vmatpush1.bf16.msra.mxu0 0
  %639 = vmatprep.subr.bf16.mxu0 0
  %640 = vmatpush1.bf16.msra.mxu0 0
  %641 = vmatprep.subr.bf16.mxu0 0
  %642 = vmatpush1.bf16.msra.mxu0 0
  %643 = vmatprep.subr.bf16.mxu0 0
  %644 = vmatpush1.bf16.msra.mxu0 0
  %645 = vmatprep.subr.bf16.mxu0 0
  %646 = vmatpush1.bf16.msra.mxu0 0
  %647 = vmatprep.subr.bf16.mxu0 0
  %648 = vmatpush1.bf16.msra.mxu0 0
  %649 = vmatprep.subr.bf16.mxu0 0
  %650 = vmatpush1.bf16.msra.mxu0 0
  %651 = vmatprep.subr.bf16.mxu0 0
  %652 = vmatpush1.bf16.msra.mxu0 0
  %653 = vmatprep.subr.bf16.mxu0 0
  %654 = vmatpush1.bf16.msra.mxu0 0
  %655 = vmatprep.subr.bf16.mxu0 0
  %656 = vmatpush1.bf16.msra.mxu0 0
  %657 = vmatprep.subr.bf16.mxu0 0
  %658 = vmatpush1.bf16.msra.mxu0 0
  %659 = vmatprep.mubr.bf16.mxu0 0
  %660 = vmatmul.mubr.bf16.gmra.mrb[0].mxu0 %v625
  %v661 = vpop.f32.mrb[0].mxu0
  %v662 = vadd.f32 0.0, %v661
  %v663 = vpop.f32.mrb[0].mxu0
  %v664 = vpop.f32.mrb[0].mxu0
  %v665 = vpop.f32.mrb[0].mxu0
  %666 = vdwg.mxu0
  %v667 = vadd.f32 %v616, %v662
  %v668 = vxor.u32 %v614, 2147483648
  %v669 = vmul.f32 %v668, 1.442695
  %v670 = vpow.pop %v669
  %v671 = vadd.f32 %v670, 1.0
  %v672 = vrcp.pop %v671
  %v673 = vmul.f32 1.0, %v672
  %v674 = vtanh.pop %v614
  %676 = vrot.lane.b32.xlu0 %v559, 16
  %v677 = vpop.permute.xlu0 %676
  %v679 = vmul.f32 %v673, %v677
  %681 = vrot.lane.b32.xlu0 %v674, 96
  %v682 = vpop.permute.xlu0 %681
  %v684 = vmul.f32 %v673, %v682
  %686 = vrot.lane.b32.xlu0 %v684, 16
  %v687 = vpop.permute.xlu0 %686
  %v689 = vadd.f32 %v679, %v687
  %v690 = vtanh.pop %v689
  %692 = vrot.lane.b32.xlu0 %v690, 32
  %v693 = vpop.permute.xlu0 %692
  %v695 = vmul.f32 %v673, %v693
  %v696 = vxor.u32 %v667, 2147483648
  %v697 = vmul.f32 %v696, 1.442695
  %v698 = vpow.pop %v697
  %v699 = vadd.f32 %v698, 1.0
  %v700 = vrcp.pop %v699
  %v701 = vmul.f32 1.0, %v700
  %v702 = vtanh.pop %v667
  %704 = vrot.lane.b32.xlu0 %v560, 16
  %v705 = vpop.permute.xlu0 %704
  %v707 = vmul.f32 %v701, %v705
  %709 = vrot.lane.b32.xlu0 %v702, 96
  %v710 = vpop.permute.xlu0 %709
  %v712 = vmul.f32 %v701, %v710
  %714 = vrot.lane.b32.xlu0 %v712, 16
  %v715 = vpop.permute.xlu0 %714
  %v717 = vadd.f32 %v707, %v715
  %v718 = vtanh.pop %v717
  %720 = vrot.lane.b32.xlu0 %v718, 32
  %v721 = vpop.permute.xlu0 %720
  %v723 = vmul.f32 %v701, %v721
  %v724 = vstv %s561
  %vm725 = vcmp.lt.s32.totalorder %v724, %v556
  %v726 = vstv %s562
  %vm727 = vcmp.lt.s32.totalorder %v726, %v556
  %v728 = vsel %vm725, 1, 0
  %729 = vset.pattern.permute.xlu0 0
  %730 = vperm.xlu0 %729, %v728
  %v731 = vpop.permute.xlu0 %730
  %vm732 = vcmp.eq.s32.totalorder %v731, 1
  %734 = vrot.lane.b32.xlu0 %v557, 48
  %v735 = vpop.permute.xlu0 %734
  %v737 = vsel %vm732, %v695, %v735
  %v738 = vsel %vm732, %v689, %v677
  %v739 = vsel %vm727, 1, 0
  %740 = vset.pattern.permute.xlu0 0
  %741 = vperm.xlu0 %740, %v739
  %v742 = vpop.permute.xlu0 %741
  %vm743 = vcmp.eq.s32.totalorder %v742, 1
  %745 = vrot.lane.b32.xlu0 %v558, 48
  %v746 = vpop.permute.xlu0 %745
  %v748 = vsel %vm743, %v723, %v746
  %v749 = vsel %vm743, %v717, %v705
  %v750 = vsel %vm732, %v695, 0.0
  %752 = vrot.lane.b32.xlu0 %v750, 80
  %v753 = vpop.permute.xlu0 %752
  %755 = vst.msk [vmem:[%s11] sm:$0xff] %vm146, %v753
  %v756 = vsel %vm743, %v723, 0.0
  %758 = vrot.lane.b32.xlu0 %v756, 80
  %v759 = vpop.permute.xlu0 %758
  %s761 = scalar_lea.vmem %s95, 56
  %762 = vst.msk [vmem:[%s761] sm:$0xff] %vm146, %v759
  %s763 = sadd.s32 %s561, 1
  %s764 = ssub.s32 6, %s561
  %s765 = scalar_lea.vmem [#allocation4], 8
  %v766 = vld [vmem:[%s765] sm:$0xff]
  %v767 = vpack.c.bf16 %v737, %v737
  %769 = vrot.lane.b32.xlu0 %v767, 80
  %v770 = vpop.permute.xlu0 %769
  %v772 = vsel %vm146, %v770, 0
  %774 = vmatprep.subr.bf16.mxu0 0
  %775 = vmatpush1.bf16.msra.mxu0 %v569
  %776 = vmatprep.subr.bf16.mxu0 0
  %777 = vmatpush1.bf16.msra.mxu0 0
  %778 = vmatprep.subr.bf16.mxu0 0
  %779 = vmatpush1.bf16.msra.mxu0 0
  %780 = vmatprep.subr.bf16.mxu0 0
  %781 = vmatpush1.bf16.msra.mxu0 0
  %782 = vmatprep.subr.bf16.mxu0 0
  %783 = vmatpush1.bf16.msra.mxu0 0
  %784 = vmatprep.subr.bf16.mxu0 0
  %785 = vmatpush1.bf16.msra.mxu0 0
  %786 = vmatprep.subr.bf16.mxu0 0
  %787 = vmatpush1.bf16.msra.mxu0 0
  %788 = vmatprep.subr.bf16.mxu0 0
  %789 = vmatpush1.bf16.msra.mxu0 0
  %790 = vmatprep.subr.bf16.mxu0 0
  %791 = vmatpush1.bf16.msra.mxu0 0
  %792 = vmatprep.subr.bf16.mxu0 0
  %793 = vmatpush1.bf16.msra.mxu0 0
  %794 = vmatprep.subr.bf16.mxu0 0
  %795 = vmatpush1.bf16.msra.mxu0 0
  %796 = vmatprep.subr.bf16.mxu0 0
  %797 = vmatpush1.bf16.msra.mxu0 0
  %798 = vmatprep.subr.bf16.mxu0 0
  %799 = vmatpush1.bf16.msra.mxu0 0
  %800 = vmatprep.subr.bf16.mxu0 0
  %801 = vmatpush1.bf16.msra.mxu0 0
  %802 = vmatprep.subr.bf16.mxu0 0
  %803 = vmatpush1.bf16.msra.mxu0 0
  %804 = vmatprep.subr.bf16.mxu0 0
  %805 = vmatpush1.bf16.msra.mxu0 0
  %806 = vmatprep.mubr.bf16.mxu0 0
  %807 = vmatmul.mubr.bf16.gmra.mrb[0].mxu0 %v772
  %v808 = vpop.f32.mrb[0].mxu0
  %v809 = vadd.f32 0.0, %v808
  %v810 = vpop.f32.mrb[0].mxu0
  %v811 = vpop.f32.mrb[0].mxu0
  %v812 = vpop.f32.mrb[0].mxu0
  %813 = vdwg.mxu0
  %v814 = vadd.f32 %v766, %v809
  %s815 = scalar_lea.vmem [#allocation5], 48
  %v816 = vld [vmem:[%s815] sm:$0xff]
  %v817 = vpack.c.bf16 %v748, %v748
  %819 = vrot.lane.b32.xlu0 %v817, 80
  %v820 = vpop.permute.xlu0 %819
  %v822 = vsel %vm146, %v820, 0
  %824 = vmatprep.subr.bf16.mxu0 0
  %825 = vmatpush1.bf16.msra.mxu0 %v622
  %826 = vmatprep.subr.bf16.mxu0 0
  %827 = vmatpush1.bf16.msra.mxu0 0
  %828 = vmatprep.subr.bf16.mxu0 0
  %829 = vmatpush1.bf16.msra.mxu0 0
  %830 = vmatprep.subr.bf16.mxu0 0
  %831 = vmatpush1.bf16.msra.mxu0 0
  %832 = vmatprep.subr.bf16.mxu0 0
  %833 = vmatpush1.bf16.msra.mxu0 0
  %834 = vmatprep.subr.bf16.mxu0 0
  %835 = vmatpush1.bf16.msra.mxu0 0
  %836 = vmatprep.subr.bf16.mxu0 0
  %837 = vmatpush1.bf16.msra.mxu0 0
  %838 = vmatprep.subr.bf16.mxu0 0
  %839 = vmatpush1.bf16.msra.mxu0 0
  %840 = vmatprep.subr.bf16.mxu0 0
  %841 = vmatpush1.bf16.msra.mxu0 0
  %842 = vmatprep.subr.bf16.mxu0 0
  %843 = vmatpush1.bf16.msra.mxu0 0
  %844 = vmatprep.subr.bf16.mxu0 0
  %845 = vmatpush1.bf16.msra.mxu0 0
  %846 = vmatprep.subr.bf16.mxu0 0
  %847 = vmatpush1.bf16.msra.mxu0 0
  %848 = vmatprep.subr.bf16.mxu0 0
  %849 = vmatpush1.bf16.msra.mxu0 0
  %850 = vmatprep.subr.bf16.mxu0 0
  %851 = vmatpush1.bf16.msra.mxu0 0
  %852 = vmatprep.subr.bf16.mxu0 0
  %853 = vmatpush1.bf16.msra.mxu0 0
  %854 = vmatprep.subr.bf16.mxu0 0
  %855 = vmatpush1.bf16.msra.mxu0 0
  %856 = vmatprep.mubr.bf16.mxu0 0
  %857 = vmatmul.mubr.bf16.gmra.mrb[0].mxu0 %v822
  %v858 = vpop.f32.mrb[0].mxu0
  %v859 = vadd.f32 0.0, %v858
  %v860 = vpop.f32.mrb[0].mxu0
  %v861 = vpop.f32.mrb[0].mxu0
  %v862 = vpop.f32.mrb[0].mxu0
  %863 = vdwg.mxu0
  %v864 = vadd.f32 %v816, %v859
  %v865 = vxor.u32 %v814, 2147483648
  %v866 = vmul.f32 %v865, 1.442695
  %v867 = vpow.pop %v866
  %v868 = vadd.f32 %v867, 1.0
  %v869 = vrcp.pop %v868
  %v870 = vmul.f32 1.0, %v869
  %v871 = vtanh.pop %v814
  %v872 = vmul.f32 %v870, %v738
  %874 = vrot.lane.b32.xlu0 %v871, 96
  %v875 = vpop.permute.xlu0 %874
  %v877 = vmul.f32 %v870, %v875
  %879 = vrot.lane.b32.xlu0 %v877, 16
  %v880 = vpop.permute.xlu0 %879
  %v882 = vadd.f32 %v872, %v880
  %v883 = vtanh.pop %v882
  %885 = vrot.lane.b32.xlu0 %v883, 32
  %v886 = vpop.permute.xlu0 %885
  %v888 = vmul.f32 %v870, %v886
  %v889 = vxor.u32 %v864, 2147483648
  %v890 = vmul.f32 %v889, 1.442695
  %v891 = vpow.pop %v890
  %v892 = vadd.f32 %v891, 1.0
  %v893 = vrcp.pop %v892
  %v894 = vmul.f32 1.0, %v893
  %v895 = vtanh.pop %v864
  %v896 = vmul.f32 %v894, %v749
  %898 = vrot.lane.b32.xlu0 %v895, 96
  %v899 = vpop.permute.xlu0 %898
  %v901 = vmul.f32 %v894, %v899
  %903 = vrot.lane.b32.xlu0 %v901, 16
  %v904 = vpop.permute.xlu0 %903
  %v906 = vadd.f32 %v896, %v904
  %v907 = vtanh.pop %v906
  %909 = vrot.lane.b32.xlu0 %v907, 32
  %v910 = vpop.permute.xlu0 %909
  %v912 = vmul.f32 %v894, %v910
  %v913 = vstv %s763
  %vm914 = vcmp.lt.s32.totalorder %v913, %v556
  %v915 = vstv %s764
  %vm916 = vcmp.lt.s32.totalorder %v915, %v556
  %v917 = vsel %vm914, 1, 0
  %918 = vset.pattern.permute.xlu0 0
  %919 = vperm.xlu0 %918, %v917
  %v920 = vpop.permute.xlu0 %919
  %vm921 = vcmp.eq.s32.totalorder %v920, 1
  %v922 = vsel %vm921, %v888, %v737
  %v923 = vsel %vm921, %v882, %v738
  %v924 = vsel %vm916, 1, 0
  %925 = vset.pattern.permute.xlu0 0
  %926 = vperm.xlu0 %925, %v924
  %v927 = vpop.permute.xlu0 %926
  %vm928 = vcmp.eq.s32.totalorder %v927, 1
  %v929 = vsel %vm928, %v912, %v748
  %v930 = vsel %vm928, %v906, %v749
  %v931 = vsel %vm921, %v888, 0.0
  %933 = vrot.lane.b32.xlu0 %v931, 80
  %v934 = vpop.permute.xlu0 %933
  %s936 = scalar_lea.vmem %s11, 8
  %937 = vst.msk [vmem:[%s936] sm:$0xff] %vm146, %v934
  %v938 = vsel %vm928, %v912, 0.0
  %940 = vrot.lane.b32.xlu0 %v938, 80
  %v941 = vpop.permute.xlu0 %940
  %s943 = scalar_lea.vmem %s95, 48
  %944 = vst.msk [vmem:[%s943] sm:$0xff] %vm146, %v941
  %s945 = sadd.s32 %s561, 2
  %s946 = ssub.s32 5, %s561
  %s947 = scalar_lea.vmem [#allocation4], 16
  %v948 = vld [vmem:[%s947] sm:$0xff]
  %v949 = vpack.c.bf16 %v922, %v922
  %951 = vrot.lane.b32.xlu0 %v949, 80
  %v952 = vpop.permute.xlu0 %951
  %v954 = vsel %vm146, %v952, 0
  %956 = vmatprep.subr.bf16.mxu0 0
  %957 = vmatpush1.bf16.msra.mxu0 %v569
  %958 = vmatprep.subr.bf16.mxu0 0
  %959 = vmatpush1.bf16.msra.mxu0 0
  %960 = vmatprep.subr.bf16.mxu0 0
  %961 = vmatpush1.bf16.msra.mxu0 0
  %962 = vmatprep.subr.bf16.mxu0 0
  %963 = vmatpush1.bf16.msra.mxu0 0
  %964 = vmatprep.subr.bf16.mxu0 0
  %965 = vmatpush1.bf16.msra.mxu0 0
  %966 = vmatprep.subr.bf16.mxu0 0
  %967 = vmatpush1.bf16.msra.mxu0 0
  %968 = vmatprep.subr.bf16.mxu0 0
  %969 = vmatpush1.bf16.msra.mxu0 0
  %970 = vmatprep.subr.bf16.mxu0 0
  %971 = vmatpush1.bf16.msra.mxu0 0
  %972 = vmatprep.subr.bf16.mxu0 0
  %973 = vmatpush1.bf16.msra.mxu0 0
  %974 = vmatprep.subr.bf16.mxu0 0
  %975 = vmatpush1.bf16.msra.mxu0 0
  %976 = vmatprep.subr.bf16.mxu0 0
  %977 = vmatpush1.bf16.msra.mxu0 0
  %978 = vmatprep.subr.bf16.mxu0 0
  %979 = vmatpush1.bf16.msra.mxu0 0
  %980 = vmatprep.subr.bf16.mxu0 0
  %981 = vmatpush1.bf16.msra.mxu0 0
  %982 = vmatprep.subr.bf16.mxu0 0
  %983 = vmatpush1.bf16.msra.mxu0 0
  %984 = vmatprep.subr.bf16.mxu0 0
  %985 = vmatpush1.bf16.msra.mxu0 0
  %986 = vmatprep.subr.bf16.mxu0 0
  %987 = vmatpush1.bf16.msra.mxu0 0
  %988 = vmatprep.mubr.bf16.mxu0 0
  %989 = vmatmul.mubr.bf16.gmra.mrb[0].mxu0 %v954
  %v990 = vpop.f32.mrb[0].mxu0
  %v991 = vadd.f32 0.0, %v990
  %v992 = vpop.f32.mrb[0].mxu0
  %v993 = vpop.f32.mrb[0].mxu0
  %v994 = vpop.f32.mrb[0].mxu0
  %995 = vdwg.mxu0
  %v996 = vadd.f32 %v948, %v991
  %s997 = scalar_lea.vmem [#allocation5], 40
  %v998 = vld [vmem:[%s997] sm:$0xff]
  %v999 = vpack.c.bf16 %v929, %v929
  %1001 = vrot.lane.b32.xlu0 %v999, 80
  %v1002 = vpop.permute.xlu0 %1001
  %v1004 = vsel %vm146, %v1002, 0
  %1006 = vmatprep.subr.bf16.mxu0 0
  %1007 = vmatpush1.bf16.msra.mxu0 %v622
  %1008 = vmatprep.subr.bf16.mxu0 0
  %1009 = vmatpush1.bf16.msra.mxu0 0
  %1010 = vmatprep.subr.bf16.mxu0 0
  %1011 = vmatpush1.bf16.msra.mxu0 0
  %1012 = vmatprep.subr.bf16.mxu0 0
  %1013 = vmatpush1.bf16.msra.mxu0 0
  %1014 = vmatprep.subr.bf16.mxu0 0
  %1015 = vmatpush1.bf16.msra.mxu0 0
  %1016 = vmatprep.subr.bf16.mxu0 0
  %1017 = vmatpush1.bf16.msra.mxu0 0
  %1018 = vmatprep.subr.bf16.mxu0 0
  %1019 = vmatpush1.bf16.msra.mxu0 0
  %1020 = vmatprep.subr.bf16.mxu0 0
  %1021 = vmatpush1.bf16.msra.mxu0 0
  %1022 = vmatprep.subr.bf16.mxu0 0
  %1023 = vmatpush1.bf16.msra.mxu0 0
  %1024 = vmatprep.subr.bf16.mxu0 0
  %1025 = vmatpush1.bf16.msra.mxu0 0
  %1026 = vmatprep.subr.bf16.mxu0 0
  %1027 = vmatpush1.bf16.msra.mxu0 0
  %1028 = vmatprep.subr.bf16.mxu0 0
  %1029 = vmatpush1.bf16.msra.mxu0 0
  %1030 = vmatprep.subr.bf16.mxu0 0
  %1031 = vmatpush1.bf16.msra.mxu0 0
  %1032 = vmatprep.subr.bf16.mxu0 0
  %1033 = vmatpush1.bf16.msra.mxu0 0
  %1034 = vmatprep.subr.bf16.mxu0 0
  %1035 = vmatpush1.bf16.msra.mxu0 0
  %1036 = vmatprep.subr.bf16.mxu0 0
  %1037 = vmatpush1.bf16.msra.mxu0 0
  %1038 = vmatprep.mubr.bf16.mxu0 0
  %1039 = vmatmul.mubr.bf16.gmra.mrb[0].mxu0 %v1004
  %v1040 = vpop.f32.mrb[0].mxu0
  %v1041 = vadd.f32 0.0, %v1040
  %v1042 = vpop.f32.mrb[0].mxu0
  %v1043 = vpop.f32.mrb[0].mxu0
  %v1044 = vpop.f32.mrb[0].mxu0
  %1045 = vdwg.mxu0
  %v1046 = vadd.f32 %v998, %v1041
  %v1047 = vxor.u32 %v996, 2147483648
  %v1048 = vmul.f32 %v1047, 1.442695
  %v1049 = vpow.pop %v1048
  %v1050 = vadd.f32 %v1049, 1.0
  %v1051 = vrcp.pop %v1050
  %v1052 = vmul.f32 1.0, %v1051
  %v1053 = vtanh.pop %v996
  %v1054 = vmul.f32 %v1052, %v923
  %1056 = vrot.lane.b32.xlu0 %v1053, 96
  %v1057 = vpop.permute.xlu0 %1056
  %v1059 = vmul.f32 %v1052, %v1057
  %1061 = vrot.lane.b32.xlu0 %v1059, 16
  %v1062 = vpop.permute.xlu0 %1061
  %v1064 = vadd.f32 %v1054, %v1062
  %v1065 = vtanh.pop %v1064
  %1067 = vrot.lane.b32.xlu0 %v1065, 32
  %v1068 = vpop.permute.xlu0 %1067
  %v1070 = vmul.f32 %v1052, %v1068
  %v1071 = vxor.u32 %v1046, 2147483648
  %v1072 = vmul.f32 %v1071, 1.442695
  %v1073 = vpow.pop %v1072
  %v1074 = vadd.f32 %v1073, 1.0
  %v1075 = vrcp.pop %v1074
  %v1076 = vmul.f32 1.0, %v1075
  %v1077 = vtanh.pop %v1046
  %v1078 = vmul.f32 %v1076, %v930
  %1080 = vrot.lane.b32.xlu0 %v1077, 96
  %v1081 = vpop.permute.xlu0 %1080
  %v1083 = vmul.f32 %v1076, %v1081
  %1085 = vrot.lane.b32.xlu0 %v1083, 16
  %v1086 = vpop.permute.xlu0 %1085
  %v1088 = vadd.f32 %v1078, %v1086
  %v1089 = vtanh.pop %v1088
  %1091 = vrot.lane.b32.xlu0 %v1089, 32
  %v1092 = vpop.permute.xlu0 %1091
  %v1094 = vmul.f32 %v1076, %v1092
  %v1095 = vstv %s945
  %vm1096 = vcmp.lt.s32.totalorder %v1095, %v556
  %v1097 = vstv %s946
  %vm1098 = vcmp.lt.s32.totalorder %v1097, %v556
  %v1099 = vsel %vm1096, 1, 0
  %1100 = vset.pattern.permute.xlu0 0
  %1101 = vperm.xlu0 %1100, %v1099
  %v1102 = vpop.permute.xlu0 %1101
  %vm1103 = vcmp.eq.s32.totalorder %v1102, 1
  %v1104 = vsel %vm1103, %v1070, %v922
  %v1105 = vsel %vm1103, %v1064, %v923
  %v1106 = vsel %vm1098, 1, 0
  %1107 = vset.pattern.permute.xlu0 0
  %1108 = vperm.xlu0 %1107, %v1106
  %v1109 = vpop.permute.xlu0 %1108
  %vm1110 = vcmp.eq.s32.totalorder %v1109, 1
  %v1111 = vsel %vm1110, %v1094, %v929
  %v1112 = vsel %vm1110, %v1088, %v930
  %v1113 = vsel %vm1103, %v1070, 0.0
  %1115 = vrot.lane.b32.xlu0 %v1113, 80
  %v1116 = vpop.permute.xlu0 %1115
  %s1118 = scalar_lea.vmem %s11, 16
  %1119 = vst.msk [vmem:[%s1118] sm:$0xff] %vm146, %v1116
  %v1120 = vsel %vm1110, %v1094, 0.0
  %1122 = vrot.lane.b32.xlu0 %v1120, 80
  %v1123 = vpop.permute.xlu0 %1122
  %s1125 = scalar_lea.vmem %s95, 40
  %1126 = vst.msk [vmem:[%s1125] sm:$0xff] %vm146, %v1123
  %s1127 = sadd.s32 %s561, 3
  %s1128 = ssub.s32 4, %s561
  %s1129 = scalar_lea.vmem [#allocation4], 24
  %v1130 = vld [vmem:[%s1129] sm:$0xff]
  %v1131 = vpack.c.bf16 %v1104, %v1104
  %1133 = vrot.lane.b32.xlu0 %v1131, 80
  %v1134 = vpop.permute.xlu0 %1133
  %v1136 = vsel %vm146, %v1134, 0
  %1138 = vmatprep.subr.bf16.mxu0 0
  %1139 = vmatpush1.bf16.msra.mxu0 %v569
  %1140 = vmatprep.subr.bf16.mxu0 0
  %1141 = vmatpush1.bf16.msra.mxu0 0
  %1142 = vmatprep.subr.bf16.mxu0 0
  %1143 = vmatpush1.bf16.msra.mxu0 0
  %1144 = vmatprep.subr.bf16.mxu0 0
  %1145 = vmatpush1.bf16.msra.mxu0 0
  %1146 = vmatprep.subr.bf16.mxu0 0
  %1147 = vmatpush1.bf16.msra.mxu0 0
  %1148 = vmatprep.subr.bf16.mxu0 0
  %1149 = vmatpush1.bf16.msra.mxu0 0
  %1150 = vmatprep.subr.bf16.mxu0 0
  %1151 = vmatpush1.bf16.msra.mxu0 0
  %1152 = vmatprep.subr.bf16.mxu0 0
  %1153 = vmatpush1.bf16.msra.mxu0 0
  %1154 = vmatprep.subr.bf16.mxu0 0
  %1155 = vmatpush1.bf16.msra.mxu0 0
  %1156 = vmatprep.subr.bf16.mxu0 0
  %1157 = vmatpush1.bf16.msra.mxu0 0
  %1158 = vmatprep.subr.bf16.mxu0 0
  %1159 = vmatpush1.bf16.msra.mxu0 0
  %1160 = vmatprep.subr.bf16.mxu0 0
  %1161 = vmatpush1.bf16.msra.mxu0 0
  %1162 = vmatprep.subr.bf16.mxu0 0
  %1163 = vmatpush1.bf16.msra.mxu0 0
  %1164 = vmatprep.subr.bf16.mxu0 0
  %1165 = vmatpush1.bf16.msra.mxu0 0
  %1166 = vmatprep.subr.bf16.mxu0 0
  %1167 = vmatpush1.bf16.msra.mxu0 0
  %1168 = vmatprep.subr.bf16.mxu0 0
  %1169 = vmatpush1.bf16.msra.mxu0 0
  %1170 = vmatprep.mubr.bf16.mxu0 0
  %1171 = vmatmul.mubr.bf16.gmra.mrb[0].mxu0 %v1136
  %v1172 = vpop.f32.mrb[0].mxu0
  %v1173 = vadd.f32 0.0, %v1172
  %v1174 = vpop.f32.mrb[0].mxu0
  %v1175 = vpop.f32.mrb[0].mxu0
  %v1176 = vpop.f32.mrb[0].mxu0
  %1177 = vdwg.mxu0
  %v1178 = vadd.f32 %v1130, %v1173
  %s1179 = scalar_lea.vmem [#allocation5], 32
  %v1180 = vld [vmem:[%s1179] sm:$0xff]
  %v1181 = vpack.c.bf16 %v1111, %v1111
  %1183 = vrot.lane.b32.xlu0 %v1181, 80
  %v1184 = vpop.permute.xlu0 %1183
  %v1186 = vsel %vm146, %v1184, 0
  %1188 = vmatprep.subr.bf16.mxu0 0
  %1189 = vmatpush1.bf16.msra.mxu0 %v622
  %1190 = vmatprep.subr.bf16.mxu0 0
  %1191 = vmatpush1.bf16.msra.mxu0 0
  %1192 = vmatprep.subr.bf16.mxu0 0
  %1193 = vmatpush1.bf16.msra.mxu0 0
  %1194 = vmatprep.subr.bf16.mxu0 0
  %1195 = vmatpush1.bf16.msra.mxu0 0
  %1196 = vmatprep.subr.bf16.mxu0 0
  %1197 = vmatpush1.bf16.msra.mxu0 0
  %1198 = vmatprep.subr.bf16.mxu0 0
  %1199 = vmatpush1.bf16.msra.mxu0 0
  %1200 = vmatprep.subr.bf16.mxu0 0
  %1201 = vmatpush1.bf16.msra.mxu0 0
  %1202 = vmatprep.subr.bf16.mxu0 0
  %1203 = vmatpush1.bf16.msra.mxu0 0
  %1204 = vmatprep.subr.bf16.mxu0 0
  %1205 = vmatpush1.bf16.msra.mxu0 0
  %1206 = vmatprep.subr.bf16.mxu0 0
  %1207 = vmatpush1.bf16.msra.mxu0 0
  %1208 = vmatprep.subr.bf16.mxu0 0
  %1209 = vmatpush1.bf16.msra.mxu0 0
  %1210 = vmatprep.subr.bf16.mxu0 0
  %1211 = vmatpush1.bf16.msra.mxu0 0
  %1212 = vmatprep.subr.bf16.mxu0 0
  %1213 = vmatpush1.bf16.msra.mxu0 0
  %1214 = vmatprep.subr.bf16.mxu0 0
  %1215 = vmatpush1.bf16.msra.mxu0 0
  %1216 = vmatprep.subr.bf16.mxu0 0
  %1217 = vmatpush1.bf16.msra.mxu0 0
  %1218 = vmatprep.subr.bf16.mxu0 0
  %1219 = vmatpush1.bf16.msra.mxu0 0
  %1220 = vmatprep.mubr.bf16.mxu0 0
  %1221 = vmatmul.mubr.bf16.gmra.mrb[0].mxu0 %v1186
  %v1222 = vpop.f32.mrb[0].mxu0
  %v1223 = vadd.f32 0.0, %v1222
  %v1224 = vpop.f32.mrb[0].mxu0
  %v1225 = vpop.f32.mrb[0].mxu0
  %v1226 = vpop.f32.mrb[0].mxu0
  %1227 = vdwg.mxu0
  %v1228 = vadd.f32 %v1180, %v1223
  %v1229 = vxor.u32 %v1178, 2147483648
  %v1230 = vmul.f32 %v1229, 1.442695
  %v1231 = vpow.pop %v1230
  %v1232 = vadd.f32 %v1231, 1.0
  %v1233 = vrcp.pop %v1232
  %v1234 = vmul.f32 1.0, %v1233
  %v1235 = vtanh.pop %v1178
  %v1236 = vmul.f32 %v1234, %v1105
  %1238 = vrot.lane.b32.xlu0 %v1235, 96
  %v1239 = vpop.permute.xlu0 %1238
  %v1241 = vmul.f32 %v1234, %v1239
  %1243 = vrot.lane.b32.xlu0 %v1241, 16
  %v1244 = vpop.permute.xlu0 %1243
  %v1246 = vadd.f32 %v1236, %v1244
  %v1247 = vtanh.pop %v1246
  %1249 = vrot.lane.b32.xlu0 %v1247, 32
  %v1250 = vpop.permute.xlu0 %1249
  %v1252 = vmul.f32 %v1234, %v1250
  %v1253 = vxor.u32 %v1228, 2147483648
  %v1254 = vmul.f32 %v1253, 1.442695
  %v1255 = vpow.pop %v1254
  %v1256 = vadd.f32 %v1255, 1.0
  %v1257 = vrcp.pop %v1256
  %v1258 = vmul.f32 1.0, %v1257
  %v1259 = vtanh.pop %v1228
  %v1260 = vmul.f32 %v1258, %v1112
  %1262 = vrot.lane.b32.xlu0 %v1259, 96
  %v1263 = vpop.permute.xlu0 %1262
  %v1265 = vmul.f32 %v1258, %v1263
  %1267 = vrot.lane.b32.xlu0 %v1265, 16
  %v1268 = vpop.permute.xlu0 %1267
  %v1270 = vadd.f32 %v1260, %v1268
  %v1271 = vtanh.pop %v1270
  %1273 = vrot.lane.b32.xlu0 %v1271, 32
  %v1274 = vpop.permute.xlu0 %1273
  %v1276 = vmul.f32 %v1258, %v1274
  %v1277 = vstv %s1127
  %vm1278 = vcmp.lt.s32.totalorder %v1277, %v556
  %v1279 = vstv %s1128
  %vm1280 = vcmp.lt.s32.totalorder %v1279, %v556
  %v1281 = vsel %vm1278, 1, 0
  %1282 = vset.pattern.permute.xlu0 0
  %1283 = vperm.xlu0 %1282, %v1281
  %v1284 = vpop.permute.xlu0 %1283
  %vm1285 = vcmp.eq.s32.totalorder %v1284, 1
  %v1286 = vsel %vm1285, %v1252, %v1104
  %v1287 = vsel %vm1285, %v1246, %v1105
  %v1288 = vsel %vm1280, 1, 0
  %1289 = vset.pattern.permute.xlu0 0
  %1290 = vperm.xlu0 %1289, %v1288
  %v1291 = vpop.permute.xlu0 %1290
  %vm1292 = vcmp.eq.s32.totalorder %v1291, 1
  %v1293 = vsel %vm1292, %v1276, %v1111
  %v1294 = vsel %vm1292, %v1270, %v1112
  %v1295 = vsel %vm1285, %v1252, 0.0
  %1297 = vrot.lane.b32.xlu0 %v1295, 80
  %v1298 = vpop.permute.xlu0 %1297
  %s1300 = scalar_lea.vmem %s11, 24
  %1301 = vst.msk [vmem:[%s1300] sm:$0xff] %vm146, %v1298
  %v1302 = vsel %vm1292, %v1276, 0.0
  %1304 = vrot.lane.b32.xlu0 %v1302, 80
  %v1305 = vpop.permute.xlu0 %1304
  %s1307 = scalar_lea.vmem %s95, 32
  %1308 = vst.msk [vmem:[%s1307] sm:$0xff] %vm146, %v1305
  %s1309 = sadd.s32 %s561, 4
  %s1310 = ssub.s32 3, %s561
  %s1311 = scalar_lea.vmem [#allocation4], 32
  %v1312 = vld [vmem:[%s1311] sm:$0xff]
  %v1313 = vpack.c.bf16 %v1286, %v1286
  %1315 = vrot.lane.b32.xlu0 %v1313, 80
  %v1316 = vpop.permute.xlu0 %1315
  %v1318 = vsel %vm146, %v1316, 0
  %1320 = vmatprep.subr.bf16.mxu0 0
  %1321 = vmatpush1.bf16.msra.mxu0 %v569
  %1322 = vmatprep.subr.bf16.mxu0 0
  %1323 = vmatpush1.bf16.msra.mxu0 0
  %1324 = vmatprep.subr.bf16.mxu0 0
  %1325 = vmatpush1.bf16.msra.mxu0 0
  %1326 = vmatprep.subr.bf16.mxu0 0
  %1327 = vmatpush1.bf16.msra.mxu0 0
  %1328 = vmatprep.subr.bf16.mxu0 0
  %1329 = vmatpush1.bf16.msra.mxu0 0
  %1330 = vmatprep.subr.bf16.mxu0 0
  %1331 = vmatpush1.bf16.msra.mxu0 0
  %1332 = vmatprep.subr.bf16.mxu0 0
  %1333 = vmatpush1.bf16.msra.mxu0 0
  %1334 = vmatprep.subr.bf16.mxu0 0
  %1335 = vmatpush1.bf16.msra.mxu0 0
  %1336 = vmatprep.subr.bf16.mxu0 0
  %1337 = vmatpush1.bf16.msra.mxu0 0
  %1338 = vmatprep.subr.bf16.mxu0 0
  %1339 = vmatpush1.bf16.msra.mxu0 0
  %1340 = vmatprep.subr.bf16.mxu0 0
  %1341 = vmatpush1.bf16.msra.mxu0 0
  %1342 = vmatprep.subr.bf16.mxu0 0
  %1343 = vmatpush1.bf16.msra.mxu0 0
  %1344 = vmatprep.subr.bf16.mxu0 0
  %1345 = vmatpush1.bf16.msra.mxu0 0
  %1346 = vmatprep.subr.bf16.mxu0 0
  %1347 = vmatpush1.bf16.msra.mxu0 0
  %1348 = vmatprep.subr.bf16.mxu0 0
  %1349 = vmatpush1.bf16.msra.mxu0 0
  %1350 = vmatprep.subr.bf16.mxu0 0
  %1351 = vmatpush1.bf16.msra.mxu0 0
  %1352 = vmatprep.mubr.bf16.mxu0 0
  %1353 = vmatmul.mubr.bf16.gmra.mrb[0].mxu0 %v1318
  %v1354 = vpop.f32.mrb[0].mxu0
  %v1355 = vadd.f32 0.0, %v1354
  %v1356 = vpop.f32.mrb[0].mxu0
  %v1357 = vpop.f32.mrb[0].mxu0
  %v1358 = vpop.f32.mrb[0].mxu0
  %1359 = vdwg.mxu0
  %v1360 = vadd.f32 %v1312, %v1355
  %s1361 = scalar_lea.vmem [#allocation5], 24
  %v1362 = vld [vmem:[%s1361] sm:$0xff]
  %v1363 = vpack.c.bf16 %v1293, %v1293
  %1365 = vrot.lane.b32.xlu0 %v1363, 80
  %v1366 = vpop.permute.xlu0 %1365
  %v1368 = vsel %vm146, %v1366, 0
  %1370 = vmatprep.subr.bf16.mxu0 0
  %1371 = vmatpush1.bf16.msra.mxu0 %v622
  %1372 = vmatprep.subr.bf16.mxu0 0
  %1373 = vmatpush1.bf16.msra.mxu0 0
  %1374 = vmatprep.subr.bf16.mxu0 0
  %1375 = vmatpush1.bf16.msra.mxu0 0
  %1376 = vmatprep.subr.bf16.mxu0 0
  %1377 = vmatpush1.bf16.msra.mxu0 0
  %1378 = vmatprep.subr.bf16.mxu0 0
  %1379 = vmatpush1.bf16.msra.mxu0 0
  %1380 = vmatprep.subr.bf16.mxu0 0
  %1381 = vmatpush1.bf16.msra.mxu0 0
  %1382 = vmatprep.subr.bf16.mxu0 0
  %1383 = vmatpush1.bf16.msra.mxu0 0
  %1384 = vmatprep.subr.bf16.mxu0 0
  %1385 = vmatpush1.bf16.msra.mxu0 0
  %1386 = vmatprep.subr.bf16.mxu0 0
  %1387 = vmatpush1.bf16.msra.mxu0 0
  %1388 = vmatprep.subr.bf16.mxu0 0
  %1389 = vmatpush1.bf16.msra.mxu0 0
  %1390 = vmatprep.subr.bf16.mxu0 0
  %1391 = vmatpush1.bf16.msra.mxu0 0
  %1392 = vmatprep.subr.bf16.mxu0 0
  %1393 = vmatpush1.bf16.msra.mxu0 0
  %1394 = vmatprep.subr.bf16.mxu0 0
  %1395 = vmatpush1.bf16.msra.mxu0 0
  %1396 = vmatprep.subr.bf16.mxu0 0
  %1397 = vmatpush1.bf16.msra.mxu0 0
  %1398 = vmatprep.subr.bf16.mxu0 0
  %1399 = vmatpush1.bf16.msra.mxu0 0
  %1400 = vmatprep.subr.bf16.mxu0 0
  %1401 = vmatpush1.bf16.msra.mxu0 0
  %1402 = vmatprep.mubr.bf16.mxu0 0
  %1403 = vmatmul.mubr.bf16.gmra.mrb[0].mxu0 %v1368
  %v1404 = vpop.f32.mrb[0].mxu0
  %v1405 = vadd.f32 0.0, %v1404
  %v1406 = vpop.f32.mrb[0].mxu0
  %v1407 = vpop.f32.mrb[0].mxu0
  %v1408 = vpop.f32.mrb[0].mxu0
  %1409 = vdwg.mxu0
  %v1410 = vadd.f32 %v1362, %v1405
  %v1411 = vxor.u32 %v1360, 2147483648
  %v1412 = vmul.f32 %v1411, 1.442695
  %v1413 = vpow.pop %v1412
  %v1414 = vadd.f32 %v1413, 1.0
  %v1415 = vrcp.pop %v1414
  %v1416 = vmul.f32 1.0, %v1415
  %v1417 = vtanh.pop %v1360
  %v1418 = vmul.f32 %v1416, %v1287
  %1420 = vrot.lane.b32.xlu0 %v1417, 96
  %v1421 = vpop.permute.xlu0 %1420
  %v1423 = vmul.f32 %v1416, %v1421
  %1425 = vrot.lane.b32.xlu0 %v1423, 16
  %v1426 = vpop.permute.xlu0 %1425
  %v1428 = vadd.f32 %v1418, %v1426
  %v1429 = vtanh.pop %v1428
  %1431 = vrot.lane.b32.xlu0 %v1429, 32
  %v1432 = vpop.permute.xlu0 %1431
  %v1434 = vmul.f32 %v1416, %v1432
  %v1435 = vxor.u32 %v1410, 2147483648
  %v1436 = vmul.f32 %v1435, 1.442695
  %v1437 = vpow.pop %v1436
  %v1438 = vadd.f32 %v1437, 1.0
  %v1439 = vrcp.pop %v1438
  %v1440 = vmul.f32 1.0, %v1439
  %v1441 = vtanh.pop %v1410
  %v1442 = vmul.f32 %v1440, %v1294
  %1444 = vrot.lane.b32.xlu0 %v1441, 96
  %v1445 = vpop.permute.xlu0 %1444
  %v1447 = vmul.f32 %v1440, %v1445
  %1449 = vrot.lane.b32.xlu0 %v1447, 16
  %v1450 = vpop.permute.xlu0 %1449
  %v1452 = vadd.f32 %v1442, %v1450
  %v1453 = vtanh.pop %v1452
  %1455 = vrot.lane.b32.xlu0 %v1453, 32
  %v1456 = vpop.permute.xlu0 %1455
  %v1458 = vmul.f32 %v1440, %v1456
  %v1459 = vstv %s1309
  %vm1460 = vcmp.lt.s32.totalorder %v1459, %v556
  %v1461 = vstv %s1310
  %vm1462 = vcmp.lt.s32.totalorder %v1461, %v556
  %v1463 = vsel %vm1460, 1, 0
  %1464 = vset.pattern.permute.xlu0 0
  %1465 = vperm.xlu0 %1464, %v1463
  %v1466 = vpop.permute.xlu0 %1465
  %vm1467 = vcmp.eq.s32.totalorder %v1466, 1
  %v1468 = vsel %vm1467, %v1434, %v1286
  %v1469 = vsel %vm1467, %v1428, %v1287
  %v1470 = vsel %vm1462, 1, 0
  %1471 = vset.pattern.permute.xlu0 0
  %1472 = vperm.xlu0 %1471, %v1470
  %v1473 = vpop.permute.xlu0 %1472
  %vm1474 = vcmp.eq.s32.totalorder %v1473, 1
  %v1475 = vsel %vm1474, %v1458, %v1293
  %v1476 = vsel %vm1474, %v1452, %v1294
  %v1477 = vsel %vm1467, %v1434, 0.0
  %1479 = vrot.lane.b32.xlu0 %v1477, 80
  %v1480 = vpop.permute.xlu0 %1479
  %s1482 = scalar_lea.vmem %s11, 32
  %1483 = vst.msk [vmem:[%s1482] sm:$0xff] %vm146, %v1480
  %v1484 = vsel %vm1474, %v1458, 0.0
  %1486 = vrot.lane.b32.xlu0 %v1484, 80
  %v1487 = vpop.permute.xlu0 %1486
  %s1489 = scalar_lea.vmem %s95, 24
  %1490 = vst.msk [vmem:[%s1489] sm:$0xff] %vm146, %v1487
  %s1491 = sadd.s32 %s561, 5
  %s1492 = ssub.s32 2, %s561
  %s1493 = scalar_lea.vmem [#allocation4], 40
  %v1494 = vld [vmem:[%s1493] sm:$0xff]
  %v1495 = vpack.c.bf16 %v1468, %v1468
  %1497 = vrot.lane.b32.xlu0 %v1495, 80
  %v1498 = vpop.permute.xlu0 %1497
  %v1500 = vsel %vm146, %v1498, 0
  %1502 = vmatprep.subr.bf16.mxu0 0
  %1503 = vmatpush1.bf16.msra.mxu0 %v569
  %1504 = vmatprep.subr.bf16.mxu0 0
  %1505 = vmatpush1.bf16.msra.mxu0 0
  %1506 = vmatprep.subr.bf16.mxu0 0
  %1507 = vmatpush1.bf16.msra.mxu0 0
  %1508 = vmatprep.subr.bf16.mxu0 0
  %1509 = vmatpush1.bf16.msra.mxu0 0
  %1510 = vmatprep.subr.bf16.mxu0 0
  %1511 = vmatpush1.bf16.msra.mxu0 0
  %1512 = vmatprep.subr.bf16.mxu0 0
  %1513 = vmatpush1.bf16.msra.mxu0 0
  %1514 = vmatprep.subr.bf16.mxu0 0
  %1515 = vmatpush1.bf16.msra.mxu0 0
  %1516 = vmatprep.subr.bf16.mxu0 0
  %1517 = vmatpush1.bf16.msra.mxu0 0
  %1518 = vmatprep.subr.bf16.mxu0 0
  %1519 = vmatpush1.bf16.msra.mxu0 0
  %1520 = vmatprep.subr.bf16.mxu0 0
  %1521 = vmatpush1.bf16.msra.mxu0 0
  %1522 = vmatprep.subr.bf16.mxu0 0
  %1523 = vmatpush1.bf16.msra.mxu0 0
  %1524 = vmatprep.subr.bf16.mxu0 0
  %1525 = vmatpush1.bf16.msra.mxu0 0
  %1526 = vmatprep.subr.bf16.mxu0 0
  %1527 = vmatpush1.bf16.msra.mxu0 0
  %1528 = vmatprep.subr.bf16.mxu0 0
  %1529 = vmatpush1.bf16.msra.mxu0 0
  %1530 = vmatprep.subr.bf16.mxu0 0
  %1531 = vmatpush1.bf16.msra.mxu0 0
  %1532 = vmatprep.subr.bf16.mxu0 0
  %1533 = vmatpush1.bf16.msra.mxu0 0
  %1534 = vmatprep.mubr.bf16.mxu0 0
  %1535 = vmatmul.mubr.bf16.gmra.mrb[0].mxu0 %v1500
  %v1536 = vpop.f32.mrb[0].mxu0
  %v1537 = vadd.f32 0.0, %v1536
  %v1538 = vpop.f32.mrb[0].mxu0
  %v1539 = vpop.f32.mrb[0].mxu0
  %v1540 = vpop.f32.mrb[0].mxu0
  %1541 = vdwg.mxu0
  %v1542 = vadd.f32 %v1494, %v1537
  %s1543 = scalar_lea.vmem [#allocation5], 16
  %v1544 = vld [vmem:[%s1543] sm:$0xff]
  %v1545 = vpack.c.bf16 %v1475, %v1475
  %1547 = vrot.lane.b32.xlu0 %v1545, 80
  %v1548 = vpop.permute.xlu0 %1547
  %v1550 = vsel %vm146, %v1548, 0
  %1552 = vmatprep.subr.bf16.mxu0 0
  %1553 = vmatpush1.bf16.msra.mxu0 %v622
  %1554 = vmatprep.subr.bf16.mxu0 0
  %1555 = vmatpush1.bf16.msra.mxu0 0
  %1556 = vmatprep.subr.bf16.mxu0 0
  %1557 = vmatpush1.bf16.msra.mxu0 0
  %1558 = vmatprep.subr.bf16.mxu0 0
  %1559 = vmatpush1.bf16.msra.mxu0 0
  %1560 = vmatprep.subr.bf16.mxu0 0
  %1561 = vmatpush1.bf16.msra.mxu0 0
  %1562 = vmatprep.subr.bf16.mxu0 0
  %1563 = vmatpush1.bf16.msra.mxu0 0
  %1564 = vmatprep.subr.bf16.mxu0 0
  %1565 = vmatpush1.bf16.msra.mxu0 0
  %1566 = vmatprep.subr.bf16.mxu0 0
  %1567 = vmatpush1.bf16.msra.mxu0 0
  %1568 = vmatprep.subr.bf16.mxu0 0
  %1569 = vmatpush1.bf16.msra.mxu0 0
  %1570 = vmatprep.subr.bf16.mxu0 0
  %1571 = vmatpush1.bf16.msra.mxu0 0
  %1572 = vmatprep.subr.bf16.mxu0 0
  %1573 = vmatpush1.bf16.msra.mxu0 0
  %1574 = vmatprep.subr.bf16.mxu0 0
  %1575 = vmatpush1.bf16.msra.mxu0 0
  %1576 = vmatprep.subr.bf16.mxu0 0
  %1577 = vmatpush1.bf16.msra.mxu0 0
  %1578 = vmatprep.subr.bf16.mxu0 0
  %1579 = vmatpush1.bf16.msra.mxu0 0
  %1580 = vmatprep.subr.bf16.mxu0 0
  %1581 = vmatpush1.bf16.msra.mxu0 0
  %1582 = vmatprep.subr.bf16.mxu0 0
  %1583 = vmatpush1.bf16.msra.mxu0 0
  %1584 = vmatprep.mubr.bf16.mxu0 0
  %1585 = vmatmul.mubr.bf16.gmra.mrb[0].mxu0 %v1550
  %v1586 = vpop.f32.mrb[0].mxu0
  %v1587 = vadd.f32 0.0, %v1586
  %v1588 = vpop.f32.mrb[0].mxu0
  %v1589 = vpop.f32.mrb[0].mxu0
  %v1590 = vpop.f32.mrb[0].mxu0
  %1591 = vdwg.mxu0
  %v1592 = vadd.f32 %v1544, %v1587
  %v1593 = vxor.u32 %v1542, 2147483648
  %v1594 = vmul.f32 %v1593, 1.442695
  %v1595 = vpow.pop %v1594
  %v1596 = vadd.f32 %v1595, 1.0
  %v1597 = vrcp.pop %v1596
  %v1598 = vmul.f32 1.0, %v1597
  %v1599 = vtanh.pop %v1542
  %v1600 = vmul.f32 %v1598, %v1469
  %1602 = vrot.lane.b32.xlu0 %v1599, 96
  %v1603 = vpop.permute.xlu0 %1602
  %v1605 = vmul.f32 %v1598, %v1603
  %1607 = vrot.lane.b32.xlu0 %v1605, 16
  %v1608 = vpop.permute.xlu0 %1607
  %v1610 = vadd.f32 %v1600, %v1608
  %v1611 = vtanh.pop %v1610
  %1613 = vrot.lane.b32.xlu0 %v1611, 32
  %v1614 = vpop.permute.xlu0 %1613
  %v1616 = vmul.f32 %v1598, %v1614
  %v1617 = vxor.u32 %v1592, 2147483648
  %v1618 = vmul.f32 %v1617, 1.442695
  %v1619 = vpow.pop %v1618
  %v1620 = vadd.f32 %v1619, 1.0
  %v1621 = vrcp.pop %v1620
  %v1622 = vmul.f32 1.0, %v1621
  %v1623 = vtanh.pop %v1592
  %v1624 = vmul.f32 %v1622, %v1476
  %1626 = vrot.lane.b32.xlu0 %v1623, 96
  %v1627 = vpop.permute.xlu0 %1626
  %v1629 = vmul.f32 %v1622, %v1627
  %1631 = vrot.lane.b32.xlu0 %v1629, 16
  %v1632 = vpop.permute.xlu0 %1631
  %v1634 = vadd.f32 %v1624, %v1632
  %v1635 = vtanh.pop %v1634
  %1637 = vrot.lane.b32.xlu0 %v1635, 32
  %v1638 = vpop.permute.xlu0 %1637
  %v1640 = vmul.f32 %v1622, %v1638
  %v1641 = vstv %s1491
  %vm1642 = vcmp.lt.s32.totalorder %v1641, %v556
  %v1643 = vstv %s1492
  %vm1644 = vcmp.lt.s32.totalorder %v1643, %v556
  %v1645 = vsel %vm1642, 1, 0
  %1646 = vset.pattern.permute.xlu0 0
  %1647 = vperm.xlu0 %1646, %v1645
  %v1648 = vpop.permute.xlu0 %1647
  %vm1649 = vcmp.eq.s32.totalorder %v1648, 1
  %v1650 = vsel %vm1649, %v1616, %v1468
  %v1651 = vsel %vm1649, %v1610, %v1469
  %v1652 = vsel %vm1644, 1, 0
  %1653 = vset.pattern.permute.xlu0 0
  %1654 = vperm.xlu0 %1653, %v1652
  %v1655 = vpop.permute.xlu0 %1654
  %vm1656 = vcmp.eq.s32.totalorder %v1655, 1
  %v1657 = vsel %vm1656, %v1640, %v1475
  %v1658 = vsel %vm1656, %v1634, %v1476
  %v1659 = vsel %vm1649, %v1616, 0.0
  %1661 = vrot.lane.b32.xlu0 %v1659, 80
  %v1662 = vpop.permute.xlu0 %1661
  %s1664 = scalar_lea.vmem %s11, 40
  %1665 = vst.msk [vmem:[%s1664] sm:$0xff] %vm146, %v1662
  %v1666 = vsel %vm1656, %v1640, 0.0
  %1668 = vrot.lane.b32.xlu0 %v1666, 80
  %v1669 = vpop.permute.xlu0 %1668
  %s1671 = scalar_lea.vmem %s95, 16
  %1672 = vst.msk [vmem:[%s1671] sm:$0xff] %vm146, %v1669
  %s1673 = sadd.s32 %s561, 6
  %s1674 = ssub.s32 1, %s561
  %s1675 = scalar_lea.vmem [#allocation4], 48
  %v1676 = vld [vmem:[%s1675] sm:$0xff]
  %v1677 = vpack.c.bf16 %v1650, %v1650
  %1679 = vrot.lane.b32.xlu0 %v1677, 80
  %v1680 = vpop.permute.xlu0 %1679
  %v1682 = vsel %vm146, %v1680, 0
  %1684 = vmatprep.subr.bf16.mxu0 0
  %1685 = vmatpush1.bf16.msra.mxu0 %v569
  %1686 = vmatprep.subr.bf16.mxu0 0
  %1687 = vmatpush1.bf16.msra.mxu0 0
  %1688 = vmatprep.subr.bf16.mxu0 0
  %1689 = vmatpush1.bf16.msra.mxu0 0
  %1690 = vmatprep.subr.bf16.mxu0 0
  %1691 = vmatpush1.bf16.msra.mxu0 0
  %1692 = vmatprep.subr.bf16.mxu0 0
  %1693 = vmatpush1.bf16.msra.mxu0 0
  %1694 = vmatprep.subr.bf16.mxu0 0
  %1695 = vmatpush1.bf16.msra.mxu0 0
  %1696 = vmatprep.subr.bf16.mxu0 0
  %1697 = vmatpush1.bf16.msra.mxu0 0
  %1698 = vmatprep.subr.bf16.mxu0 0
  %1699 = vmatpush1.bf16.msra.mxu0 0
  %1700 = vmatprep.subr.bf16.mxu0 0
  %1701 = vmatpush1.bf16.msra.mxu0 0
  %1702 = vmatprep.subr.bf16.mxu0 0
  %1703 = vmatpush1.bf16.msra.mxu0 0
  %1704 = vmatprep.subr.bf16.mxu0 0
  %1705 = vmatpush1.bf16.msra.mxu0 0
  %1706 = vmatprep.subr.bf16.mxu0 0
  %1707 = vmatpush1.bf16.msra.mxu0 0
  %1708 = vmatprep.subr.bf16.mxu0 0
  %1709 = vmatpush1.bf16.msra.mxu0 0
  %1710 = vmatprep.subr.bf16.mxu0 0
  %1711 = vmatpush1.bf16.msra.mxu0 0
  %1712 = vmatprep.subr.bf16.mxu0 0
  %1713 = vmatpush1.bf16.msra.mxu0 0
  %1714 = vmatprep.subr.bf16.mxu0 0
  %1715 = vmatpush1.bf16.msra.mxu0 0
  %1716 = vmatprep.mubr.bf16.mxu0 0
  %1717 = vmatmul.mubr.bf16.gmra.mrb[0].mxu0 %v1682
  %v1718 = vpop.f32.mrb[0].mxu0
  %v1719 = vadd.f32 0.0, %v1718
  %v1720 = vpop.f32.mrb[0].mxu0
  %v1721 = vpop.f32.mrb[0].mxu0
  %v1722 = vpop.f32.mrb[0].mxu0
  %1723 = vdwg.mxu0
  %v1724 = vadd.f32 %v1676, %v1719
  %s1725 = scalar_lea.vmem [#allocation5], 8
  %v1726 = vld [vmem:[%s1725] sm:$0xff]
  %v1727 = vpack.c.bf16 %v1657, %v1657
  %1729 = vrot.lane.b32.xlu0 %v1727, 80
  %v1730 = vpop.permute.xlu0 %1729
  %v1732 = vsel %vm146, %v1730, 0
  %1734 = vmatprep.subr.bf16.mxu0 0
  %1735 = vmatpush1.bf16.msra.mxu0 %v622
  %1736 = vmatprep.subr.bf16.mxu0 0
  %1737 = vmatpush1.bf16.msra.mxu0 0
  %1738 = vmatprep.subr.bf16.mxu0 0
  %1739 = vmatpush1.bf16.msra.mxu0 0
  %1740 = vmatprep.subr.bf16.mxu0 0
  %1741 = vmatpush1.bf16.msra.mxu0 0
  %1742 = vmatprep.subr.bf16.mxu0 0
  %1743 = vmatpush1.bf16.msra.mxu0 0
  %1744 = vmatprep.subr.bf16.mxu0 0
  %1745 = vmatpush1.bf16.msra.mxu0 0
  %1746 = vmatprep.subr.bf16.mxu0 0
  %1747 = vmatpush1.bf16.msra.mxu0 0
  %1748 = vmatprep.subr.bf16.mxu0 0
  %1749 = vmatpush1.bf16.msra.mxu0 0
  %1750 = vmatprep.subr.bf16.mxu0 0
  %1751 = vmatpush1.bf16.msra.mxu0 0
  %1752 = vmatprep.subr.bf16.mxu0 0
  %1753 = vmatpush1.bf16.msra.mxu0 0
  %1754 = vmatprep.subr.bf16.mxu0 0
  %1755 = vmatpush1.bf16.msra.mxu0 0
  %1756 = vmatprep.subr.bf16.mxu0 0
  %1757 = vmatpush1.bf16.msra.mxu0 0
  %1758 = vmatprep.subr.bf16.mxu0 0
  %1759 = vmatpush1.bf16.msra.mxu0 0
  %1760 = vmatprep.subr.bf16.mxu0 0
  %1761 = vmatpush1.bf16.msra.mxu0 0
  %1762 = vmatprep.subr.bf16.mxu0 0
  %1763 = vmatpush1.bf16.msra.mxu0 0
  %1764 = vmatprep.subr.bf16.mxu0 0
  %1765 = vmatpush1.bf16.msra.mxu0 0
  %1766 = vmatprep.mubr.bf16.mxu0 0
  %1767 = vmatmul.mubr.bf16.gmra.mrb[0].mxu0 %v1732
  %v1768 = vpop.f32.mrb[0].mxu0
  %v1769 = vadd.f32 0.0, %v1768
  %v1770 = vpop.f32.mrb[0].mxu0
  %v1771 = vpop.f32.mrb[0].mxu0
  %v1772 = vpop.f32.mrb[0].mxu0
  %1773 = vdwg.mxu0
  %v1774 = vadd.f32 %v1726, %v1769
  %v1775 = vxor.u32 %v1724, 2147483648
  %v1776 = vmul.f32 %v1775, 1.442695
  %v1777 = vpow.pop %v1776
  %v1778 = vadd.f32 %v1777, 1.0
  %v1779 = vrcp.pop %v1778
  %v1780 = vmul.f32 1.0, %v1779
  %v1781 = vtanh.pop %v1724
  %v1782 = vmul.f32 %v1780, %v1651
  %1784 = vrot.lane.b32.xlu0 %v1781, 96
  %v1785 = vpop.permute.xlu0 %1784
  %v1787 = vmul.f32 %v1780, %v1785
  %1789 = vrot.lane.b32.xlu0 %v1787, 16
  %v1790 = vpop.permute.xlu0 %1789
  %v1792 = vadd.f32 %v1782, %v1790
  %v1793 = vtanh.pop %v1792
  %1795 = vrot.lane.b32.xlu0 %v1793, 32
  %v1796 = vpop.permute.xlu0 %1795
  %v1798 = vmul.f32 %v1780, %v1796
  %v1799 = vxor.u32 %v1774, 2147483648
  %v1800 = vmul.f32 %v1799, 1.442695
  %v1801 = vpow.pop %v1800
  %v1802 = vadd.f32 %v1801, 1.0
  %v1803 = vrcp.pop %v1802
  %v1804 = vmul.f32 1.0, %v1803
  %v1805 = vtanh.pop %v1774
  %v1806 = vmul.f32 %v1804, %v1658
  %1808 = vrot.lane.b32.xlu0 %v1805, 96
  %v1809 = vpop.permute.xlu0 %1808
  %v1811 = vmul.f32 %v1804, %v1809
  %1813 = vrot.lane.b32.xlu0 %v1811, 16
  %v1814 = vpop.permute.xlu0 %1813
  %v1816 = vadd.f32 %v1806, %v1814
  %v1817 = vtanh.pop %v1816
  %1819 = vrot.lane.b32.xlu0 %v1817, 32
  %v1820 = vpop.permute.xlu0 %1819
  %v1822 = vmul.f32 %v1804, %v1820
  %v1823 = vstv %s1673
  %vm1824 = vcmp.lt.s32.totalorder %v1823, %v556
  %v1825 = vstv %s1674
  %vm1826 = vcmp.lt.s32.totalorder %v1825, %v556
  %v1827 = vsel %vm1824, 1, 0
  %1828 = vset.pattern.permute.xlu0 0
  %1829 = vperm.xlu0 %1828, %v1827
  %v1830 = vpop.permute.xlu0 %1829
  %vm1831 = vcmp.eq.s32.totalorder %v1830, 1
  %v1832 = vsel %vm1831, %v1798, %v1650
  %v1833 = vsel %vm1831, %v1792, %v1651
  %v1834 = vsel %vm1826, 1, 0
  %1835 = vset.pattern.permute.xlu0 0
  %1836 = vperm.xlu0 %1835, %v1834
  %v1837 = vpop.permute.xlu0 %1836
  %vm1838 = vcmp.eq.s32.totalorder %v1837, 1
  %v1839 = vsel %vm1838, %v1822, %v1657
  %v1840 = vsel %vm1838, %v1816, %v1658
  %v1841 = vsel %vm1831, %v1798, 0.0
  %1843 = vrot.lane.b32.xlu0 %v1841, 80
  %v1844 = vpop.permute.xlu0 %1843
  %s1846 = scalar_lea.vmem %s11, 48
  %1847 = vst.msk [vmem:[%s1846] sm:$0xff] %vm146, %v1844
  %v1848 = vsel %vm1838, %v1822, 0.0
  %1850 = vrot.lane.b32.xlu0 %v1848, 80
  %v1851 = vpop.permute.xlu0 %1850
  %s1853 = scalar_lea.vmem %s95, 8
  %1854 = vst.msk [vmem:[%s1853] sm:$0xff] %vm146, %v1851
  %s1855 = sadd.s32 %s561, 7
  %s1856 = ssub.s32 0, %s561
  %s1857 = scalar_lea.vmem [#allocation4], 56
  %v1858 = vld [vmem:[%s1857] sm:$0xff]
  %v1859 = vpack.c.bf16 %v1832, %v1832
  %1861 = vrot.lane.b32.xlu0 %v1859, 80
  %v1862 = vpop.permute.xlu0 %1861
  %v1864 = vsel %vm146, %v1862, 0
  %1866 = vmatprep.subr.bf16.mxu0 0
  %1867 = vmatpush1.bf16.msra.mxu0 %v569
  %1868 = vmatprep.subr.bf16.mxu0 0
  %1869 = vmatpush1.bf16.msra.mxu0 0
  %1870 = vmatprep.subr.bf16.mxu0 0
  %1871 = vmatpush1.bf16.msra.mxu0 0
  %1872 = vmatprep.subr.bf16.mxu0 0
  %1873 = vmatpush1.bf16.msra.mxu0 0
  %1874 = vmatprep.subr.bf16.mxu0 0
  %1875 = vmatpush1.bf16.msra.mxu0 0
  %1876 = vmatprep.subr.bf16.mxu0 0
  %1877 = vmatpush1.bf16.msra.mxu0 0
  %1878 = vmatprep.subr.bf16.mxu0 0
  %1879 = vmatpush1.bf16.msra.mxu0 0
  %1880 = vmatprep.subr.bf16.mxu0 0
  %1881 = vmatpush1.bf16.msra.mxu0 0
  %1882 = vmatprep.subr.bf16.mxu0 0
  %1883 = vmatpush1.bf16.msra.mxu0 0
  %1884 = vmatprep.subr.bf16.mxu0 0
  %1885 = vmatpush1.bf16.msra.mxu0 0
  %1886 = vmatprep.subr.bf16.mxu0 0
  %1887 = vmatpush1.bf16.msra.mxu0 0
  %1888 = vmatprep.subr.bf16.mxu0 0
  %1889 = vmatpush1.bf16.msra.mxu0 0
  %1890 = vmatprep.subr.bf16.mxu0 0
  %1891 = vmatpush1.bf16.msra.mxu0 0
  %1892 = vmatprep.subr.bf16.mxu0 0
  %1893 = vmatpush1.bf16.msra.mxu0 0
  %1894 = vmatprep.subr.bf16.mxu0 0
  %1895 = vmatpush1.bf16.msra.mxu0 0
  %1896 = vmatprep.subr.bf16.mxu0 0
  %1897 = vmatpush1.bf16.msra.mxu0 0
  %1898 = vmatprep.mubr.bf16.mxu0 0
  %1899 = vmatmul.mubr.bf16.gmra.mrb[0].mxu0 %v1864
  %v1900 = vpop.f32.mrb[0].mxu0
  %v1901 = vadd.f32 0.0, %v1900
  %v1902 = vpop.f32.mrb[0].mxu0
  %v1903 = vpop.f32.mrb[0].mxu0
  %v1904 = vpop.f32.mrb[0].mxu0
  %1905 = vdwg.mxu0
  %v1906 = vadd.f32 %v1858, %v1901
  %v1907 = vld [vmem:[#allocation5] sm:$0xff]
  %v1908 = vpack.c.bf16 %v1839, %v1839
  %1910 = vrot.lane.b32.xlu0 %v1908, 80
  %v1911 = vpop.permute.xlu0 %1910
  %v1913 = vsel %vm146, %v1911, 0
  %1915 = vmatprep.subr.bf16.mxu0 0
  %1916 = vmatpush1.bf16.msra.mxu0 %v622
  %1917 = vmatprep.subr.bf16.mxu0 0
  %1918 = vmatpush1.bf16.msra.mxu0 0
  %1919 = vmatprep.subr.bf16.mxu0 0
  %1920 = vmatpush1.bf16.msra.mxu0 0
  %1921 = vmatprep.subr.bf16.mxu0 0
  %1922 = vmatpush1.bf16.msra.mxu0 0
  %1923 = vmatprep.subr.bf16.mxu0 0
  %1924 = vmatpush1.bf16.msra.mxu0 0
  %1925 = vmatprep.subr.bf16.mxu0 0
  %1926 = vmatpush1.bf16.msra.mxu0 0
  %1927 = vmatprep.subr.bf16.mxu0 0
  %1928 = vmatpush1.bf16.msra.mxu0 0
  %1929 = vmatprep.subr.bf16.mxu0 0
  %1930 = vmatpush1.bf16.msra.mxu0 0
  %1931 = vmatprep.subr.bf16.mxu0 0
  %1932 = vmatpush1.bf16.msra.mxu0 0
  %1933 = vmatprep.subr.bf16.mxu0 0
  %1934 = vmatpush1.bf16.msra.mxu0 0
  %1935 = vmatprep.subr.bf16.mxu0 0
  %1936 = vmatpush1.bf16.msra.mxu0 0
  %1937 = vmatprep.subr.bf16.mxu0 0
  %1938 = vmatpush1.bf16.msra.mxu0 0
  %1939 = vmatprep.subr.bf16.mxu0 0
  %1940 = vmatpush1.bf16.msra.mxu0 0
  %1941 = vmatprep.subr.bf16.mxu0 0
  %1942 = vmatpush1.bf16.msra.mxu0 0
  %1943 = vmatprep.subr.bf16.mxu0 0
  %1944 = vmatpush1.bf16.msra.mxu0 0
  %1945 = vmatprep.subr.bf16.mxu0 0
  %1946 = vmatpush1.bf16.msra.mxu0 0
  %1947 = vmatprep.mubr.bf16.mxu0 0
  %1948 = vmatmul.mubr.bf16.gmra.mrb[0].mxu0 %v1913
  %v1949 = vpop.f32.mrb[0].mxu0
  %v1950 = vadd.f32 0.0, %v1949
  %v1951 = vpop.f32.mrb[0].mxu0
  %v1952 = vpop.f32.mrb[0].mxu0
  %v1953 = vpop.f32.mrb[0].mxu0
  %1954 = vdwg.mxu0
  %v1955 = vadd.f32 %v1907, %v1950
  %v1956 = vxor.u32 %v1906, 2147483648
  %v1957 = vmul.f32 %v1956, 1.442695
  %v1958 = vpow.pop %v1957
  %v1959 = vadd.f32 %v1958, 1.0
  %v1960 = vrcp.pop %v1959
  %v1961 = vmul.f32 1.0, %v1960
  %v1962 = vtanh.pop %v1906
  %v1963 = vmul.f32 %v1961, %v1833
  %1965 = vrot.lane.b32.xlu0 %v1962, 96
  %v1966 = vpop.permute.xlu0 %1965
  %v1968 = vmul.f32 %v1961, %v1966
  %1970 = vrot.lane.b32.xlu0 %v1968, 16
  %v1971 = vpop.permute.xlu0 %1970
  %v1973 = vadd.f32 %v1963, %v1971
  %v1974 = vtanh.pop %v1973
  %1976 = vrot.lane.b32.xlu0 %v1974, 32
  %v1977 = vpop.permute.xlu0 %1976
  %v1979 = vmul.f32 %v1961, %v1977
  %v1980 = vxor.u32 %v1955, 2147483648
  %v1981 = vmul.f32 %v1980, 1.442695
  %v1982 = vpow.pop %v1981
  %v1983 = vadd.f32 %v1982, 1.0
  %v1984 = vrcp.pop %v1983
  %v1985 = vmul.f32 1.0, %v1984
  %v1986 = vtanh.pop %v1955
  %v1987 = vmul.f32 %v1985, %v1840
  %1989 = vrot.lane.b32.xlu0 %v1986, 96
  %v1990 = vpop.permute.xlu0 %1989
  %v1992 = vmul.f32 %v1985, %v1990
  %1994 = vrot.lane.b32.xlu0 %v1992, 16
  %v1995 = vpop.permute.xlu0 %1994
  %v1997 = vadd.f32 %v1987, %v1995
  %v1998 = vtanh.pop %v1997
  %2000 = vrot.lane.b32.xlu0 %v1998, 32
  %v2001 = vpop.permute.xlu0 %2000
  %v2003 = vmul.f32 %v1985, %v2001
  %v2004 = vstv %s1855
  %vm2005 = vcmp.lt.s32.totalorder %v2004, %v556
  %v2006 = vstv %s1856
  %vm2007 = vcmp.lt.s32.totalorder %v2006, %v556
  %v2008 = vsel %vm2005, 1, 0
  %2009 = vset.pattern.permute.xlu0 0
  %2010 = vperm.xlu0 %2009, %v2008
  %v2011 = vpop.permute.xlu0 %2010
  %vm2012 = vcmp.eq.s32.totalorder %v2011, 1
  %v2013 = vsel %vm2012, %v1979, %v1832
  %v2014 = vsel %vm2012, %v1973, %v1833
  %v2015 = vsel %vm2007, 1, 0
  %2016 = vset.pattern.permute.xlu0 0
  %2017 = vperm.xlu0 %2016, %v2015
  %v2018 = vpop.permute.xlu0 %2017
  %vm2019 = vcmp.eq.s32.totalorder %v2018, 1
  %v2020 = vsel %vm2019, %v2003, %v1839
  %v2021 = vsel %vm2019, %v1997, %v1840
  %v2022 = vsel %vm2012, %v1979, 0.0
  %2024 = vrot.lane.b32.xlu0 %v2022, 80
  %v2025 = vpop.permute.xlu0 %2024
  %s2027 = scalar_lea.vmem %s11, 56
  %2028 = vst.msk [vmem:[%s2027] sm:$0xff] %vm146, %v2025
  %v2029 = vsel %vm2019, %v2003, 0.0
  %2031 = vrot.lane.b32.xlu0 %v2029, 80
  %v2032 = vpop.permute.xlu0 %2031
  %2034 = vst.msk [vmem:[%s95] sm:$0xff] %vm146, %v2032
  %2036 = vrot.lane.b32.xlu0 %v2013, 80
  %v2037 = vpop.permute.xlu0 %2036
  %2039 = vst.msk [vmem:[#allocation2] sm:$0xff] %vm146, %v2037
  %2041 = vrot.lane.b32.xlu0 %v2020, 80
  %v2042 = vpop.permute.xlu0 %2041
  %s2044 = scalar_lea.vmem [#allocation2], 8
  %2045 = vst.msk [vmem:[%s2044] sm:$0xff] %vm146, %v2042
  %2047 = vrot.lane.b32.xlu0 %v2014, 112
  %v2048 = vpop.permute.xlu0 %2047
  %2050 = vst.msk [vmem:[#allocation3] sm:$0xff] %vm146, %v2048
  %2052 = vrot.lane.b32.xlu0 %v2021, 112
  %v2053 = vpop.permute.xlu0 %2052
  %s2055 = scalar_lea.vmem [#allocation3], 8
  %2056 = vst.msk [vmem:[%s2055] sm:$0xff] %vm146, %v2053
  %s2057 = ssub.s32 0, 0
  %s2058 = smul.u32 8, %s2057
  %p2059 = scmp.lt.s32.totalorder %s2058, 7
  %s2060 = scalar_select %p2059, %s2058, 7
  %s2061 = smul.addr %s2060, 8
  %s2062 = scalar_lea.vmem %s12, %s2061
  // Predicated region
  $region50: #{language_model_forward.4} parent=0 // pred_check
    _
  $region51: #{language_model_forward.4} parent=0 // pred_check_branch
    %2064 = sbr.rel (0) target = $region53
  $region52: #{language_model_forward.4} parent=0 // pred_region
    _
  $region53: #{language_model_forward.4} parent=0 // pred_fallthru
    _
  // Predicated region
  $region54: #{language_model_forward.4} parent=0 // pred_check
    _
  $region55: #{language_model_forward.4} parent=0 // pred_check_branch
    %2066 = sbr.rel (0) target = $region57
  $region56: #{language_model_forward.4} parent=0 // pred_region
    %s2067 = ssub.s32 0, 0
    %s2068 = smul.u32 8, %s2067
  $region57: #{language_model_forward.4} parent=0 // pred_fallthru
    _
  // Predicated region
  $region58: #{language_model_forward.4} parent=0 // pred_check
    _
  $region59: #{language_model_forward.4} parent=0 // pred_check_branch
    %2070 = sbr.rel (0) target = $region61
  $region60: #{language_model_forward.4} parent=0 // pred_region
    _
  $region61: #{language_model_forward.4} parent=0 // pred_fallthru
    _
  // Predicated region
  $region62: #{language_model_forward.4} parent=0 // pred_check
    _
  $region63: #{language_model_forward.4} parent=0 // pred_check_branch
    %2072 = sbr.rel (0) target = $region65
  $region64: #{language_model_forward.4} parent=0 // pred_region
    %s2073 = ssub.s32 0, 0
    %s2074 = smul.u32 8, %s2073
    %p2075 = scmp.lt.s32.totalorder %s2074, 7
    %s2076 = scalar_select %p2075, %s2074, 7
    %s2077 = smul.addr %s2076, 8
    %s2078 = scalar_lea.vmem %s12, %s2077
  $region65: #{language_model_forward.4} parent=0 // pred_fallthru
    _

</llo_original>
